<compile_context>
chip_gen: v5e
topology: v5e:2x2
jax: 0.10.0
libtpu: 0.0.40
codegen_flags: <defaults>
</compile_context>

<pallas_src>
import jax
import jax.numpy as jnp
from jax.experimental import pallas as pl
from jax.experimental.pallas import tpu as pltpu


# ----------------------------------------------------------------------------
# In-kernel helpers
# ----------------------------------------------------------------------------
def _elu(x):
    # torch.nn.ELU(alpha=1.0).
    # TODO(synk): jnp.expm1 lowering inside Mosaic is not guaranteed on all
    # jax versions, so we use exp(min(x,0))-1; differs only by f32 rounding
    # for tiny negative inputs.
    return jnp.where(x > 0, x, jnp.exp(jnp.minimum(x, 0.0)) - 1.0)


def _lin(x, w, b):
    # x: f32 activations, w: bf16 weights, b: f32 bias (1, d_out).
    return jnp.dot(x.astype(jnp.bfloat16), w, preferred_element_type=jnp.float32) + b


# ----------------------------------------------------------------------------
# Fused kernel: whole TCNRMA forward in one grid=() pallas_call
# ----------------------------------------------------------------------------
def _fused_tcnrma_kernel(
    # activations
    obs_ref, priv_ref, hist_ref,
    # privileged encoder (3 Linear)
    pe_w0, pe_b0, pe_w1, pe_b1, pe_w2, pe_b2,
    # TCN conv stack (3 Conv1d; weights laid out (K, C_in, C_out))
    c1_w, c1_b, c2_w, c2_b, c3_w, c3_b,
    # adaptation head (2 Linear)
    ah_w0, ah_b0, ah_w1, ah_b1,
    # actor (first layer split obs/emb, then 3 Linear)
    a_w0_obs, a_w0_emb, a_b0, a_w1, a_b1, a_w2, a_b2, a_w3, a_b3,
    # critic (first layer split obs/priv; layers 1 and 2 live in HBM)
    cr_w0_obs, cr_w0_priv, cr_b0, cr_w1_hbm, cr_b1, cr_w2_hbm, cr_b2, cr_w3, cr_b3,
    # output slab
    out_ref,
    # scratch: VMEM landing buffers for the big critic weights + DMA sems
    cr_w1_vmem, cr_w2_vmem, dma_sem,
):
    # ---- start prefetch of the two large critic weights (overlaps compute) --
    cp1 = pltpu.make_async_copy(cr_w1_hbm, cr_w1_vmem, dma_sem.at[0])
    cp2 = pltpu.make_async_copy(cr_w2_hbm, cr_w2_vmem, dma_sem.at[1])
    cp1.start()
    cp2.start()

    obs = obs_ref[...]
    priv = priv_ref[...]

    # ---- privileged encoder -------------------------------------------------
    h = _elu(_lin(priv, pe_w0[...], pe_b0[...]))
    h = _elu(_lin(h, pe_w1[...], pe_b1[...]))
    priv_emb = _lin(h, pe_w2[...], pe_b2[...])          # (Bp, num_emb)

    # ---- adaptation module: Conv1d(k=3, s=2) x3 + ELU, in-kernel ------------
    # obs_history is channels-last (Bp, T, C); keep the time axis as a Python
    # list of (Bp, C) slices so the conv is K small matmuls per output step
    # (no gathers, no reshapes).
    T = hist_ref.shape[1]
    xs = [hist_ref[:, t, :] for t in range(T)]

    def conv_elu(seq, w_ref, b_ref, stride=2):
        K = w_ref.shape[0]
        b = b_ref[...]
        l_out = (len(seq) - K) // stride + 1
        outs = []
        for j in range(l_out):
            acc = b
            for k in range(K):
                acc = acc + jnp.dot(
                    seq[stride * j + k].astype(jnp.bfloat16), w_ref[k],
                    preferred_element_type=jnp.float32)
            outs.append(_elu(acc))
        return outs

    xs = conv_elu(xs, c1_w, c1_b)
    xs = conv_elu(xs, c2_w, c2_b)
    xs = conv_elu(xs, c3_w, c3_b)
    # transpose(-1,-2) + Flatten(start_dim=-2): channels-last, flatten L-major
    flat = xs[0] if len(xs) == 1 else jnp.concatenate(xs, axis=-1)
    h = _elu(_lin(flat, ah_w0[...], ah_b0[...]))
    priv_est = _lin(h, ah_w1[...], ah_b1[...])          # (Bp, num_emb)

    # ---- actor (cat(obs, priv_emb) fused as split first-layer matmuls) ------
    h = (jnp.dot(obs.astype(jnp.bfloat16), a_w0_obs[...],
                 preferred_element_type=jnp.float32)
         + jnp.dot(priv_emb.astype(jnp.bfloat16), a_w0_emb[...],
                   preferred_element_type=jnp.float32)
         + a_b0[...])
    h = _elu(h)
    h = _elu(_lin(h, a_w1[...], a_b1[...]))
    h = _elu(_lin(h, a_w2[...], a_b2[...]))
    action_mean = _lin(h, a_w3[...], a_b3[...])         # (Bp, num_act)

    # ---- critic (cat(obs, privileged) fused; wait on prefetched weights) ----
    h = (jnp.dot(obs.astype(jnp.bfloat16), cr_w0_obs[...],
                 preferred_element_type=jnp.float32)
         + jnp.dot(priv.astype(jnp.bfloat16), cr_w0_priv[...],
                   preferred_element_type=jnp.float32)
         + cr_b0[...])
    h = _elu(h)
    cp1.wait()
    h = _elu(_lin(h, cr_w1_vmem[...], cr_b1[...]))
    cp2.wait()
    h = _elu(_lin(h, cr_w2_vmem[...], cr_b2[...]))
    value = _lin(h, cr_w3[...], cr_b3[...])             # (Bp, 1)

    # ---- pack results into a single lane-dense output slab ------------------
    num_act = action_mean.shape[1]
    num_emb = priv_emb.shape[1]
    out_ref[...] = jnp.zeros(out_ref.shape, out_ref.dtype)
    out_ref[:, 0:num_act] = action_mean
    out_ref[:, num_act:num_act + 1] = value
    out_ref[:, num_act + 1:num_act + 1 + num_emb] = priv_emb
    out_ref[:, num_act + 1 + num_emb:num_act + 1 + 2 * num_emb] = priv_est


# ----------------------------------------------------------------------------
# Parameter initialization (PyTorch-like fan-in uniform; weights kept bf16)
# ----------------------------------------------------------------------------
def _init_linear(key, d_in, d_out):
    kw, kb = jax.random.split(key)
    s = 1.0 / jnp.sqrt(d_in)
    w = jax.random.uniform(kw, (d_in, d_out), jnp.float32, -s, s).astype(jnp.bfloat16)
    b = jax.random.uniform(kb, (1, d_out), jnp.float32, -s, s)
    return w, b


def _init_conv(key, c_in, c_out, k=3):
    kw, kb = jax.random.split(key)
    s = 1.0 / jnp.sqrt(c_in * k)
    # pre-transposed from PyTorch (C_out, C_in, K) to (K, C_in, C_out)
    w = jax.random.uniform(kw, (k, c_in, c_out), jnp.float32, -s, s).astype(jnp.bfloat16)
    b = jax.random.uniform(kb, (1, c_out), jnp.float32, -s, s)
    return w, b


def init_params(key, num_act, num_obs, num_obs_stacking, num_privileged_obs,
                num_critic_priv_obs=0, num_emb=64, num_value=1):
    # TODO(synk): the fused forward below assumes num_critic_priv_obs == 0
    # (no critic_priv input), matching est_value(obs, privileged).
    keys = iter(jax.random.split(key, 32))
    params = {}

    # critic: Linear(num_obs + num_priv [+cp], 1024) -> 512 -> 128 -> num_value
    w0, b0 = _init_linear(next(keys),
                          num_obs + num_privileged_obs + num_critic_priv_obs, 1024)
    params["critic0"] = (w0[:num_obs], w0[num_obs:], b0)   # split obs / priv blocks
    params["critic_rest"] = [
        _init_linear(next(keys), 1024, 512),
        _init_linear(next(keys), 512, 128),
        _init_linear(next(keys), 128, num_value),
    ]

    # actor: Linear(num_obs + num_emb, 512) -> 256 -> 128 -> num_act
    w0, b0 = _init_linear(next(keys), num_obs + num_emb, 512)
    params["actor0"] = (w0[:num_obs], w0[num_obs:], b0)
    params["actor_rest"] = [
        _init_linear(next(keys), 512, 256),
        _init_linear(next(keys), 256, 128),
        _init_linear(next(keys), 128, num_act),
    ]

    # privileged encoder: num_priv -> 128 -> 128 -> num_emb
    params["priv_enc"] = [
        _init_linear(next(keys), num_privileged_obs, 128),
        _init_linear(next(keys), 128, 128),
        _init_linear(next(keys), 128, num_emb),
    ]

    # TCN convs + adaptation head
    params["conv"] = [
        _init_conv(next(keys), num_obs, 64),
        _init_conv(next(keys), 64, 128),
        _init_conv(next(keys), 128, 256),
    ]
    linear_size = int((((num_obs_stacking - 3) // 2 - 2) // 2 - 2) // 2 + 1)
    params["adapt_head"] = [
        _init_linear(next(keys), linear_size * 256, 256),
        _init_linear(next(keys), 256, num_emb),
    ]
    params["logstd"] = jnp.full((1, num_act), -2.0, jnp.float32)
    return params


# ----------------------------------------------------------------------------
# Forward pass (act(..., return_emb=True) + est_value) — single pallas_call
# ----------------------------------------------------------------------------
def tcnrma_forward(params, obs, privileged, obs_history):
    B, _ = obs.shape
    num_emb = params["priv_enc"][2][0].shape[1]
    num_act = params["actor_rest"][-1][0].shape[1]

    # Pad rows to a multiple of 8 for clean sublane layout; sliced off below.
    Bp = ((B + 7) // 8) * 8
    pr = Bp - B
    obs_p = jnp.pad(obs, ((0, pr), (0, 0)))
    priv_p = jnp.pad(privileged, ((0, pr), (0, 0)))
    hist_p = jnp.pad(obs_history, ((0, pr), (0, 0), (0, 0)))

    used = num_act + 1 + 2 * num_emb
    out_cols = ((used + 127) // 128) * 128

    # Flatten params in kernel-argument order.
    flat = []
    for w, b in params["priv_enc"]:
        flat += [w, b]
    for w, b in params["conv"]:
        flat += [w, b]
    for w, b in params["adapt_head"]:
        flat += [w, b]
    flat += list(params["actor0"])
    for w, b in params["actor_rest"]:
        flat += [w, b]
    flat += list(params["critic0"])
    (c_w1, c_b1), (c_w2, c_b2), (c_w3, c_b3) = params["critic_rest"]
    flat += [c_w1, c_b1, c_w2, c_b2, c_w3, c_b3]

    vmem = pl.BlockSpec(memory_space=pltpu.MemorySpace.VMEM)
    hbm = pl.BlockSpec(memory_space=pl.ANY)
    # 3 activations + priv_enc(6) + conv(6) + adapt(4) + actor(3+6) = 28 VMEM refs,
    # then the critic group with its two big weights left in HBM for manual DMA.
    in_specs = [vmem] * 28 + [vmem, vmem, vmem, hbm, vmem, hbm, vmem, vmem, vmem]

    out = pl.pallas_call(
        _fused_tcnrma_kernel,
        out_shape=jax.ShapeDtypeStruct((Bp, out_cols), jnp.float32),
        in_specs=in_specs,
        out_specs=vmem,
        scratch_shapes=[
            pltpu.VMEM(c_w1.shape, jnp.bfloat16),
            pltpu.VMEM(c_w2.shape, jnp.bfloat16),
            pltpu.SemaphoreType.DMA((2,)),
        ],
    )(obs_p, priv_p, hist_p, *flat)

    action_mean = out[:B, :num_act]
    value = out[:B, num_act]
    priv_emb = out[:B, num_act + 1:num_act + 1 + num_emb]
    priv_est = out[:B, num_act + 1 + num_emb:used]
    # TODO(synk): torch.distributions.Normal has no Pallas equivalent; return
    # its defining (mean, std) tensors instead.
    action_std = jnp.broadcast_to(jnp.exp(params["logstd"]), action_mean.shape)
    return action_mean, action_std, value, priv_emb, priv_est


# ----------------------------------------------------------------------------
if __name__ == "__main__":
    num_act = 4
    num_obs = 16
    num_obs_stacking = 19   # conv chain 19 -> 9 -> 4 -> 1, linear_size = 1
    num_privileged_obs = 8
    num_emb = 64
    B = 2

    key = jax.random.PRNGKey(0)
    k_params, k_obs, k_priv, k_hist = jax.random.split(key, 4)

    params = init_params(k_params, num_act, num_obs, num_obs_stacking,
                         num_privileged_obs, num_critic_priv_obs=0,
                         num_emb=num_emb, num_value=1)

    obs = jax.random.normal(k_obs, (B, num_obs), jnp.float32)
    privileged = jax.random.normal(k_priv, (B, num_privileged_obs), jnp.float32)
    obs_history = jax.random.normal(k_hist, (B, num_obs_stacking, num_obs), jnp.float32)

    fwd = jax.jit(tcnrma_forward)
    outs = fwd(params, obs, privileged, obs_history)
    jax.block_until_ready(outs)

    action_mean, action_std, value, priv_emb, priv_est = outs
    assert action_mean.shape == (B, num_act)
    assert action_std.shape == (B, num_act)
    assert value.shape == (B,)
    assert priv_emb.shape == (B, num_emb)
    assert priv_est.shape == (B, num_emb)
    print("KERNEL_OK")
</pallas_src>

<mosaic_0001>
module attributes {stable_mosaic.version = 11 : i64} {
  func.func @_fused_tcnrma_kernel(%arg0: memref<8x16xf32, #tpu.memory_space<vmem>>, %arg1: memref<8x8xf32, #tpu.memory_space<vmem>>, %arg2: memref<8x19x16xf32, #tpu.memory_space<vmem>>, %arg3: memref<8x128xbf16, #tpu.memory_space<vmem>>, %arg4: memref<1x128xf32, #tpu.memory_space<vmem>>, %arg5: memref<128x128xbf16, #tpu.memory_space<vmem>>, %arg6: memref<1x128xf32, #tpu.memory_space<vmem>>, %arg7: memref<128x64xbf16, #tpu.memory_space<vmem>>, %arg8: memref<1x64xf32, #tpu.memory_space<vmem>>, %arg9: memref<3x16x64xbf16, #tpu.memory_space<vmem>>, %arg10: memref<1x64xf32, #tpu.memory_space<vmem>>, %arg11: memref<3x64x128xbf16, #tpu.memory_space<vmem>>, %arg12: memref<1x128xf32, #tpu.memory_space<vmem>>, %arg13: memref<3x128x256xbf16, #tpu.memory_space<vmem>>, %arg14: memref<1x256xf32, #tpu.memory_space<vmem>>, %arg15: memref<256x256xbf16, #tpu.memory_space<vmem>>, %arg16: memref<1x256xf32, #tpu.memory_space<vmem>>, %arg17: memref<256x64xbf16, #tpu.memory_space<vmem>>, %arg18: memref<1x64xf32, #tpu.memory_space<vmem>>, %arg19: memref<16x512xbf16, #tpu.memory_space<vmem>>, %arg20: memref<64x512xbf16, #tpu.memory_space<vmem>>, %arg21: memref<1x512xf32, #tpu.memory_space<vmem>>, %arg22: memref<512x256xbf16, #tpu.memory_space<vmem>>, %arg23: memref<1x256xf32, #tpu.memory_space<vmem>>, %arg24: memref<256x128xbf16, #tpu.memory_space<vmem>>, %arg25: memref<1x128xf32, #tpu.memory_space<vmem>>, %arg26: memref<128x4xbf16, #tpu.memory_space<vmem>>, %arg27: memref<1x4xf32, #tpu.memory_space<vmem>>, %arg28: memref<16x1024xbf16, #tpu.memory_space<vmem>>, %arg29: memref<8x1024xbf16, #tpu.memory_space<vmem>>, %arg30: memref<1x1024xf32, #tpu.memory_space<vmem>>, %arg31: memref<1024x512xbf16, #tpu.memory_space<any>>, %arg32: memref<1x512xf32, #tpu.memory_space<vmem>>, %arg33: memref<512x128xbf16, #tpu.memory_space<any>>, %arg34: memref<1x128xf32, #tpu.memory_space<vmem>>, %arg35: memref<128x1xbf16, #tpu.memory_space<vmem>>, %arg36: memref<1x1xf32, #tpu.memory_space<vmem>>, %arg37: memref<8x256xf32, #tpu.memory_space<vmem>>, %arg38: memref<1024x512xbf16, #tpu.memory_space<vmem>>, %arg39: memref<512x128xbf16, #tpu.memory_space<vmem>>, %arg40: memref<2x!tpu.dma_semaphore, #tpu.memory_space<semaphore_mem>>) attributes {dimension_semantics = [], scalar_prefetch = 0 : i64, scratch_operands = 3 : i64, tpu.core_type = #tpu.core_type<tc>} {
    %c0_i32 = arith.constant 0 : i32
    %0 = tpu.memref_slice %arg40[%c0_i32] : memref<2x!tpu.dma_semaphore, #tpu.memory_space<semaphore_mem>> -> memref<1x!tpu.dma_semaphore, #tpu.memory_space<semaphore_mem>>
    %1 = tpu.memref_squeeze %0 : memref<1x!tpu.dma_semaphore, #tpu.memory_space<semaphore_mem>> -> memref<!tpu.dma_semaphore, #tpu.memory_space<semaphore_mem>>
    tpu.enqueue_dma source(%arg31 : memref<1024x512xbf16, #tpu.memory_space<any>>) target(%arg38 : memref<1024x512xbf16, #tpu.memory_space<vmem>>) target_semaphore(%1 : memref<!tpu.dma_semaphore, #tpu.memory_space<semaphore_mem>>)
    %c1_i32 = arith.constant 1 : i32
    %2 = tpu.memref_slice %arg40[%c1_i32] : memref<2x!tpu.dma_semaphore, #tpu.memory_space<semaphore_mem>> -> memref<1x!tpu.dma_semaphore, #tpu.memory_space<semaphore_mem>>
    %3 = tpu.memref_squeeze %2 : memref<1x!tpu.dma_semaphore, #tpu.memory_space<semaphore_mem>> -> memref<!tpu.dma_semaphore, #tpu.memory_space<semaphore_mem>>
    tpu.enqueue_dma source(%arg33 : memref<512x128xbf16, #tpu.memory_space<any>>) target(%arg39 : memref<512x128xbf16, #tpu.memory_space<vmem>>) target_semaphore(%3 : memref<!tpu.dma_semaphore, #tpu.memory_space<semaphore_mem>>)
    %c0 = arith.constant 0 : index
    %c0_0 = arith.constant 0 : index
    %4 = vector.load %arg0[%c0, %c0_0] : memref<8x16xf32, #tpu.memory_space<vmem>>, vector<8x16xf32>
    %c0_1 = arith.constant 0 : index
    %c0_2 = arith.constant 0 : index
    %5 = vector.load %arg1[%c0_1, %c0_2] : memref<8x8xf32, #tpu.memory_space<vmem>>, vector<8x8xf32>
    %c0_3 = arith.constant 0 : index
    %c0_4 = arith.constant 0 : index
    %6 = vector.load %arg3[%c0_3, %c0_4] : memref<8x128xbf16, #tpu.memory_space<vmem>>, vector<8x128xbf16>
    %c0_5 = arith.constant 0 : index
    %c0_6 = arith.constant 0 : index
    %7 = vector.load %arg4[%c0_5, %c0_6] : memref<1x128xf32, #tpu.memory_space<vmem>>, vector<1x128xf32>
    %8 = arith.truncf %5 : vector<8x8xf32> to vector<8x8xbf16>
    %cst = arith.constant dense<0.000000e+00> : vector<8x128xf32>
    %9 = tpu.matmul %8, %6, %cst {dimension_numbers = #tpu.dot_dimension_numbers<[1], [0], [0], [1], [0, 0, 1, 1], [], []>} : vector<8x8xbf16>, vector<8x128xbf16>, vector<8x128xf32> -> vector<8x128xf32>
    %10 = vector.broadcast %7 : vector<1x128xf32> to vector<8x128xf32>
    %11 = arith.addf %9, %10 : vector<8x128xf32>
    %cst_7 = arith.constant 0.000000e+00 : f32
    %12 = vector.broadcast %cst_7 : f32 to vector<8x128xf32>
    %13 = arith.cmpf ogt, %11, %12 : vector<8x128xf32>
    %cst_8 = arith.constant 0.000000e+00 : f32
    %14 = vector.broadcast %cst_8 : f32 to vector<8x128xf32>
    %15 = arith.minimumf %11, %14 : vector<8x128xf32>
    %16 = math.exp %15 : vector<8x128xf32>
    %cst_9 = arith.constant 1.000000e+00 : f32
    %17 = vector.broadcast %cst_9 : f32 to vector<8x128xf32>
    %18 = arith.subf %16, %17 : vector<8x128xf32>
    %19 = arith.select %13, %11, %18 : vector<8x128xi1>, vector<8x128xf32>
    %c0_10 = arith.constant 0 : index
    %c0_11 = arith.constant 0 : index
    %20 = vector.load %arg5[%c0_10, %c0_11] : memref<128x128xbf16, #tpu.memory_space<vmem>>, vector<128x128xbf16>
    %c0_12 = arith.constant 0 : index
    %c0_13 = arith.constant 0 : index
    %21 = vector.load %arg6[%c0_12, %c0_13] : memref<1x128xf32, #tpu.memory_space<vmem>>, vector<1x128xf32>
    %22 = arith.truncf %19 : vector<8x128xf32> to vector<8x128xbf16>
    %cst_14 = arith.constant dense<0.000000e+00> : vector<8x128xf32>
    %23 = tpu.matmul %22, %20, %cst_14 {dimension_numbers = #tpu.dot_dimension_numbers<[1], [0], [0], [1], [0, 0, 1, 1], [], []>} : vector<8x128xbf16>, vector<128x128xbf16>, vector<8x128xf32> -> vector<8x128xf32>
    %24 = vector.broadcast %21 : vector<1x128xf32> to vector<8x128xf32>
    %25 = arith.addf %23, %24 : vector<8x128xf32>
    %cst_15 = arith.constant 0.000000e+00 : f32
    %26 = vector.broadcast %cst_15 : f32 to vector<8x128xf32>
    %27 = arith.cmpf ogt, %25, %26 : vector<8x128xf32>
    %cst_16 = arith.constant 0.000000e+00 : f32
    %28 = vector.broadcast %cst_16 : f32 to vector<8x128xf32>
    %29 = arith.minimumf %25, %28 : vector<8x128xf32>
    %30 = math.exp %29 : vector<8x128xf32>
    %cst_17 = arith.constant 1.000000e+00 : f32
    %31 = vector.broadcast %cst_17 : f32 to vector<8x128xf32>
    %32 = arith.subf %30, %31 : vector<8x128xf32>
    %33 = arith.select %27, %25, %32 : vector<8x128xi1>, vector<8x128xf32>
    %c0_18 = arith.constant 0 : index
    %c0_19 = arith.constant 0 : index
    %34 = vector.load %arg7[%c0_18, %c0_19] : memref<128x64xbf16, #tpu.memory_space<vmem>>, vector<128x64xbf16>
    %c0_20 = arith.constant 0 : index
    %c0_21 = arith.constant 0 : index
    %35 = vector.load %arg8[%c0_20, %c0_21] : memref<1x64xf32, #tpu.memory_space<vmem>>, vector<1x64xf32>
    %36 = arith.truncf %33 : vector<8x128xf32> to vector<8x128xbf16>
    %cst_22 = arith.constant dense<0.000000e+00> : vector<8x64xf32>
    %37 = tpu.matmul %36, %34, %cst_22 {dimension_numbers = #tpu.dot_dimension_numbers<[1], [0], [0], [1], [0, 0, 1, 1], [], []>} : vector<8x128xbf16>, vector<128x64xbf16>, vector<8x64xf32> -> vector<8x64xf32>
    %38 = vector.broadcast %35 : vector<1x64xf32> to vector<8x64xf32>
    %39 = arith.addf %37, %38 : vector<8x64xf32>
    %c0_23 = arith.constant 0 : index
    %c0_24 = arith.constant 0 : index
    %c0_25 = arith.constant 0 : index
    %40 = vector.load %arg2[%c0_23, %c0_24, %c0_25] : memref<8x19x16xf32, #tpu.memory_space<vmem>>, vector<8x1x16xf32>
    %41 = vector.shape_cast %40 : vector<8x1x16xf32> to vector<8x16xf32>
    %c0_26 = arith.constant 0 : index
    %c1 = arith.constant 1 : index
    %c0_27 = arith.constant 0 : index
    %42 = vector.load %arg2[%c0_26, %c1, %c0_27] : memref<8x19x16xf32, #tpu.memory_space<vmem>>, vector<8x1x16xf32>
    %43 = vector.shape_cast %42 : vector<8x1x16xf32> to vector<8x16xf32>
    %c0_28 = arith.constant 0 : index
    %c2 = arith.constant 2 : index
    %c0_29 = arith.constant 0 : index
    %44 = vector.load %arg2[%c0_28, %c2, %c0_29] : memref<8x19x16xf32, #tpu.memory_space<vmem>>, vector<8x1x16xf32>
    %45 = vector.shape_cast %44 : vector<8x1x16xf32> to vector<8x16xf32>
    %c0_30 = arith.constant 0 : index
    %c3 = arith.constant 3 : index
    %c0_31 = arith.constant 0 : index
    %46 = vector.load %arg2[%c0_30, %c3, %c0_31] : memref<8x19x16xf32, #tpu.memory_space<vmem>>, vector<8x1x16xf32>
    %47 = vector.shape_cast %46 : vector<8x1x16xf32> to vector<8x16xf32>
    %c0_32 = arith.constant 0 : index
    %c4 = arith.constant 4 : index
    %c0_33 = arith.constant 0 : index
    %48 = vector.load %arg2[%c0_32, %c4, %c0_33] : memref<8x19x16xf32, #tpu.memory_space<vmem>>, vector<8x1x16xf32>
    %49 = vector.shape_cast %48 : vector<8x1x16xf32> to vector<8x16xf32>
    %c0_34 = arith.constant 0 : index
    %c5 = arith.constant 5 : index
    %c0_35 = arith.constant 0 : index
    %50 = vector.load %arg2[%c0_34, %c5, %c0_35] : memref<8x19x16xf32, #tpu.memory_space<vmem>>, vector<8x1x16xf32>
    %51 = vector.shape_cast %50 : vector<8x1x16xf32> to vector<8x16xf32>
    %c0_36 = arith.constant 0 : index
    %c6 = arith.constant 6 : index
    %c0_37 = arith.constant 0 : index
    %52 = vector.load %arg2[%c0_36, %c6, %c0_37] : memref<8x19x16xf32, #tpu.memory_space<vmem>>, vector<8x1x16xf32>
    %53 = vector.shape_cast %52 : vector<8x1x16xf32> to vector<8x16xf32>
    %c0_38 = arith.constant 0 : index
    %c7 = arith.constant 7 : index
    %c0_39 = arith.constant 0 : index
    %54 = vector.load %arg2[%c0_38, %c7, %c0_39] : memref<8x19x16xf32, #tpu.memory_space<vmem>>, vector<8x1x16xf32>
    %55 = vector.shape_cast %54 : vector<8x1x16xf32> to vector<8x16xf32>
    %c0_40 = arith.constant 0 : index
    %c8 = arith.constant 8 : index
    %c0_41 = arith.constant 0 : index
    %56 = vector.load %arg2[%c0_40, %c8, %c0_41] : memref<8x19x16xf32, #tpu.memory_space<vmem>>, vector<8x1x16xf32>
    %57 = vector.shape_cast %56 : vector<8x1x16xf32> to vector<8x16xf32>
    %c0_42 = arith.constant 0 : index
    %c9 = arith.constant 9 : index
    %c0_43 = arith.constant 0 : index
    %58 = vector.load %arg2[%c0_42, %c9, %c0_43] : memref<8x19x16xf32, #tpu.memory_space<vmem>>, vector<8x1x16xf32>
    %59 = vector.shape_cast %58 : vector<8x1x16xf32> to vector<8x16xf32>
    %c0_44 = arith.constant 0 : index
    %c10 = arith.constant 10 : index
    %c0_45 = arith.constant 0 : index
    %60 = vector.load %arg2[%c0_44, %c10, %c0_45] : memref<8x19x16xf32, #tpu.memory_space<vmem>>, vector<8x1x16xf32>
    %61 = vector.shape_cast %60 : vector<8x1x16xf32> to vector<8x16xf32>
    %c0_46 = arith.constant 0 : index
    %c11 = arith.constant 11 : index
    %c0_47 = arith.constant 0 : index
    %62 = vector.load %arg2[%c0_46, %c11, %c0_47] : memref<8x19x16xf32, #tpu.memory_space<vmem>>, vector<8x1x16xf32>
    %63 = vector.shape_cast %62 : vector<8x1x16xf32> to vector<8x16xf32>
    %c0_48 = arith.constant 0 : index
    %c12 = arith.constant 12 : index
    %c0_49 = arith.constant 0 : index
    %64 = vector.load %arg2[%c0_48, %c12, %c0_49] : memref<8x19x16xf32, #tpu.memory_space<vmem>>, vector<8x1x16xf32>
    %65 = vector.shape_cast %64 : vector<8x1x16xf32> to vector<8x16xf32>
    %c0_50 = arith.constant 0 : index
    %c13 = arith.constant 13 : index
    %c0_51 = arith.constant 0 : index
    %66 = vector.load %arg2[%c0_50, %c13, %c0_51] : memref<8x19x16xf32, #tpu.memory_space<vmem>>, vector<8x1x16xf32>
    %67 = vector.shape_cast %66 : vector<8x1x16xf32> to vector<8x16xf32>
    %c0_52 = arith.constant 0 : index
    %c14 = arith.constant 14 : index
    %c0_53 = arith.constant 0 : index
    %68 = vector.load %arg2[%c0_52, %c14, %c0_53] : memref<8x19x16xf32, #tpu.memory_space<vmem>>, vector<8x1x16xf32>
    %69 = vector.shape_cast %68 : vector<8x1x16xf32> to vector<8x16xf32>
    %c0_54 = arith.constant 0 : index
    %c0_55 = arith.constant 0 : index
    %70 = vector.load %arg10[%c0_54, %c0_55] : memref<1x64xf32, #tpu.memory_space<vmem>>, vector<1x64xf32>
    %71 = arith.truncf %41 : vector<8x16xf32> to vector<8x16xbf16>
    %c0_56 = arith.constant 0 : index
    %c0_57 = arith.constant 0 : index
    %c0_58 = arith.constant 0 : index
    %72 = vector.load %arg9[%c0_56, %c0_57, %c0_58] : memref<3x16x64xbf16, #tpu.memory_space<vmem>>, vector<1x16x64xbf16>
    %73 = vector.shape_cast %72 : vector<1x16x64xbf16> to vector<16x64xbf16>
    %cst_59 = arith.constant dense<0.000000e+00> : vector<8x64xf32>
    %74 = tpu.matmul %71, %73, %cst_59 {dimension_numbers = #tpu.dot_dimension_numbers<[1], [0], [0], [1], [0, 0, 1, 1], [], []>} : vector<8x16xbf16>, vector<16x64xbf16>, vector<8x64xf32> -> vector<8x64xf32>
    %75 = vector.broadcast %70 : vector<1x64xf32> to vector<8x64xf32>
    %76 = arith.addf %75, %74 : vector<8x64xf32>
    %77 = arith.truncf %43 : vector<8x16xf32> to vector<8x16xbf16>
    %c1_60 = arith.constant 1 : index
    %c0_61 = arith.constant 0 : index
    %c0_62 = arith.constant 0 : index
    %78 = vector.load %arg9[%c1_60, %c0_61, %c0_62] : memref<3x16x64xbf16, #tpu.memory_space<vmem>>, vector<1x16x64xbf16>
    %79 = vector.shape_cast %78 : vector<1x16x64xbf16> to vector<16x64xbf16>
    %cst_63 = arith.constant dense<0.000000e+00> : vector<8x64xf32>
    %80 = tpu.matmul %77, %79, %cst_63 {dimension_numbers = #tpu.dot_dimension_numbers<[1], [0], [0], [1], [0, 0, 1, 1], [], []>} : vector<8x16xbf16>, vector<16x64xbf16>, vector<8x64xf32> -> vector<8x64xf32>
    %81 = arith.addf %76, %80 : vector<8x64xf32>
    %82 = arith.truncf %45 : vector<8x16xf32> to vector<8x16xbf16>
    %c2_64 = arith.constant 2 : index
    %c0_65 = arith.constant 0 : index
    %c0_66 = arith.constant 0 : index
    %83 = vector.load %arg9[%c2_64, %c0_65, %c0_66] : memref<3x16x64xbf16, #tpu.memory_space<vmem>>, vector<1x16x64xbf16>
    %84 = vector.shape_cast %83 : vector<1x16x64xbf16> to vector<16x64xbf16>
    %cst_67 = arith.constant dense<0.000000e+00> : vector<8x64xf32>
    %85 = tpu.matmul %82, %84, %cst_67 {dimension_numbers = #tpu.dot_dimension_numbers<[1], [0], [0], [1], [0, 0, 1, 1], [], []>} : vector<8x16xbf16>, vector<16x64xbf16>, vector<8x64xf32> -> vector<8x64xf32>
    %86 = arith.addf %81, %85 : vector<8x64xf32>
    %cst_68 = arith.constant 0.000000e+00 : f32
    %87 = vector.broadcast %cst_68 : f32 to vector<8x64xf32>
    %88 = arith.cmpf ogt, %86, %87 : vector<8x64xf32>
    %cst_69 = arith.constant 0.000000e+00 : f32
    %89 = vector.broadcast %cst_69 : f32 to vector<8x64xf32>
    %90 = arith.minimumf %86, %89 : vector<8x64xf32>
    %91 = math.exp %90 : vector<8x64xf32>
    %cst_70 = arith.constant 1.000000e+00 : f32
    %92 = vector.broadcast %cst_70 : f32 to vector<8x64xf32>
    %93 = arith.subf %91, %92 : vector<8x64xf32>
    %94 = arith.select %88, %86, %93 : vector<8x64xi1>, vector<8x64xf32>
    %95 = arith.truncf %45 : vector<8x16xf32> to vector<8x16xbf16>
    %c0_71 = arith.constant 0 : index
    %c0_72 = arith.constant 0 : index
    %c0_73 = arith.constant 0 : index
    %96 = vector.load %arg9[%c0_71, %c0_72, %c0_73] : memref<3x16x64xbf16, #tpu.memory_space<vmem>>, vector<1x16x64xbf16>
    %97 = vector.shape_cast %96 : vector<1x16x64xbf16> to vector<16x64xbf16>
    %cst_74 = arith.constant dense<0.000000e+00> : vector<8x64xf32>
    %98 = tpu.matmul %95, %97, %cst_74 {dimension_numbers = #tpu.dot_dimension_numbers<[1], [0], [0], [1], [0, 0, 1, 1], [], []>} : vector<8x16xbf16>, vector<16x64xbf16>, vector<8x64xf32> -> vector<8x64xf32>
    %99 = vector.broadcast %70 : vector<1x64xf32> to vector<8x64xf32>
    %100 = arith.addf %99, %98 : vector<8x64xf32>
    %101 = arith.truncf %47 : vector<8x16xf32> to vector<8x16xbf16>
    %c1_75 = arith.constant 1 : index
    %c0_76 = arith.constant 0 : index
    %c0_77 = arith.constant 0 : index
    %102 = vector.load %arg9[%c1_75, %c0_76, %c0_77] : memref<3x16x64xbf16, #tpu.memory_space<vmem>>, vector<1x16x64xbf16>
    %103 = vector.shape_cast %102 : vector<1x16x64xbf16> to vector<16x64xbf16>
    %cst_78 = arith.constant dense<0.000000e+00> : vector<8x64xf32>
    %104 = tpu.matmul %101, %103, %cst_78 {dimension_numbers = #tpu.dot_dimension_numbers<[1], [0], [0], [1], [0, 0, 1, 1], [], []>} : vector<8x16xbf16>, vector<16x64xbf16>, vector<8x64xf32> -> vector<8x64xf32>
    %105 = arith.addf %100, %104 : vector<8x64xf32>
    %106 = arith.truncf %49 : vector<8x16xf32> to vector<8x16xbf16>
    %c2_79 = arith.constant 2 : index
    %c0_80 = arith.constant 0 : index
    %c0_81 = arith.constant 0 : index
    %107 = vector.load %arg9[%c2_79, %c0_80, %c0_81] : memref<3x16x64xbf16, #tpu.memory_space<vmem>>, vector<1x16x64xbf16>
    %108 = vector.shape_cast %107 : vector<1x16x64xbf16> to vector<16x64xbf16>
    %cst_82 = arith.constant dense<0.000000e+00> : vector<8x64xf32>
    %109 = tpu.matmul %106, %108, %cst_82 {dimension_numbers = #tpu.dot_dimension_numbers<[1], [0], [0], [1], [0, 0, 1, 1], [], []>} : vector<8x16xbf16>, vector<16x64xbf16>, vector<8x64xf32> -> vector<8x64xf32>
    %110 = arith.addf %105, %109 : vector<8x64xf32>
    %cst_83 = arith.constant 0.000000e+00 : f32
    %111 = vector.broadcast %cst_83 : f32 to vector<8x64xf32>
    %112 = arith.cmpf ogt, %110, %111 : vector<8x64xf32>
    %cst_84 = arith.constant 0.000000e+00 : f32
    %113 = vector.broadcast %cst_84 : f32 to vector<8x64xf32>
    %114 = arith.minimumf %110, %113 : vector<8x64xf32>
    %115 = math.exp %114 : vector<8x64xf32>
    %cst_85 = arith.constant 1.000000e+00 : f32
    %116 = vector.broadcast %cst_85 : f32 to vector<8x64xf32>
    %117 = arith.subf %115, %116 : vector<8x64xf32>
    %118 = arith.select %112, %110, %117 : vector<8x64xi1>, vector<8x64xf32>
    %119 = arith.truncf %49 : vector<8x16xf32> to vector<8x16xbf16>
    %c0_86 = arith.constant 0 : index
    %c0_87 = arith.constant 0 : index
    %c0_88 = arith.constant 0 : index
    %120 = vector.load %arg9[%c0_86, %c0_87, %c0_88] : memref<3x16x64xbf16, #tpu.memory_space<vmem>>, vector<1x16x64xbf16>
    %121 = vector.shape_cast %120 : vector<1x16x64xbf16> to vector<16x64xbf16>
    %cst_89 = arith.constant dense<0.000000e+00> : vector<8x64xf32>
    %122 = tpu.matmul %119, %121, %cst_89 {dimension_numbers = #tpu.dot_dimension_numbers<[1], [0], [0], [1], [0, 0, 1, 1], [], []>} : vector<8x16xbf16>, vector<16x64xbf16>, vector<8x64xf32> -> vector<8x64xf32>
    %123 = vector.broadcast %70 : vector<1x64xf32> to vector<8x64xf32>
    %124 = arith.addf %123, %122 : vector<8x64xf32>
    %125 = arith.truncf %51 : vector<8x16xf32> to vector<8x16xbf16>
    %c1_90 = arith.constant 1 : index
    %c0_91 = arith.constant 0 : index
    %c0_92 = arith.constant 0 : index
    %126 = vector.load %arg9[%c1_90, %c0_91, %c0_92] : memref<3x16x64xbf16, #tpu.memory_space<vmem>>, vector<1x16x64xbf16>
    %127 = vector.shape_cast %126 : vector<1x16x64xbf16> to vector<16x64xbf16>
    %cst_93 = arith.constant dense<0.000000e+00> : vector<8x64xf32>
    %128 = tpu.matmul %125, %127, %cst_93 {dimension_numbers = #tpu.dot_dimension_numbers<[1], [0], [0], [1], [0, 0, 1, 1], [], []>} : vector<8x16xbf16>, vector<16x64xbf16>, vector<8x64xf32> -> vector<8x64xf32>
    %129 = arith.addf %124, %128 : vector<8x64xf32>
    %130 = arith.truncf %53 : vector<8x16xf32> to vector<8x16xbf16>
    %c2_94 = arith.constant 2 : index
    %c0_95 = arith.constant 0 : index
    %c0_96 = arith.constant 0 : index
    %131 = vector.load %arg9[%c2_94, %c0_95, %c0_96] : memref<3x16x64xbf16, #tpu.memory_space<vmem>>, vector<1x16x64xbf16>
    %132 = vector.shape_cast %131 : vector<1x16x64xbf16> to vector<16x64xbf16>
    %cst_97 = arith.constant dense<0.000000e+00> : vector<8x64xf32>
    %133 = tpu.matmul %130, %132, %cst_97 {dimension_numbers = #tpu.dot_dimension_numbers<[1], [0], [0], [1], [0, 0, 1, 1], [], []>} : vector<8x16xbf16>, vector<16x64xbf16>, vector<8x64xf32> -> vector<8x64xf32>
    %134 = arith.addf %129, %133 : vector<8x64xf32>
    %cst_98 = arith.constant 0.000000e+00 : f32
    %135 = vector.broadcast %cst_98 : f32 to vector<8x64xf32>
    %136 = arith.cmpf ogt, %134, %135 : vector<8x64xf32>
    %cst_99 = arith.constant 0.000000e+00 : f32
    %137 = vector.broadcast %cst_99 : f32 to vector<8x64xf32>
    %138 = arith.minimumf %134, %137 : vector<8x64xf32>
    %139 = math.exp %138 : vector<8x64xf32>
    %cst_100 = arith.constant 1.000000e+00 : f32
    %140 = vector.broadcast %cst_100 : f32 to vector<8x64xf32>
    %141 = arith.subf %139, %140 : vector<8x64xf32>
    %142 = arith.select %136, %134, %141 : vector<8x64xi1>, vector<8x64xf32>
    %143 = arith.truncf %53 : vector<8x16xf32> to vector<8x16xbf16>
    %c0_101 = arith.constant 0 : index
    %c0_102 = arith.constant 0 : index
    %c0_103 = arith.constant 0 : index
    %144 = vector.load %arg9[%c0_101, %c0_102, %c0_103] : memref<3x16x64xbf16, #tpu.memory_space<vmem>>, vector<1x16x64xbf16>
    %145 = vector.shape_cast %144 : vector<1x16x64xbf16> to vector<16x64xbf16>
    %cst_104 = arith.constant dense<0.000000e+00> : vector<8x64xf32>
    %146 = tpu.matmul %143, %145, %cst_104 {dimension_numbers = #tpu.dot_dimension_numbers<[1], [0], [0], [1], [0, 0, 1, 1], [], []>} : vector<8x16xbf16>, vector<16x64xbf16>, vector<8x64xf32> -> vector<8x64xf32>
    %147 = vector.broadcast %70 : vector<1x64xf32> to vector<8x64xf32>
    %148 = arith.addf %147, %146 : vector<8x64xf32>
    %149 = arith.truncf %55 : vector<8x16xf32> to vector<8x16xbf16>
    %c1_105 = arith.constant 1 : index
    %c0_106 = arith.constant 0 : index
    %c0_107 = arith.constant 0 : index
    %150 = vector.load %arg9[%c1_105, %c0_106, %c0_107] : memref<3x16x64xbf16, #tpu.memory_space<vmem>>, vector<1x16x64xbf16>
    %151 = vector.shape_cast %150 : vector<1x16x64xbf16> to vector<16x64xbf16>
    %cst_108 = arith.constant dense<0.000000e+00> : vector<8x64xf32>
    %152 = tpu.matmul %149, %151, %cst_108 {dimension_numbers = #tpu.dot_dimension_numbers<[1], [0], [0], [1], [0, 0, 1, 1], [], []>} : vector<8x16xbf16>, vector<16x64xbf16>, vector<8x64xf32> -> vector<8x64xf32>
    %153 = arith.addf %148, %152 : vector<8x64xf32>
    %154 = arith.truncf %57 : vector<8x16xf32> to vector<8x16xbf16>
    %c2_109 = arith.constant 2 : index
    %c0_110 = arith.constant 0 : index
    %c0_111 = arith.constant 0 : index
    %155 = vector.load %arg9[%c2_109, %c0_110, %c0_111] : memref<3x16x64xbf16, #tpu.memory_space<vmem>>, vector<1x16x64xbf16>
    %156 = vector.shape_cast %155 : vector<1x16x64xbf16> to vector<16x64xbf16>
    %cst_112 = arith.constant dense<0.000000e+00> : vector<8x64xf32>
    %157 = tpu.matmul %154, %156, %cst_112 {dimension_numbers = #tpu.dot_dimension_numbers<[1], [0], [0], [1], [0, 0, 1, 1], [], []>} : vector<8x16xbf16>, vector<16x64xbf16>, vector<8x64xf32> -> vector<8x64xf32>
    %158 = arith.addf %153, %157 : vector<8x64xf32>
    %cst_113 = arith.constant 0.000000e+00 : f32
    %159 = vector.broadcast %cst_113 : f32 to vector<8x64xf32>
    %160 = arith.cmpf ogt, %158, %159 : vector<8x64xf32>
    %cst_114 = arith.constant 0.000000e+00 : f32
    %161 = vector.broadcast %cst_114 : f32 to vector<8x64xf32>
    %162 = arith.minimumf %158, %161 : vector<8x64xf32>
    %163 = math.exp %162 : vector<8x64xf32>
    %cst_115 = arith.constant 1.000000e+00 : f32
    %164 = vector.broadcast %cst_115 : f32 to vector<8x64xf32>
    %165 = arith.subf %163, %164 : vector<8x64xf32>
    %166 = arith.select %160, %158, %165 : vector<8x64xi1>, vector<8x64xf32>
    %167 = arith.truncf %57 : vector<8x16xf32> to vector<8x16xbf16>
    %c0_116 = arith.constant 0 : index
    %c0_117 = arith.constant 0 : index
    %c0_118 = arith.constant 0 : index
    %168 = vector.load %arg9[%c0_116, %c0_117, %c0_118] : memref<3x16x64xbf16, #tpu.memory_space<vmem>>, vector<1x16x64xbf16>
    %169 = vector.shape_cast %168 : vector<1x16x64xbf16> to vector<16x64xbf16>
    %cst_119 = arith.constant dense<0.000000e+00> : vector<8x64xf32>
    %170 = tpu.matmul %167, %169, %cst_119 {dimension_numbers = #tpu.dot_dimension_numbers<[1], [0], [0], [1], [0, 0, 1, 1], [], []>} : vector<8x16xbf16>, vector<16x64xbf16>, vector<8x64xf32> -> vector<8x64xf32>
    %171 = vector.broadcast %70 : vector<1x64xf32> to vector<8x64xf32>
    %172 = arith.addf %171, %170 : vector<8x64xf32>
    %173 = arith.truncf %59 : vector<8x16xf32> to vector<8x16xbf16>
    %c1_120 = arith.constant 1 : index
    %c0_121 = arith.constant 0 : index
    %c0_122 = arith.constant 0 : index
    %174 = vector.load %arg9[%c1_120, %c0_121, %c0_122] : memref<3x16x64xbf16, #tpu.memory_space<vmem>>, vector<1x16x64xbf16>
    %175 = vector.shape_cast %174 : vector<1x16x64xbf16> to vector<16x64xbf16>
    %cst_123 = arith.constant dense<0.000000e+00> : vector<8x64xf32>
    %176 = tpu.matmul %173, %175, %cst_123 {dimension_numbers = #tpu.dot_dimension_numbers<[1], [0], [0], [1], [0, 0, 1, 1], [], []>} : vector<8x16xbf16>, vector<16x64xbf16>, vector<8x64xf32> -> vector<8x64xf32>
    %177 = arith.addf %172, %176 : vector<8x64xf32>
    %178 = arith.truncf %61 : vector<8x16xf32> to vector<8x16xbf16>
    %c2_124 = arith.constant 2 : index
    %c0_125 = arith.constant 0 : index
    %c0_126 = arith.constant 0 : index
    %179 = vector.load %arg9[%c2_124, %c0_125, %c0_126] : memref<3x16x64xbf16, #tpu.memory_space<vmem>>, vector<1x16x64xbf16>
    %180 = vector.shape_cast %179 : vector<1x16x64xbf16> to vector<16x64xbf16>
    %cst_127 = arith.constant dense<0.000000e+00> : vector<8x64xf32>
    %181 = tpu.matmul %178, %180, %cst_127 {dimension_numbers = #tpu.dot_dimension_numbers<[1], [0], [0], [1], [0, 0, 1, 1], [], []>} : vector<8x16xbf16>, vector<16x64xbf16>, vector<8x64xf32> -> vector<8x64xf32>
    %182 = arith.addf %177, %181 : vector<8x64xf32>
    %cst_128 = arith.constant 0.000000e+00 : f32
    %183 = vector.broadcast %cst_128 : f32 to vector<8x64xf32>
    %184 = arith.cmpf ogt, %182, %183 : vector<8x64xf32>
    %cst_129 = arith.constant 0.000000e+00 : f32
    %185 = vector.broadcast %cst_129 : f32 to vector<8x64xf32>
    %186 = arith.minimumf %182, %185 : vector<8x64xf32>
    %187 = math.exp %186 : vector<8x64xf32>
    %cst_130 = arith.constant 1.000000e+00 : f32
    %188 = vector.broadcast %cst_130 : f32 to vector<8x64xf32>
    %189 = arith.subf %187, %188 : vector<8x64xf32>
    %190 = arith.select %184, %182, %189 : vector<8x64xi1>, vector<8x64xf32>
    %191 = arith.truncf %61 : vector<8x16xf32> to vector<8x16xbf16>
    %c0_131 = arith.constant 0 : index
    %c0_132 = arith.constant 0 : index
    %c0_133 = arith.constant 0 : index
    %192 = vector.load %arg9[%c0_131, %c0_132, %c0_133] : memref<3x16x64xbf16, #tpu.memory_space<vmem>>, vector<1x16x64xbf16>
    %193 = vector.shape_cast %192 : vector<1x16x64xbf16> to vector<16x64xbf16>
    %cst_134 = arith.constant dense<0.000000e+00> : vector<8x64xf32>
    %194 = tpu.matmul %191, %193, %cst_134 {dimension_numbers = #tpu.dot_dimension_numbers<[1], [0], [0], [1], [0, 0, 1, 1], [], []>} : vector<8x16xbf16>, vector<16x64xbf16>, vector<8x64xf32> -> vector<8x64xf32>
    %195 = vector.broadcast %70 : vector<1x64xf32> to vector<8x64xf32>
    %196 = arith.addf %195, %194 : vector<8x64xf32>
    %197 = arith.truncf %63 : vector<8x16xf32> to vector<8x16xbf16>
    %c1_135 = arith.constant 1 : index
    %c0_136 = arith.constant 0 : index
    %c0_137 = arith.constant 0 : index
    %198 = vector.load %arg9[%c1_135, %c0_136, %c0_137] : memref<3x16x64xbf16, #tpu.memory_space<vmem>>, vector<1x16x64xbf16>
    %199 = vector.shape_cast %198 : vector<1x16x64xbf16> to vector<16x64xbf16>
    %cst_138 = arith.constant dense<0.000000e+00> : vector<8x64xf32>
    %200 = tpu.matmul %197, %199, %cst_138 {dimension_numbers = #tpu.dot_dimension_numbers<[1], [0], [0], [1], [0, 0, 1, 1], [], []>} : vector<8x16xbf16>, vector<16x64xbf16>, vector<8x64xf32> -> vector<8x64xf32>
    %201 = arith.addf %196, %200 : vector<8x64xf32>
    %202 = arith.truncf %65 : vector<8x16xf32> to vector<8x16xbf16>
    %c2_139 = arith.constant 2 : index
    %c0_140 = arith.constant 0 : index
    %c0_141 = arith.constant 0 : index
    %203 = vector.load %arg9[%c2_139, %c0_140, %c0_141] : memref<3x16x64xbf16, #tpu.memory_space<vmem>>, vector<1x16x64xbf16>
    %204 = vector.shape_cast %203 : vector<1x16x64xbf16> to vector<16x64xbf16>
    %cst_142 = arith.constant dense<0.000000e+00> : vector<8x64xf32>
    %205 = tpu.matmul %202, %204, %cst_142 {dimension_numbers = #tpu.dot_dimension_numbers<[1], [0], [0], [1], [0, 0, 1, 1], [], []>} : vector<8x16xbf16>, vector<16x64xbf16>, vector<8x64xf32> -> vector<8x64xf32>
    %206 = arith.addf %201, %205 : vector<8x64xf32>
    %cst_143 = arith.constant 0.000000e+00 : f32
    %207 = vector.broadcast %cst_143 : f32 to vector<8x64xf32>
    %208 = arith.cmpf ogt, %206, %207 : vector<8x64xf32>
    %cst_144 = arith.constant 0.000000e+00 : f32
    %209 = vector.broadcast %cst_144 : f32 to vector<8x64xf32>
    %210 = arith.minimumf %206, %209 : vector<8x64xf32>
    %211 = math.exp %210 : vector<8x64xf32>
    %cst_145 = arith.constant 1.000000e+00 : f32
    %212 = vector.broadcast %cst_145 : f32 to vector<8x64xf32>
    %213 = arith.subf %211, %212 : vector<8x64xf32>
    %214 = arith.select %208, %206, %213 : vector<8x64xi1>, vector<8x64xf32>
    %215 = arith.truncf %65 : vector<8x16xf32> to vector<8x16xbf16>
    %c0_146 = arith.constant 0 : index
    %c0_147 = arith.constant 0 : index
    %c0_148 = arith.constant 0 : index
    %216 = vector.load %arg9[%c0_146, %c0_147, %c0_148] : memref<3x16x64xbf16, #tpu.memory_space<vmem>>, vector<1x16x64xbf16>
    %217 = vector.shape_cast %216 : vector<1x16x64xbf16> to vector<16x64xbf16>
    %cst_149 = arith.constant dense<0.000000e+00> : vector<8x64xf32>
    %218 = tpu.matmul %215, %217, %cst_149 {dimension_numbers = #tpu.dot_dimension_numbers<[1], [0], [0], [1], [0, 0, 1, 1], [], []>} : vector<8x16xbf16>, vector<16x64xbf16>, vector<8x64xf32> -> vector<8x64xf32>
    %219 = vector.broadcast %70 : vector<1x64xf32> to vector<8x64xf32>
    %220 = arith.addf %219, %218 : vector<8x64xf32>
    %221 = arith.truncf %67 : vector<8x16xf32> to vector<8x16xbf16>
    %c1_150 = arith.constant 1 : index
    %c0_151 = arith.constant 0 : index
    %c0_152 = arith.constant 0 : index
    %222 = vector.load %arg9[%c1_150, %c0_151, %c0_152] : memref<3x16x64xbf16, #tpu.memory_space<vmem>>, vector<1x16x64xbf16>
    %223 = vector.shape_cast %222 : vector<1x16x64xbf16> to vector<16x64xbf16>
    %cst_153 = arith.constant dense<0.000000e+00> : vector<8x64xf32>
    %224 = tpu.matmul %221, %223, %cst_153 {dimension_numbers = #tpu.dot_dimension_numbers<[1], [0], [0], [1], [0, 0, 1, 1], [], []>} : vector<8x16xbf16>, vector<16x64xbf16>, vector<8x64xf32> -> vector<8x64xf32>
    %225 = arith.addf %220, %224 : vector<8x64xf32>
    %226 = arith.truncf %69 : vector<8x16xf32> to vector<8x16xbf16>
    %c2_154 = arith.constant 2 : index
    %c0_155 = arith.constant 0 : index
    %c0_156 = arith.constant 0 : index
    %227 = vector.load %arg9[%c2_154, %c0_155, %c0_156] : memref<3x16x64xbf16, #tpu.memory_space<vmem>>, vector<1x16x64xbf16>
    %228 = vector.shape_cast %227 : vector<1x16x64xbf16> to vector<16x64xbf16>
    %cst_157 = arith.constant dense<0.000000e+00> : vector<8x64xf32>
    %229 = tpu.matmul %226, %228, %cst_157 {dimension_numbers = #tpu.dot_dimension_numbers<[1], [0], [0], [1], [0, 0, 1, 1], [], []>} : vector<8x16xbf16>, vector<16x64xbf16>, vector<8x64xf32> -> vector<8x64xf32>
    %230 = arith.addf %225, %229 : vector<8x64xf32>
    %cst_158 = arith.constant 0.000000e+00 : f32
    %231 = vector.broadcast %cst_158 : f32 to vector<8x64xf32>
    %232 = arith.cmpf ogt, %230, %231 : vector<8x64xf32>
    %cst_159 = arith.constant 0.000000e+00 : f32
    %233 = vector.broadcast %cst_159 : f32 to vector<8x64xf32>
    %234 = arith.minimumf %230, %233 : vector<8x64xf32>
    %235 = math.exp %234 : vector<8x64xf32>
    %cst_160 = arith.constant 1.000000e+00 : f32
    %236 = vector.broadcast %cst_160 : f32 to vector<8x64xf32>
    %237 = arith.subf %235, %236 : vector<8x64xf32>
    %238 = arith.select %232, %230, %237 : vector<8x64xi1>, vector<8x64xf32>
    %c0_161 = arith.constant 0 : index
    %c0_162 = arith.constant 0 : index
    %239 = vector.load %arg12[%c0_161, %c0_162] : memref<1x128xf32, #tpu.memory_space<vmem>>, vector<1x128xf32>
    %240 = arith.truncf %94 : vector<8x64xf32> to vector<8x64xbf16>
    %c0_163 = arith.constant 0 : index
    %c0_164 = arith.constant 0 : index
    %c0_165 = arith.constant 0 : index
    %241 = vector.load %arg11[%c0_163, %c0_164, %c0_165] : memref<3x64x128xbf16, #tpu.memory_space<vmem>>, vector<1x64x128xbf16>
    %242 = vector.shape_cast %241 : vector<1x64x128xbf16> to vector<64x128xbf16>
    %cst_166 = arith.constant dense<0.000000e+00> : vector<8x128xf32>
    %243 = tpu.matmul %240, %242, %cst_166 {dimension_numbers = #tpu.dot_dimension_numbers<[1], [0], [0], [1], [0, 0, 1, 1], [], []>} : vector<8x64xbf16>, vector<64x128xbf16>, vector<8x128xf32> -> vector<8x128xf32>
    %244 = vector.broadcast %239 : vector<1x128xf32> to vector<8x128xf32>
    %245 = arith.addf %244, %243 : vector<8x128xf32>
    %246 = arith.truncf %118 : vector<8x64xf32> to vector<8x64xbf16>
    %c1_167 = arith.constant 1 : index
    %c0_168 = arith.constant 0 : index
    %c0_169 = arith.constant 0 : index
    %247 = vector.load %arg11[%c1_167, %c0_168, %c0_169] : memref<3x64x128xbf16, #tpu.memory_space<vmem>>, vector<1x64x128xbf16>
    %248 = vector.shape_cast %247 : vector<1x64x128xbf16> to vector<64x128xbf16>
    %cst_170 = arith.constant dense<0.000000e+00> : vector<8x128xf32>
    %249 = tpu.matmul %246, %248, %cst_170 {dimension_numbers = #tpu.dot_dimension_numbers<[1], [0], [0], [1], [0, 0, 1, 1], [], []>} : vector<8x64xbf16>, vector<64x128xbf16>, vector<8x128xf32> -> vector<8x128xf32>
    %250 = arith.addf %245, %249 : vector<8x128xf32>
    %251 = arith.truncf %142 : vector<8x64xf32> to vector<8x64xbf16>
    %c2_171 = arith.constant 2 : index
    %c0_172 = arith.constant 0 : index
    %c0_173 = arith.constant 0 : index
    %252 = vector.load %arg11[%c2_171, %c0_172, %c0_173] : memref<3x64x128xbf16, #tpu.memory_space<vmem>>, vector<1x64x128xbf16>
    %253 = vector.shape_cast %252 : vector<1x64x128xbf16> to vector<64x128xbf16>
    %cst_174 = arith.constant dense<0.000000e+00> : vector<8x128xf32>
    %254 = tpu.matmul %251, %253, %cst_174 {dimension_numbers = #tpu.dot_dimension_numbers<[1], [0], [0], [1], [0, 0, 1, 1], [], []>} : vector<8x64xbf16>, vector<64x128xbf16>, vector<8x128xf32> -> vector<8x128xf32>
    %255 = arith.addf %250, %254 : vector<8x128xf32>
    %cst_175 = arith.constant 0.000000e+00 : f32
    %256 = vector.broadcast %cst_175 : f32 to vector<8x128xf32>
    %257 = arith.cmpf ogt, %255, %256 : vector<8x128xf32>
    %cst_176 = arith.constant 0.000000e+00 : f32
    %258 = vector.broadcast %cst_176 : f32 to vector<8x128xf32>
    %259 = arith.minimumf %255, %258 : vector<8x128xf32>
    %260 = math.exp %259 : vector<8x128xf32>
    %cst_177 = arith.constant 1.000000e+00 : f32
    %261 = vector.broadcast %cst_177 : f32 to vector<8x128xf32>
    %262 = arith.subf %260, %261 : vector<8x128xf32>
    %263 = arith.select %257, %255, %262 : vector<8x128xi1>, vector<8x128xf32>
    %264 = arith.truncf %142 : vector<8x64xf32> to vector<8x64xbf16>
    %c0_178 = arith.constant 0 : index
    %c0_179 = arith.constant 0 : index
    %c0_180 = arith.constant 0 : index
    %265 = vector.load %arg11[%c0_178, %c0_179, %c0_180] : memref<3x64x128xbf16, #tpu.memory_space<vmem>>, vector<1x64x128xbf16>
    %266 = vector.shape_cast %265 : vector<1x64x128xbf16> to vector<64x128xbf16>
    %cst_181 = arith.constant dense<0.000000e+00> : vector<8x128xf32>
    %267 = tpu.matmul %264, %266, %cst_181 {dimension_numbers = #tpu.dot_dimension_numbers<[1], [0], [0], [1], [0, 0, 1, 1], [], []>} : vector<8x64xbf16>, vector<64x128xbf16>, vector<8x128xf32> -> vector<8x128xf32>
    %268 = vector.broadcast %239 : vector<1x128xf32> to vector<8x128xf32>
    %269 = arith.addf %268, %267 : vector<8x128xf32>
    %270 = arith.truncf %166 : vector<8x64xf32> to vector<8x64xbf16>
    %c1_182 = arith.constant 1 : index
    %c0_183 = arith.constant 0 : index
    %c0_184 = arith.constant 0 : index
    %271 = vector.load %arg11[%c1_182, %c0_183, %c0_184] : memref<3x64x128xbf16, #tpu.memory_space<vmem>>, vector<1x64x128xbf16>
    %272 = vector.shape_cast %271 : vector<1x64x128xbf16> to vector<64x128xbf16>
    %cst_185 = arith.constant dense<0.000000e+00> : vector<8x128xf32>
    %273 = tpu.matmul %270, %272, %cst_185 {dimension_numbers = #tpu.dot_dimension_numbers<[1], [0], [0], [1], [0, 0, 1, 1], [], []>} : vector<8x64xbf16>, vector<64x128xbf16>, vector<8x128xf32> -> vector<8x128xf32>
    %274 = arith.addf %269, %273 : vector<8x128xf32>
    %275 = arith.truncf %190 : vector<8x64xf32> to vector<8x64xbf16>
    %c2_186 = arith.constant 2 : index
    %c0_187 = arith.constant 0 : index
    %c0_188 = arith.constant 0 : index
    %276 = vector.load %arg11[%c2_186, %c0_187, %c0_188] : memref<3x64x128xbf16, #tpu.memory_space<vmem>>, vector<1x64x128xbf16>
    %277 = vector.shape_cast %276 : vector<1x64x128xbf16> to vector<64x128xbf16>
    %cst_189 = arith.constant dense<0.000000e+00> : vector<8x128xf32>
    %278 = tpu.matmul %275, %277, %cst_189 {dimension_numbers = #tpu.dot_dimension_numbers<[1], [0], [0], [1], [0, 0, 1, 1], [], []>} : vector<8x64xbf16>, vector<64x128xbf16>, vector<8x128xf32> -> vector<8x128xf32>
    %279 = arith.addf %274, %278 : vector<8x128xf32>
    %cst_190 = arith.constant 0.000000e+00 : f32
    %280 = vector.broadcast %cst_190 : f32 to vector<8x128xf32>
    %281 = arith.cmpf ogt, %279, %280 : vector<8x128xf32>
    %cst_191 = arith.constant 0.000000e+00 : f32
    %282 = vector.broadcast %cst_191 : f32 to vector<8x128xf32>
    %283 = arith.minimumf %279, %282 : vector<8x128xf32>
    %284 = math.exp %283 : vector<8x128xf32>
    %cst_192 = arith.constant 1.000000e+00 : f32
    %285 = vector.broadcast %cst_192 : f32 to vector<8x128xf32>
    %286 = arith.subf %284, %285 : vector<8x128xf32>
    %287 = arith.select %281, %279, %286 : vector<8x128xi1>, vector<8x128xf32>
    %288 = arith.truncf %190 : vector<8x64xf32> to vector<8x64xbf16>
    %c0_193 = arith.constant 0 : index
    %c0_194 = arith.constant 0 : index
    %c0_195 = arith.constant 0 : index
    %289 = vector.load %arg11[%c0_193, %c0_194, %c0_195] : memref<3x64x128xbf16, #tpu.memory_space<vmem>>, vector<1x64x128xbf16>
    %290 = vector.shape_cast %289 : vector<1x64x128xbf16> to vector<64x128xbf16>
    %cst_196 = arith.constant dense<0.000000e+00> : vector<8x128xf32>
    %291 = tpu.matmul %288, %290, %cst_196 {dimension_numbers = #tpu.dot_dimension_numbers<[1], [0], [0], [1], [0, 0, 1, 1], [], []>} : vector<8x64xbf16>, vector<64x128xbf16>, vector<8x128xf32> -> vector<8x128xf32>
    %292 = vector.broadcast %239 : vector<1x128xf32> to vector<8x128xf32>
    %293 = arith.addf %292, %291 : vector<8x128xf32>
    %294 = arith.truncf %214 : vector<8x64xf32> to vector<8x64xbf16>
    %c1_197 = arith.constant 1 : index
    %c0_198 = arith.constant 0 : index
    %c0_199 = arith.constant 0 : index
    %295 = vector.load %arg11[%c1_197, %c0_198, %c0_199] : memref<3x64x128xbf16, #tpu.memory_space<vmem>>, vector<1x64x128xbf16>
    %296 = vector.shape_cast %295 : vector<1x64x128xbf16> to vector<64x128xbf16>
    %cst_200 = arith.constant dense<0.000000e+00> : vector<8x128xf32>
    %297 = tpu.matmul %294, %296, %cst_200 {dimension_numbers = #tpu.dot_dimension_numbers<[1], [0], [0], [1], [0, 0, 1, 1], [], []>} : vector<8x64xbf16>, vector<64x128xbf16>, vector<8x128xf32> -> vector<8x128xf32>
    %298 = arith.addf %293, %297 : vector<8x128xf32>
    %299 = arith.truncf %238 : vector<8x64xf32> to vector<8x64xbf16>
    %c2_201 = arith.constant 2 : index
    %c0_202 = arith.constant 0 : index
    %c0_203 = arith.constant 0 : index
    %300 = vector.load %arg11[%c2_201, %c0_202, %c0_203] : memref<3x64x128xbf16, #tpu.memory_space<vmem>>, vector<1x64x128xbf16>
    %301 = vector.shape_cast %300 : vector<1x64x128xbf16> to vector<64x128xbf16>
    %cst_204 = arith.constant dense<0.000000e+00> : vector<8x128xf32>
    %302 = tpu.matmul %299, %301, %cst_204 {dimension_numbers = #tpu.dot_dimension_numbers<[1], [0], [0], [1], [0, 0, 1, 1], [], []>} : vector<8x64xbf16>, vector<64x128xbf16>, vector<8x128xf32> -> vector<8x128xf32>
    %303 = arith.addf %298, %302 : vector<8x128xf32>
    %cst_205 = arith.constant 0.000000e+00 : f32
    %304 = vector.broadcast %cst_205 : f32 to vector<8x128xf32>
    %305 = arith.cmpf ogt, %303, %304 : vector<8x128xf32>
    %cst_206 = arith.constant 0.000000e+00 : f32
    %306 = vector.broadcast %cst_206 : f32 to vector<8x128xf32>
    %307 = arith.minimumf %303, %306 : vector<8x128xf32>
    %308 = math.exp %307 : vector<8x128xf32>
    %cst_207 = arith.constant 1.000000e+00 : f32
    %309 = vector.broadcast %cst_207 : f32 to vector<8x128xf32>
    %310 = arith.subf %308, %309 : vector<8x128xf32>
    %311 = arith.select %305, %303, %310 : vector<8x128xi1>, vector<8x128xf32>
    %c0_208 = arith.constant 0 : index
    %c0_209 = arith.constant 0 : index
    %312 = vector.load %arg14[%c0_208, %c0_209] : memref<1x256xf32, #tpu.memory_space<vmem>>, vector<1x256xf32>
    %313 = arith.truncf %263 : vector<8x128xf32> to vector<8x128xbf16>
    %c0_210 = arith.constant 0 : index
    %c0_211 = arith.constant 0 : index
    %c0_212 = arith.constant 0 : index
    %314 = vector.load %arg13[%c0_210, %c0_211, %c0_212] : memref<3x128x256xbf16, #tpu.memory_space<vmem>>, vector<1x128x256xbf16>
    %315 = vector.shape_cast %314 : vector<1x128x256xbf16> to vector<128x256xbf16>
    %cst_213 = arith.constant dense<0.000000e+00> : vector<8x256xf32>
    %316 = tpu.matmul %313, %315, %cst_213 {dimension_numbers = #tpu.dot_dimension_numbers<[1], [0], [0], [1], [0, 0, 1, 1], [], []>} : vector<8x128xbf16>, vector<128x256xbf16>, vector<8x256xf32> -> vector<8x256xf32>
    %317 = vector.broadcast %312 : vector<1x256xf32> to vector<8x256xf32>
    %318 = arith.addf %317, %316 : vector<8x256xf32>
    %319 = arith.truncf %287 : vector<8x128xf32> to vector<8x128xbf16>
    %c1_214 = arith.constant 1 : index
    %c0_215 = arith.constant 0 : index
    %c0_216 = arith.constant 0 : index
    %320 = vector.load %arg13[%c1_214, %c0_215, %c0_216] : memref<3x128x256xbf16, #tpu.memory_space<vmem>>, vector<1x128x256xbf16>
    %321 = vector.shape_cast %320 : vector<1x128x256xbf16> to vector<128x256xbf16>
    %cst_217 = arith.constant dense<0.000000e+00> : vector<8x256xf32>
    %322 = tpu.matmul %319, %321, %cst_217 {dimension_numbers = #tpu.dot_dimension_numbers<[1], [0], [0], [1], [0, 0, 1, 1], [], []>} : vector<8x128xbf16>, vector<128x256xbf16>, vector<8x256xf32> -> vector<8x256xf32>
    %323 = arith.addf %318, %322 : vector<8x256xf32>
    %324 = arith.truncf %311 : vector<8x128xf32> to vector<8x128xbf16>
    %c2_218 = arith.constant 2 : index
    %c0_219 = arith.constant 0 : index
    %c0_220 = arith.constant 0 : index
    %325 = vector.load %arg13[%c2_218, %c0_219, %c0_220] : memref<3x128x256xbf16, #tpu.memory_space<vmem>>, vector<1x128x256xbf16>
    %326 = vector.shape_cast %325 : vector<1x128x256xbf16> to vector<128x256xbf16>
    %cst_221 = arith.constant dense<0.000000e+00> : vector<8x256xf32>
    %327 = tpu.matmul %324, %326, %cst_221 {dimension_numbers = #tpu.dot_dimension_numbers<[1], [0], [0], [1], [0, 0, 1, 1], [], []>} : vector<8x128xbf16>, vector<128x256xbf16>, vector<8x256xf32> -> vector<8x256xf32>
    %328 = arith.addf %323, %327 : vector<8x256xf32>
    %cst_222 = arith.constant 0.000000e+00 : f32
    %329 = vector.broadcast %cst_222 : f32 to vector<8x256xf32>
    %330 = arith.cmpf ogt, %328, %329 : vector<8x256xf32>
    %cst_223 = arith.constant 0.000000e+00 : f32
    %331 = vector.broadcast %cst_223 : f32 to vector<8x256xf32>
    %332 = arith.minimumf %328, %331 : vector<8x256xf32>
    %333 = math.exp %332 : vector<8x256xf32>
    %cst_224 = arith.constant 1.000000e+00 : f32
    %334 = vector.broadcast %cst_224 : f32 to vector<8x256xf32>
    %335 = arith.subf %333, %334 : vector<8x256xf32>
    %336 = arith.select %330, %328, %335 : vector<8x256xi1>, vector<8x256xf32>
    %c0_225 = arith.constant 0 : index
    %c0_226 = arith.constant 0 : index
    %337 = vector.load %arg15[%c0_225, %c0_226] : memref<256x256xbf16, #tpu.memory_space<vmem>>, vector<256x256xbf16>
    %c0_227 = arith.constant 0 : index
    %c0_228 = arith.constant 0 : index
    %338 = vector.load %arg16[%c0_227, %c0_228] : memref<1x256xf32, #tpu.memory_space<vmem>>, vector<1x256xf32>
    %339 = arith.truncf %336 : vector<8x256xf32> to vector<8x256xbf16>
    %cst_229 = arith.constant dense<0.000000e+00> : vector<8x256xf32>
    %340 = tpu.matmul %339, %337, %cst_229 {dimension_numbers = #tpu.dot_dimension_numbers<[1], [0], [0], [1], [0, 0, 1, 1], [], []>} : vector<8x256xbf16>, vector<256x256xbf16>, vector<8x256xf32> -> vector<8x256xf32>
    %341 = vector.broadcast %338 : vector<1x256xf32> to vector<8x256xf32>
    %342 = arith.addf %340, %341 : vector<8x256xf32>
    %cst_230 = arith.constant 0.000000e+00 : f32
    %343 = vector.broadcast %cst_230 : f32 to vector<8x256xf32>
    %344 = arith.cmpf ogt, %342, %343 : vector<8x256xf32>
    %cst_231 = arith.constant 0.000000e+00 : f32
    %345 = vector.broadcast %cst_231 : f32 to vector<8x256xf32>
    %346 = arith.minimumf %342, %345 : vector<8x256xf32>
    %347 = math.exp %346 : vector<8x256xf32>
    %cst_232 = arith.constant 1.000000e+00 : f32
    %348 = vector.broadcast %cst_232 : f32 to vector<8x256xf32>
    %349 = arith.subf %347, %348 : vector<8x256xf32>
    %350 = arith.select %344, %342, %349 : vector<8x256xi1>, vector<8x256xf32>
    %c0_233 = arith.constant 0 : index
    %c0_234 = arith.constant 0 : index
    %351 = vector.load %arg17[%c0_233, %c0_234] : memref<256x64xbf16, #tpu.memory_space<vmem>>, vector<256x64xbf16>
    %c0_235 = arith.constant 0 : index
    %c0_236 = arith.constant 0 : index
    %352 = vector.load %arg18[%c0_235, %c0_236] : memref<1x64xf32, #tpu.memory_space<vmem>>, vector<1x64xf32>
    %353 = arith.truncf %350 : vector<8x256xf32> to vector<8x256xbf16>
    %cst_237 = arith.constant dense<0.000000e+00> : vector<8x64xf32>
    %354 = tpu.matmul %353, %351, %cst_237 {dimension_numbers = #tpu.dot_dimension_numbers<[1], [0], [0], [1], [0, 0, 1, 1], [], []>} : vector<8x256xbf16>, vector<256x64xbf16>, vector<8x64xf32> -> vector<8x64xf32>
    %355 = vector.broadcast %352 : vector<1x64xf32> to vector<8x64xf32>
    %356 = arith.addf %354, %355 : vector<8x64xf32>
    %357 = arith.truncf %4 : vector<8x16xf32> to vector<8x16xbf16>
    %c0_238 = arith.constant 0 : index
    %c0_239 = arith.constant 0 : index
    %358 = vector.load %arg19[%c0_238, %c0_239] : memref<16x512xbf16, #tpu.memory_space<vmem>>, vector<16x512xbf16>
    %cst_240 = arith.constant dense<0.000000e+00> : vector<8x512xf32>
    %359 = tpu.matmul %357, %358, %cst_240 {dimension_numbers = #tpu.dot_dimension_numbers<[1], [0], [0], [1], [0, 0, 1, 1], [], []>} : vector<8x16xbf16>, vector<16x512xbf16>, vector<8x512xf32> -> vector<8x512xf32>
    %360 = arith.truncf %39 : vector<8x64xf32> to vector<8x64xbf16>
    %c0_241 = arith.constant 0 : index
    %c0_242 = arith.constant 0 : index
    %361 = vector.load %arg20[%c0_241, %c0_242] : memref<64x512xbf16, #tpu.memory_space<vmem>>, vector<64x512xbf16>
    %cst_243 = arith.constant dense<0.000000e+00> : vector<8x512xf32>
    %362 = tpu.matmul %360, %361, %cst_243 {dimension_numbers = #tpu.dot_dimension_numbers<[1], [0], [0], [1], [0, 0, 1, 1], [], []>} : vector<8x64xbf16>, vector<64x512xbf16>, vector<8x512xf32> -> vector<8x512xf32>
    %363 = arith.addf %359, %362 : vector<8x512xf32>
    %c0_244 = arith.constant 0 : index
    %c0_245 = arith.constant 0 : index
    %364 = vector.load %arg21[%c0_244, %c0_245] : memref<1x512xf32, #tpu.memory_space<vmem>>, vector<1x512xf32>
    %365 = vector.broadcast %364 : vector<1x512xf32> to vector<8x512xf32>
    %366 = arith.addf %363, %365 : vector<8x512xf32>
    %cst_246 = arith.constant 0.000000e+00 : f32
    %367 = vector.broadcast %cst_246 : f32 to vector<8x512xf32>
    %368 = arith.cmpf ogt, %366, %367 : vector<8x512xf32>
    %cst_247 = arith.constant 0.000000e+00 : f32
    %369 = vector.broadcast %cst_247 : f32 to vector<8x512xf32>
    %370 = arith.minimumf %366, %369 : vector<8x512xf32>
    %371 = math.exp %370 : vector<8x512xf32>
    %cst_248 = arith.constant 1.000000e+00 : f32
    %372 = vector.broadcast %cst_248 : f32 to vector<8x512xf32>
    %373 = arith.subf %371, %372 : vector<8x512xf32>
    %374 = arith.select %368, %366, %373 : vector<8x512xi1>, vector<8x512xf32>
    %c0_249 = arith.constant 0 : index
    %c0_250 = arith.constant 0 : index
    %375 = vector.load %arg22[%c0_249, %c0_250] : memref<512x256xbf16, #tpu.memory_space<vmem>>, vector<512x256xbf16>
    %c0_251 = arith.constant 0 : index
    %c0_252 = arith.constant 0 : index
    %376 = vector.load %arg23[%c0_251, %c0_252] : memref<1x256xf32, #tpu.memory_space<vmem>>, vector<1x256xf32>
    %377 = arith.truncf %374 : vector<8x512xf32> to vector<8x512xbf16>
    %cst_253 = arith.constant dense<0.000000e+00> : vector<8x256xf32>
    %378 = tpu.matmul %377, %375, %cst_253 {dimension_numbers = #tpu.dot_dimension_numbers<[1], [0], [0], [1], [0, 0, 1, 1], [], []>} : vector<8x512xbf16>, vector<512x256xbf16>, vector<8x256xf32> -> vector<8x256xf32>
    %379 = vector.broadcast %376 : vector<1x256xf32> to vector<8x256xf32>
    %380 = arith.addf %378, %379 : vector<8x256xf32>
    %cst_254 = arith.constant 0.000000e+00 : f32
    %381 = vector.broadcast %cst_254 : f32 to vector<8x256xf32>
    %382 = arith.cmpf ogt, %380, %381 : vector<8x256xf32>
    %cst_255 = arith.constant 0.000000e+00 : f32
    %383 = vector.broadcast %cst_255 : f32 to vector<8x256xf32>
    %384 = arith.minimumf %380, %383 : vector<8x256xf32>
    %385 = math.exp %384 : vector<8x256xf32>
    %cst_256 = arith.constant 1.000000e+00 : f32
    %386 = vector.broadcast %cst_256 : f32 to vector<8x256xf32>
    %387 = arith.subf %385, %386 : vector<8x256xf32>
    %388 = arith.select %382, %380, %387 : vector<8x256xi1>, vector<8x256xf32>
    %c0_257 = arith.constant 0 : index
    %c0_258 = arith.constant 0 : index
    %389 = vector.load %arg24[%c0_257, %c0_258] : memref<256x128xbf16, #tpu.memory_space<vmem>>, vector<256x128xbf16>
    %c0_259 = arith.constant 0 : index
    %c0_260 = arith.constant 0 : index
    %390 = vector.load %arg25[%c0_259, %c0_260] : memref<1x128xf32, #tpu.memory_space<vmem>>, vector<1x128xf32>
    %391 = arith.truncf %388 : vector<8x256xf32> to vector<8x256xbf16>
    %cst_261 = arith.constant dense<0.000000e+00> : vector<8x128xf32>
    %392 = tpu.matmul %391, %389, %cst_261 {dimension_numbers = #tpu.dot_dimension_numbers<[1], [0], [0], [1], [0, 0, 1, 1], [], []>} : vector<8x256xbf16>, vector<256x128xbf16>, vector<8x128xf32> -> vector<8x128xf32>
    %393 = vector.broadcast %390 : vector<1x128xf32> to vector<8x128xf32>
    %394 = arith.addf %392, %393 : vector<8x128xf32>
    %cst_262 = arith.constant 0.000000e+00 : f32
    %395 = vector.broadcast %cst_262 : f32 to vector<8x128xf32>
    %396 = arith.cmpf ogt, %394, %395 : vector<8x128xf32>
    %cst_263 = arith.constant 0.000000e+00 : f32
    %397 = vector.broadcast %cst_263 : f32 to vector<8x128xf32>
    %398 = arith.minimumf %394, %397 : vector<8x128xf32>
    %399 = math.exp %398 : vector<8x128xf32>
    %cst_264 = arith.constant 1.000000e+00 : f32
    %400 = vector.broadcast %cst_264 : f32 to vector<8x128xf32>
    %401 = arith.subf %399, %400 : vector<8x128xf32>
    %402 = arith.select %396, %394, %401 : vector<8x128xi1>, vector<8x128xf32>
    %c0_265 = arith.constant 0 : index
    %c0_266 = arith.constant 0 : index
    %403 = vector.load %arg26[%c0_265, %c0_266] : memref<128x4xbf16, #tpu.memory_space<vmem>>, vector<128x4xbf16>
    %c0_267 = arith.constant 0 : index
    %c0_268 = arith.constant 0 : index
    %404 = vector.load %arg27[%c0_267, %c0_268] : memref<1x4xf32, #tpu.memory_space<vmem>>, vector<1x4xf32>
    %405 = arith.truncf %402 : vector<8x128xf32> to vector<8x128xbf16>
    %cst_269 = arith.constant dense<0.000000e+00> : vector<8x4xf32>
    %406 = tpu.matmul %405, %403, %cst_269 {dimension_numbers = #tpu.dot_dimension_numbers<[1], [0], [0], [1], [0, 0, 1, 1], [], []>} : vector<8x128xbf16>, vector<128x4xbf16>, vector<8x4xf32> -> vector<8x4xf32>
    %407 = vector.broadcast %404 : vector<1x4xf32> to vector<8x4xf32>
    %408 = arith.addf %406, %407 : vector<8x4xf32>
    %409 = arith.truncf %4 : vector<8x16xf32> to vector<8x16xbf16>
    %c0_270 = arith.constant 0 : index
    %c0_271 = arith.constant 0 : index
    %410 = vector.load %arg28[%c0_270, %c0_271] : memref<16x1024xbf16, #tpu.memory_space<vmem>>, vector<16x1024xbf16>
    %cst_272 = arith.constant dense<0.000000e+00> : vector<8x1024xf32>
    %411 = tpu.matmul %409, %410, %cst_272 {dimension_numbers = #tpu.dot_dimension_numbers<[1], [0], [0], [1], [0, 0, 1, 1], [], []>} : vector<8x16xbf16>, vector<16x1024xbf16>, vector<8x1024xf32> -> vector<8x1024xf32>
    %412 = arith.truncf %5 : vector<8x8xf32> to vector<8x8xbf16>
    %c0_273 = arith.constant 0 : index
    %c0_274 = arith.constant 0 : index
    %413 = vector.load %arg29[%c0_273, %c0_274] : memref<8x1024xbf16, #tpu.memory_space<vmem>>, vector<8x1024xbf16>
    %cst_275 = arith.constant dense<0.000000e+00> : vector<8x1024xf32>
    %414 = tpu.matmul %412, %413, %cst_275 {dimension_numbers = #tpu.dot_dimension_numbers<[1], [0], [0], [1], [0, 0, 1, 1], [], []>} : vector<8x8xbf16>, vector<8x1024xbf16>, vector<8x1024xf32> -> vector<8x1024xf32>
    %415 = arith.addf %411, %414 : vector<8x1024xf32>
    %c0_276 = arith.constant 0 : index
    %c0_277 = arith.constant 0 : index
    %416 = vector.load %arg30[%c0_276, %c0_277] : memref<1x1024xf32, #tpu.memory_space<vmem>>, vector<1x1024xf32>
    %417 = vector.broadcast %416 : vector<1x1024xf32> to vector<8x1024xf32>
    %418 = arith.addf %415, %417 : vector<8x1024xf32>
    %cst_278 = arith.constant 0.000000e+00 : f32
    %419 = vector.broadcast %cst_278 : f32 to vector<8x1024xf32>
    %420 = arith.cmpf ogt, %418, %419 : vector<8x1024xf32>
    %cst_279 = arith.constant 0.000000e+00 : f32
    %421 = vector.broadcast %cst_279 : f32 to vector<8x1024xf32>
    %422 = arith.minimumf %418, %421 : vector<8x1024xf32>
    %423 = math.exp %422 : vector<8x1024xf32>
    %cst_280 = arith.constant 1.000000e+00 : f32
    %424 = vector.broadcast %cst_280 : f32 to vector<8x1024xf32>
    %425 = arith.subf %423, %424 : vector<8x1024xf32>
    %426 = arith.select %420, %418, %425 : vector<8x1024xi1>, vector<8x1024xf32>
    %c0_i32_281 = arith.constant 0 : i32
    %427 = tpu.memref_slice %arg40[%c0_i32_281] : memref<2x!tpu.dma_semaphore, #tpu.memory_space<semaphore_mem>> -> memref<1x!tpu.dma_semaphore, #tpu.memory_space<semaphore_mem>>
    %428 = tpu.memref_squeeze %427 : memref<1x!tpu.dma_semaphore, #tpu.memory_space<semaphore_mem>> -> memref<!tpu.dma_semaphore, #tpu.memory_space<semaphore_mem>>
    tpu.wait_dma2 semaphore(%428 : memref<!tpu.dma_semaphore, #tpu.memory_space<semaphore_mem>>) src(%arg31 : memref<1024x512xbf16, #tpu.memory_space<any>>) dst(%arg38 : memref<1024x512xbf16, #tpu.memory_space<vmem>>)
    %c0_282 = arith.constant 0 : index
    %c0_283 = arith.constant 0 : index
    %429 = vector.load %arg38[%c0_282, %c0_283] : memref<1024x512xbf16, #tpu.memory_space<vmem>>, vector<1024x512xbf16>
    %c0_284 = arith.constant 0 : index
    %c0_285 = arith.constant 0 : index
    %430 = vector.load %arg32[%c0_284, %c0_285] : memref<1x512xf32, #tpu.memory_space<vmem>>, vector<1x512xf32>
    %431 = arith.truncf %426 : vector<8x1024xf32> to vector<8x1024xbf16>
    %cst_286 = arith.constant dense<0.000000e+00> : vector<8x512xf32>
    %432 = tpu.matmul %431, %429, %cst_286 {dimension_numbers = #tpu.dot_dimension_numbers<[1], [0], [0], [1], [0, 0, 1, 1], [], []>} : vector<8x1024xbf16>, vector<1024x512xbf16>, vector<8x512xf32> -> vector<8x512xf32>
    %433 = vector.broadcast %430 : vector<1x512xf32> to vector<8x512xf32>
    %434 = arith.addf %432, %433 : vector<8x512xf32>
    %cst_287 = arith.constant 0.000000e+00 : f32
    %435 = vector.broadcast %cst_287 : f32 to vector<8x512xf32>
    %436 = arith.cmpf ogt, %434, %435 : vector<8x512xf32>
    %cst_288 = arith.constant 0.000000e+00 : f32
    %437 = vector.broadcast %cst_288 : f32 to vector<8x512xf32>
    %438 = arith.minimumf %434, %437 : vector<8x512xf32>
    %439 = math.exp %438 : vector<8x512xf32>
    %cst_289 = arith.constant 1.000000e+00 : f32
    %440 = vector.broadcast %cst_289 : f32 to vector<8x512xf32>
    %441 = arith.subf %439, %440 : vector<8x512xf32>
    %442 = arith.select %436, %434, %441 : vector<8x512xi1>, vector<8x512xf32>
    %c1_i32_290 = arith.constant 1 : i32
    %443 = tpu.memref_slice %arg40[%c1_i32_290] : memref<2x!tpu.dma_semaphore, #tpu.memory_space<semaphore_mem>> -> memref<1x!tpu.dma_semaphore, #tpu.memory_space<semaphore_mem>>
    %444 = tpu.memref_squeeze %443 : memref<1x!tpu.dma_semaphore, #tpu.memory_space<semaphore_mem>> -> memref<!tpu.dma_semaphore, #tpu.memory_space<semaphore_mem>>
    tpu.wait_dma2 semaphore(%444 : memref<!tpu.dma_semaphore, #tpu.memory_space<semaphore_mem>>) src(%arg33 : memref<512x128xbf16, #tpu.memory_space<any>>) dst(%arg39 : memref<512x128xbf16, #tpu.memory_space<vmem>>)
    %c0_291 = arith.constant 0 : index
    %c0_292 = arith.constant 0 : index
    %445 = vector.load %arg39[%c0_291, %c0_292] : memref<512x128xbf16, #tpu.memory_space<vmem>>, vector<512x128xbf16>
    %c0_293 = arith.constant 0 : index
    %c0_294 = arith.constant 0 : index
    %446 = vector.load %arg34[%c0_293, %c0_294] : memref<1x128xf32, #tpu.memory_space<vmem>>, vector<1x128xf32>
    %447 = arith.truncf %442 : vector<8x512xf32> to vector<8x512xbf16>
    %cst_295 = arith.constant dense<0.000000e+00> : vector<8x128xf32>
    %448 = tpu.matmul %447, %445, %cst_295 {dimension_numbers = #tpu.dot_dimension_numbers<[1], [0], [0], [1], [0, 0, 1, 1], [], []>} : vector<8x512xbf16>, vector<512x128xbf16>, vector<8x128xf32> -> vector<8x128xf32>
    %449 = vector.broadcast %446 : vector<1x128xf32> to vector<8x128xf32>
    %450 = arith.addf %448, %449 : vector<8x128xf32>
    %cst_296 = arith.constant 0.000000e+00 : f32
    %451 = vector.broadcast %cst_296 : f32 to vector<8x128xf32>
    %452 = arith.cmpf ogt, %450, %451 : vector<8x128xf32>
    %cst_297 = arith.constant 0.000000e+00 : f32
    %453 = vector.broadcast %cst_297 : f32 to vector<8x128xf32>
    %454 = arith.minimumf %450, %453 : vector<8x128xf32>
    %455 = math.exp %454 : vector<8x128xf32>
    %cst_298 = arith.constant 1.000000e+00 : f32
    %456 = vector.broadcast %cst_298 : f32 to vector<8x128xf32>
    %457 = arith.subf %455, %456 : vector<8x128xf32>
    %458 = arith.select %452, %450, %457 : vector<8x128xi1>, vector<8x128xf32>
    %c0_299 = arith.constant 0 : index
    %c0_300 = arith.constant 0 : index
    %459 = vector.load %arg35[%c0_299, %c0_300] : memref<128x1xbf16, #tpu.memory_space<vmem>>, vector<128x1xbf16>
    %c0_301 = arith.constant 0 : index
    %c0_302 = arith.constant 0 : index
    %460 = vector.load %arg36[%c0_301, %c0_302] : memref<1x1xf32, #tpu.memory_space<vmem>>, vector<1x1xf32>
    %461 = arith.truncf %458 : vector<8x128xf32> to vector<8x128xbf16>
    %cst_303 = arith.constant dense<0.000000e+00> : vector<8x1xf32>
    %462 = tpu.matmul %461, %459, %cst_303 {dimension_numbers = #tpu.dot_dimension_numbers<[1], [0], [0], [1], [0, 0, 1, 1], [], []>} : vector<8x128xbf16>, vector<128x1xbf16>, vector<8x1xf32> -> vector<8x1xf32>
    %463 = vector.broadcast %460 : vector<1x1xf32> to vector<8x1xf32>
    %464 = arith.addf %462, %463 : vector<8x1xf32>
    %cst_304 = arith.constant 0.000000e+00 : f32
    %465 = vector.broadcast %cst_304 : f32 to vector<8x256xf32>
    %c0_305 = arith.constant 0 : index
    %c0_306 = arith.constant 0 : index
    %466 = vector.load %arg37[%c0_305, %c0_306] : memref<8x256xf32, #tpu.memory_space<vmem>>, vector<8x256xf32>
    tpu.vector_store %arg37[%c0_305, %c0_306], %465 {strides = array<i32>} : memref<8x256xf32, #tpu.memory_space<vmem>>, vector<8x256xf32>,
    %c0_307 = arith.constant 0 : index
    %c0_308 = arith.constant 0 : index
    %467 = vector.load %arg37[%c0_307, %c0_308] : memref<8x256xf32, #tpu.memory_space<vmem>>, vector<8x4xf32>
    tpu.vector_store %arg37[%c0_307, %c0_308], %408 {strides = array<i32>} : memref<8x256xf32, #tpu.memory_space<vmem>>, vector<8x4xf32>,
    %c0_309 = arith.constant 0 : index
    %c4_310 = arith.constant 4 : index
    %468 = vector.load %arg37[%c0_309, %c4_310] : memref<8x256xf32, #tpu.memory_space<vmem>>, vector<8x1xf32>
    tpu.vector_store %arg37[%c0_309, %c4_310], %464 {strides = array<i32>} : memref<8x256xf32, #tpu.memory_space<vmem>>, vector<8x1xf32>,
    %c0_311 = arith.constant 0 : index
    %c5_312 = arith.constant 5 : index
    %469 = vector.load %arg37[%c0_311, %c5_312] : memref<8x256xf32, #tpu.memory_space<vmem>>, vector<8x64xf32>
    tpu.vector_store %arg37[%c0_311, %c5_312], %39 {strides = array<i32>} : memref<8x256xf32, #tpu.memory_space<vmem>>, vector<8x64xf32>,
    %c0_313 = arith.constant 0 : index
    %c69 = arith.constant 69 : index
    %470 = vector.load %arg37[%c0_313, %c69] : memref<8x256xf32, #tpu.memory_space<vmem>>, vector<8x64xf32>
    tpu.vector_store %arg37[%c0_313, %c69], %356 {strides = array<i32>} : memref<8x256xf32, #tpu.memory_space<vmem>>, vector<8x64xf32>,
    return
  }
}

</mosaic_0001>

<llo_original>
// kernel: tcnrma_forward.1
$region0: #{tcnrma_forward.1}
  #allocation0 [shape = 'u32[]', space=smem, size = 0x4, offset = 0x4, fixed_abs, tag = 'smem constant byte address 0x4 - core index']
  #allocation1 [shape = 'u32[72,128]{1,0:T(1,128)}', space=vmem, size = 0x9000, scoped, tag = 'internal scratch']
  #allocation2 [shape = 'bf16[1024,512]{1,0:T(8,128)(2,1)}', space=vmem, size = 0x100000, scoped, tag = 'scratch operand']
  #allocation3 [shape = 'bf16[512,128]{1,0:T(8,128)(2,1)}', space=vmem, size = 0x20000, scoped, tag = 'scratch operand']
  #allocation4 [shape = 's32[2]{0}', space=sflag, size = 0x8, scoped, tag = 'scratch operand']
  #allocation5 [shape = 'f32[1,1]{1,0:T(1,128)S(1)}', space=vmem, size = 0x200, scoped, tag = 'scoped memory for tcnrma_forward.1']
  #allocation29 [shape = 's32[]', space=sflag, size = 0x4, offset = 0, fixed_abs, tag = 'sflag constant byte address 0x0 - dummy sync flag']
  #allocation30 [shape = 's32[]', space=sflag, size = 0x4, offset = 0, fixed_abs, tag = 'sflag constant byte address 0x0 - dummy sync flag']
  #allocation31 [shape = 'u32[]', space=smem, size = 0x4, offset = 0x44, fixed_abs, tag = 'smem constant byte address 0x44 - assertion arg 0']
  #allocation32 [shape = 'u32[]', space=smem, size = 0x4, offset = 0x48, fixed_abs, tag = 'smem constant byte address 0x48 - assertion arg 1']
  #allocation33 [shape = 's32[]', space=sflag, size = 0x4, offset = 0, fixed_abs, tag = 'sflag constant byte address 0x0 - dummy sync flag']
  #allocation34 [shape = 's32[]', space=sflag, size = 0x4, offset = 0, fixed_abs, tag = 'sflag constant byte address 0x0 - dummy sync flag']
  %s0 = inlined_call_operand.smem [shape: u32[38], index: -1, kind: input, shape index: {}]
  %s1 = sld [smem:[%s0]]
  %s2 = scalar_lea.smem %s0, 1
  %s3 = sld [smem:[%s2]]
  %s4 = scalar_lea.smem %s0, 2
  %s5 = sld [smem:[%s4]]
  %s6 = scalar_lea.smem %s0, 3
  %s7 = sld [smem:[%s6]]
  %s8 = scalar_lea.smem %s0, 4
  %s9 = sld [smem:[%s8]]
  %s10 = scalar_lea.smem %s0, 5
  %s11 = sld [smem:[%s10]]
  %s12 = scalar_lea.smem %s0, 6
  %s13 = sld [smem:[%s12]]
  %s14 = scalar_lea.smem %s0, 7
  %s15 = sld [smem:[%s14]]
  %s16 = scalar_lea.smem %s0, 8
  %s17 = sld [smem:[%s16]]
  %s18 = scalar_lea.smem %s0, 9
  %s19 = sld [smem:[%s18]]
  %s20 = scalar_lea.smem %s0, 10
  %s21 = sld [smem:[%s20]]
  %s22 = scalar_lea.smem %s0, 11
  %s23 = sld [smem:[%s22]]
  %s24 = scalar_lea.smem %s0, 12
  %s25 = sld [smem:[%s24]]
  %s26 = scalar_lea.smem %s0, 13
  %s27 = sld [smem:[%s26]]
  %s28 = scalar_lea.smem %s0, 14
  %s29 = sld [smem:[%s28]]
  %s30 = scalar_lea.smem %s0, 15
  %s31 = sld [smem:[%s30]]
  %s32 = scalar_lea.smem %s0, 16
  %s33 = sld [smem:[%s32]]
  %s34 = scalar_lea.smem %s0, 17
  %s35 = sld [smem:[%s34]]
  %s36 = scalar_lea.smem %s0, 18
  %s37 = sld [smem:[%s36]]
  %s38 = scalar_lea.smem %s0, 19
  %s39 = sld [smem:[%s38]]
  %s40 = scalar_lea.smem %s0, 20
  %s41 = sld [smem:[%s40]]
  %s42 = scalar_lea.smem %s0, 21
  %s43 = sld [smem:[%s42]]
  %s44 = scalar_lea.smem %s0, 22
  %s45 = sld [smem:[%s44]]
  %s46 = scalar_lea.smem %s0, 23
  %s47 = sld [smem:[%s46]]
  %s48 = scalar_lea.smem %s0, 24
  %s49 = sld [smem:[%s48]]
  %s50 = scalar_lea.smem %s0, 25
  %s51 = sld [smem:[%s50]]
  %s52 = scalar_lea.smem %s0, 26
  %s53 = sld [smem:[%s52]]
  %s54 = scalar_lea.smem %s0, 27
  %s55 = sld [smem:[%s54]]
  %s56 = scalar_lea.smem %s0, 28
  %s57 = sld [smem:[%s56]]
  %s58 = scalar_lea.smem %s0, 29
  %s59 = sld [smem:[%s58]]
  %s60 = scalar_lea.smem %s0, 30
  %s61 = sld [smem:[%s60]]
  %s62 = scalar_lea.smem %s0, 31
  %s63 = sld [smem:[%s62]]
  %s64 = scalar_lea.smem %s0, 32
  %s65 = sld [smem:[%s64]]
  %s66 = scalar_lea.smem %s0, 33
  %s67 = sld [smem:[%s66]]
  %s68 = scalar_lea.smem %s0, 34
  %s69 = sld [smem:[%s68]]
  %s70 = scalar_lea.smem %s0, 35
  %s71 = sld [smem:[%s70]]
  %s72 = scalar_lea.smem %s0, 36
  %s73 = sld [smem:[%s72]]
  %s74 = scalar_lea.smem %s0, 37
  %s75 = sld [smem:[%s74]]
  %s76 = sld [smem:[#allocation0]]
  $region218: #{tcnrma_forward.1} parent=0
    _
  %s78 = ssub.s32 1, %s76
  %s79 = scalar_select 0, %s78, %s76
  %v80 = vstv %s73
  %81 = vst [vmem:[#allocation5] sm:$0x1] %v80
  $region1: #{tcnrma_forward.1} parent=0
    #allocation6 [shape = 'u8[512]{0}', space=vmem, size = 0x400, scoped, tag = 'input window, operand 4, single buffered']
    #allocation7 [shape = 's32[1]{0}', space=sflag, size = 0x4, scoped, tag = 'scoped memory for tcnrma_forward.1']
    #allocation8 [shape = 'u8[512]{0}', space=vmem, size = 0x400, scoped, tag = 'input window, operand 6, single buffered']
    #allocation9 [shape = 's32[1]{0}', space=sflag, size = 0x4, scoped, tag = 'scoped memory for tcnrma_forward.1']
    #allocation10 [shape = 'u8[512]{0}', space=vmem, size = 0x400, scoped, tag = 'input window, operand 8, single buffered']
    #allocation11 [shape = 'u8[12288]{0}', space=vmem, size = 0x3000, scoped, tag = 'input window, operand 9, single buffered']
    #allocation12 [shape = 's32[1]{0}', space=sflag, size = 0x4, scoped, tag = 'scoped memory for tcnrma_forward.1']
    #allocation13 [shape = 'u8[512]{0}', space=vmem, size = 0x400, scoped, tag = 'input window, operand 10, single buffered']
    #allocation14 [shape = 'u8[49152]{0}', space=vmem, size = 0xc000, scoped, tag = 'input window, operand 11, single buffered']
    #allocation15 [shape = 's32[1]{0}', space=sflag, size = 0x4, scoped, tag = 'scoped memory for tcnrma_forward.1']
    #allocation16 [shape = 'u8[512]{0}', space=vmem, size = 0x400, scoped, tag = 'input window, operand 12, single buffered']
    #allocation17 [shape = 'u8[196608]{0}', space=vmem, size = 0x30000, scoped, tag = 'input window, operand 13, single buffered']
    #allocation18 [shape = 's32[1]{0}', space=sflag, size = 0x4, scoped, tag = 'scoped memory for tcnrma_forward.1']
    #allocation19 [shape = 'u8[512]{0}', space=vmem, size = 0x400, scoped, tag = 'input window, operand 18, single buffered']
    #allocation20 [shape = 'u8[262144]{0}', space=vmem, size = 0x40000, scoped, tag = 'input window, operand 22, single buffered']
    #allocation21 [shape = 's32[1]{0}', space=sflag, size = 0x4, scoped, tag = 'scoped memory for tcnrma_forward.1']
    #allocation22 [shape = 'u8[1024]{0}', space=vmem, size = 0x400, scoped, tag = 'input window, operand 23, single buffered']
    #allocation23 [shape = 'u8[512]{0}', space=vmem, size = 0x400, scoped, tag = 'input window, operand 25, single buffered']
    #allocation24 [shape = 's32[1]{0}', space=sflag, size = 0x4, scoped, tag = 'scoped memory for tcnrma_forward.1']
    #allocation25 [shape = 'u8[512]{0}', space=vmem, size = 0x400, scoped, tag = 'input window, operand 27, single buffered']
    #allocation26 [shape = 'u8[32768]{0}', space=vmem, size = 0x8000, scoped, tag = 'input window, operand 28, single buffered']
    #allocation27 [shape = 's32[1]{0}', space=sflag, size = 0x4, scoped, tag = 'scoped memory for tcnrma_forward.1']
    #allocation28 [shape = 'u8[512]{0}', space=vmem, size = 0x400, scoped, tag = 'input window, operand 34, single buffered']
    %82 = vsyncpa [#allocation7], 0
    %83 = vsyncpa [#allocation9], 0
    %84 = vsyncpa [#allocation12], 0
    %85 = vsyncpa [#allocation15], 0
    %86 = vsyncpa [#allocation18], 0
    %87 = vsyncpa [#allocation21], 0
    %88 = vsyncpa [#allocation24], 0
    %89 = vsyncpa [#allocation27], 0
    // Predicated region
    $region2: #{tcnrma_forward.1} parent=1 // pred_check
      _
    $region3: #{tcnrma_forward.1} parent=1 // pred_check_branch
      %91 = sbr.rel (0) target = $region5
    $region4: #{tcnrma_forward.1} parent=1 // pred_region
      _
    $region5: #{tcnrma_forward.1} parent=1 // pred_fallthru
      _
    // Predicated region
    $region6: #{tcnrma_forward.1} parent=1 // pred_check
      _
    $region7: #{tcnrma_forward.1} parent=1 // pred_check_branch
      %93 = sbr.rel (0) target = $region9
    $region8: #{tcnrma_forward.1} parent=1 // pred_region
      _
    $region9: #{tcnrma_forward.1} parent=1 // pred_fallthru
      _
    // Predicated region
    $region10: #{tcnrma_forward.1} parent=1 // pred_check
      _
    $region11: #{tcnrma_forward.1} parent=1 // pred_check_branch
      %95 = sbr.rel (0) target = $region13
    $region12: #{tcnrma_forward.1} parent=1 // pred_region
      _
    $region13: #{tcnrma_forward.1} parent=1 // pred_fallthru
      _
    // Predicated region
    $region14: #{tcnrma_forward.1} parent=1 // pred_check
      _
    $region15: #{tcnrma_forward.1} parent=1 // pred_check_branch
      %97 = sbr.rel (0) target = $region17
    $region16: #{tcnrma_forward.1} parent=1 // pred_region
      _
    $region17: #{tcnrma_forward.1} parent=1 // pred_fallthru
      _
    // Predicated region
    $region18: #{tcnrma_forward.1} parent=1 // pred_check
      _
    $region19: #{tcnrma_forward.1} parent=1 // pred_check_branch
      %99 = sbr.rel (0) target = $region21
    $region20: #{tcnrma_forward.1} parent=1 // pred_region
      %101 = vsyncadd [#allocation7], 0
      %s103 = sshll.u32 %s9, 4
      %s104 = int_to_ptr.hbm [resolvable:$true] %s103
      %s105 = sshll.u32 [#allocation6], 4
      %s106 = int_to_ptr.vmem [resolvable:$true] %s105
      %108 = dma.hbm_to_vmem [thread:$0]  %s104, 16, %s106, [#allocation7]
    $region21: #{tcnrma_forward.1} parent=1 // pred_fallthru
      _
    // Predicated region
    $region22: #{tcnrma_forward.1} parent=1 // pred_check
      _
    $region23: #{tcnrma_forward.1} parent=1 // pred_check_branch
      %110 = sbr.rel (0) target = $region25
    $region24: #{tcnrma_forward.1} parent=1 // pred_region
      _
    $region25: #{tcnrma_forward.1} parent=1 // pred_fallthru
      _
    // Predicated region
    $region26: #{tcnrma_forward.1} parent=1 // pred_check
      _
    $region27: #{tcnrma_forward.1} parent=1 // pred_check_branch
      %112 = sbr.rel (0) target = $region29
    $region28: #{tcnrma_forward.1} parent=1 // pred_region
      %114 = vsyncadd [#allocation9], 0
      %s116 = sshll.u32 %s13, 4
      %s117 = int_to_ptr.hbm [resolvable:$true] %s116
      %s118 = sshll.u32 [#allocation8], 4
      %s119 = int_to_ptr.vmem [resolvable:$true] %s118
      %121 = dma.hbm_to_vmem [thread:$0]  %s117, 16, %s119, [#allocation9]
    $region29: #{tcnrma_forward.1} parent=1 // pred_fallthru
      _
    // Predicated region
    $region30: #{tcnrma_forward.1} parent=1 // pred_check
      _
    $region31: #{tcnrma_forward.1} parent=1 // pred_check_branch
      %123 = sbr.rel (0) target = $region33
    $region32: #{tcnrma_forward.1} parent=1 // pred_region
      _
    $region33: #{tcnrma_forward.1} parent=1 // pred_fallthru
      _
    // Predicated region
    $region34: #{tcnrma_forward.1} parent=1 // pred_check
      _
    $region35: #{tcnrma_forward.1} parent=1 // pred_check_branch
      %125 = sbr.rel (0) target = $region37
    $region36: #{tcnrma_forward.1} parent=1 // pred_region
      %127 = vsyncadd [#allocation9], 0
      %s129 = sshll.u32 %s17, 4
      %s130 = int_to_ptr.hbm [resolvable:$true] %s129
      %s131 = sshll.u32 [#allocation10], 4
      %s132 = int_to_ptr.vmem [resolvable:$true] %s131
      %134 = dma.hbm_to_vmem [thread:$0]  %s130, 16, %s132, [#allocation9]
    $region37: #{tcnrma_forward.1} parent=1 // pred_fallthru
      _
    // Predicated region
    $region38: #{tcnrma_forward.1} parent=1 // pred_check
      _
    $region39: #{tcnrma_forward.1} parent=1 // pred_check_branch
      %136 = sbr.rel (0) target = $region41
    $region40: #{tcnrma_forward.1} parent=1 // pred_region
      %138 = vsyncadd [#allocation12], 0
      %s139 = sshll.u32 %s19, 4
      %s140 = int_to_ptr.hbm [resolvable:$true] %s139
      %s141 = sshll.u32 [#allocation11], 4
      %s142 = int_to_ptr.vmem [resolvable:$true] %s141
      %147 = dma.hbm_to_vmem [thread:$0]  %s140, 384, %s142, [#allocation12], 64, 64, 4
    $region41: #{tcnrma_forward.1} parent=1 // pred_fallthru
      _
    // Predicated region
    $region42: #{tcnrma_forward.1} parent=1 // pred_check
      _
    $region43: #{tcnrma_forward.1} parent=1 // pred_check_branch
      %149 = sbr.rel (0) target = $region45
    $region44: #{tcnrma_forward.1} parent=1 // pred_region
      %151 = vsyncadd [#allocation12], 0
      %s153 = sshll.u32 %s21, 4
      %s154 = int_to_ptr.hbm [resolvable:$true] %s153
      %s155 = sshll.u32 [#allocation13], 4
      %s156 = int_to_ptr.vmem [resolvable:$true] %s155
      %158 = dma.hbm_to_vmem [thread:$0]  %s154, 16, %s156, [#allocation12]
    $region45: #{tcnrma_forward.1} parent=1 // pred_fallthru
      _
    // Predicated region
    $region46: #{tcnrma_forward.1} parent=1 // pred_check
      _
    $region47: #{tcnrma_forward.1} parent=1 // pred_check_branch
      %160 = sbr.rel (0) target = $region49
    $region48: #{tcnrma_forward.1} parent=1 // pred_region
      %162 = vsyncadd [#allocation15], 0
      %s163 = sshll.u32 %s23, 4
      %s164 = int_to_ptr.hbm [resolvable:$true] %s163
      %s165 = sshll.u32 [#allocation14], 4
      %s166 = int_to_ptr.vmem [resolvable:$true] %s165
      %171 = dma.hbm_to_vmem [thread:$0]  %s164, 1536, %s166, [#allocation15], 64, 64, 4
    $region49: #{tcnrma_forward.1} parent=1 // pred_fallthru
      _
    // Predicated region
    $region50: #{tcnrma_forward.1} parent=1 // pred_check
      _
    $region51: #{tcnrma_forward.1} parent=1 // pred_check_branch
      %173 = sbr.rel (0) target = $region53
    $region52: #{tcnrma_forward.1} parent=1 // pred_region
      %175 = vsyncadd [#allocation15], 0
      %s177 = sshll.u32 %s25, 4
      %s178 = int_to_ptr.hbm [resolvable:$true] %s177
      %s179 = sshll.u32 [#allocation16], 4
      %s180 = int_to_ptr.vmem [resolvable:$true] %s179
      %182 = dma.hbm_to_vmem [thread:$0]  %s178, 16, %s180, [#allocation15]
    $region53: #{tcnrma_forward.1} parent=1 // pred_fallthru
      _
    // Predicated region
    $region54: #{tcnrma_forward.1} parent=1 // pred_check
      _
    $region55: #{tcnrma_forward.1} parent=1 // pred_check_branch
      %184 = sbr.rel (0) target = $region57
    $region56: #{tcnrma_forward.1} parent=1 // pred_region
      %186 = vsyncadd [#allocation18], 0
      %s187 = sshll.u32 %s27, 4
      %s188 = int_to_ptr.hbm [resolvable:$true] %s187
      %s189 = sshll.u32 [#allocation17], 4
      %s190 = int_to_ptr.vmem [resolvable:$true] %s189
      %195 = dma.hbm_to_vmem [thread:$0]  %s188, 6144, %s190, [#allocation18], 128, 128, 8
    $region57: #{tcnrma_forward.1} parent=1 // pred_fallthru
      _
    // Predicated region
    $region58: #{tcnrma_forward.1} parent=1 // pred_check
      _
    $region59: #{tcnrma_forward.1} parent=1 // pred_check_branch
      %197 = sbr.rel (0) target = $region61
    $region60: #{tcnrma_forward.1} parent=1 // pred_region
      _
    $region61: #{tcnrma_forward.1} parent=1 // pred_fallthru
      _
    // Predicated region
    $region62: #{tcnrma_forward.1} parent=1 // pred_check
      _
    $region63: #{tcnrma_forward.1} parent=1 // pred_check_branch
      %199 = sbr.rel (0) target = $region65
    $region64: #{tcnrma_forward.1} parent=1 // pred_region
      _
    $region65: #{tcnrma_forward.1} parent=1 // pred_fallthru
      _
    // Predicated region
    $region66: #{tcnrma_forward.1} parent=1 // pred_check
      _
    $region67: #{tcnrma_forward.1} parent=1 // pred_check_branch
      %201 = sbr.rel (0) target = $region69
    $region68: #{tcnrma_forward.1} parent=1 // pred_region
      _
    $region69: #{tcnrma_forward.1} parent=1 // pred_fallthru
      _
    // Predicated region
    $region70: #{tcnrma_forward.1} parent=1 // pred_check
      _
    $region71: #{tcnrma_forward.1} parent=1 // pred_check_branch
      %203 = sbr.rel (0) target = $region73
    $region72: #{tcnrma_forward.1} parent=1 // pred_region
      _
    $region73: #{tcnrma_forward.1} parent=1 // pred_fallthru
      _
    // Predicated region
    $region74: #{tcnrma_forward.1} parent=1 // pred_check
      _
    $region75: #{tcnrma_forward.1} parent=1 // pred_check_branch
      %205 = sbr.rel (0) target = $region77
    $region76: #{tcnrma_forward.1} parent=1 // pred_region
      %207 = vsyncadd [#allocation18], 0
      %s209 = sshll.u32 %s37, 4
      %s210 = int_to_ptr.hbm [resolvable:$true] %s209
      %s211 = sshll.u32 [#allocation19], 4
      %s212 = int_to_ptr.vmem [resolvable:$true] %s211
      %214 = dma.hbm_to_vmem [thread:$0]  %s210, 16, %s212, [#allocation18]
    $region77: #{tcnrma_forward.1} parent=1 // pred_fallthru
      _
    // Predicated region
    $region78: #{tcnrma_forward.1} parent=1 // pred_check
      _
    $region79: #{tcnrma_forward.1} parent=1 // pred_check_branch
      %216 = sbr.rel (0) target = $region81
    $region80: #{tcnrma_forward.1} parent=1 // pred_region
      _
    $region81: #{tcnrma_forward.1} parent=1 // pred_fallthru
      _
    // Predicated region
    $region82: #{tcnrma_forward.1} parent=1 // pred_check
      _
    $region83: #{tcnrma_forward.1} parent=1 // pred_check_branch
      %218 = sbr.rel (0) target = $region85
    $region84: #{tcnrma_forward.1} parent=1 // pred_region
      _
    $region85: #{tcnrma_forward.1} parent=1 // pred_fallthru
      _
    // Predicated region
    $region86: #{tcnrma_forward.1} parent=1 // pred_check
      _
    $region87: #{tcnrma_forward.1} parent=1 // pred_check_branch
      %220 = sbr.rel (0) target = $region89
    $region88: #{tcnrma_forward.1} parent=1 // pred_region
      _
    $region89: #{tcnrma_forward.1} parent=1 // pred_fallthru
      _
    // Predicated region
    $region90: #{tcnrma_forward.1} parent=1 // pred_check
      _
    $region91: #{tcnrma_forward.1} parent=1 // pred_check_branch
      %222 = sbr.rel (0) target = $region93
    $region92: #{tcnrma_forward.1} parent=1 // pred_region
      %224 = vsyncadd [#allocation21], 0
      %s225 = sshll.u32 %s45, 4
      %s226 = int_to_ptr.hbm [resolvable:$true] %s225
      %s227 = sshll.u32 [#allocation20], 4
      %s228 = int_to_ptr.vmem [resolvable:$true] %s227
      %233 = dma.hbm_to_vmem [thread:$0]  %s226, 8192, %s228, [#allocation21], 128, 128, 8
    $region93: #{tcnrma_forward.1} parent=1 // pred_fallthru
      _
    // Predicated region
    $region94: #{tcnrma_forward.1} parent=1 // pred_check
      _
    $region95: #{tcnrma_forward.1} parent=1 // pred_check_branch
      %235 = sbr.rel (0) target = $region97
    $region96: #{tcnrma_forward.1} parent=1 // pred_region
      %237 = vsyncadd [#allocation21], 0
      %s239 = sshll.u32 %s47, 4
      %s240 = int_to_ptr.hbm [resolvable:$true] %s239
      %s241 = sshll.u32 [#allocation22], 4
      %s242 = int_to_ptr.vmem [resolvable:$true] %s241
      %244 = dma.hbm_to_vmem [thread:$0]  %s240, 32, %s242, [#allocation21]
    $region97: #{tcnrma_forward.1} parent=1 // pred_fallthru
      _
    // Predicated region
    $region98: #{tcnrma_forward.1} parent=1 // pred_check
      _
    $region99: #{tcnrma_forward.1} parent=1 // pred_check_branch
      %246 = sbr.rel (0) target = $region101
    $region100: #{tcnrma_forward.1} parent=1 // pred_region
      _
    $region101: #{tcnrma_forward.1} parent=1 // pred_fallthru
      _
    // Predicated region
    $region102: #{tcnrma_forward.1} parent=1 // pred_check
      _
    $region103: #{tcnrma_forward.1} parent=1 // pred_check_branch
      %248 = sbr.rel (0) target = $region105
    $region104: #{tcnrma_forward.1} parent=1 // pred_region
      %250 = vsyncadd [#allocation24], 0
      %s252 = sshll.u32 %s51, 4
      %s253 = int_to_ptr.hbm [resolvable:$true] %s252
      %s254 = sshll.u32 [#allocation23], 4
      %s255 = int_to_ptr.vmem [resolvable:$true] %s254
      %257 = dma.hbm_to_vmem [thread:$0]  %s253, 16, %s255, [#allocation24]
    $region105: #{tcnrma_forward.1} parent=1 // pred_fallthru
      _
    // Predicated region
    $region106: #{tcnrma_forward.1} parent=1 // pred_check
      _
    $region107: #{tcnrma_forward.1} parent=1 // pred_check_branch
      %259 = sbr.rel (0) target = $region109
    $region108: #{tcnrma_forward.1} parent=1 // pred_region
      _
    $region109: #{tcnrma_forward.1} parent=1 // pred_fallthru
      _
    // Predicated region
    $region110: #{tcnrma_forward.1} parent=1 // pred_check
      _
    $region111: #{tcnrma_forward.1} parent=1 // pred_check_branch
      %261 = sbr.rel (0) target = $region113
    $region112: #{tcnrma_forward.1} parent=1 // pred_region
      %263 = vsyncadd [#allocation24], 0
      %s265 = sshll.u32 %s55, 4
      %s266 = int_to_ptr.hbm [resolvable:$true] %s265
      %s267 = sshll.u32 [#allocation25], 4
      %s268 = int_to_ptr.vmem [resolvable:$true] %s267
      %270 = dma.hbm_to_vmem [thread:$0]  %s266, 16, %s268, [#allocation24]
    $region113: #{tcnrma_forward.1} parent=1 // pred_fallthru
      _
    // Predicated region
    $region114: #{tcnrma_forward.1} parent=1 // pred_check
      _
    $region115: #{tcnrma_forward.1} parent=1 // pred_check_branch
      %272 = sbr.rel (0) target = $region117
    $region116: #{tcnrma_forward.1} parent=1 // pred_region
      %274 = vsyncadd [#allocation27], 0
      %s275 = sshll.u32 %s57, 4
      %s276 = int_to_ptr.hbm [resolvable:$true] %s275
      %s277 = sshll.u32 [#allocation26], 4
      %s278 = int_to_ptr.vmem [resolvable:$true] %s277
      %283 = dma.hbm_to_vmem [thread:$0]  %s276, 1024, %s278, [#allocation27], 512, 512, 32
    $region117: #{tcnrma_forward.1} parent=1 // pred_fallthru
      _
    // Predicated region
    $region118: #{tcnrma_forward.1} parent=1 // pred_check
      _
    $region119: #{tcnrma_forward.1} parent=1 // pred_check_branch
      %285 = sbr.rel (0) target = $region121
    $region120: #{tcnrma_forward.1} parent=1 // pred_region
      _
    $region121: #{tcnrma_forward.1} parent=1 // pred_fallthru
      _
    // Predicated region
    $region122: #{tcnrma_forward.1} parent=1 // pred_check
      _
    $region123: #{tcnrma_forward.1} parent=1 // pred_check_branch
      %287 = sbr.rel (0) target = $region125
    $region124: #{tcnrma_forward.1} parent=1 // pred_region
      _
    $region125: #{tcnrma_forward.1} parent=1 // pred_fallthru
      _
    // Predicated region
    $region126: #{tcnrma_forward.1} parent=1 // pred_check
      _
    $region127: #{tcnrma_forward.1} parent=1 // pred_check_branch
      %289 = sbr.rel (0) target = $region129
    $region128: #{tcnrma_forward.1} parent=1 // pred_region
      _
    $region129: #{tcnrma_forward.1} parent=1 // pred_fallthru
      _
    // Predicated region
    $region130: #{tcnrma_forward.1} parent=1 // pred_check
      _
    $region131: #{tcnrma_forward.1} parent=1 // pred_check_branch
      %291 = sbr.rel (0) target = $region133
    $region132: #{tcnrma_forward.1} parent=1 // pred_region
      %293 = vsyncadd [#allocation27], 0
      %s295 = sshll.u32 %s69, 4
      %s296 = int_to_ptr.hbm [resolvable:$true] %s295
      %s297 = sshll.u32 [#allocation28], 4
      %s298 = int_to_ptr.vmem [resolvable:$true] %s297
      %300 = dma.hbm_to_vmem [thread:$0]  %s296, 16, %s298, [#allocation27]
    $region133: #{tcnrma_forward.1} parent=1 // pred_fallthru
      _
    // Predicated region
    $region134: #{tcnrma_forward.1} parent=1 // pred_check
      _
    $region135: #{tcnrma_forward.1} parent=1 // pred_check_branch
      %302 = sbr.rel (0) target = $region137
    $region136: #{tcnrma_forward.1} parent=1 // pred_region
      _
    $region137: #{tcnrma_forward.1} parent=1 // pred_fallthru
      _
    // Predicated region
    $region138: #{tcnrma_forward.1} parent=1 // pred_check
      _
    $region139: #{tcnrma_forward.1} parent=1 // pred_check_branch
      %304 = sbr.rel (0) target = $region141
    $region140: #{tcnrma_forward.1} parent=1 // pred_region
      _
    $region141: #{tcnrma_forward.1} parent=1 // pred_fallthru
      _
    // Predicated region
    $region142: #{tcnrma_forward.1} parent=1 // pred_check
      _
    $region143: #{tcnrma_forward.1} parent=1 // pred_check_branch
      %306 = sbr.rel (0) target = $region145
    $region144: #{tcnrma_forward.1} parent=1 // pred_region
      %308 = dma.done [#allocation7], 16
    $region145: #{tcnrma_forward.1} parent=1 // pred_fallthru
      _
    // Predicated region
    $region146: #{tcnrma_forward.1} parent=1 // pred_check
      _
    $region147: #{tcnrma_forward.1} parent=1 // pred_check_branch
      %310 = sbr.rel (0) target = $region149
    $region148: #{tcnrma_forward.1} parent=1 // pred_region
      %312 = dma.done [#allocation9], 16
    $region149: #{tcnrma_forward.1} parent=1 // pred_fallthru
      _
    // Predicated region
    $region150: #{tcnrma_forward.1} parent=1 // pred_check
      _
    $region151: #{tcnrma_forward.1} parent=1 // pred_check_branch
      %314 = sbr.rel (0) target = $region153
    $region152: #{tcnrma_forward.1} parent=1 // pred_region
      %316 = dma.done [#allocation9], 16
    $region153: #{tcnrma_forward.1} parent=1 // pred_fallthru
      _
    // Predicated region
    $region154: #{tcnrma_forward.1} parent=1 // pred_check
      _
    $region155: #{tcnrma_forward.1} parent=1 // pred_check_branch
      %318 = sbr.rel (0) target = $region157
    $region156: #{tcnrma_forward.1} parent=1 // pred_region
      %320 = dma.done [#allocation12], 384
    $region157: #{tcnrma_forward.1} parent=1 // pred_fallthru
      _
    // Predicated region
    $region158: #{tcnrma_forward.1} parent=1 // pred_check
      _
    $region159: #{tcnrma_forward.1} parent=1 // pred_check_branch
      %322 = sbr.rel (0) target = $region161
    $region160: #{tcnrma_forward.1} parent=1 // pred_region
      %324 = dma.done [#allocation12], 16
    $region161: #{tcnrma_forward.1} parent=1 // pred_fallthru
      _
    // Predicated region
    $region162: #{tcnrma_forward.1} parent=1 // pred_check
      _
    $region163: #{tcnrma_forward.1} parent=1 // pred_check_branch
      %326 = sbr.rel (0) target = $region165
    $region164: #{tcnrma_forward.1} parent=1 // pred_region
      %328 = dma.done [#allocation15], 1536
    $region165: #{tcnrma_forward.1} parent=1 // pred_fallthru
      _
    // Predicated region
    $region166: #{tcnrma_forward.1} parent=1 // pred_check
      _
    $region167: #{tcnrma_forward.1} parent=1 // pred_check_branch
      %330 = sbr.rel (0) target = $region169
    $region168: #{tcnrma_forward.1} parent=1 // pred_region
      %332 = dma.done [#allocation15], 16
    $region169: #{tcnrma_forward.1} parent=1 // pred_fallthru
      _
    // Predicated region
    $region170: #{tcnrma_forward.1} parent=1 // pred_check
      _
    $region171: #{tcnrma_forward.1} parent=1 // pred_check_branch
      %334 = sbr.rel (0) target = $region173
    $region172: #{tcnrma_forward.1} parent=1 // pred_region
      %336 = dma.done [#allocation18], 6144
    $region173: #{tcnrma_forward.1} parent=1 // pred_fallthru
      _
    // Predicated region
    $region174: #{tcnrma_forward.1} parent=1 // pred_check
      _
    $region175: #{tcnrma_forward.1} parent=1 // pred_check_branch
      %338 = sbr.rel (0) target = $region177
    $region176: #{tcnrma_forward.1} parent=1 // pred_region
      %340 = dma.done [#allocation18], 16
    $region177: #{tcnrma_forward.1} parent=1 // pred_fallthru
      _
    // Predicated region
    $region178: #{tcnrma_forward.1} parent=1 // pred_check
      _
    $region179: #{tcnrma_forward.1} parent=1 // pred_check_branch
      %342 = sbr.rel (0) target = $region181
    $region180: #{tcnrma_forward.1} parent=1 // pred_region
      %344 = dma.done [#allocation21], 8192
    $region181: #{tcnrma_forward.1} parent=1 // pred_fallthru
      _
    // Predicated region
    $region182: #{tcnrma_forward.1} parent=1 // pred_check
      _
    $region183: #{tcnrma_forward.1} parent=1 // pred_check_branch
      %346 = sbr.rel (0) target = $region185
    $region184: #{tcnrma_forward.1} parent=1 // pred_region
      %348 = dma.done [#allocation21], 32
    $region185: #{tcnrma_forward.1} parent=1 // pred_fallthru
      _
    // Predicated region
    $region186: #{tcnrma_forward.1} parent=1 // pred_check
      _
    $region187: #{tcnrma_forward.1} parent=1 // pred_check_branch
      %350 = sbr.rel (0) target = $region189
    $region188: #{tcnrma_forward.1} parent=1 // pred_region
      %352 = dma.done [#allocation24], 16
    $region189: #{tcnrma_forward.1} parent=1 // pred_fallthru
      _
    // Predicated region
    $region190: #{tcnrma_forward.1} parent=1 // pred_check
      _
    $region191: #{tcnrma_forward.1} parent=1 // pred_check_branch
      %354 = sbr.rel (0) target = $region193
    $region192: #{tcnrma_forward.1} parent=1 // pred_region
      %356 = dma.done [#allocation24], 16
    $region193: #{tcnrma_forward.1} parent=1 // pred_fallthru
      _
    // Predicated region
    $region194: #{tcnrma_forward.1} parent=1 // pred_check
      _
    $region195: #{tcnrma_forward.1} parent=1 // pred_check_branch
      %358 = sbr.rel (0) target = $region197
    $region196: #{tcnrma_forward.1} parent=1 // pred_region
      %360 = dma.done [#allocation27], 1024
    $region197: #{tcnrma_forward.1} parent=1 // pred_fallthru
      _
    // Predicated region
    $region198: #{tcnrma_forward.1} parent=1 // pred_check
      _
    $region199: #{tcnrma_forward.1} parent=1 // pred_check_branch
      %362 = sbr.rel (0) target = $region201
    $region200: #{tcnrma_forward.1} parent=1 // pred_region
      %364 = dma.done [#allocation27], 16
    $region201: #{tcnrma_forward.1} parent=1 // pred_fallthru
      _
    // Predicated region
    $region202: #{tcnrma_forward.1} parent=1 // pred_check
      _
    $region203: #{tcnrma_forward.1} parent=1 // pred_check_branch
      %367 = sbr.rel target = $region205
    $region204: #{tcnrma_forward.1} parent=1 // pred_region
      %368 = sst [smem:[#allocation31]] [#allocation30]
      %369 = sst [smem:[#allocation32]] [#allocation29]
    $region205: #{tcnrma_forward.1} parent=1 // pred_fallthru
      _
    %371 = shalt.err (0)
    %s373 = sshll.u32 %s63, 4
    %s374 = int_to_ptr.hbm [resolvable:$true] %s373
    %s375 = sshll.u32 [#allocation2], 4
    %s376 = int_to_ptr.vmem [resolvable:$true] %s375
    %378 = dma.hbm_to_vmem [thread:$0]  %s374, 32768, %s376, [#allocation4]
    %s379 = scalar_lea.sflag [#allocation4], 1
    // Predicated region
    $region206: #{tcnrma_forward.1} parent=1 // pred_check
      _
    $region207: #{tcnrma_forward.1} parent=1 // pred_check_branch
      %381 = sbr.rel target = $region209
    $region208: #{tcnrma_forward.1} parent=1 // pred_region
      %382 = sst [smem:[#allocation31]] [#allocation34]
      %383 = sst [smem:[#allocation32]] [#allocation33]
    $region209: #{tcnrma_forward.1} parent=1 // pred_fallthru
      _
    %385 = shalt.err (0)
    %s387 = sshll.u32 %s67, 4
    %s388 = int_to_ptr.hbm [resolvable:$true] %s387
    %s389 = sshll.u32 [#allocation3], 4
    %s390 = int_to_ptr.vmem [resolvable:$true] %s389
    %392 = dma.hbm_to_vmem [thread:$0]  %s388, 4096, %s390, %s379
    %v393 = vld [vmem:[%s1] sm:$0xff]
    %v394 = vld [vmem:[%s3] sm:$0xff]
    %v395 = vld [vmem:[%s7] sm:$0xf]
    %v396 = vld [vmem:[#allocation6] sm:$0x1]
    %v397 = vpack.c.bf16 %v394, %v394
    %v399 = vperm.slane %v396, 0
    %vm401 = vcmask 64512
    %v403 = vsel %vm401, %v397, 0
    %vm405 = vcmask 1043456
    %v407 = vsel %vm405, %v395, 0
    %409 = vmatpush.bf16.msra.mxu0 0
    %410 = vmatpush.bf16.msra.mxu0 0
    %411 = vmatpush.bf16.msra.mxu0 0
    %412 = vmatpush.bf16.msra.mxu0 0
    %413 = vmatpush.bf16.msra.mxu0 0
    %414 = vmatpush.bf16.msra.mxu0 0
    %415 = vmatpush.bf16.msra.mxu0 0
    %416 = vmatpush.bf16.msra.mxu0 %v407
    %417 = vmatmul.bf16.gmra.mxu0 %v403
    %v418 = vpop.f32.mrf.mxu0
    %v419 = vadd.f32 %v399, %v418
    %v420 = vpop.f32.mrf.mxu0
    %421 = vdwg.mxu0
    %vm422 = vcmp.gt.f32.partialorder %v419, 0.0
    %v423 = vmin.f32 %v419, 0.0
    %v424 = vmul.f32 %v423, 1.442695
    %v425 = vpow.pop %v424
    %v426 = vsub.f32 %v425, 1.0
    %v427 = vsel %vm422, %v419, %v426
    %v428 = vld [vmem:[%s11] sm:$0xf]
    %v429 = vld [vmem:[%s11 + $0x4] sm:$0xf]
    %v430 = vld [vmem:[%s11 + $0x8] sm:$0xf]
    %v431 = vld [vmem:[%s11 + $0xc] sm:$0xf]
    %v432 = vld [vmem:[%s11 + $0x10] sm:$0xf]
    %v433 = vld [vmem:[%s11 + $0x14] sm:$0xf]
    %v434 = vld [vmem:[%s11 + $0x18] sm:$0xf]
    %v435 = vld [vmem:[%s11 + $0x1c] sm:$0xf]
    %v436 = vld [vmem:[%s11 + $0x20] sm:$0xf]
    %v437 = vld [vmem:[%s11 + $0x24] sm:$0xf]
    %v438 = vld [vmem:[%s11 + $0x28] sm:$0xf]
    %v439 = vld [vmem:[%s11 + $0x2c] sm:$0xf]
    %v440 = vld [vmem:[%s11 + $0x30] sm:$0xf]
    %v441 = vld [vmem:[%s11 + $0x34] sm:$0xf]
    %v442 = vld [vmem:[%s11 + $0x38] sm:$0xf]
    %v443 = vld [vmem:[%s11 + $0x3c] sm:$0xf]
    %v444 = vld [vmem:[#allocation8] sm:$0x1]
    %v445 = vpack.c.bf16 %v427, %v427
    %v447 = vperm.slane %v444, 0
    %v465 = vunpack.c.l.b16 %v428
    %v466 = vunpack.c.l.b16 %v429
    %v467 = vunpack.c.l.b16 %v430
    %v468 = vunpack.c.l.b16 %v431
    %v469 = vunpack.c.l.b16 %v432
    %v470 = vunpack.c.l.b16 %v433
    %v471 = vunpack.c.l.b16 %v434
    %v472 = vunpack.c.l.b16 %v435
    %v473 = vunpack.c.l.b16 %v436
    %v474 = vunpack.c.l.b16 %v437
    %v475 = vunpack.c.l.b16 %v438
    %v476 = vunpack.c.l.b16 %v439
    %v477 = vunpack.c.l.b16 %v440
    %v478 = vunpack.c.l.b16 %v441
    %v479 = vunpack.c.l.b16 %v442
    %v480 = vunpack.c.l.b16 %v443
    %v481 = vpack.c.b16 %v466, %v465
    %v482 = vpack.c.b16 %v468, %v467
    %v483 = vpack.c.b16 %v470, %v469
    %v484 = vpack.c.b16 %v472, %v471
    %v485 = vpack.c.b16 %v474, %v473
    %v486 = vpack.c.b16 %v476, %v475
    %v487 = vpack.c.b16 %v478, %v477
    %v488 = vpack.c.b16 %v480, %v479
    %497 = vmatpush.bf16.msra.mxu0 %v488
    %498 = vmatpush.bf16.msra.mxu0 %v487
    %499 = vmatpush.bf16.msra.mxu0 %v486
    %500 = vmatpush.bf16.msra.mxu0 %v485
    %501 = vmatpush.bf16.msra.mxu0 %v484
    %502 = vmatpush.bf16.msra.mxu0 %v483
    %503 = vmatpush.bf16.msra.mxu0 %v482
    %504 = vmatpush.bf16.msra.mxu0 %v481
    %505 = vmatmul.bf16.gmra.mxu0 %v445
    %v506 = vpop.f32.mrf.mxu0
    %v507 = vadd.f32 %v447, %v506
    %v508 = vpop.f32.mrf.mxu0
    %509 = vdwg.mxu0
    %vm510 = vcmp.gt.f32.partialorder %v507, 0.0
    %v511 = vmin.f32 %v507, 0.0
    %v512 = vmul.f32 %v511, 1.442695
    %v513 = vpow.pop %v512
    %v514 = vsub.f32 %v513, 1.0
    %v515 = vsel %vm510, %v507, %v514
    %v516 = vld [vmem:[%s15] sm:$0xf]
    %v517 = vld [vmem:[%s15 + $0x4] sm:$0xf]
    %v518 = vld [vmem:[%s15 + $0x8] sm:$0xf]
    %v519 = vld [vmem:[%s15 + $0xc] sm:$0xf]
    %v520 = vld [vmem:[%s15 + $0x10] sm:$0xf]
    %v521 = vld [vmem:[%s15 + $0x14] sm:$0xf]
    %v522 = vld [vmem:[%s15 + $0x18] sm:$0xf]
    %v523 = vld [vmem:[%s15 + $0x1c] sm:$0xf]
    %v524 = vld [vmem:[%s15 + $0x20] sm:$0xf]
    %v525 = vld [vmem:[%s15 + $0x24] sm:$0xf]
    %v526 = vld [vmem:[%s15 + $0x28] sm:$0xf]
    %v527 = vld [vmem:[%s15 + $0x2c] sm:$0xf]
    %v528 = vld [vmem:[%s15 + $0x30] sm:$0xf]
    %v529 = vld [vmem:[%s15 + $0x34] sm:$0xf]
    %v530 = vld [vmem:[%s15 + $0x38] sm:$0xf]
    %v531 = vld [vmem:[%s15 + $0x3c] sm:$0xf]
    %v532 = vld [vmem:[#allocation10] sm:$0x1]
    %v533 = vpack.c.bf16 %v515, %v515
    %v535 = vperm.slane %v532, 0
    %v553 = vunpack.c.l.b16 %v516
    %v554 = vunpack.c.l.b16 %v517
    %v555 = vunpack.c.l.b16 %v518
    %v556 = vunpack.c.l.b16 %v519
    %v557 = vunpack.c.l.b16 %v520
    %v558 = vunpack.c.l.b16 %v521
    %v559 = vunpack.c.l.b16 %v522
    %v560 = vunpack.c.l.b16 %v523
    %v561 = vunpack.c.l.b16 %v524
    %v562 = vunpack.c.l.b16 %v525
    %v563 = vunpack.c.l.b16 %v526
    %v564 = vunpack.c.l.b16 %v527
    %v565 = vunpack.c.l.b16 %v528
    %v566 = vunpack.c.l.b16 %v529
    %v567 = vunpack.c.l.b16 %v530
    %v568 = vunpack.c.l.b16 %v531
    %v569 = vpack.c.b16 %v554, %v553
    %v570 = vpack.c.b16 %v556, %v555
    %v571 = vpack.c.b16 %v558, %v557
    %v572 = vpack.c.b16 %v560, %v559
    %v573 = vpack.c.b16 %v562, %v561
    %v574 = vpack.c.b16 %v564, %v563
    %v575 = vpack.c.b16 %v566, %v565
    %v576 = vpack.c.b16 %v568, %v567
    %585 = vmatpush.bf16.msra.mxu0 %v576
    %586 = vmatpush.bf16.msra.mxu0 %v575
    %587 = vmatpush.bf16.msra.mxu0 %v574
    %588 = vmatpush.bf16.msra.mxu0 %v573
    %589 = vmatpush.bf16.msra.mxu0 %v572
    %590 = vmatpush.bf16.msra.mxu0 %v571
    %591 = vmatpush.bf16.msra.mxu0 %v570
    %592 = vmatpush.bf16.msra.mxu0 %v569
    %593 = vmatmul.bf16.gmra.mxu0 %v533
    %v594 = vpop.f32.mrf.mxu0
    %v595 = vadd.f32 %v535, %v594
    %v596 = vpop.f32.mrf.mxu0
    %597 = vdwg.mxu0
    %v598 = vld [vmem:[%s5] sm:$0x1]
    %v599 = vld [vmem:[%s5 + $0x18] sm:$0x1]
    %v600 = vld [vmem:[%s5 + $0x30] sm:$0x1]
    %v601 = vld [vmem:[%s5 + $0x48] sm:$0x1]
    %v602 = vld [vmem:[%s5 + $0x60] sm:$0x1]
    %v603 = vld [vmem:[%s5 + $0x78] sm:$0x1]
    %v604 = vld [vmem:[%s5 + $0x90] sm:$0x1]
    %v605 = vld [vmem:[%s5 + $0xa8] sm:$0x1]
    %v606 = vld [vmem:[%s5 + $0x1] sm:$0x1]
    %v607 = vld [vmem:[%s5 + $0x19] sm:$0x1]
    %v608 = vld [vmem:[%s5 + $0x31] sm:$0x1]
    %v609 = vld [vmem:[%s5 + $0x49] sm:$0x1]
    %v610 = vld [vmem:[%s5 + $0x61] sm:$0x1]
    %v611 = vld [vmem:[%s5 + $0x79] sm:$0x1]
    %v612 = vld [vmem:[%s5 + $0x91] sm:$0x1]
    %v613 = vld [vmem:[%s5 + $0xa9] sm:$0x1]
    %v614 = vld [vmem:[%s5 + $0x2] sm:$0x1]
    %v615 = vld [vmem:[%s5 + $0x1a] sm:$0x1]
    %v616 = vld [vmem:[%s5 + $0x32] sm:$0x1]
    %v617 = vld [vmem:[%s5 + $0x4a] sm:$0x1]
    %v618 = vld [vmem:[%s5 + $0x62] sm:$0x1]
    %v619 = vld [vmem:[%s5 + $0x7a] sm:$0x1]
    %v620 = vld [vmem:[%s5 + $0x92] sm:$0x1]
    %v621 = vld [vmem:[%s5 + $0xaa] sm:$0x1]
    %v622 = vld [vmem:[%s5 + $0x3] sm:$0x1]
    %v623 = vld [vmem:[%s5 + $0x1b] sm:$0x1]
    %v624 = vld [vmem:[%s5 + $0x33] sm:$0x1]
    %v625 = vld [vmem:[%s5 + $0x4b] sm:$0x1]
    %v626 = vld [vmem:[%s5 + $0x63] sm:$0x1]
    %v627 = vld [vmem:[%s5 + $0x7b] sm:$0x1]
    %v628 = vld [vmem:[%s5 + $0x93] sm:$0x1]
    %v629 = vld [vmem:[%s5 + $0xab] sm:$0x1]
    %v630 = vld [vmem:[%s5 + $0x4] sm:$0x1]
    %v631 = vld [vmem:[%s5 + $0x1c] sm:$0x1]
    %v632 = vld [vmem:[%s5 + $0x34] sm:$0x1]
    %v633 = vld [vmem:[%s5 + $0x4c] sm:$0x1]
    %v634 = vld [vmem:[%s5 + $0x64] sm:$0x1]
    %v635 = vld [vmem:[%s5 + $0x7c] sm:$0x1]
    %v636 = vld [vmem:[%s5 + $0x94] sm:$0x1]
    %v637 = vld [vmem:[%s5 + $0xac] sm:$0x1]
    %v638 = vld [vmem:[%s5 + $0x5] sm:$0x1]
    %v639 = vld [vmem:[%s5 + $0x1d] sm:$0x1]
    %v640 = vld [vmem:[%s5 + $0x35] sm:$0x1]
    %v641 = vld [vmem:[%s5 + $0x4d] sm:$0x1]
    %v642 = vld [vmem:[%s5 + $0x65] sm:$0x1]
    %v643 = vld [vmem:[%s5 + $0x7d] sm:$0x1]
    %v644 = vld [vmem:[%s5 + $0x95] sm:$0x1]
    %v645 = vld [vmem:[%s5 + $0xad] sm:$0x1]
    %v646 = vld [vmem:[%s5 + $0x6] sm:$0x1]
    %v647 = vld [vmem:[%s5 + $0x1e] sm:$0x1]
    %v648 = vld [vmem:[%s5 + $0x36] sm:$0x1]
    %v649 = vld [vmem:[%s5 + $0x4e] sm:$0x1]
    %v650 = vld [vmem:[%s5 + $0x66] sm:$0x1]
    %v651 = vld [vmem:[%s5 + $0x7e] sm:$0x1]
    %v652 = vld [vmem:[%s5 + $0x96] sm:$0x1]
    %v653 = vld [vmem:[%s5 + $0xae] sm:$0x1]
    %v654 = vld [vmem:[%s5 + $0x7] sm:$0x1]
    %v655 = vld [vmem:[%s5 + $0x1f] sm:$0x1]
    %v656 = vld [vmem:[%s5 + $0x37] sm:$0x1]
    %v657 = vld [vmem:[%s5 + $0x4f] sm:$0x1]
    %v658 = vld [vmem:[%s5 + $0x67] sm:$0x1]
    %v659 = vld [vmem:[%s5 + $0x7f] sm:$0x1]
    %v660 = vld [vmem:[%s5 + $0x97] sm:$0x1]
    %v661 = vld [vmem:[%s5 + $0xaf] sm:$0x1]
    %v662 = vld [vmem:[%s5 + $0x8] sm:$0x1]
    %v663 = vld [vmem:[%s5 + $0x20] sm:$0x1]
    %v664 = vld [vmem:[%s5 + $0x38] sm:$0x1]
    %v665 = vld [vmem:[%s5 + $0x50] sm:$0x1]
    %v666 = vld [vmem:[%s5 + $0x68] sm:$0x1]
    %v667 = vld [vmem:[%s5 + $0x80] sm:$0x1]
    %v668 = vld [vmem:[%s5 + $0x98] sm:$0x1]
    %v669 = vld [vmem:[%s5 + $0xb0] sm:$0x1]
    %v670 = vld [vmem:[%s5 + $0x9] sm:$0x1]
    %v671 = vld [vmem:[%s5 + $0x21] sm:$0x1]
    %v672 = vld [vmem:[%s5 + $0x39] sm:$0x1]
    %v673 = vld [vmem:[%s5 + $0x51] sm:$0x1]
    %v674 = vld [vmem:[%s5 + $0x69] sm:$0x1]
    %v675 = vld [vmem:[%s5 + $0x81] sm:$0x1]
    %v676 = vld [vmem:[%s5 + $0x99] sm:$0x1]
    %v677 = vld [vmem:[%s5 + $0xb1] sm:$0x1]
    %v678 = vld [vmem:[%s5 + $0xa] sm:$0x1]
    %v679 = vld [vmem:[%s5 + $0x22] sm:$0x1]
    %v680 = vld [vmem:[%s5 + $0x3a] sm:$0x1]
    %v681 = vld [vmem:[%s5 + $0x52] sm:$0x1]
    %v682 = vld [vmem:[%s5 + $0x6a] sm:$0x1]
    %v683 = vld [vmem:[%s5 + $0x82] sm:$0x1]
    %v684 = vld [vmem:[%s5 + $0x9a] sm:$0x1]
    %v685 = vld [vmem:[%s5 + $0xb2] sm:$0x1]
    %v686 = vld [vmem:[%s5 + $0xb] sm:$0x1]
    %v687 = vld [vmem:[%s5 + $0x23] sm:$0x1]
    %v688 = vld [vmem:[%s5 + $0x3b] sm:$0x1]
    %v689 = vld [vmem:[%s5 + $0x53] sm:$0x1]
    %v690 = vld [vmem:[%s5 + $0x6b] sm:$0x1]
    %v691 = vld [vmem:[%s5 + $0x83] sm:$0x1]
    %v692 = vld [vmem:[%s5 + $0x9b] sm:$0x1]
    %v693 = vld [vmem:[%s5 + $0xb3] sm:$0x1]
    %v694 = vld [vmem:[%s5 + $0xc] sm:$0x1]
    %v695 = vld [vmem:[%s5 + $0x24] sm:$0x1]
    %v696 = vld [vmem:[%s5 + $0x3c] sm:$0x1]
    %v697 = vld [vmem:[%s5 + $0x54] sm:$0x1]
    %v698 = vld [vmem:[%s5 + $0x6c] sm:$0x1]
    %v699 = vld [vmem:[%s5 + $0x84] sm:$0x1]
    %v700 = vld [vmem:[%s5 + $0x9c] sm:$0x1]
    %v701 = vld [vmem:[%s5 + $0xb4] sm:$0x1]
    %v702 = vld [vmem:[%s5 + $0xd] sm:$0x1]
    %v703 = vld [vmem:[%s5 + $0x25] sm:$0x1]
    %v704 = vld [vmem:[%s5 + $0x3d] sm:$0x1]
    %v705 = vld [vmem:[%s5 + $0x55] sm:$0x1]
    %v706 = vld [vmem:[%s5 + $0x6d] sm:$0x1]
    %v707 = vld [vmem:[%s5 + $0x85] sm:$0x1]
    %v708 = vld [vmem:[%s5 + $0x9d] sm:$0x1]
    %v709 = vld [vmem:[%s5 + $0xb5] sm:$0x1]
    %v710 = vld [vmem:[%s5 + $0xe] sm:$0x1]
    %v711 = vld [vmem:[%s5 + $0x26] sm:$0x1]
    %v712 = vld [vmem:[%s5 + $0x3e] sm:$0x1]
    %v713 = vld [vmem:[%s5 + $0x56] sm:$0x1]
    %v714 = vld [vmem:[%s5 + $0x6e] sm:$0x1]
    %v715 = vld [vmem:[%s5 + $0x86] sm:$0x1]
    %v716 = vld [vmem:[%s5 + $0x9e] sm:$0x1]
    %v717 = vld [vmem:[%s5 + $0xb6] sm:$0x1]
    %v718 = vld [vmem:[#allocation13] sm:$0x1]
    %v719 = vpack.c.bf16 %v598, %v598
    %v720 = vpack.c.bf16 %v599, %v599
    %v721 = vpack.c.bf16 %v600, %v600
    %v722 = vpack.c.bf16 %v601, %v601
    %v723 = vpack.c.bf16 %v602, %v602
    %v724 = vpack.c.bf16 %v603, %v603
    %v725 = vpack.c.bf16 %v604, %v604
    %v726 = vpack.c.bf16 %v605, %v605
    %v727 = vld [vmem:[#allocation11] sm:$0xf]
    %v728 = vld [vmem:[#allocation11 + $0x4] sm:$0xf]
    %v737 = vunpack.c.l.b16 %v719
    %v738 = vunpack.c.l.b16 %v720
    %v739 = vunpack.c.l.b16 %v721
    %v740 = vunpack.c.l.b16 %v722
    %v741 = vunpack.c.l.b16 %v723
    %v742 = vunpack.c.l.b16 %v724
    %v743 = vunpack.c.l.b16 %v725
    %v744 = vunpack.c.l.b16 %v726
    %v745 = vrot.slane %v738, 7
    %vm746 = vcmask 1041409
    %v747 = vsel %vm746, %v745, %v737
    %v748 = vrot.slane %v739, 6
    %vm749 = vcmask 1042434
    %v750 = vsel %vm749, %v748, %v747
    %v751 = vrot.slane %v740, 5
    %vm752 = vcmask 1043459
    %v753 = vsel %vm752, %v751, %v750
    %v754 = vrot.slane %v741, 4
    %vm755 = vcmask 1044484
    %v756 = vsel %vm755, %v754, %v753
    %v757 = vrot.slane %v742, 3
    %vm758 = vcmask 1045509
    %v759 = vsel %vm758, %v757, %v756
    %v760 = vrot.slane %v743, 2
    %vm761 = vcmask 1046534
    %v762 = vsel %vm761, %v760, %v759
    %v763 = vrot.slane %v744, 1
    %vm764 = vcmask 1047559
    %v765 = vsel %vm764, %v763, %v762
    %v766 = vpack.c.b16 %v765, %v765
    %v769 = vunpack.c.l.b16 %v727
    %v770 = vunpack.c.l.b16 %v728
    %v771 = vpack.c.b16 %v770, %v769
    %vm773 = vcmask 130048
    %v775 = vsel %vm773, %v766, 0
    %777 = vmatpush.bf16.msra.mxu0 0
    %778 = vmatpush.bf16.msra.mxu0 0
    %779 = vmatpush.bf16.msra.mxu0 0
    %780 = vmatpush.bf16.msra.mxu0 0
    %781 = vmatpush.bf16.msra.mxu0 0
    %782 = vmatpush.bf16.msra.mxu0 0
    %783 = vmatpush.bf16.msra.mxu0 0
    %784 = vmatpush.bf16.msra.mxu0 %v771
    %785 = vmatmul.bf16.gmra.mxu0 %v775
    %v786 = vpop.f32.mrf.mxu0
    %v787 = vadd.f32 0.0, %v786
    %v788 = vpop.f32.mrf.mxu0
    %789 = vdwg.mxu0
    %v791 = vperm.slane %v718, 0
    %v793 = vadd.f32 %v791, %v787
    %v794 = vpack.c.bf16 %v606, %v606
    %v795 = vpack.c.bf16 %v607, %v607
    %v796 = vpack.c.bf16 %v608, %v608
    %v797 = vpack.c.bf16 %v609, %v609
    %v798 = vpack.c.bf16 %v610, %v610
    %v799 = vpack.c.bf16 %v611, %v611
    %v800 = vpack.c.bf16 %v612, %v612
    %v801 = vpack.c.bf16 %v613, %v613
    %s802 = scalar_lea.vmem [#allocation11], 8
    %v803 = vld [vmem:[%s802] sm:$0xf]
    %v804 = vld [vmem:[%s802 + $0x4] sm:$0xf]
    %v813 = vunpack.c.l.b16 %v794
    %v814 = vunpack.c.l.b16 %v795
    %v815 = vunpack.c.l.b16 %v796
    %v816 = vunpack.c.l.b16 %v797
    %v817 = vunpack.c.l.b16 %v798
    %v818 = vunpack.c.l.b16 %v799
    %v819 = vunpack.c.l.b16 %v800
    %v820 = vunpack.c.l.b16 %v801
    %v821 = vrot.slane %v814, 7
    %v822 = vsel %vm746, %v821, %v813
    %v823 = vrot.slane %v815, 6
    %v824 = vsel %vm749, %v823, %v822
    %v825 = vrot.slane %v816, 5
    %v826 = vsel %vm752, %v825, %v824
    %v827 = vrot.slane %v817, 4
    %v828 = vsel %vm755, %v827, %v826
    %v829 = vrot.slane %v818, 3
    %v830 = vsel %vm758, %v829, %v828
    %v831 = vrot.slane %v819, 2
    %v832 = vsel %vm761, %v831, %v830
    %v833 = vrot.slane %v820, 1
    %v834 = vsel %vm764, %v833, %v832
    %v835 = vpack.c.b16 %v834, %v834
    %v838 = vunpack.c.l.b16 %v803
    %v839 = vunpack.c.l.b16 %v804
    %v840 = vpack.c.b16 %v839, %v838
    %v843 = vsel %vm773, %v835, 0
    %845 = vmatpush.bf16.msra.mxu0 0
    %846 = vmatpush.bf16.msra.mxu0 0
    %847 = vmatpush.bf16.msra.mxu0 0
    %848 = vmatpush.bf16.msra.mxu0 0
    %849 = vmatpush.bf16.msra.mxu0 0
    %850 = vmatpush.bf16.msra.mxu0 0
    %851 = vmatpush.bf16.msra.mxu0 0
    %852 = vmatpush.bf16.msra.mxu0 %v840
    %853 = vmatmul.bf16.gmra.mxu0 %v843
    %v854 = vpop.f32.mrf.mxu0
    %v855 = vadd.f32 0.0, %v854
    %v856 = vpop.f32.mrf.mxu0
    %857 = vdwg.mxu0
    %v858 = vadd.f32 %v793, %v855
    %v859 = vpack.c.bf16 %v614, %v614
    %v860 = vpack.c.bf16 %v615, %v615
    %v861 = vpack.c.bf16 %v616, %v616
    %v862 = vpack.c.bf16 %v617, %v617
    %v863 = vpack.c.bf16 %v618, %v618
    %v864 = vpack.c.bf16 %v619, %v619
    %v865 = vpack.c.bf16 %v620, %v620
    %v866 = vpack.c.bf16 %v621, %v621
    %s867 = scalar_lea.vmem [#allocation11], 16
    %v868 = vld [vmem:[%s867] sm:$0xf]
    %v869 = vld [vmem:[%s867 + $0x4] sm:$0xf]
    %v878 = vunpack.c.l.b16 %v859
    %v879 = vunpack.c.l.b16 %v860
    %v880 = vunpack.c.l.b16 %v861
    %v881 = vunpack.c.l.b16 %v862
    %v882 = vunpack.c.l.b16 %v863
    %v883 = vunpack.c.l.b16 %v864
    %v884 = vunpack.c.l.b16 %v865
    %v885 = vunpack.c.l.b16 %v866
    %v886 = vrot.slane %v879, 7
    %v887 = vsel %vm746, %v886, %v878
    %v888 = vrot.slane %v880, 6
    %v889 = vsel %vm749, %v888, %v887
    %v890 = vrot.slane %v881, 5
    %v891 = vsel %vm752, %v890, %v889
    %v892 = vrot.slane %v882, 4
    %v893 = vsel %vm755, %v892, %v891
    %v894 = vrot.slane %v883, 3
    %v895 = vsel %vm758, %v894, %v893
    %v896 = vrot.slane %v884, 2
    %v897 = vsel %vm761, %v896, %v895
    %v898 = vrot.slane %v885, 1
    %v899 = vsel %vm764, %v898, %v897
    %v900 = vpack.c.b16 %v899, %v899
    %v903 = vunpack.c.l.b16 %v868
    %v904 = vunpack.c.l.b16 %v869
    %v905 = vpack.c.b16 %v904, %v903
    %v908 = vsel %vm773, %v900, 0
    %910 = vmatpush.bf16.msra.mxu0 0
    %911 = vmatpush.bf16.msra.mxu0 0
    %912 = vmatpush.bf16.msra.mxu0 0
    %913 = vmatpush.bf16.msra.mxu0 0
    %914 = vmatpush.bf16.msra.mxu0 0
    %915 = vmatpush.bf16.msra.mxu0 0
    %916 = vmatpush.bf16.msra.mxu0 0
    %917 = vmatpush.bf16.msra.mxu0 %v905
    %918 = vmatmul.bf16.gmra.mxu0 %v908
    %v919 = vpop.f32.mrf.mxu0
    %v920 = vadd.f32 0.0, %v919
    %v921 = vpop.f32.mrf.mxu0
    %922 = vdwg.mxu0
    %v923 = vadd.f32 %v858, %v920
    %vm924 = vcmp.gt.f32.partialorder %v923, 0.0
    %v925 = vmin.f32 %v923, 0.0
    %v926 = vmul.f32 %v925, 1.442695
    %v927 = vpow.pop %v926
    %v928 = vsub.f32 %v927, 1.0
    %v929 = vsel %vm924, %v923, %v928
    %930 = vmatpush.bf16.msra.mxu0 0
    %931 = vmatpush.bf16.msra.mxu0 0
    %932 = vmatpush.bf16.msra.mxu0 0
    %933 = vmatpush.bf16.msra.mxu0 0
    %934 = vmatpush.bf16.msra.mxu0 0
    %935 = vmatpush.bf16.msra.mxu0 0
    %936 = vmatpush.bf16.msra.mxu0 0
    %937 = vmatpush.bf16.msra.mxu0 %v771
    %938 = vmatmul.bf16.gmra.mxu0 %v908
    %v939 = vpop.f32.mrf.mxu0
    %v940 = vadd.f32 0.0, %v939
    %v941 = vpop.f32.mrf.mxu0
    %942 = vdwg.mxu0
    %v943 = vadd.f32 %v791, %v940
    %v944 = vpack.c.bf16 %v622, %v622
    %v945 = vpack.c.bf16 %v623, %v623
    %v946 = vpack.c.bf16 %v624, %v624
    %v947 = vpack.c.bf16 %v625, %v625
    %v948 = vpack.c.bf16 %v626, %v626
    %v949 = vpack.c.bf16 %v627, %v627
    %v950 = vpack.c.bf16 %v628, %v628
    %v951 = vpack.c.bf16 %v629, %v629
    %v960 = vunpack.c.l.b16 %v944
    %v961 = vunpack.c.l.b16 %v945
    %v962 = vunpack.c.l.b16 %v946
    %v963 = vunpack.c.l.b16 %v947
    %v964 = vunpack.c.l.b16 %v948
    %v965 = vunpack.c.l.b16 %v949
    %v966 = vunpack.c.l.b16 %v950
    %v967 = vunpack.c.l.b16 %v951
    %v968 = vrot.slane %v961, 7
    %v969 = vsel %vm746, %v968, %v960
    %v970 = vrot.slane %v962, 6
    %v971 = vsel %vm749, %v970, %v969
    %v972 = vrot.slane %v963, 5
    %v973 = vsel %vm752, %v972, %v971
    %v974 = vrot.slane %v964, 4
    %v975 = vsel %vm755, %v974, %v973
    %v976 = vrot.slane %v965, 3
    %v977 = vsel %vm758, %v976, %v975
    %v978 = vrot.slane %v966, 2
    %v979 = vsel %vm761, %v978, %v977
    %v980 = vrot.slane %v967, 1
    %v981 = vsel %vm764, %v980, %v979
    %v982 = vpack.c.b16 %v981, %v981
    %v984 = vsel %vm773, %v982, 0
    %986 = vmatpush.bf16.msra.mxu0 0
    %987 = vmatpush.bf16.msra.mxu0 0
    %988 = vmatpush.bf16.msra.mxu0 0
    %989 = vmatpush.bf16.msra.mxu0 0
    %990 = vmatpush.bf16.msra.mxu0 0
    %991 = vmatpush.bf16.msra.mxu0 0
    %992 = vmatpush.bf16.msra.mxu0 0
    %993 = vmatpush.bf16.msra.mxu0 %v840
    %994 = vmatmul.bf16.gmra.mxu0 %v984
    %v995 = vpop.f32.mrf.mxu0
    %v996 = vadd.f32 0.0, %v995
    %v997 = vpop.f32.mrf.mxu0
    %998 = vdwg.mxu0
    %v999 = vadd.f32 %v943, %v996
    %v1000 = vpack.c.bf16 %v630, %v630
    %v1001 = vpack.c.bf16 %v631, %v631
    %v1002 = vpack.c.bf16 %v632, %v632
    %v1003 = vpack.c.bf16 %v633, %v633
    %v1004 = vpack.c.bf16 %v634, %v634
    %v1005 = vpack.c.bf16 %v635, %v635
    %v1006 = vpack.c.bf16 %v636, %v636
    %v1007 = vpack.c.bf16 %v637, %v637
    %v1016 = vunpack.c.l.b16 %v1000
    %v1017 = vunpack.c.l.b16 %v1001
    %v1018 = vunpack.c.l.b16 %v1002
    %v1019 = vunpack.c.l.b16 %v1003
    %v1020 = vunpack.c.l.b16 %v1004
    %v1021 = vunpack.c.l.b16 %v1005
    %v1022 = vunpack.c.l.b16 %v1006
    %v1023 = vunpack.c.l.b16 %v1007
    %v1024 = vrot.slane %v1017, 7
    %v1025 = vsel %vm746, %v1024, %v1016
    %v1026 = vrot.slane %v1018, 6
    %v1027 = vsel %vm749, %v1026, %v1025
    %v1028 = vrot.slane %v1019, 5
    %v1029 = vsel %vm752, %v1028, %v1027
    %v1030 = vrot.slane %v1020, 4
    %v1031 = vsel %vm755, %v1030, %v1029
    %v1032 = vrot.slane %v1021, 3
    %v1033 = vsel %vm758, %v1032, %v1031
    %v1034 = vrot.slane %v1022, 2
    %v1035 = vsel %vm761, %v1034, %v1033
    %v1036 = vrot.slane %v1023, 1
    %v1037 = vsel %vm764, %v1036, %v1035
    %v1038 = vpack.c.b16 %v1037, %v1037
    %v1040 = vsel %vm773, %v1038, 0
    %1042 = vmatpush.bf16.msra.mxu0 0
    %1043 = vmatpush.bf16.msra.mxu0 0
    %1044 = vmatpush.bf16.msra.mxu0 0
    %1045 = vmatpush.bf16.msra.mxu0 0
    %1046 = vmatpush.bf16.msra.mxu0 0
    %1047 = vmatpush.bf16.msra.mxu0 0
    %1048 = vmatpush.bf16.msra.mxu0 0
    %1049 = vmatpush.bf16.msra.mxu0 %v905
    %1050 = vmatmul.bf16.gmra.mxu0 %v1040
    %v1051 = vpop.f32.mrf.mxu0
    %v1052 = vadd.f32 0.0, %v1051
    %v1053 = vpop.f32.mrf.mxu0
    %1054 = vdwg.mxu0
    %v1055 = vadd.f32 %v999, %v1052
    %vm1056 = vcmp.gt.f32.partialorder %v1055, 0.0
    %v1057 = vmin.f32 %v1055, 0.0
    %v1058 = vmul.f32 %v1057, 1.442695
    %v1059 = vpow.pop %v1058
    %v1060 = vsub.f32 %v1059, 1.0
    %v1061 = vsel %vm1056, %v1055, %v1060
    %1062 = vmatpush.bf16.msra.mxu0 0
    %1063 = vmatpush.bf16.msra.mxu0 0
    %1064 = vmatpush.bf16.msra.mxu0 0
    %1065 = vmatpush.bf16.msra.mxu0 0
    %1066 = vmatpush.bf16.msra.mxu0 0
    %1067 = vmatpush.bf16.msra.mxu0 0
    %1068 = vmatpush.bf16.msra.mxu0 0
    %1069 = vmatpush.bf16.msra.mxu0 %v771
    %1070 = vmatmul.bf16.gmra.mxu0 %v1040
    %v1071 = vpop.f32.mrf.mxu0
    %v1072 = vadd.f32 0.0, %v1071
    %v1073 = vpop.f32.mrf.mxu0
    %1074 = vdwg.mxu0
    %v1075 = vadd.f32 %v791, %v1072
    %v1076 = vpack.c.bf16 %v638, %v638
    %v1077 = vpack.c.bf16 %v639, %v639
    %v1078 = vpack.c.bf16 %v640, %v640
    %v1079 = vpack.c.bf16 %v641, %v641
    %v1080 = vpack.c.bf16 %v642, %v642
    %v1081 = vpack.c.bf16 %v643, %v643
    %v1082 = vpack.c.bf16 %v644, %v644
    %v1083 = vpack.c.bf16 %v645, %v645
    %v1092 = vunpack.c.l.b16 %v1076
    %v1093 = vunpack.c.l.b16 %v1077
    %v1094 = vunpack.c.l.b16 %v1078
    %v1095 = vunpack.c.l.b16 %v1079
    %v1096 = vunpack.c.l.b16 %v1080
    %v1097 = vunpack.c.l.b16 %v1081
    %v1098 = vunpack.c.l.b16 %v1082
    %v1099 = vunpack.c.l.b16 %v1083
    %v1100 = vrot.slane %v1093, 7
    %v1101 = vsel %vm746, %v1100, %v1092
    %v1102 = vrot.slane %v1094, 6
    %v1103 = vsel %vm749, %v1102, %v1101
    %v1104 = vrot.slane %v1095, 5
    %v1105 = vsel %vm752, %v1104, %v1103
    %v1106 = vrot.slane %v1096, 4
    %v1107 = vsel %vm755, %v1106, %v1105
    %v1108 = vrot.slane %v1097, 3
    %v1109 = vsel %vm758, %v1108, %v1107
    %v1110 = vrot.slane %v1098, 2
    %v1111 = vsel %vm761, %v1110, %v1109
    %v1112 = vrot.slane %v1099, 1
    %v1113 = vsel %vm764, %v1112, %v1111
    %v1114 = vpack.c.b16 %v1113, %v1113
    %v1116 = vsel %vm773, %v1114, 0
    %1118 = vmatpush.bf16.msra.mxu0 0
    %1119 = vmatpush.bf16.msra.mxu0 0
    %1120 = vmatpush.bf16.msra.mxu0 0
    %1121 = vmatpush.bf16.msra.mxu0 0
    %1122 = vmatpush.bf16.msra.mxu0 0
    %1123 = vmatpush.bf16.msra.mxu0 0
    %1124 = vmatpush.bf16.msra.mxu0 0
    %1125 = vmatpush.bf16.msra.mxu0 %v840
    %1126 = vmatmul.bf16.gmra.mxu0 %v1116
    %v1127 = vpop.f32.mrf.mxu0
    %v1128 = vadd.f32 0.0, %v1127
    %v1129 = vpop.f32.mrf.mxu0
    %1130 = vdwg.mxu0
    %v1131 = vadd.f32 %v1075, %v1128
    %v1132 = vpack.c.bf16 %v646, %v646
    %v1133 = vpack.c.bf16 %v647, %v647
    %v1134 = vpack.c.bf16 %v648, %v648
    %v1135 = vpack.c.bf16 %v649, %v649
    %v1136 = vpack.c.bf16 %v650, %v650
    %v1137 = vpack.c.bf16 %v651, %v651
    %v1138 = vpack.c.bf16 %v652, %v652
    %v1139 = vpack.c.bf16 %v653, %v653
    %v1148 = vunpack.c.l.b16 %v1132
    %v1149 = vunpack.c.l.b16 %v1133
    %v1150 = vunpack.c.l.b16 %v1134
    %v1151 = vunpack.c.l.b16 %v1135
    %v1152 = vunpack.c.l.b16 %v1136
    %v1153 = vunpack.c.l.b16 %v1137
    %v1154 = vunpack.c.l.b16 %v1138
    %v1155 = vunpack.c.l.b16 %v1139
    %v1156 = vrot.slane %v1149, 7
    %v1157 = vsel %vm746, %v1156, %v1148
    %v1158 = vrot.slane %v1150, 6
    %v1159 = vsel %vm749, %v1158, %v1157
    %v1160 = vrot.slane %v1151, 5
    %v1161 = vsel %vm752, %v1160, %v1159
    %v1162 = vrot.slane %v1152, 4
    %v1163 = vsel %vm755, %v1162, %v1161
    %v1164 = vrot.slane %v1153, 3
    %v1165 = vsel %vm758, %v1164, %v1163
    %v1166 = vrot.slane %v1154, 2
    %v1167 = vsel %vm761, %v1166, %v1165
    %v1168 = vrot.slane %v1155, 1
    %v1169 = vsel %vm764, %v1168, %v1167
    %v1170 = vpack.c.b16 %v1169, %v1169
    %v1172 = vsel %vm773, %v1170, 0
    %1174 = vmatpush.bf16.msra.mxu0 0
    %1175 = vmatpush.bf16.msra.mxu0 0
    %1176 = vmatpush.bf16.msra.mxu0 0
    %1177 = vmatpush.bf16.msra.mxu0 0
    %1178 = vmatpush.bf16.msra.mxu0 0
    %1179 = vmatpush.bf16.msra.mxu0 0
    %1180 = vmatpush.bf16.msra.mxu0 0
    %1181 = vmatpush.bf16.msra.mxu0 %v905
    %1182 = vmatmul.bf16.gmra.mxu0 %v1172
    %v1183 = vpop.f32.mrf.mxu0
    %v1184 = vadd.f32 0.0, %v1183
    %v1185 = vpop.f32.mrf.mxu0
    %1186 = vdwg.mxu0
    %v1187 = vadd.f32 %v1131, %v1184
    %vm1188 = vcmp.gt.f32.partialorder %v1187, 0.0
    %v1189 = vmin.f32 %v1187, 0.0
    %v1190 = vmul.f32 %v1189, 1.442695
    %v1191 = vpow.pop %v1190
    %v1192 = vsub.f32 %v1191, 1.0
    %v1193 = vsel %vm1188, %v1187, %v1192
    %1194 = vmatpush.bf16.msra.mxu0 0
    %1195 = vmatpush.bf16.msra.mxu0 0
    %1196 = vmatpush.bf16.msra.mxu0 0
    %1197 = vmatpush.bf16.msra.mxu0 0
    %1198 = vmatpush.bf16.msra.mxu0 0
    %1199 = vmatpush.bf16.msra.mxu0 0
    %1200 = vmatpush.bf16.msra.mxu0 0
    %1201 = vmatpush.bf16.msra.mxu0 %v771
    %1202 = vmatmul.bf16.gmra.mxu0 %v1172
    %v1203 = vpop.f32.mrf.mxu0
    %v1204 = vadd.f32 0.0, %v1203
    %v1205 = vpop.f32.mrf.mxu0
    %1206 = vdwg.mxu0
    %v1207 = vadd.f32 %v791, %v1204
    %v1208 = vpack.c.bf16 %v654, %v654
    %v1209 = vpack.c.bf16 %v655, %v655
    %v1210 = vpack.c.bf16 %v656, %v656
    %v1211 = vpack.c.bf16 %v657, %v657
    %v1212 = vpack.c.bf16 %v658, %v658
    %v1213 = vpack.c.bf16 %v659, %v659
    %v1214 = vpack.c.bf16 %v660, %v660
    %v1215 = vpack.c.bf16 %v661, %v661
    %v1224 = vunpack.c.l.b16 %v1208
    %v1225 = vunpack.c.l.b16 %v1209
    %v1226 = vunpack.c.l.b16 %v1210
    %v1227 = vunpack.c.l.b16 %v1211
    %v1228 = vunpack.c.l.b16 %v1212
    %v1229 = vunpack.c.l.b16 %v1213
    %v1230 = vunpack.c.l.b16 %v1214
    %v1231 = vunpack.c.l.b16 %v1215
    %v1232 = vrot.slane %v1225, 7
    %v1233 = vsel %vm746, %v1232, %v1224
    %v1234 = vrot.slane %v1226, 6
    %v1235 = vsel %vm749, %v1234, %v1233
    %v1236 = vrot.slane %v1227, 5
    %v1237 = vsel %vm752, %v1236, %v1235
    %v1238 = vrot.slane %v1228, 4
    %v1239 = vsel %vm755, %v1238, %v1237
    %v1240 = vrot.slane %v1229, 3
    %v1241 = vsel %vm758, %v1240, %v1239
    %v1242 = vrot.slane %v1230, 2
    %v1243 = vsel %vm761, %v1242, %v1241
    %v1244 = vrot.slane %v1231, 1
    %v1245 = vsel %vm764, %v1244, %v1243
    %v1246 = vpack.c.b16 %v1245, %v1245
    %v1248 = vsel %vm773, %v1246, 0
    %1250 = vmatpush.bf16.msra.mxu0 0
    %1251 = vmatpush.bf16.msra.mxu0 0
    %1252 = vmatpush.bf16.msra.mxu0 0
    %1253 = vmatpush.bf16.msra.mxu0 0
    %1254 = vmatpush.bf16.msra.mxu0 0
    %1255 = vmatpush.bf16.msra.mxu0 0
    %1256 = vmatpush.bf16.msra.mxu0 0
    %1257 = vmatpush.bf16.msra.mxu0 %v840
    %1258 = vmatmul.bf16.gmra.mxu0 %v1248
    %v1259 = vpop.f32.mrf.mxu0
    %v1260 = vadd.f32 0.0, %v1259
    %v1261 = vpop.f32.mrf.mxu0
    %1262 = vdwg.mxu0
    %v1263 = vadd.f32 %v1207, %v1260
    %v1264 = vpack.c.bf16 %v662, %v662
    %v1265 = vpack.c.bf16 %v663, %v663
    %v1266 = vpack.c.bf16 %v664, %v664
    %v1267 = vpack.c.bf16 %v665, %v665
    %v1268 = vpack.c.bf16 %v666, %v666
    %v1269 = vpack.c.bf16 %v667, %v667
    %v1270 = vpack.c.bf16 %v668, %v668
    %v1271 = vpack.c.bf16 %v669, %v669
    %v1280 = vunpack.c.l.b16 %v1264
    %v1281 = vunpack.c.l.b16 %v1265
    %v1282 = vunpack.c.l.b16 %v1266
    %v1283 = vunpack.c.l.b16 %v1267
    %v1284 = vunpack.c.l.b16 %v1268
    %v1285 = vunpack.c.l.b16 %v1269
    %v1286 = vunpack.c.l.b16 %v1270
    %v1287 = vunpack.c.l.b16 %v1271
    %v1288 = vrot.slane %v1281, 7
    %v1289 = vsel %vm746, %v1288, %v1280
    %v1290 = vrot.slane %v1282, 6
    %v1291 = vsel %vm749, %v1290, %v1289
    %v1292 = vrot.slane %v1283, 5
    %v1293 = vsel %vm752, %v1292, %v1291
    %v1294 = vrot.slane %v1284, 4
    %v1295 = vsel %vm755, %v1294, %v1293
    %v1296 = vrot.slane %v1285, 3
    %v1297 = vsel %vm758, %v1296, %v1295
    %v1298 = vrot.slane %v1286, 2
    %v1299 = vsel %vm761, %v1298, %v1297
    %v1300 = vrot.slane %v1287, 1
    %v1301 = vsel %vm764, %v1300, %v1299
    %v1302 = vpack.c.b16 %v1301, %v1301
    %v1304 = vsel %vm773, %v1302, 0
    %1306 = vmatpush.bf16.msra.mxu0 0
    %1307 = vmatpush.bf16.msra.mxu0 0
    %1308 = vmatpush.bf16.msra.mxu0 0
    %1309 = vmatpush.bf16.msra.mxu0 0
    %1310 = vmatpush.bf16.msra.mxu0 0
    %1311 = vmatpush.bf16.msra.mxu0 0
    %1312 = vmatpush.bf16.msra.mxu0 0
    %1313 = vmatpush.bf16.msra.mxu0 %v905
    %1314 = vmatmul.bf16.gmra.mxu0 %v1304
    %v1315 = vpop.f32.mrf.mxu0
    %v1316 = vadd.f32 0.0, %v1315
    %v1317 = vpop.f32.mrf.mxu0
    %1318 = vdwg.mxu0
    %v1319 = vadd.f32 %v1263, %v1316
    %vm1320 = vcmp.gt.f32.partialorder %v1319, 0.0
    %v1321 = vmin.f32 %v1319, 0.0
    %v1322 = vmul.f32 %v1321, 1.442695
    %v1323 = vpow.pop %v1322
    %v1324 = vsub.f32 %v1323, 1.0
    %v1325 = vsel %vm1320, %v1319, %v1324
    %1326 = vmatpush.bf16.msra.mxu0 0
    %1327 = vmatpush.bf16.msra.mxu0 0
    %1328 = vmatpush.bf16.msra.mxu0 0
    %1329 = vmatpush.bf16.msra.mxu0 0
    %1330 = vmatpush.bf16.msra.mxu0 0
    %1331 = vmatpush.bf16.msra.mxu0 0
    %1332 = vmatpush.bf16.msra.mxu0 0
    %1333 = vmatpush.bf16.msra.mxu0 %v771
    %1334 = vmatmul.bf16.gmra.mxu0 %v1304
    %v1335 = vpop.f32.mrf.mxu0
    %v1336 = vadd.f32 0.0, %v1335
    %v1337 = vpop.f32.mrf.mxu0
    %1338 = vdwg.mxu0
    %v1339 = vadd.f32 %v791, %v1336
    %v1340 = vpack.c.bf16 %v670, %v670
    %v1341 = vpack.c.bf16 %v671, %v671
    %v1342 = vpack.c.bf16 %v672, %v672
    %v1343 = vpack.c.bf16 %v673, %v673
    %v1344 = vpack.c.bf16 %v674, %v674
    %v1345 = vpack.c.bf16 %v675, %v675
    %v1346 = vpack.c.bf16 %v676, %v676
    %v1347 = vpack.c.bf16 %v677, %v677
    %v1356 = vunpack.c.l.b16 %v1340
    %v1357 = vunpack.c.l.b16 %v1341
    %v1358 = vunpack.c.l.b16 %v1342
    %v1359 = vunpack.c.l.b16 %v1343
    %v1360 = vunpack.c.l.b16 %v1344
    %v1361 = vunpack.c.l.b16 %v1345
    %v1362 = vunpack.c.l.b16 %v1346
    %v1363 = vunpack.c.l.b16 %v1347
    %v1364 = vrot.slane %v1357, 7
    %v1365 = vsel %vm746, %v1364, %v1356
    %v1366 = vrot.slane %v1358, 6
    %v1367 = vsel %vm749, %v1366, %v1365
    %v1368 = vrot.slane %v1359, 5
    %v1369 = vsel %vm752, %v1368, %v1367
    %v1370 = vrot.slane %v1360, 4
    %v1371 = vsel %vm755, %v1370, %v1369
    %v1372 = vrot.slane %v1361, 3
    %v1373 = vsel %vm758, %v1372, %v1371
    %v1374 = vrot.slane %v1362, 2
    %v1375 = vsel %vm761, %v1374, %v1373
    %v1376 = vrot.slane %v1363, 1
    %v1377 = vsel %vm764, %v1376, %v1375
    %v1378 = vpack.c.b16 %v1377, %v1377
    %v1380 = vsel %vm773, %v1378, 0
    %1382 = vmatpush.bf16.msra.mxu0 0
    %1383 = vmatpush.bf16.msra.mxu0 0
    %1384 = vmatpush.bf16.msra.mxu0 0
    %1385 = vmatpush.bf16.msra.mxu0 0
    %1386 = vmatpush.bf16.msra.mxu0 0
    %1387 = vmatpush.bf16.msra.mxu0 0
    %1388 = vmatpush.bf16.msra.mxu0 0
    %1389 = vmatpush.bf16.msra.mxu0 %v840
    %1390 = vmatmul.bf16.gmra.mxu0 %v1380
    %v1391 = vpop.f32.mrf.mxu0
    %v1392 = vadd.f32 0.0, %v1391
    %v1393 = vpop.f32.mrf.mxu0
    %1394 = vdwg.mxu0
    %v1395 = vadd.f32 %v1339, %v1392
    %v1396 = vpack.c.bf16 %v678, %v678
    %v1397 = vpack.c.bf16 %v679, %v679
    %v1398 = vpack.c.bf16 %v680, %v680
    %v1399 = vpack.c.bf16 %v681, %v681
    %v1400 = vpack.c.bf16 %v682, %v682
    %v1401 = vpack.c.bf16 %v683, %v683
    %v1402 = vpack.c.bf16 %v684, %v684
    %v1403 = vpack.c.bf16 %v685, %v685
    %v1412 = vunpack.c.l.b16 %v1396
    %v1413 = vunpack.c.l.b16 %v1397
    %v1414 = vunpack.c.l.b16 %v1398
    %v1415 = vunpack.c.l.b16 %v1399
    %v1416 = vunpack.c.l.b16 %v1400
    %v1417 = vunpack.c.l.b16 %v1401
    %v1418 = vunpack.c.l.b16 %v1402
    %v1419 = vunpack.c.l.b16 %v1403
    %v1420 = vrot.slane %v1413, 7
    %v1421 = vsel %vm746, %v1420, %v1412
    %v1422 = vrot.slane %v1414, 6
    %v1423 = vsel %vm749, %v1422, %v1421
    %v1424 = vrot.slane %v1415, 5
    %v1425 = vsel %vm752, %v1424, %v1423
    %v1426 = vrot.slane %v1416, 4
    %v1427 = vsel %vm755, %v1426, %v1425
    %v1428 = vrot.slane %v1417, 3
    %v1429 = vsel %vm758, %v1428, %v1427
    %v1430 = vrot.slane %v1418, 2
    %v1431 = vsel %vm761, %v1430, %v1429
    %v1432 = vrot.slane %v1419, 1
    %v1433 = vsel %vm764, %v1432, %v1431
    %v1434 = vpack.c.b16 %v1433, %v1433
    %v1436 = vsel %vm773, %v1434, 0
    %1438 = vmatpush.bf16.msra.mxu0 0
    %1439 = vmatpush.bf16.msra.mxu0 0
    %1440 = vmatpush.bf16.msra.mxu0 0
    %1441 = vmatpush.bf16.msra.mxu0 0
    %1442 = vmatpush.bf16.msra.mxu0 0
    %1443 = vmatpush.bf16.msra.mxu0 0
    %1444 = vmatpush.bf16.msra.mxu0 0
    %1445 = vmatpush.bf16.msra.mxu0 %v905
    %1446 = vmatmul.bf16.gmra.mxu0 %v1436
    %v1447 = vpop.f32.mrf.mxu0
    %v1448 = vadd.f32 0.0, %v1447
    %v1449 = vpop.f32.mrf.mxu0
    %1450 = vdwg.mxu0
    %v1451 = vadd.f32 %v1395, %v1448
    %vm1452 = vcmp.gt.f32.partialorder %v1451, 0.0
    %v1453 = vmin.f32 %v1451, 0.0
    %v1454 = vmul.f32 %v1453, 1.442695
    %v1455 = vpow.pop %v1454
    %v1456 = vsub.f32 %v1455, 1.0
    %v1457 = vsel %vm1452, %v1451, %v1456
    %1458 = vmatpush.bf16.msra.mxu0 0
    %1459 = vmatpush.bf16.msra.mxu0 0
    %1460 = vmatpush.bf16.msra.mxu0 0
    %1461 = vmatpush.bf16.msra.mxu0 0
    %1462 = vmatpush.bf16.msra.mxu0 0
    %1463 = vmatpush.bf16.msra.mxu0 0
    %1464 = vmatpush.bf16.msra.mxu0 0
    %1465 = vmatpush.bf16.msra.mxu0 %v771
    %1466 = vmatmul.bf16.gmra.mxu0 %v1436
    %v1467 = vpop.f32.mrf.mxu0
    %v1468 = vadd.f32 0.0, %v1467
    %v1469 = vpop.f32.mrf.mxu0
    %1470 = vdwg.mxu0
    %v1471 = vadd.f32 %v791, %v1468
    %v1472 = vpack.c.bf16 %v686, %v686
    %v1473 = vpack.c.bf16 %v687, %v687
    %v1474 = vpack.c.bf16 %v688, %v688
    %v1475 = vpack.c.bf16 %v689, %v689
    %v1476 = vpack.c.bf16 %v690, %v690
    %v1477 = vpack.c.bf16 %v691, %v691
    %v1478 = vpack.c.bf16 %v692, %v692
    %v1479 = vpack.c.bf16 %v693, %v693
    %v1488 = vunpack.c.l.b16 %v1472
    %v1489 = vunpack.c.l.b16 %v1473
    %v1490 = vunpack.c.l.b16 %v1474
    %v1491 = vunpack.c.l.b16 %v1475
    %v1492 = vunpack.c.l.b16 %v1476
    %v1493 = vunpack.c.l.b16 %v1477
    %v1494 = vunpack.c.l.b16 %v1478
    %v1495 = vunpack.c.l.b16 %v1479
    %v1496 = vrot.slane %v1489, 7
    %v1497 = vsel %vm746, %v1496, %v1488
    %v1498 = vrot.slane %v1490, 6
    %v1499 = vsel %vm749, %v1498, %v1497
    %v1500 = vrot.slane %v1491, 5
    %v1501 = vsel %vm752, %v1500, %v1499
    %v1502 = vrot.slane %v1492, 4
    %v1503 = vsel %vm755, %v1502, %v1501
    %v1504 = vrot.slane %v1493, 3
    %v1505 = vsel %vm758, %v1504, %v1503
    %v1506 = vrot.slane %v1494, 2
    %v1507 = vsel %vm761, %v1506, %v1505
    %v1508 = vrot.slane %v1495, 1
    %v1509 = vsel %vm764, %v1508, %v1507
    %v1510 = vpack.c.b16 %v1509, %v1509
    %v1512 = vsel %vm773, %v1510, 0
    %1514 = vmatpush.bf16.msra.mxu0 0
    %1515 = vmatpush.bf16.msra.mxu0 0
    %1516 = vmatpush.bf16.msra.mxu0 0
    %1517 = vmatpush.bf16.msra.mxu0 0
    %1518 = vmatpush.bf16.msra.mxu0 0
    %1519 = vmatpush.bf16.msra.mxu0 0
    %1520 = vmatpush.bf16.msra.mxu0 0
    %1521 = vmatpush.bf16.msra.mxu0 %v840
    %1522 = vmatmul.bf16.gmra.mxu0 %v1512
    %v1523 = vpop.f32.mrf.mxu0
    %v1524 = vadd.f32 0.0, %v1523
    %v1525 = vpop.f32.mrf.mxu0
    %1526 = vdwg.mxu0
    %v1527 = vadd.f32 %v1471, %v1524
    %v1528 = vpack.c.bf16 %v694, %v694
    %v1529 = vpack.c.bf16 %v695, %v695
    %v1530 = vpack.c.bf16 %v696, %v696
    %v1531 = vpack.c.bf16 %v697, %v697
    %v1532 = vpack.c.bf16 %v698, %v698
    %v1533 = vpack.c.bf16 %v699, %v699
    %v1534 = vpack.c.bf16 %v700, %v700
    %v1535 = vpack.c.bf16 %v701, %v701
    %v1544 = vunpack.c.l.b16 %v1528
    %v1545 = vunpack.c.l.b16 %v1529
    %v1546 = vunpack.c.l.b16 %v1530
    %v1547 = vunpack.c.l.b16 %v1531
    %v1548 = vunpack.c.l.b16 %v1532
    %v1549 = vunpack.c.l.b16 %v1533
    %v1550 = vunpack.c.l.b16 %v1534
    %v1551 = vunpack.c.l.b16 %v1535
    %v1552 = vrot.slane %v1545, 7
    %v1553 = vsel %vm746, %v1552, %v1544
    %v1554 = vrot.slane %v1546, 6
    %v1555 = vsel %vm749, %v1554, %v1553
    %v1556 = vrot.slane %v1547, 5
    %v1557 = vsel %vm752, %v1556, %v1555
    %v1558 = vrot.slane %v1548, 4
    %v1559 = vsel %vm755, %v1558, %v1557
    %v1560 = vrot.slane %v1549, 3
    %v1561 = vsel %vm758, %v1560, %v1559
    %v1562 = vrot.slane %v1550, 2
    %v1563 = vsel %vm761, %v1562, %v1561
    %v1564 = vrot.slane %v1551, 1
    %v1565 = vsel %vm764, %v1564, %v1563
    %v1566 = vpack.c.b16 %v1565, %v1565
    %v1568 = vsel %vm773, %v1566, 0
    %1570 = vmatpush.bf16.msra.mxu0 0
    %1571 = vmatpush.bf16.msra.mxu0 0
    %1572 = vmatpush.bf16.msra.mxu0 0
    %1573 = vmatpush.bf16.msra.mxu0 0
    %1574 = vmatpush.bf16.msra.mxu0 0
    %1575 = vmatpush.bf16.msra.mxu0 0
    %1576 = vmatpush.bf16.msra.mxu0 0
    %1577 = vmatpush.bf16.msra.mxu0 %v905
    %1578 = vmatmul.bf16.gmra.mxu0 %v1568
    %v1579 = vpop.f32.mrf.mxu0
    %v1580 = vadd.f32 0.0, %v1579
    %v1581 = vpop.f32.mrf.mxu0
    %1582 = vdwg.mxu0
    %v1583 = vadd.f32 %v1527, %v1580
    %vm1584 = vcmp.gt.f32.partialorder %v1583, 0.0
    %v1585 = vmin.f32 %v1583, 0.0
    %v1586 = vmul.f32 %v1585, 1.442695
    %v1587 = vpow.pop %v1586
    %v1588 = vsub.f32 %v1587, 1.0
    %v1589 = vsel %vm1584, %v1583, %v1588
    %1590 = vmatpush.bf16.msra.mxu0 0
    %1591 = vmatpush.bf16.msra.mxu0 0
    %1592 = vmatpush.bf16.msra.mxu0 0
    %1593 = vmatpush.bf16.msra.mxu0 0
    %1594 = vmatpush.bf16.msra.mxu0 0
    %1595 = vmatpush.bf16.msra.mxu0 0
    %1596 = vmatpush.bf16.msra.mxu0 0
    %1597 = vmatpush.bf16.msra.mxu0 %v771
    %1598 = vmatmul.bf16.gmra.mxu0 %v1568
    %v1599 = vpop.f32.mrf.mxu0
    %v1600 = vadd.f32 0.0, %v1599
    %v1601 = vpop.f32.mrf.mxu0
    %1602 = vdwg.mxu0
    %v1603 = vadd.f32 %v791, %v1600
    %v1604 = vpack.c.bf16 %v702, %v702
    %v1605 = vpack.c.bf16 %v703, %v703
    %v1606 = vpack.c.bf16 %v704, %v704
    %v1607 = vpack.c.bf16 %v705, %v705
    %v1608 = vpack.c.bf16 %v706, %v706
    %v1609 = vpack.c.bf16 %v707, %v707
    %v1610 = vpack.c.bf16 %v708, %v708
    %v1611 = vpack.c.bf16 %v709, %v709
    %v1620 = vunpack.c.l.b16 %v1604
    %v1621 = vunpack.c.l.b16 %v1605
    %v1622 = vunpack.c.l.b16 %v1606
    %v1623 = vunpack.c.l.b16 %v1607
    %v1624 = vunpack.c.l.b16 %v1608
    %v1625 = vunpack.c.l.b16 %v1609
    %v1626 = vunpack.c.l.b16 %v1610
    %v1627 = vunpack.c.l.b16 %v1611
    %v1628 = vrot.slane %v1621, 7
    %v1629 = vsel %vm746, %v1628, %v1620
    %v1630 = vrot.slane %v1622, 6
    %v1631 = vsel %vm749, %v1630, %v1629
    %v1632 = vrot.slane %v1623, 5
    %v1633 = vsel %vm752, %v1632, %v1631
    %v1634 = vrot.slane %v1624, 4
    %v1635 = vsel %vm755, %v1634, %v1633
    %v1636 = vrot.slane %v1625, 3
    %v1637 = vsel %vm758, %v1636, %v1635
    %v1638 = vrot.slane %v1626, 2
    %v1639 = vsel %vm761, %v1638, %v1637
    %v1640 = vrot.slane %v1627, 1
    %v1641 = vsel %vm764, %v1640, %v1639
    %v1642 = vpack.c.b16 %v1641, %v1641
    %v1644 = vsel %vm773, %v1642, 0
    %1646 = vmatpush.bf16.msra.mxu0 0
    %1647 = vmatpush.bf16.msra.mxu0 0
    %1648 = vmatpush.bf16.msra.mxu0 0
    %1649 = vmatpush.bf16.msra.mxu0 0
    %1650 = vmatpush.bf16.msra.mxu0 0
    %1651 = vmatpush.bf16.msra.mxu0 0
    %1652 = vmatpush.bf16.msra.mxu0 0
    %1653 = vmatpush.bf16.msra.mxu0 %v840
    %1654 = vmatmul.bf16.gmra.mxu0 %v1644
    %v1655 = vpop.f32.mrf.mxu0
    %v1656 = vadd.f32 0.0, %v1655
    %v1657 = vpop.f32.mrf.mxu0
    %1658 = vdwg.mxu0
    %v1659 = vadd.f32 %v1603, %v1656
    %v1660 = vpack.c.bf16 %v710, %v710
    %v1661 = vpack.c.bf16 %v711, %v711
    %v1662 = vpack.c.bf16 %v712, %v712
    %v1663 = vpack.c.bf16 %v713, %v713
    %v1664 = vpack.c.bf16 %v714, %v714
    %v1665 = vpack.c.bf16 %v715, %v715
    %v1666 = vpack.c.bf16 %v716, %v716
    %v1667 = vpack.c.bf16 %v717, %v717
    %v1676 = vunpack.c.l.b16 %v1660
    %v1677 = vunpack.c.l.b16 %v1661
    %v1678 = vunpack.c.l.b16 %v1662
    %v1679 = vunpack.c.l.b16 %v1663
    %v1680 = vunpack.c.l.b16 %v1664
    %v1681 = vunpack.c.l.b16 %v1665
    %v1682 = vunpack.c.l.b16 %v1666
    %v1683 = vunpack.c.l.b16 %v1667
    %v1684 = vrot.slane %v1677, 7
    %v1685 = vsel %vm746, %v1684, %v1676
    %v1686 = vrot.slane %v1678, 6
    %v1687 = vsel %vm749, %v1686, %v1685
    %v1688 = vrot.slane %v1679, 5
    %v1689 = vsel %vm752, %v1688, %v1687
    %v1690 = vrot.slane %v1680, 4
    %v1691 = vsel %vm755, %v1690, %v1689
    %v1692 = vrot.slane %v1681, 3
    %v1693 = vsel %vm758, %v1692, %v1691
    %v1694 = vrot.slane %v1682, 2
    %v1695 = vsel %vm761, %v1694, %v1693
    %v1696 = vrot.slane %v1683, 1
    %v1697 = vsel %vm764, %v1696, %v1695
    %v1698 = vpack.c.b16 %v1697, %v1697
    %v1700 = vsel %vm773, %v1698, 0
    %1702 = vmatpush.bf16.msra.mxu0 0
    %1703 = vmatpush.bf16.msra.mxu0 0
    %1704 = vmatpush.bf16.msra.mxu0 0
    %1705 = vmatpush.bf16.msra.mxu0 0
    %1706 = vmatpush.bf16.msra.mxu0 0
    %1707 = vmatpush.bf16.msra.mxu0 0
    %1708 = vmatpush.bf16.msra.mxu0 0
    %1709 = vmatpush.bf16.msra.mxu0 %v905
    %1710 = vmatmul.bf16.gmra.mxu0 %v1700
    %v1711 = vpop.f32.mrf.mxu0
    %v1712 = vadd.f32 0.0, %v1711
    %v1713 = vpop.f32.mrf.mxu0
    %1714 = vdwg.mxu0
    %v1715 = vadd.f32 %v1659, %v1712
    %vm1716 = vcmp.gt.f32.partialorder %v1715, 0.0
    %v1717 = vmin.f32 %v1715, 0.0
    %v1718 = vmul.f32 %v1717, 1.442695
    %v1719 = vpow.pop %v1718
    %v1720 = vsub.f32 %v1719, 1.0
    %v1721 = vsel %vm1716, %v1715, %v1720
    %v1722 = vld [vmem:[#allocation16] sm:$0x1]
    %v1723 = vpack.c.bf16 %v929, %v929
    %v1724 = vld [vmem:[#allocation14] sm:$0xf]
    %v1725 = vld [vmem:[#allocation14 + $0x4] sm:$0xf]
    %v1726 = vld [vmem:[#allocation14 + $0x8] sm:$0xf]
    %v1727 = vld [vmem:[#allocation14 + $0xc] sm:$0xf]
    %v1728 = vld [vmem:[#allocation14 + $0x10] sm:$0xf]
    %v1729 = vld [vmem:[#allocation14 + $0x14] sm:$0xf]
    %v1730 = vld [vmem:[#allocation14 + $0x18] sm:$0xf]
    %v1731 = vld [vmem:[#allocation14 + $0x1c] sm:$0xf]
    %v1740 = vunpack.c.l.b16 %v1724
    %v1741 = vunpack.c.l.b16 %v1725
    %v1742 = vunpack.c.l.b16 %v1726
    %v1743 = vunpack.c.l.b16 %v1727
    %v1744 = vunpack.c.l.b16 %v1728
    %v1745 = vunpack.c.l.b16 %v1729
    %v1746 = vunpack.c.l.b16 %v1730
    %v1747 = vunpack.c.l.b16 %v1731
    %v1748 = vpack.c.b16 %v1741, %v1740
    %v1749 = vpack.c.b16 %v1743, %v1742
    %v1750 = vpack.c.b16 %v1745, %v1744
    %v1751 = vpack.c.b16 %v1747, %v1746
    %vm1756 = vcmask 523264
    %v1758 = vsel %vm1756, %v1723, 0
    %1760 = vmatpush.bf16.msra.mxu0 0
    %1761 = vmatpush.bf16.msra.mxu0 0
    %1762 = vmatpush.bf16.msra.mxu0 0
    %1763 = vmatpush.bf16.msra.mxu0 0
    %1764 = vmatpush.bf16.msra.mxu0 %v1751
    %1765 = vmatpush.bf16.msra.mxu0 %v1750
    %1766 = vmatpush.bf16.msra.mxu0 %v1749
    %1767 = vmatpush.bf16.msra.mxu0 %v1748
    %1768 = vmatmul.bf16.gmra.mxu0 %v1758
    %v1769 = vpop.f32.mrf.mxu0
    %v1770 = vadd.f32 0.0, %v1769
    %v1771 = vpop.f32.mrf.mxu0
    %1772 = vdwg.mxu0
    %v1774 = vperm.slane %v1722, 0
    %v1776 = vadd.f32 %v1774, %v1770
    %v1777 = vpack.c.bf16 %v1061, %v1061
    %s1778 = scalar_lea.vmem [#allocation14], 32
    %v1779 = vld [vmem:[%s1778] sm:$0xf]
    %v1780 = vld [vmem:[%s1778 + $0x4] sm:$0xf]
    %v1781 = vld [vmem:[%s1778 + $0x8] sm:$0xf]
    %v1782 = vld [vmem:[%s1778 + $0xc] sm:$0xf]
    %v1783 = vld [vmem:[%s1778 + $0x10] sm:$0xf]
    %v1784 = vld [vmem:[%s1778 + $0x14] sm:$0xf]
    %v1785 = vld [vmem:[%s1778 + $0x18] sm:$0xf]
    %v1786 = vld [vmem:[%s1778 + $0x1c] sm:$0xf]
    %v1795 = vunpack.c.l.b16 %v1779
    %v1796 = vunpack.c.l.b16 %v1780
    %v1797 = vunpack.c.l.b16 %v1781
    %v1798 = vunpack.c.l.b16 %v1782
    %v1799 = vunpack.c.l.b16 %v1783
    %v1800 = vunpack.c.l.b16 %v1784
    %v1801 = vunpack.c.l.b16 %v1785
    %v1802 = vunpack.c.l.b16 %v1786
    %v1803 = vpack.c.b16 %v1796, %v1795
    %v1804 = vpack.c.b16 %v1798, %v1797
    %v1805 = vpack.c.b16 %v1800, %v1799
    %v1806 = vpack.c.b16 %v1802, %v1801
    %v1812 = vsel %vm1756, %v1777, 0
    %1814 = vmatpush.bf16.msra.mxu0 0
    %1815 = vmatpush.bf16.msra.mxu0 0
    %1816 = vmatpush.bf16.msra.mxu0 0
    %1817 = vmatpush.bf16.msra.mxu0 0
    %1818 = vmatpush.bf16.msra.mxu0 %v1806
    %1819 = vmatpush.bf16.msra.mxu0 %v1805
    %1820 = vmatpush.bf16.msra.mxu0 %v1804
    %1821 = vmatpush.bf16.msra.mxu0 %v1803
    %1822 = vmatmul.bf16.gmra.mxu0 %v1812
    %v1823 = vpop.f32.mrf.mxu0
    %v1824 = vadd.f32 0.0, %v1823
    %v1825 = vpop.f32.mrf.mxu0
    %1826 = vdwg.mxu0
    %v1827 = vadd.f32 %v1776, %v1824
    %v1828 = vpack.c.bf16 %v1193, %v1193
    %s1829 = scalar_lea.vmem [#allocation14], 64
    %v1830 = vld [vmem:[%s1829] sm:$0xf]
    %v1831 = vld [vmem:[%s1829 + $0x4] sm:$0xf]
    %v1832 = vld [vmem:[%s1829 + $0x8] sm:$0xf]
    %v1833 = vld [vmem:[%s1829 + $0xc] sm:$0xf]
    %v1834 = vld [vmem:[%s1829 + $0x10] sm:$0xf]
    %v1835 = vld [vmem:[%s1829 + $0x14] sm:$0xf]
    %v1836 = vld [vmem:[%s1829 + $0x18] sm:$0xf]
    %v1837 = vld [vmem:[%s1829 + $0x1c] sm:$0xf]
    %v1846 = vunpack.c.l.b16 %v1830
    %v1847 = vunpack.c.l.b16 %v1831
    %v1848 = vunpack.c.l.b16 %v1832
    %v1849 = vunpack.c.l.b16 %v1833
    %v1850 = vunpack.c.l.b16 %v1834
    %v1851 = vunpack.c.l.b16 %v1835
    %v1852 = vunpack.c.l.b16 %v1836
    %v1853 = vunpack.c.l.b16 %v1837
    %v1854 = vpack.c.b16 %v1847, %v1846
    %v1855 = vpack.c.b16 %v1849, %v1848
    %v1856 = vpack.c.b16 %v1851, %v1850
    %v1857 = vpack.c.b16 %v1853, %v1852
    %v1863 = vsel %vm1756, %v1828, 0
    %1865 = vmatpush.bf16.msra.mxu0 0
    %1866 = vmatpush.bf16.msra.mxu0 0
    %1867 = vmatpush.bf16.msra.mxu0 0
    %1868 = vmatpush.bf16.msra.mxu0 0
    %1869 = vmatpush.bf16.msra.mxu0 %v1857
    %1870 = vmatpush.bf16.msra.mxu0 %v1856
    %1871 = vmatpush.bf16.msra.mxu0 %v1855
    %1872 = vmatpush.bf16.msra.mxu0 %v1854
    %1873 = vmatmul.bf16.gmra.mxu0 %v1863
    %v1874 = vpop.f32.mrf.mxu0
    %v1875 = vadd.f32 0.0, %v1874
    %v1876 = vpop.f32.mrf.mxu0
    %1877 = vdwg.mxu0
    %v1878 = vadd.f32 %v1827, %v1875
    %vm1879 = vcmp.gt.f32.partialorder %v1878, 0.0
    %v1880 = vmin.f32 %v1878, 0.0
    %v1881 = vmul.f32 %v1880, 1.442695
    %v1882 = vpow.pop %v1881
    %v1883 = vsub.f32 %v1882, 1.0
    %v1884 = vsel %vm1879, %v1878, %v1883
    %1885 = vmatpush.bf16.msra.mxu0 0
    %1886 = vmatpush.bf16.msra.mxu0 0
    %1887 = vmatpush.bf16.msra.mxu0 0
    %1888 = vmatpush.bf16.msra.mxu0 0
    %1889 = vmatpush.bf16.msra.mxu0 %v1751
    %1890 = vmatpush.bf16.msra.mxu0 %v1750
    %1891 = vmatpush.bf16.msra.mxu0 %v1749
    %1892 = vmatpush.bf16.msra.mxu0 %v1748
    %1893 = vmatmul.bf16.gmra.mxu0 %v1863
    %v1894 = vpop.f32.mrf.mxu0
    %v1895 = vadd.f32 0.0, %v1894
    %v1896 = vpop.f32.mrf.mxu0
    %1897 = vdwg.mxu0
    %v1898 = vadd.f32 %v1774, %v1895
    %v1899 = vpack.c.bf16 %v1325, %v1325
    %v1901 = vsel %vm1756, %v1899, 0
    %1903 = vmatpush.bf16.msra.mxu0 0
    %1904 = vmatpush.bf16.msra.mxu0 0
    %1905 = vmatpush.bf16.msra.mxu0 0
    %1906 = vmatpush.bf16.msra.mxu0 0
    %1907 = vmatpush.bf16.msra.mxu0 %v1806
    %1908 = vmatpush.bf16.msra.mxu0 %v1805
    %1909 = vmatpush.bf16.msra.mxu0 %v1804
    %1910 = vmatpush.bf16.msra.mxu0 %v1803
    %1911 = vmatmul.bf16.gmra.mxu0 %v1901
    %v1912 = vpop.f32.mrf.mxu0
    %v1913 = vadd.f32 0.0, %v1912
    %v1914 = vpop.f32.mrf.mxu0
    %1915 = vdwg.mxu0
    %v1916 = vadd.f32 %v1898, %v1913
    %v1917 = vpack.c.bf16 %v1457, %v1457
    %v1919 = vsel %vm1756, %v1917, 0
    %1921 = vmatpush.bf16.msra.mxu0 0
    %1922 = vmatpush.bf16.msra.mxu0 0
    %1923 = vmatpush.bf16.msra.mxu0 0
    %1924 = vmatpush.bf16.msra.mxu0 0
    %1925 = vmatpush.bf16.msra.mxu0 %v1857
    %1926 = vmatpush.bf16.msra.mxu0 %v1856
    %1927 = vmatpush.bf16.msra.mxu0 %v1855
    %1928 = vmatpush.bf16.msra.mxu0 %v1854
    %1929 = vmatmul.bf16.gmra.mxu0 %v1919
    %v1930 = vpop.f32.mrf.mxu0
    %v1931 = vadd.f32 0.0, %v1930
    %v1932 = vpop.f32.mrf.mxu0
    %1933 = vdwg.mxu0
    %v1934 = vadd.f32 %v1916, %v1931
    %vm1935 = vcmp.gt.f32.partialorder %v1934, 0.0
    %v1936 = vmin.f32 %v1934, 0.0
    %v1937 = vmul.f32 %v1936, 1.442695
    %v1938 = vpow.pop %v1937
    %v1939 = vsub.f32 %v1938, 1.0
    %v1940 = vsel %vm1935, %v1934, %v1939
    %1941 = vmatpush.bf16.msra.mxu0 0
    %1942 = vmatpush.bf16.msra.mxu0 0
    %1943 = vmatpush.bf16.msra.mxu0 0
    %1944 = vmatpush.bf16.msra.mxu0 0
    %1945 = vmatpush.bf16.msra.mxu0 %v1751
    %1946 = vmatpush.bf16.msra.mxu0 %v1750
    %1947 = vmatpush.bf16.msra.mxu0 %v1749
    %1948 = vmatpush.bf16.msra.mxu0 %v1748
    %1949 = vmatmul.bf16.gmra.mxu0 %v1919
    %v1950 = vpop.f32.mrf.mxu0
    %v1951 = vadd.f32 0.0, %v1950
    %v1952 = vpop.f32.mrf.mxu0
    %1953 = vdwg.mxu0
    %v1954 = vadd.f32 %v1774, %v1951
    %v1955 = vpack.c.bf16 %v1589, %v1589
    %v1957 = vsel %vm1756, %v1955, 0
    %1959 = vmatpush.bf16.msra.mxu0 0
    %1960 = vmatpush.bf16.msra.mxu0 0
    %1961 = vmatpush.bf16.msra.mxu0 0
    %1962 = vmatpush.bf16.msra.mxu0 0
    %1963 = vmatpush.bf16.msra.mxu0 %v1806
    %1964 = vmatpush.bf16.msra.mxu0 %v1805
    %1965 = vmatpush.bf16.msra.mxu0 %v1804
    %1966 = vmatpush.bf16.msra.mxu0 %v1803
    %1967 = vmatmul.bf16.gmra.mxu0 %v1957
    %v1968 = vpop.f32.mrf.mxu0
    %v1969 = vadd.f32 0.0, %v1968
    %v1970 = vpop.f32.mrf.mxu0
    %1971 = vdwg.mxu0
    %v1972 = vadd.f32 %v1954, %v1969
    %v1973 = vpack.c.bf16 %v1721, %v1721
    %v1975 = vsel %vm1756, %v1973, 0
    %1977 = vmatpush.bf16.msra.mxu0 0
    %1978 = vmatpush.bf16.msra.mxu0 0
    %1979 = vmatpush.bf16.msra.mxu0 0
    %1980 = vmatpush.bf16.msra.mxu0 0
    %1981 = vmatpush.bf16.msra.mxu0 %v1857
    %1982 = vmatpush.bf16.msra.mxu0 %v1856
    %1983 = vmatpush.bf16.msra.mxu0 %v1855
    %1984 = vmatpush.bf16.msra.mxu0 %v1854
    %1985 = vmatmul.bf16.gmra.mxu0 %v1975
    %v1986 = vpop.f32.mrf.mxu0
    %v1987 = vadd.f32 0.0, %v1986
    %v1988 = vpop.f32.mrf.mxu0
    %1989 = vdwg.mxu0
    %v1990 = vadd.f32 %v1972, %v1987
    %vm1991 = vcmp.gt.f32.partialorder %v1990, 0.0
    %v1992 = vmin.f32 %v1990, 0.0
    %v1993 = vmul.f32 %v1992, 1.442695
    %v1994 = vpow.pop %v1993
    %v1995 = vsub.f32 %v1994, 1.0
    %v1996 = vsel %vm1991, %v1990, %v1995
    %v1997 = vld [vmem:[%s29] sm:$0x3]
    %v1998 = vpack.c.bf16 %v1884, %v1884
    %v1999 = vld [vmem:[#allocation17] sm:$0xff]
    %v2000 = vld [vmem:[#allocation17 + $0x8] sm:$0xff]
    %v2001 = vld [vmem:[#allocation17 + $0x10] sm:$0xff]
    %v2002 = vld [vmem:[#allocation17 + $0x18] sm:$0xff]
    %v2003 = vld [vmem:[#allocation17 + $0x20] sm:$0xff]
    %v2004 = vld [vmem:[#allocation17 + $0x28] sm:$0xff]
    %v2005 = vld [vmem:[#allocation17 + $0x30] sm:$0xff]
    %v2006 = vld [vmem:[#allocation17 + $0x38] sm:$0xff]
    %v2007 = vld [vmem:[#allocation17 + $0x40] sm:$0xff]
    %v2008 = vld [vmem:[#allocation17 + $0x48] sm:$0xff]
    %v2009 = vld [vmem:[#allocation17 + $0x50] sm:$0xff]
    %v2010 = vld [vmem:[#allocation17 + $0x58] sm:$0xff]
    %v2011 = vld [vmem:[#allocation17 + $0x60] sm:$0xff]
    %v2012 = vld [vmem:[#allocation17 + $0x68] sm:$0xff]
    %v2013 = vld [vmem:[#allocation17 + $0x70] sm:$0xff]
    %v2014 = vld [vmem:[#allocation17 + $0x78] sm:$0xff]
    %v2031 = vunpack.c.l.b16 %v1999
    %v2032 = vunpack.c.h.b16 %v1999
    %v2033 = vunpack.c.l.b16 %v2000
    %v2034 = vunpack.c.h.b16 %v2000
    %v2035 = vunpack.c.l.b16 %v2001
    %v2036 = vunpack.c.h.b16 %v2001
    %v2037 = vunpack.c.l.b16 %v2002
    %v2038 = vunpack.c.h.b16 %v2002
    %v2039 = vunpack.c.l.b16 %v2003
    %v2040 = vunpack.c.h.b16 %v2003
    %v2041 = vunpack.c.l.b16 %v2004
    %v2042 = vunpack.c.h.b16 %v2004
    %v2043 = vunpack.c.l.b16 %v2005
    %v2044 = vunpack.c.h.b16 %v2005
    %v2045 = vunpack.c.l.b16 %v2006
    %v2046 = vunpack.c.h.b16 %v2006
    %v2047 = vunpack.c.l.b16 %v2007
    %v2048 = vunpack.c.h.b16 %v2007
    %v2049 = vunpack.c.l.b16 %v2008
    %v2050 = vunpack.c.h.b16 %v2008
    %v2051 = vunpack.c.l.b16 %v2009
    %v2052 = vunpack.c.h.b16 %v2009
    %v2053 = vunpack.c.l.b16 %v2010
    %v2054 = vunpack.c.h.b16 %v2010
    %v2055 = vunpack.c.l.b16 %v2011
    %v2056 = vunpack.c.h.b16 %v2011
    %v2057 = vunpack.c.l.b16 %v2012
    %v2058 = vunpack.c.h.b16 %v2012
    %v2059 = vunpack.c.l.b16 %v2013
    %v2060 = vunpack.c.h.b16 %v2013
    %v2061 = vunpack.c.l.b16 %v2014
    %v2062 = vunpack.c.h.b16 %v2014
    %v2063 = vpack.c.b16 %v2033, %v2031
    %v2064 = vpack.c.b16 %v2034, %v2032
    %v2065 = vpack.c.b16 %v2037, %v2035
    %v2066 = vpack.c.b16 %v2038, %v2036
    %v2067 = vpack.c.b16 %v2041, %v2039
    %v2068 = vpack.c.b16 %v2042, %v2040
    %v2069 = vpack.c.b16 %v2045, %v2043
    %v2070 = vpack.c.b16 %v2046, %v2044
    %v2071 = vpack.c.b16 %v2049, %v2047
    %v2072 = vpack.c.b16 %v2050, %v2048
    %v2073 = vpack.c.b16 %v2053, %v2051
    %v2074 = vpack.c.b16 %v2054, %v2052
    %v2075 = vpack.c.b16 %v2057, %v2055
    %v2076 = vpack.c.b16 %v2058, %v2056
    %v2077 = vpack.c.b16 %v2061, %v2059
    %v2078 = vpack.c.b16 %v2062, %v2060
    %2095 = vmatpush.bf16.msra.mxu0 %v2077
    %2096 = vmatpush.bf16.msra.mxu0 %v2075
    %2097 = vmatpush.bf16.msra.mxu0 %v2073
    %2098 = vmatpush.bf16.msra.mxu0 %v2071
    %2099 = vmatpush.bf16.msra.mxu0 %v2069
    %2100 = vmatpush.bf16.msra.mxu0 %v2067
    %2101 = vmatpush.bf16.msra.mxu0 %v2065
    %2102 = vmatpush.bf16.msra.mxu0 %v2063
    %2103 = vmatmul.bf16.gmra.mxu0 %v1998
    %v2104 = vpop.f32.mrf.mxu0
    %v2105 = vadd.f32 0.0, %v2104
    %v2106 = vpop.f32.mrf.mxu0
    %2107 = vdwg.mxu0
    %2108 = vmatpush.bf16.msra.mxu0 %v2078
    %2109 = vmatpush.bf16.msra.mxu0 %v2076
    %2110 = vmatpush.bf16.msra.mxu0 %v2074
    %2111 = vmatpush.bf16.msra.mxu0 %v2072
    %2112 = vmatpush.bf16.msra.mxu0 %v2070
    %2113 = vmatpush.bf16.msra.mxu0 %v2068
    %2114 = vmatpush.bf16.msra.mxu0 %v2066
    %2115 = vmatpush.bf16.msra.mxu0 %v2064
    %2116 = vmatmul.bf16.gmra.mxu0 %v1998
    %v2117 = vpop.f32.mrf.mxu0
    %v2118 = vadd.f32 0.0, %v2117
    %v2119 = vpop.f32.mrf.mxu0
    %2120 = vdwg.mxu0
    %v2122 = vperm.slane %v1997, 0
    %v2123 = vperm.slane %v1997, 1
    %v2126 = vadd.f32 %v2122, %v2105
    %v2127 = vadd.f32 %v2123, %v2118
    %v2128 = vpack.c.bf16 %v1940, %v1940
    %s2129 = scalar_lea.vmem [#allocation17], 128
    %v2130 = vld [vmem:[%s2129] sm:$0xff]
    %v2131 = vld [vmem:[%s2129 + $0x8] sm:$0xff]
    %v2132 = vld [vmem:[%s2129 + $0x10] sm:$0xff]
    %v2133 = vld [vmem:[%s2129 + $0x18] sm:$0xff]
    %v2134 = vld [vmem:[%s2129 + $0x20] sm:$0xff]
    %v2135 = vld [vmem:[%s2129 + $0x28] sm:$0xff]
    %v2136 = vld [vmem:[%s2129 + $0x30] sm:$0xff]
    %v2137 = vld [vmem:[%s2129 + $0x38] sm:$0xff]
    %v2138 = vld [vmem:[%s2129 + $0x40] sm:$0xff]
    %v2139 = vld [vmem:[%s2129 + $0x48] sm:$0xff]
    %v2140 = vld [vmem:[%s2129 + $0x50] sm:$0xff]
    %v2141 = vld [vmem:[%s2129 + $0x58] sm:$0xff]
    %v2142 = vld [vmem:[%s2129 + $0x60] sm:$0xff]
    %v2143 = vld [vmem:[%s2129 + $0x68] sm:$0xff]
    %v2144 = vld [vmem:[%s2129 + $0x70] sm:$0xff]
    %v2145 = vld [vmem:[%s2129 + $0x78] sm:$0xff]
    %v2162 = vunpack.c.l.b16 %v2130
    %v2163 = vunpack.c.h.b16 %v2130
    %v2164 = vunpack.c.l.b16 %v2131
    %v2165 = vunpack.c.h.b16 %v2131
    %v2166 = vunpack.c.l.b16 %v2132
    %v2167 = vunpack.c.h.b16 %v2132
    %v2168 = vunpack.c.l.b16 %v2133
    %v2169 = vunpack.c.h.b16 %v2133
    %v2170 = vunpack.c.l.b16 %v2134
    %v2171 = vunpack.c.h.b16 %v2134
    %v2172 = vunpack.c.l.b16 %v2135
    %v2173 = vunpack.c.h.b16 %v2135
    %v2174 = vunpack.c.l.b16 %v2136
    %v2175 = vunpack.c.h.b16 %v2136
    %v2176 = vunpack.c.l.b16 %v2137
    %v2177 = vunpack.c.h.b16 %v2137
    %v2178 = vunpack.c.l.b16 %v2138
    %v2179 = vunpack.c.h.b16 %v2138
    %v2180 = vunpack.c.l.b16 %v2139
    %v2181 = vunpack.c.h.b16 %v2139
    %v2182 = vunpack.c.l.b16 %v2140
    %v2183 = vunpack.c.h.b16 %v2140
    %v2184 = vunpack.c.l.b16 %v2141
    %v2185 = vunpack.c.h.b16 %v2141
    %v2186 = vunpack.c.l.b16 %v2142
    %v2187 = vunpack.c.h.b16 %v2142
    %v2188 = vunpack.c.l.b16 %v2143
    %v2189 = vunpack.c.h.b16 %v2143
    %v2190 = vunpack.c.l.b16 %v2144
    %v2191 = vunpack.c.h.b16 %v2144
    %v2192 = vunpack.c.l.b16 %v2145
    %v2193 = vunpack.c.h.b16 %v2145
    %v2194 = vpack.c.b16 %v2164, %v2162
    %v2195 = vpack.c.b16 %v2165, %v2163
    %v2196 = vpack.c.b16 %v2168, %v2166
    %v2197 = vpack.c.b16 %v2169, %v2167
    %v2198 = vpack.c.b16 %v2172, %v2170
    %v2199 = vpack.c.b16 %v2173, %v2171
    %v2200 = vpack.c.b16 %v2176, %v2174
    %v2201 = vpack.c.b16 %v2177, %v2175
    %v2202 = vpack.c.b16 %v2180, %v2178
    %v2203 = vpack.c.b16 %v2181, %v2179
    %v2204 = vpack.c.b16 %v2184, %v2182
    %v2205 = vpack.c.b16 %v2185, %v2183
    %v2206 = vpack.c.b16 %v2188, %v2186
    %v2207 = vpack.c.b16 %v2189, %v2187
    %v2208 = vpack.c.b16 %v2192, %v2190
    %v2209 = vpack.c.b16 %v2193, %v2191
    %2226 = vmatpush.bf16.msra.mxu0 %v2208
    %2227 = vmatpush.bf16.msra.mxu0 %v2206
    %2228 = vmatpush.bf16.msra.mxu0 %v2204
    %2229 = vmatpush.bf16.msra.mxu0 %v2202
    %2230 = vmatpush.bf16.msra.mxu0 %v2200
    %2231 = vmatpush.bf16.msra.mxu0 %v2198
    %2232 = vmatpush.bf16.msra.mxu0 %v2196
    %2233 = vmatpush.bf16.msra.mxu0 %v2194
    %2234 = vmatmul.bf16.gmra.mxu0 %v2128
    %v2235 = vpop.f32.mrf.mxu0
    %v2236 = vadd.f32 0.0, %v2235
    %v2237 = vpop.f32.mrf.mxu0
    %2238 = vdwg.mxu0
    %2239 = vmatpush.bf16.msra.mxu0 %v2209
    %2240 = vmatpush.bf16.msra.mxu0 %v2207
    %2241 = vmatpush.bf16.msra.mxu0 %v2205
    %2242 = vmatpush.bf16.msra.mxu0 %v2203
    %2243 = vmatpush.bf16.msra.mxu0 %v2201
    %2244 = vmatpush.bf16.msra.mxu0 %v2199
    %2245 = vmatpush.bf16.msra.mxu0 %v2197
    %2246 = vmatpush.bf16.msra.mxu0 %v2195
    %2247 = vmatmul.bf16.gmra.mxu0 %v2128
    %v2248 = vpop.f32.mrf.mxu0
    %v2249 = vadd.f32 0.0, %v2248
    %v2250 = vpop.f32.mrf.mxu0
    %2251 = vdwg.mxu0
    %v2252 = vadd.f32 %v2126, %v2236
    %v2253 = vadd.f32 %v2127, %v2249
    %v2254 = vpack.c.bf16 %v1996, %v1996
    %s2255 = scalar_lea.vmem [#allocation17], 256
    %v2256 = vld [vmem:[%s2255] sm:$0xff]
    %v2257 = vld [vmem:[%s2255 + $0x8] sm:$0xff]
    %v2258 = vld [vmem:[%s2255 + $0x10] sm:$0xff]
    %v2259 = vld [vmem:[%s2255 + $0x18] sm:$0xff]
    %v2260 = vld [vmem:[%s2255 + $0x20] sm:$0xff]
    %v2261 = vld [vmem:[%s2255 + $0x28] sm:$0xff]
    %v2262 = vld [vmem:[%s2255 + $0x30] sm:$0xff]
    %v2263 = vld [vmem:[%s2255 + $0x38] sm:$0xff]
    %v2264 = vld [vmem:[%s2255 + $0x40] sm:$0xff]
    %v2265 = vld [vmem:[%s2255 + $0x48] sm:$0xff]
    %v2266 = vld [vmem:[%s2255 + $0x50] sm:$0xff]
    %v2267 = vld [vmem:[%s2255 + $0x58] sm:$0xff]
    %v2268 = vld [vmem:[%s2255 + $0x60] sm:$0xff]
    %v2269 = vld [vmem:[%s2255 + $0x68] sm:$0xff]
    %v2270 = vld [vmem:[%s2255 + $0x70] sm:$0xff]
    %v2271 = vld [vmem:[%s2255 + $0x78] sm:$0xff]
    %v2288 = vunpack.c.l.b16 %v2256
    %v2289 = vunpack.c.h.b16 %v2256
    %v2290 = vunpack.c.l.b16 %v2257
    %v2291 = vunpack.c.h.b16 %v2257
    %v2292 = vunpack.c.l.b16 %v2258
    %v2293 = vunpack.c.h.b16 %v2258
    %v2294 = vunpack.c.l.b16 %v2259
    %v2295 = vunpack.c.h.b16 %v2259
    %v2296 = vunpack.c.l.b16 %v2260
    %v2297 = vunpack.c.h.b16 %v2260
    %v2298 = vunpack.c.l.b16 %v2261
    %v2299 = vunpack.c.h.b16 %v2261
    %v2300 = vunpack.c.l.b16 %v2262
    %v2301 = vunpack.c.h.b16 %v2262
    %v2302 = vunpack.c.l.b16 %v2263
    %v2303 = vunpack.c.h.b16 %v2263
    %v2304 = vunpack.c.l.b16 %v2264
    %v2305 = vunpack.c.h.b16 %v2264
    %v2306 = vunpack.c.l.b16 %v2265
    %v2307 = vunpack.c.h.b16 %v2265
    %v2308 = vunpack.c.l.b16 %v2266
    %v2309 = vunpack.c.h.b16 %v2266
    %v2310 = vunpack.c.l.b16 %v2267
    %v2311 = vunpack.c.h.b16 %v2267
    %v2312 = vunpack.c.l.b16 %v2268
    %v2313 = vunpack.c.h.b16 %v2268
    %v2314 = vunpack.c.l.b16 %v2269
    %v2315 = vunpack.c.h.b16 %v2269
    %v2316 = vunpack.c.l.b16 %v2270
    %v2317 = vunpack.c.h.b16 %v2270
    %v2318 = vunpack.c.l.b16 %v2271
    %v2319 = vunpack.c.h.b16 %v2271
    %v2320 = vpack.c.b16 %v2290, %v2288
    %v2321 = vpack.c.b16 %v2291, %v2289
    %v2322 = vpack.c.b16 %v2294, %v2292
    %v2323 = vpack.c.b16 %v2295, %v2293
    %v2324 = vpack.c.b16 %v2298, %v2296
    %v2325 = vpack.c.b16 %v2299, %v2297
    %v2326 = vpack.c.b16 %v2302, %v2300
    %v2327 = vpack.c.b16 %v2303, %v2301
    %v2328 = vpack.c.b16 %v2306, %v2304
    %v2329 = vpack.c.b16 %v2307, %v2305
    %v2330 = vpack.c.b16 %v2310, %v2308
    %v2331 = vpack.c.b16 %v2311, %v2309
    %v2332 = vpack.c.b16 %v2314, %v2312
    %v2333 = vpack.c.b16 %v2315, %v2313
    %v2334 = vpack.c.b16 %v2318, %v2316
    %v2335 = vpack.c.b16 %v2319, %v2317
    %2352 = vmatpush.bf16.msra.mxu0 %v2334
    %2353 = vmatpush.bf16.msra.mxu0 %v2332
    %2354 = vmatpush.bf16.msra.mxu0 %v2330
    %2355 = vmatpush.bf16.msra.mxu0 %v2328
    %2356 = vmatpush.bf16.msra.mxu0 %v2326
    %2357 = vmatpush.bf16.msra.mxu0 %v2324
    %2358 = vmatpush.bf16.msra.mxu0 %v2322
    %2359 = vmatpush.bf16.msra.mxu0 %v2320
    %2360 = vmatmul.bf16.gmra.mxu0 %v2254
    %v2361 = vpop.f32.mrf.mxu0
    %v2362 = vadd.f32 0.0, %v2361
    %v2363 = vpop.f32.mrf.mxu0
    %2364 = vdwg.mxu0
    %2365 = vmatpush.bf16.msra.mxu0 %v2335
    %2366 = vmatpush.bf16.msra.mxu0 %v2333
    %2367 = vmatpush.bf16.msra.mxu0 %v2331
    %2368 = vmatpush.bf16.msra.mxu0 %v2329
    %2369 = vmatpush.bf16.msra.mxu0 %v2327
    %2370 = vmatpush.bf16.msra.mxu0 %v2325
    %2371 = vmatpush.bf16.msra.mxu0 %v2323
    %2372 = vmatpush.bf16.msra.mxu0 %v2321
    %2373 = vmatmul.bf16.gmra.mxu0 %v2254
    %v2374 = vpop.f32.mrf.mxu0
    %v2375 = vadd.f32 0.0, %v2374
    %v2376 = vpop.f32.mrf.mxu0
    %2377 = vdwg.mxu0
    %v2378 = vadd.f32 %v2252, %v2362
    %v2379 = vadd.f32 %v2253, %v2375
    %vm2380 = vcmp.gt.f32.partialorder %v2378, 0.0
    %vm2381 = vcmp.gt.f32.partialorder %v2379, 0.0
    %v2382 = vmin.f32 %v2378, 0.0
    %v2383 = vmin.f32 %v2379, 0.0
    %v2384 = vmul.f32 %v2382, 1.442695
    %v2385 = vpow.pop %v2384
    %v2386 = vmul.f32 %v2383, 1.442695
    %v2387 = vpow.pop %v2386
    %v2388 = vsub.f32 %v2385, 1.0
    %v2389 = vsub.f32 %v2387, 1.0
    %v2390 = vsel %vm2380, %v2378, %v2388
    %v2391 = vsel %vm2381, %v2379, %v2389
    %v2392 = vld [vmem:[%s31] sm:$0xff]
    %v2393 = vld [vmem:[%s31 + $0x8] sm:$0xff]
    %v2394 = vld [vmem:[%s31 + $0x10] sm:$0xff]
    %v2395 = vld [vmem:[%s31 + $0x18] sm:$0xff]
    %v2396 = vld [vmem:[%s31 + $0x20] sm:$0xff]
    %v2397 = vld [vmem:[%s31 + $0x28] sm:$0xff]
    %v2398 = vld [vmem:[%s31 + $0x30] sm:$0xff]
    %v2399 = vld [vmem:[%s31 + $0x38] sm:$0xff]
    %v2400 = vld [vmem:[%s31 + $0x40] sm:$0xff]
    %v2401 = vld [vmem:[%s31 + $0x48] sm:$0xff]
    %v2402 = vld [vmem:[%s31 + $0x50] sm:$0xff]
    %v2403 = vld [vmem:[%s31 + $0x58] sm:$0xff]
    %v2404 = vld [vmem:[%s31 + $0x60] sm:$0xff]
    %v2405 = vld [vmem:[%s31 + $0x68] sm:$0xff]
    %v2406 = vld [vmem:[%s31 + $0x70] sm:$0xff]
    %v2407 = vld [vmem:[%s31 + $0x78] sm:$0xff]
    %v2408 = vld [vmem:[%s31 + $0x80] sm:$0xff]
    %v2409 = vld [vmem:[%s31 + $0x88] sm:$0xff]
    %v2410 = vld [vmem:[%s31 + $0x90] sm:$0xff]
    %v2411 = vld [vmem:[%s31 + $0x98] sm:$0xff]
    %v2412 = vld [vmem:[%s31 + $0xa0] sm:$0xff]
    %v2413 = vld [vmem:[%s31 + $0xa8] sm:$0xff]
    %v2414 = vld [vmem:[%s31 + $0xb0] sm:$0xff]
    %v2415 = vld [vmem:[%s31 + $0xb8] sm:$0xff]
    %v2416 = vld [vmem:[%s31 + $0xc0] sm:$0xff]
    %v2417 = vld [vmem:[%s31 + $0xc8] sm:$0xff]
    %v2418 = vld [vmem:[%s31 + $0xd0] sm:$0xff]
    %v2419 = vld [vmem:[%s31 + $0xd8] sm:$0xff]
    %v2420 = vld [vmem:[%s31 + $0xe0] sm:$0xff]
    %v2421 = vld [vmem:[%s31 + $0xe8] sm:$0xff]
    %v2422 = vld [vmem:[%s31 + $0xf0] sm:$0xff]
    %v2423 = vld [vmem:[%s31 + $0xf8] sm:$0xff]
    %v2424 = vld [vmem:[%s33] sm:$0x3]
    %v2425 = vpack.c.bf16 %v2390, %v2390
    %v2426 = vpack.c.bf16 %v2391, %v2391
    %v2428 = vperm.slane %v2424, 0
    %v2429 = vperm.slane %v2424, 1
    %v2464 = vunpack.c.l.b16 %v2392
    %v2465 = vunpack.c.h.b16 %v2392
    %v2466 = vunpack.c.l.b16 %v2393
    %v2467 = vunpack.c.h.b16 %v2393
    %v2468 = vunpack.c.l.b16 %v2394
    %v2469 = vunpack.c.h.b16 %v2394
    %v2470 = vunpack.c.l.b16 %v2395
    %v2471 = vunpack.c.h.b16 %v2395
    %v2472 = vunpack.c.l.b16 %v2396
    %v2473 = vunpack.c.h.b16 %v2396
    %v2474 = vunpack.c.l.b16 %v2397
    %v2475 = vunpack.c.h.b16 %v2397
    %v2476 = vunpack.c.l.b16 %v2398
    %v2477 = vunpack.c.h.b16 %v2398
    %v2478 = vunpack.c.l.b16 %v2399
    %v2479 = vunpack.c.h.b16 %v2399
    %v2480 = vunpack.c.l.b16 %v2400
    %v2481 = vunpack.c.h.b16 %v2400
    %v2482 = vunpack.c.l.b16 %v2401
    %v2483 = vunpack.c.h.b16 %v2401
    %v2484 = vunpack.c.l.b16 %v2402
    %v2485 = vunpack.c.h.b16 %v2402
    %v2486 = vunpack.c.l.b16 %v2403
    %v2487 = vunpack.c.h.b16 %v2403
    %v2488 = vunpack.c.l.b16 %v2404
    %v2489 = vunpack.c.h.b16 %v2404
    %v2490 = vunpack.c.l.b16 %v2405
    %v2491 = vunpack.c.h.b16 %v2405
    %v2492 = vunpack.c.l.b16 %v2406
    %v2493 = vunpack.c.h.b16 %v2406
    %v2494 = vunpack.c.l.b16 %v2407
    %v2495 = vunpack.c.h.b16 %v2407
    %v2496 = vunpack.c.l.b16 %v2408
    %v2497 = vunpack.c.h.b16 %v2408
    %v2498 = vunpack.c.l.b16 %v2409
    %v2499 = vunpack.c.h.b16 %v2409
    %v2500 = vunpack.c.l.b16 %v2410
    %v2501 = vunpack.c.h.b16 %v2410
    %v2502 = vunpack.c.l.b16 %v2411
    %v2503 = vunpack.c.h.b16 %v2411
    %v2504 = vunpack.c.l.b16 %v2412
    %v2505 = vunpack.c.h.b16 %v2412
    %v2506 = vunpack.c.l.b16 %v2413
    %v2507 = vunpack.c.h.b16 %v2413
    %v2508 = vunpack.c.l.b16 %v2414
    %v2509 = vunpack.c.h.b16 %v2414
    %v2510 = vunpack.c.l.b16 %v2415
    %v2511 = vunpack.c.h.b16 %v2415
    %v2512 = vunpack.c.l.b16 %v2416
    %v2513 = vunpack.c.h.b16 %v2416
    %v2514 = vunpack.c.l.b16 %v2417
    %v2515 = vunpack.c.h.b16 %v2417
    %v2516 = vunpack.c.l.b16 %v2418
    %v2517 = vunpack.c.h.b16 %v2418
    %v2518 = vunpack.c.l.b16 %v2419
    %v2519 = vunpack.c.h.b16 %v2419
    %v2520 = vunpack.c.l.b16 %v2420
    %v2521 = vunpack.c.h.b16 %v2420
    %v2522 = vunpack.c.l.b16 %v2421
    %v2523 = vunpack.c.h.b16 %v2421
    %v2524 = vunpack.c.l.b16 %v2422
    %v2525 = vunpack.c.h.b16 %v2422
    %v2526 = vunpack.c.l.b16 %v2423
    %v2527 = vunpack.c.h.b16 %v2423
    %v2528 = vpack.c.b16 %v2466, %v2464
    %v2529 = vpack.c.b16 %v2467, %v2465
    %v2530 = vpack.c.b16 %v2470, %v2468
    %v2531 = vpack.c.b16 %v2471, %v2469
    %v2532 = vpack.c.b16 %v2474, %v2472
    %v2533 = vpack.c.b16 %v2475, %v2473
    %v2534 = vpack.c.b16 %v2478, %v2476
    %v2535 = vpack.c.b16 %v2479, %v2477
    %v2536 = vpack.c.b16 %v2482, %v2480
    %v2537 = vpack.c.b16 %v2483, %v2481
    %v2538 = vpack.c.b16 %v2486, %v2484
    %v2539 = vpack.c.b16 %v2487, %v2485
    %v2540 = vpack.c.b16 %v2490, %v2488
    %v2541 = vpack.c.b16 %v2491, %v2489
    %v2542 = vpack.c.b16 %v2494, %v2492
    %v2543 = vpack.c.b16 %v2495, %v2493
    %v2544 = vpack.c.b16 %v2498, %v2496
    %v2545 = vpack.c.b16 %v2499, %v2497
    %v2546 = vpack.c.b16 %v2502, %v2500
    %v2547 = vpack.c.b16 %v2503, %v2501
    %v2548 = vpack.c.b16 %v2506, %v2504
    %v2549 = vpack.c.b16 %v2507, %v2505
    %v2550 = vpack.c.b16 %v2510, %v2508
    %v2551 = vpack.c.b16 %v2511, %v2509
    %v2552 = vpack.c.b16 %v2514, %v2512
    %v2553 = vpack.c.b16 %v2515, %v2513
    %v2554 = vpack.c.b16 %v2518, %v2516
    %v2555 = vpack.c.b16 %v2519, %v2517
    %v2556 = vpack.c.b16 %v2522, %v2520
    %v2557 = vpack.c.b16 %v2523, %v2521
    %v2558 = vpack.c.b16 %v2526, %v2524
    %v2559 = vpack.c.b16 %v2527, %v2525
    %2592 = vmatpush.bf16.msra.mxu0 %v2542
    %2593 = vmatpush.bf16.msra.mxu0 %v2540
    %2594 = vmatpush.bf16.msra.mxu0 %v2538
    %2595 = vmatpush.bf16.msra.mxu0 %v2536
    %2596 = vmatpush.bf16.msra.mxu0 %v2534
    %2597 = vmatpush.bf16.msra.mxu0 %v2532
    %2598 = vmatpush.bf16.msra.mxu0 %v2530
    %2599 = vmatpush.bf16.msra.mxu0 %v2528
    %2600 = vmatmul.bf16.gmra.mxu0 %v2425
    %v2601 = vpop.f32.mrf.mxu0
    %v2602 = vadd.f32 %v2428, %v2601
    %v2603 = vpop.f32.mrf.mxu0
    %2604 = vdwg.mxu0
    %2605 = vmatpush.bf16.msra.mxu0 %v2558
    %2606 = vmatpush.bf16.msra.mxu0 %v2556
    %2607 = vmatpush.bf16.msra.mxu0 %v2554
    %2608 = vmatpush.bf16.msra.mxu0 %v2552
    %2609 = vmatpush.bf16.msra.mxu0 %v2550
    %2610 = vmatpush.bf16.msra.mxu0 %v2548
    %2611 = vmatpush.bf16.msra.mxu0 %v2546
    %2612 = vmatpush.bf16.msra.mxu0 %v2544
    %2613 = vmatmul.bf16.gmra.mxu0 %v2426
    %v2614 = vpop.f32.mrf.mxu0
    %v2615 = vadd.f32 %v2602, %v2614
    %v2616 = vpop.f32.mrf.mxu0
    %2617 = vdwg.mxu0
    %2618 = vmatpush.bf16.msra.mxu0 %v2543
    %2619 = vmatpush.bf16.msra.mxu0 %v2541
    %2620 = vmatpush.bf16.msra.mxu0 %v2539
    %2621 = vmatpush.bf16.msra.mxu0 %v2537
    %2622 = vmatpush.bf16.msra.mxu0 %v2535
    %2623 = vmatpush.bf16.msra.mxu0 %v2533
    %2624 = vmatpush.bf16.msra.mxu0 %v2531
    %2625 = vmatpush.bf16.msra.mxu0 %v2529
    %2626 = vmatmul.bf16.gmra.mxu0 %v2425
    %v2627 = vpop.f32.mrf.mxu0
    %v2628 = vadd.f32 %v2429, %v2627
    %v2629 = vpop.f32.mrf.mxu0
    %2630 = vdwg.mxu0
    %2631 = vmatpush.bf16.msra.mxu0 %v2559
    %2632 = vmatpush.bf16.msra.mxu0 %v2557
    %2633 = vmatpush.bf16.msra.mxu0 %v2555
    %2634 = vmatpush.bf16.msra.mxu0 %v2553
    %2635 = vmatpush.bf16.msra.mxu0 %v2551
    %2636 = vmatpush.bf16.msra.mxu0 %v2549
    %2637 = vmatpush.bf16.msra.mxu0 %v2547
    %2638 = vmatpush.bf16.msra.mxu0 %v2545
    %2639 = vmatmul.bf16.gmra.mxu0 %v2426
    %v2640 = vpop.f32.mrf.mxu0
    %v2641 = vadd.f32 %v2628, %v2640
    %v2642 = vpop.f32.mrf.mxu0
    %2643 = vdwg.mxu0
    %vm2644 = vcmp.gt.f32.partialorder %v2615, 0.0
    %vm2645 = vcmp.gt.f32.partialorder %v2641, 0.0
    %v2646 = vmin.f32 %v2615, 0.0
    %v2647 = vmin.f32 %v2641, 0.0
    %v2648 = vmul.f32 %v2646, 1.442695
    %v2649 = vpow.pop %v2648
    %v2650 = vmul.f32 %v2647, 1.442695
    %v2651 = vpow.pop %v2650
    %v2652 = vsub.f32 %v2649, 1.0
    %v2653 = vsub.f32 %v2651, 1.0
    %v2654 = vsel %vm2644, %v2615, %v2652
    %v2655 = vsel %vm2645, %v2641, %v2653
    %v2656 = vld [vmem:[%s35] sm:$0xf]
    %v2657 = vld [vmem:[%s35 + $0x4] sm:$0xf]
    %v2658 = vld [vmem:[%s35 + $0x8] sm:$0xf]
    %v2659 = vld [vmem:[%s35 + $0xc] sm:$0xf]
    %v2660 = vld [vmem:[%s35 + $0x10] sm:$0xf]
    %v2661 = vld [vmem:[%s35 + $0x14] sm:$0xf]
    %v2662 = vld [vmem:[%s35 + $0x18] sm:$0xf]
    %v2663 = vld [vmem:[%s35 + $0x1c] sm:$0xf]
    %v2664 = vld [vmem:[%s35 + $0x20] sm:$0xf]
    %v2665 = vld [vmem:[%s35 + $0x24] sm:$0xf]
    %v2666 = vld [vmem:[%s35 + $0x28] sm:$0xf]
    %v2667 = vld [vmem:[%s35 + $0x2c] sm:$0xf]
    %v2668 = vld [vmem:[%s35 + $0x30] sm:$0xf]
    %v2669 = vld [vmem:[%s35 + $0x34] sm:$0xf]
    %v2670 = vld [vmem:[%s35 + $0x38] sm:$0xf]
    %v2671 = vld [vmem:[%s35 + $0x3c] sm:$0xf]
    %v2672 = vld [vmem:[%s35 + $0x40] sm:$0xf]
    %v2673 = vld [vmem:[%s35 + $0x44] sm:$0xf]
    %v2674 = vld [vmem:[%s35 + $0x48] sm:$0xf]
    %v2675 = vld [vmem:[%s35 + $0x4c] sm:$0xf]
    %v2676 = vld [vmem:[%s35 + $0x50] sm:$0xf]
    %v2677 = vld [vmem:[%s35 + $0x54] sm:$0xf]
    %v2678 = vld [vmem:[%s35 + $0x58] sm:$0xf]
    %v2679 = vld [vmem:[%s35 + $0x5c] sm:$0xf]
    %v2680 = vld [vmem:[%s35 + $0x60] sm:$0xf]
    %v2681 = vld [vmem:[%s35 + $0x64] sm:$0xf]
    %v2682 = vld [vmem:[%s35 + $0x68] sm:$0xf]
    %v2683 = vld [vmem:[%s35 + $0x6c] sm:$0xf]
    %v2684 = vld [vmem:[%s35 + $0x70] sm:$0xf]
    %v2685 = vld [vmem:[%s35 + $0x74] sm:$0xf]
    %v2686 = vld [vmem:[%s35 + $0x78] sm:$0xf]
    %v2687 = vld [vmem:[%s35 + $0x7c] sm:$0xf]
    %v2688 = vld [vmem:[#allocation19] sm:$0x1]
    %v2689 = vpack.c.bf16 %v2654, %v2654
    %v2690 = vpack.c.bf16 %v2655, %v2655
    %v2692 = vperm.slane %v2688, 0
    %v2726 = vunpack.c.l.b16 %v2656
    %v2727 = vunpack.c.l.b16 %v2657
    %v2728 = vunpack.c.l.b16 %v2658
    %v2729 = vunpack.c.l.b16 %v2659
    %v2730 = vunpack.c.l.b16 %v2660
    %v2731 = vunpack.c.l.b16 %v2661
    %v2732 = vunpack.c.l.b16 %v2662
    %v2733 = vunpack.c.l.b16 %v2663
    %v2734 = vunpack.c.l.b16 %v2664
    %v2735 = vunpack.c.l.b16 %v2665
    %v2736 = vunpack.c.l.b16 %v2666
    %v2737 = vunpack.c.l.b16 %v2667
    %v2738 = vunpack.c.l.b16 %v2668
    %v2739 = vunpack.c.l.b16 %v2669
    %v2740 = vunpack.c.l.b16 %v2670
    %v2741 = vunpack.c.l.b16 %v2671
    %v2742 = vunpack.c.l.b16 %v2672
    %v2743 = vunpack.c.l.b16 %v2673
    %v2744 = vunpack.c.l.b16 %v2674
    %v2745 = vunpack.c.l.b16 %v2675
    %v2746 = vunpack.c.l.b16 %v2676
    %v2747 = vunpack.c.l.b16 %v2677
    %v2748 = vunpack.c.l.b16 %v2678
    %v2749 = vunpack.c.l.b16 %v2679
    %v2750 = vunpack.c.l.b16 %v2680
    %v2751 = vunpack.c.l.b16 %v2681
    %v2752 = vunpack.c.l.b16 %v2682
    %v2753 = vunpack.c.l.b16 %v2683
    %v2754 = vunpack.c.l.b16 %v2684
    %v2755 = vunpack.c.l.b16 %v2685
    %v2756 = vunpack.c.l.b16 %v2686
    %v2757 = vunpack.c.l.b16 %v2687
    %v2758 = vpack.c.b16 %v2727, %v2726
    %v2759 = vpack.c.b16 %v2729, %v2728
    %v2760 = vpack.c.b16 %v2731, %v2730
    %v2761 = vpack.c.b16 %v2733, %v2732
    %v2762 = vpack.c.b16 %v2735, %v2734
    %v2763 = vpack.c.b16 %v2737, %v2736
    %v2764 = vpack.c.b16 %v2739, %v2738
    %v2765 = vpack.c.b16 %v2741, %v2740
    %v2766 = vpack.c.b16 %v2743, %v2742
    %v2767 = vpack.c.b16 %v2745, %v2744
    %v2768 = vpack.c.b16 %v2747, %v2746
    %v2769 = vpack.c.b16 %v2749, %v2748
    %v2770 = vpack.c.b16 %v2751, %v2750
    %v2771 = vpack.c.b16 %v2753, %v2752
    %v2772 = vpack.c.b16 %v2755, %v2754
    %v2773 = vpack.c.b16 %v2757, %v2756
    %2790 = vmatpush.bf16.msra.mxu0 %v2765
    %2791 = vmatpush.bf16.msra.mxu0 %v2764
    %2792 = vmatpush.bf16.msra.mxu0 %v2763
    %2793 = vmatpush.bf16.msra.mxu0 %v2762
    %2794 = vmatpush.bf16.msra.mxu0 %v2761
    %2795 = vmatpush.bf16.msra.mxu0 %v2760
    %2796 = vmatpush.bf16.msra.mxu0 %v2759
    %2797 = vmatpush.bf16.msra.mxu0 %v2758
    %2798 = vmatmul.bf16.gmra.mxu0 %v2689
    %v2799 = vpop.f32.mrf.mxu0
    %v2800 = vadd.f32 %v2692, %v2799
    %v2801 = vpop.f32.mrf.mxu0
    %2802 = vdwg.mxu0
    %2803 = vmatpush.bf16.msra.mxu0 %v2773
    %2804 = vmatpush.bf16.msra.mxu0 %v2772
    %2805 = vmatpush.bf16.msra.mxu0 %v2771
    %2806 = vmatpush.bf16.msra.mxu0 %v2770
    %2807 = vmatpush.bf16.msra.mxu0 %v2769
    %2808 = vmatpush.bf16.msra.mxu0 %v2768
    %2809 = vmatpush.bf16.msra.mxu0 %v2767
    %2810 = vmatpush.bf16.msra.mxu0 %v2766
    %2811 = vmatmul.bf16.gmra.mxu0 %v2690
    %v2812 = vpop.f32.mrf.mxu0
    %v2813 = vadd.f32 %v2800, %v2812
    %v2814 = vpop.f32.mrf.mxu0
    %2815 = vdwg.mxu0
    %v2816 = vpack.c.bf16 %v393, %v393
    %v2817 = vld [vmem:[%s39] sm:$0xff]
    %v2818 = vld [vmem:[%s39 + $0x8] sm:$0xff]
    %v2819 = vld [vmem:[%s39 + $0x10] sm:$0xff]
    %v2820 = vld [vmem:[%s39 + $0x18] sm:$0xff]
    %v2821 = vpack.c.bf16 %v595, %v595
    %v2822 = vld [vmem:[%s41] sm:$0xff]
    %v2823 = vld [vmem:[%s41 + $0x8] sm:$0xff]
    %v2824 = vld [vmem:[%s41 + $0x10] sm:$0xff]
    %v2825 = vld [vmem:[%s41 + $0x18] sm:$0xff]
    %v2826 = vld [vmem:[%s41 + $0x20] sm:$0xff]
    %v2827 = vld [vmem:[%s41 + $0x28] sm:$0xff]
    %v2828 = vld [vmem:[%s41 + $0x30] sm:$0xff]
    %v2829 = vld [vmem:[%s41 + $0x38] sm:$0xff]
    %v2830 = vld [vmem:[%s41 + $0x40] sm:$0xff]
    %v2831 = vld [vmem:[%s41 + $0x48] sm:$0xff]
    %v2832 = vld [vmem:[%s41 + $0x50] sm:$0xff]
    %v2833 = vld [vmem:[%s41 + $0x58] sm:$0xff]
    %v2834 = vld [vmem:[%s41 + $0x60] sm:$0xff]
    %v2835 = vld [vmem:[%s41 + $0x68] sm:$0xff]
    %v2836 = vld [vmem:[%s41 + $0x70] sm:$0xff]
    %v2837 = vld [vmem:[%s41 + $0x78] sm:$0xff]
    %v2854 = vunpack.c.l.b16 %v2822
    %v2855 = vunpack.c.h.b16 %v2822
    %v2856 = vunpack.c.l.b16 %v2823
    %v2857 = vunpack.c.h.b16 %v2823
    %v2858 = vunpack.c.l.b16 %v2824
    %v2859 = vunpack.c.h.b16 %v2824
    %v2860 = vunpack.c.l.b16 %v2825
    %v2861 = vunpack.c.h.b16 %v2825
    %v2862 = vunpack.c.l.b16 %v2826
    %v2863 = vunpack.c.h.b16 %v2826
    %v2864 = vunpack.c.l.b16 %v2827
    %v2865 = vunpack.c.h.b16 %v2827
    %v2866 = vunpack.c.l.b16 %v2828
    %v2867 = vunpack.c.h.b16 %v2828
    %v2868 = vunpack.c.l.b16 %v2829
    %v2869 = vunpack.c.h.b16 %v2829
    %v2870 = vunpack.c.l.b16 %v2830
    %v2871 = vunpack.c.h.b16 %v2830
    %v2872 = vunpack.c.l.b16 %v2831
    %v2873 = vunpack.c.h.b16 %v2831
    %v2874 = vunpack.c.l.b16 %v2832
    %v2875 = vunpack.c.h.b16 %v2832
    %v2876 = vunpack.c.l.b16 %v2833
    %v2877 = vunpack.c.h.b16 %v2833
    %v2878 = vunpack.c.l.b16 %v2834
    %v2879 = vunpack.c.h.b16 %v2834
    %v2880 = vunpack.c.l.b16 %v2835
    %v2881 = vunpack.c.h.b16 %v2835
    %v2882 = vunpack.c.l.b16 %v2836
    %v2883 = vunpack.c.h.b16 %v2836
    %v2884 = vunpack.c.l.b16 %v2837
    %v2885 = vunpack.c.h.b16 %v2837
    %v2886 = vpack.c.b16 %v2858, %v2854
    %v2887 = vpack.c.b16 %v2859, %v2855
    %v2888 = vpack.c.b16 %v2860, %v2856
    %v2889 = vpack.c.b16 %v2861, %v2857
    %v2890 = vpack.c.b16 %v2866, %v2862
    %v2891 = vpack.c.b16 %v2867, %v2863
    %v2892 = vpack.c.b16 %v2868, %v2864
    %v2893 = vpack.c.b16 %v2869, %v2865
    %v2894 = vpack.c.b16 %v2874, %v2870
    %v2895 = vpack.c.b16 %v2875, %v2871
    %v2896 = vpack.c.b16 %v2876, %v2872
    %v2897 = vpack.c.b16 %v2877, %v2873
    %v2898 = vpack.c.b16 %v2882, %v2878
    %v2899 = vpack.c.b16 %v2883, %v2879
    %v2900 = vpack.c.b16 %v2884, %v2880
    %v2901 = vpack.c.b16 %v2885, %v2881
    %v2919 = vsel %vm1756, %v2821, 0
    %2921 = vmatpush.bf16.msra.mxu0 0
    %2922 = vmatpush.bf16.msra.mxu0 0
    %2923 = vmatpush.bf16.msra.mxu0 0
    %2924 = vmatpush.bf16.msra.mxu0 0
    %2925 = vmatpush.bf16.msra.mxu0 %v2898
    %2926 = vmatpush.bf16.msra.mxu0 %v2894
    %2927 = vmatpush.bf16.msra.mxu0 %v2890
    %2928 = vmatpush.bf16.msra.mxu0 %v2886
    %2929 = vmatmul.bf16.gmra.mxu0 %v2919
    %v2930 = vpop.f32.mrf.mxu0
    %v2931 = vadd.f32 0.0, %v2930
    %v2932 = vpop.f32.mrf.mxu0
    %2933 = vdwg.mxu0
    %2934 = vmatpush.bf16.msra.mxu0 0
    %2935 = vmatpush.bf16.msra.mxu0 0
    %2936 = vmatpush.bf16.msra.mxu0 0
    %2937 = vmatpush.bf16.msra.mxu0 0
    %2938 = vmatpush.bf16.msra.mxu0 %v2899
    %2939 = vmatpush.bf16.msra.mxu0 %v2895
    %2940 = vmatpush.bf16.msra.mxu0 %v2891
    %2941 = vmatpush.bf16.msra.mxu0 %v2887
    %2942 = vmatmul.bf16.gmra.mxu0 %v2919
    %v2943 = vpop.f32.mrf.mxu0
    %v2944 = vadd.f32 0.0, %v2943
    %v2945 = vpop.f32.mrf.mxu0
    %2946 = vdwg.mxu0
    %2947 = vmatpush.bf16.msra.mxu0 0
    %2948 = vmatpush.bf16.msra.mxu0 0
    %2949 = vmatpush.bf16.msra.mxu0 0
    %2950 = vmatpush.bf16.msra.mxu0 0
    %2951 = vmatpush.bf16.msra.mxu0 %v2900
    %2952 = vmatpush.bf16.msra.mxu0 %v2896
    %2953 = vmatpush.bf16.msra.mxu0 %v2892
    %2954 = vmatpush.bf16.msra.mxu0 %v2888
    %2955 = vmatmul.bf16.gmra.mxu0 %v2919
    %v2956 = vpop.f32.mrf.mxu0
    %v2957 = vadd.f32 0.0, %v2956
    %v2958 = vpop.f32.mrf.mxu0
    %2959 = vdwg.mxu0
    %2960 = vmatpush.bf16.msra.mxu0 0
    %2961 = vmatpush.bf16.msra.mxu0 0
    %2962 = vmatpush.bf16.msra.mxu0 0
    %2963 = vmatpush.bf16.msra.mxu0 0
    %2964 = vmatpush.bf16.msra.mxu0 %v2901
    %2965 = vmatpush.bf16.msra.mxu0 %v2897
    %2966 = vmatpush.bf16.msra.mxu0 %v2893
    %2967 = vmatpush.bf16.msra.mxu0 %v2889
    %2968 = vmatmul.bf16.gmra.mxu0 %v2919
    %v2969 = vpop.f32.mrf.mxu0
    %v2970 = vadd.f32 0.0, %v2969
    %v2971 = vpop.f32.mrf.mxu0
    %2972 = vdwg.mxu0
    %v2977 = vunpack.c.l.b16 %v2817
    %v2978 = vunpack.c.h.b16 %v2817
    %v2979 = vunpack.c.l.b16 %v2818
    %v2980 = vunpack.c.h.b16 %v2818
    %v2981 = vunpack.c.l.b16 %v2819
    %v2982 = vunpack.c.h.b16 %v2819
    %v2983 = vunpack.c.l.b16 %v2820
    %v2984 = vunpack.c.h.b16 %v2820
    %v2985 = vpack.c.b16 %v2981, %v2977
    %v2986 = vpack.c.b16 %v2982, %v2978
    %v2987 = vpack.c.b16 %v2983, %v2979
    %v2988 = vpack.c.b16 %v2984, %v2980
    %v2994 = vsel %vm773, %v2816, 0
    %2996 = vmatpush.bf16.msra.mxu0 0
    %2997 = vmatpush.bf16.msra.mxu0 0
    %2998 = vmatpush.bf16.msra.mxu0 0
    %2999 = vmatpush.bf16.msra.mxu0 0
    %3000 = vmatpush.bf16.msra.mxu0 0
    %3001 = vmatpush.bf16.msra.mxu0 0
    %3002 = vmatpush.bf16.msra.mxu0 0
    %3003 = vmatpush.bf16.msra.mxu0 %v2985
    %3004 = vmatmul.bf16.gmra.mxu0 %v2994
    %v3005 = vpop.f32.mrf.mxu0
    %v3006 = vadd.f32 %v2931, %v3005
    %v3007 = vpop.f32.mrf.mxu0
    %3008 = vdwg.mxu0
    %3009 = vmatpush.bf16.msra.mxu0 0
    %3010 = vmatpush.bf16.msra.mxu0 0
    %3011 = vmatpush.bf16.msra.mxu0 0
    %3012 = vmatpush.bf16.msra.mxu0 0
    %3013 = vmatpush.bf16.msra.mxu0 0
    %3014 = vmatpush.bf16.msra.mxu0 0
    %3015 = vmatpush.bf16.msra.mxu0 0
    %3016 = vmatpush.bf16.msra.mxu0 %v2986
    %3017 = vmatmul.bf16.gmra.mxu0 %v2994
    %v3018 = vpop.f32.mrf.mxu0
    %v3019 = vadd.f32 %v2944, %v3018
    %v3020 = vpop.f32.mrf.mxu0
    %3021 = vdwg.mxu0
    %3022 = vmatpush.bf16.msra.mxu0 0
    %3023 = vmatpush.bf16.msra.mxu0 0
    %3024 = vmatpush.bf16.msra.mxu0 0
    %3025 = vmatpush.bf16.msra.mxu0 0
    %3026 = vmatpush.bf16.msra.mxu0 0
    %3027 = vmatpush.bf16.msra.mxu0 0
    %3028 = vmatpush.bf16.msra.mxu0 0
    %3029 = vmatpush.bf16.msra.mxu0 %v2987
    %3030 = vmatmul.bf16.gmra.mxu0 %v2994
    %v3031 = vpop.f32.mrf.mxu0
    %v3032 = vadd.f32 %v2957, %v3031
    %v3033 = vpop.f32.mrf.mxu0
    %3034 = vdwg.mxu0
    %3035 = vmatpush.bf16.msra.mxu0 0
    %3036 = vmatpush.bf16.msra.mxu0 0
    %3037 = vmatpush.bf16.msra.mxu0 0
    %3038 = vmatpush.bf16.msra.mxu0 0
    %3039 = vmatpush.bf16.msra.mxu0 0
    %3040 = vmatpush.bf16.msra.mxu0 0
    %3041 = vmatpush.bf16.msra.mxu0 0
    %3042 = vmatpush.bf16.msra.mxu0 %v2988
    %3043 = vmatmul.bf16.gmra.mxu0 %v2994
    %v3044 = vpop.f32.mrf.mxu0
    %v3045 = vadd.f32 %v2970, %v3044
    %v3046 = vpop.f32.mrf.mxu0
    %3047 = vdwg.mxu0
    %v3048 = vld [vmem:[%s43] sm:$0xf]
    %v3050 = vperm.slane %v3048, 0
    %v3051 = vperm.slane %v3048, 1
    %v3052 = vperm.slane %v3048, 2
    %v3053 = vperm.slane %v3048, 3
    %v3058 = vadd.f32 %v3006, %v3050
    %v3059 = vadd.f32 %v3019, %v3051
    %v3060 = vadd.f32 %v3032, %v3052
    %v3061 = vadd.f32 %v3045, %v3053
    %vm3062 = vcmp.gt.f32.partialorder %v3058, 0.0
    %vm3063 = vcmp.gt.f32.partialorder %v3059, 0.0
    %vm3064 = vcmp.gt.f32.partialorder %v3060, 0.0
    %vm3065 = vcmp.gt.f32.partialorder %v3061, 0.0
    %v3066 = vmin.f32 %v3058, 0.0
    %v3067 = vmin.f32 %v3059, 0.0
    %v3068 = vmin.f32 %v3060, 0.0
    %v3069 = vmin.f32 %v3061, 0.0
    %v3070 = vmul.f32 %v3066, 1.442695
    %v3071 = vpow.pop %v3070
    %v3072 = vmul.f32 %v3067, 1.442695
    %v3073 = vpow.pop %v3072
    %v3074 = vmul.f32 %v3068, 1.442695
    %v3075 = vpow.pop %v3074
    %v3076 = vmul.f32 %v3069, 1.442695
    %v3077 = vpow.pop %v3076
    %v3078 = vsub.f32 %v3071, 1.0
    %v3079 = vsub.f32 %v3073, 1.0
    %v3080 = vsub.f32 %v3075, 1.0
    %v3081 = vsub.f32 %v3077, 1.0
    %v3082 = vsel %vm3062, %v3058, %v3078
    %v3083 = vsel %vm3063, %v3059, %v3079
    %v3084 = vsel %vm3064, %v3060, %v3080
    %v3085 = vsel %vm3065, %v3061, %v3081
    %v3086 = vld [vmem:[#allocation20] sm:$0xff]
    %v3087 = vld [vmem:[#allocation20 + $0x8] sm:$0xff]
    %v3088 = vld [vmem:[#allocation20 + $0x10] sm:$0xff]
    %v3089 = vld [vmem:[#allocation20 + $0x18] sm:$0xff]
    %v3090 = vld [vmem:[#allocation20 + $0x20] sm:$0xff]
    %v3091 = vld [vmem:[#allocation20 + $0x28] sm:$0xff]
    %v3092 = vld [vmem:[#allocation20 + $0x30] sm:$0xff]
    %v3093 = vld [vmem:[#allocation20 + $0x38] sm:$0xff]
    %v3094 = vld [vmem:[#allocation20 + $0x40] sm:$0xff]
    %v3095 = vld [vmem:[#allocation20 + $0x48] sm:$0xff]
    %v3096 = vld [vmem:[#allocation20 + $0x50] sm:$0xff]
    %v3097 = vld [vmem:[#allocation20 + $0x58] sm:$0xff]
    %v3098 = vld [vmem:[#allocation20 + $0x60] sm:$0xff]
    %v3099 = vld [vmem:[#allocation20 + $0x68] sm:$0xff]
    %v3100 = vld [vmem:[#allocation20 + $0x70] sm:$0xff]
    %v3101 = vld [vmem:[#allocation20 + $0x78] sm:$0xff]
    %v3102 = vld [vmem:[#allocation20 + $0x80] sm:$0xff]
    %v3103 = vld [vmem:[#allocation20 + $0x88] sm:$0xff]
    %v3104 = vld [vmem:[#allocation20 + $0x90] sm:$0xff]
    %v3105 = vld [vmem:[#allocation20 + $0x98] sm:$0xff]
    %v3106 = vld [vmem:[#allocation20 + $0xa0] sm:$0xff]
    %v3107 = vld [vmem:[#allocation20 + $0xa8] sm:$0xff]
    %v3108 = vld [vmem:[#allocation20 + $0xb0] sm:$0xff]
    %v3109 = vld [vmem:[#allocation20 + $0xb8] sm:$0xff]
    %v3110 = vld [vmem:[#allocation20 + $0xc0] sm:$0xff]
    %v3111 = vld [vmem:[#allocation20 + $0xc8] sm:$0xff]
    %v3112 = vld [vmem:[#allocation20 + $0xd0] sm:$0xff]
    %v3113 = vld [vmem:[#allocation20 + $0xd8] sm:$0xff]
    %v3114 = vld [vmem:[#allocation20 + $0xe0] sm:$0xff]
    %v3115 = vld [vmem:[#allocation20 + $0xe8] sm:$0xff]
    %v3116 = vld [vmem:[#allocation20 + $0xf0] sm:$0xff]
    %v3117 = vld [vmem:[#allocation20 + $0xf8] sm:$0xff]
    %v3118 = vld [vmem:[#allocation20 + $0x100] sm:$0xff]
    %v3119 = vld [vmem:[#allocation20 + $0x108] sm:$0xff]
    %v3120 = vld [vmem:[#allocation20 + $0x110] sm:$0xff]
    %v3121 = vld [vmem:[#allocation20 + $0x118] sm:$0xff]
    %v3122 = vld [vmem:[#allocation20 + $0x120] sm:$0xff]
    %v3123 = vld [vmem:[#allocation20 + $0x128] sm:$0xff]
    %v3124 = vld [vmem:[#allocation20 + $0x130] sm:$0xff]
    %v3125 = vld [vmem:[#allocation20 + $0x138] sm:$0xff]
    %v3126 = vld [vmem:[#allocation20 + $0x140] sm:$0xff]
    %v3127 = vld [vmem:[#allocation20 + $0x148] sm:$0xff]
    %v3128 = vld [vmem:[#allocation20 + $0x150] sm:$0xff]
    %v3129 = vld [vmem:[#allocation20 + $0x158] sm:$0xff]
    %v3130 = vld [vmem:[#allocation20 + $0x160] sm:$0xff]
    %v3131 = vld [vmem:[#allocation20 + $0x168] sm:$0xff]
    %v3132 = vld [vmem:[#allocation20 + $0x170] sm:$0xff]
    %v3133 = vld [vmem:[#allocation20 + $0x178] sm:$0xff]
    %v3134 = vld [vmem:[#allocation20 + $0x180] sm:$0xff]
    %v3135 = vld [vmem:[#allocation20 + $0x188] sm:$0xff]
    %v3136 = vld [vmem:[#allocation20 + $0x190] sm:$0xff]
    %v3137 = vld [vmem:[#allocation20 + $0x198] sm:$0xff]
    %v3138 = vld [vmem:[#allocation20 + $0x1a0] sm:$0xff]
    %v3139 = vld [vmem:[#allocation20 + $0x1a8] sm:$0xff]
    %v3140 = vld [vmem:[#allocation20 + $0x1b0] sm:$0xff]
    %v3141 = vld [vmem:[#allocation20 + $0x1b8] sm:$0xff]
    %v3142 = vld [vmem:[#allocation20 + $0x1c0] sm:$0xff]
    %v3143 = vld [vmem:[#allocation20 + $0x1c8] sm:$0xff]
    %v3144 = vld [vmem:[#allocation20 + $0x1d0] sm:$0xff]
    %v3145 = vld [vmem:[#allocation20 + $0x1d8] sm:$0xff]
    %v3146 = vld [vmem:[#allocation20 + $0x1e0] sm:$0xff]
    %v3147 = vld [vmem:[#allocation20 + $0x1e8] sm:$0xff]
    %v3148 = vld [vmem:[#allocation20 + $0x1f0] sm:$0xff]
    %v3149 = vld [vmem:[#allocation20 + $0x1f8] sm:$0xff]
    %v3150 = vld [vmem:[#allocation22] sm:$0x3]
    %v3151 = vpack.c.bf16 %v3082, %v3082
    %v3152 = vpack.c.bf16 %v3083, %v3083
    %v3153 = vpack.c.bf16 %v3084, %v3084
    %v3154 = vpack.c.bf16 %v3085, %v3085
    %v3156 = vperm.slane %v3150, 0
    %v3157 = vperm.slane %v3150, 1
    %v3224 = vunpack.c.l.b16 %v3086
    %v3225 = vunpack.c.h.b16 %v3086
    %v3226 = vunpack.c.l.b16 %v3087
    %v3227 = vunpack.c.h.b16 %v3087
    %v3228 = vunpack.c.l.b16 %v3088
    %v3229 = vunpack.c.h.b16 %v3088
    %v3230 = vunpack.c.l.b16 %v3089
    %v3231 = vunpack.c.h.b16 %v3089
    %v3232 = vunpack.c.l.b16 %v3090
    %v3233 = vunpack.c.h.b16 %v3090
    %v3234 = vunpack.c.l.b16 %v3091
    %v3235 = vunpack.c.h.b16 %v3091
    %v3236 = vunpack.c.l.b16 %v3092
    %v3237 = vunpack.c.h.b16 %v3092
    %v3238 = vunpack.c.l.b16 %v3093
    %v3239 = vunpack.c.h.b16 %v3093
    %v3240 = vunpack.c.l.b16 %v3094
    %v3241 = vunpack.c.h.b16 %v3094
    %v3242 = vunpack.c.l.b16 %v3095
    %v3243 = vunpack.c.h.b16 %v3095
    %v3244 = vunpack.c.l.b16 %v3096
    %v3245 = vunpack.c.h.b16 %v3096
    %v3246 = vunpack.c.l.b16 %v3097
    %v3247 = vunpack.c.h.b16 %v3097
    %v3248 = vunpack.c.l.b16 %v3098
    %v3249 = vunpack.c.h.b16 %v3098
    %v3250 = vunpack.c.l.b16 %v3099
    %v3251 = vunpack.c.h.b16 %v3099
    %v3252 = vunpack.c.l.b16 %v3100
    %v3253 = vunpack.c.h.b16 %v3100
    %v3254 = vunpack.c.l.b16 %v3101
    %v3255 = vunpack.c.h.b16 %v3101
    %v3256 = vunpack.c.l.b16 %v3102
    %v3257 = vunpack.c.h.b16 %v3102
    %v3258 = vunpack.c.l.b16 %v3103
    %v3259 = vunpack.c.h.b16 %v3103
    %v3260 = vunpack.c.l.b16 %v3104
    %v3261 = vunpack.c.h.b16 %v3104
    %v3262 = vunpack.c.l.b16 %v3105
    %v3263 = vunpack.c.h.b16 %v3105
    %v3264 = vunpack.c.l.b16 %v3106
    %v3265 = vunpack.c.h.b16 %v3106
    %v3266 = vunpack.c.l.b16 %v3107
    %v3267 = vunpack.c.h.b16 %v3107
    %v3268 = vunpack.c.l.b16 %v3108
    %v3269 = vunpack.c.h.b16 %v3108
    %v3270 = vunpack.c.l.b16 %v3109
    %v3271 = vunpack.c.h.b16 %v3109
    %v3272 = vunpack.c.l.b16 %v3110
    %v3273 = vunpack.c.h.b16 %v3110
    %v3274 = vunpack.c.l.b16 %v3111
    %v3275 = vunpack.c.h.b16 %v3111
    %v3276 = vunpack.c.l.b16 %v3112
    %v3277 = vunpack.c.h.b16 %v3112
    %v3278 = vunpack.c.l.b16 %v3113
    %v3279 = vunpack.c.h.b16 %v3113
    %v3280 = vunpack.c.l.b16 %v3114
    %v3281 = vunpack.c.h.b16 %v3114
    %v3282 = vunpack.c.l.b16 %v3115
    %v3283 = vunpack.c.h.b16 %v3115
    %v3284 = vunpack.c.l.b16 %v3116
    %v3285 = vunpack.c.h.b16 %v3116
    %v3286 = vunpack.c.l.b16 %v3117
    %v3287 = vunpack.c.h.b16 %v3117
    %v3288 = vunpack.c.l.b16 %v3118
    %v3289 = vunpack.c.h.b16 %v3118
    %v3290 = vunpack.c.l.b16 %v3119
    %v3291 = vunpack.c.h.b16 %v3119
    %v3292 = vunpack.c.l.b16 %v3120
    %v3293 = vunpack.c.h.b16 %v3120
    %v3294 = vunpack.c.l.b16 %v3121
    %v3295 = vunpack.c.h.b16 %v3121
    %v3296 = vunpack.c.l.b16 %v3122
    %v3297 = vunpack.c.h.b16 %v3122
    %v3298 = vunpack.c.l.b16 %v3123
    %v3299 = vunpack.c.h.b16 %v3123
    %v3300 = vunpack.c.l.b16 %v3124
    %v3301 = vunpack.c.h.b16 %v3124
    %v3302 = vunpack.c.l.b16 %v3125
    %v3303 = vunpack.c.h.b16 %v3125
    %v3304 = vunpack.c.l.b16 %v3126
    %v3305 = vunpack.c.h.b16 %v3126
    %v3306 = vunpack.c.l.b16 %v3127
    %v3307 = vunpack.c.h.b16 %v3127
    %v3308 = vunpack.c.l.b16 %v3128
    %v3309 = vunpack.c.h.b16 %v3128
    %v3310 = vunpack.c.l.b16 %v3129
    %v3311 = vunpack.c.h.b16 %v3129
    %v3312 = vunpack.c.l.b16 %v3130
    %v3313 = vunpack.c.h.b16 %v3130
    %v3314 = vunpack.c.l.b16 %v3131
    %v3315 = vunpack.c.h.b16 %v3131
    %v3316 = vunpack.c.l.b16 %v3132
    %v3317 = vunpack.c.h.b16 %v3132
    %v3318 = vunpack.c.l.b16 %v3133
    %v3319 = vunpack.c.h.b16 %v3133
    %v3320 = vunpack.c.l.b16 %v3134
    %v3321 = vunpack.c.h.b16 %v3134
    %v3322 = vunpack.c.l.b16 %v3135
    %v3323 = vunpack.c.h.b16 %v3135
    %v3324 = vunpack.c.l.b16 %v3136
    %v3325 = vunpack.c.h.b16 %v3136
    %v3326 = vunpack.c.l.b16 %v3137
    %v3327 = vunpack.c.h.b16 %v3137
    %v3328 = vunpack.c.l.b16 %v3138
    %v3329 = vunpack.c.h.b16 %v3138
    %v3330 = vunpack.c.l.b16 %v3139
    %v3331 = vunpack.c.h.b16 %v3139
    %v3332 = vunpack.c.l.b16 %v3140
    %v3333 = vunpack.c.h.b16 %v3140
    %v3334 = vunpack.c.l.b16 %v3141
    %v3335 = vunpack.c.h.b16 %v3141
    %v3336 = vunpack.c.l.b16 %v3142
    %v3337 = vunpack.c.h.b16 %v3142
    %v3338 = vunpack.c.l.b16 %v3143
    %v3339 = vunpack.c.h.b16 %v3143
    %v3340 = vunpack.c.l.b16 %v3144
    %v3341 = vunpack.c.h.b16 %v3144
    %v3342 = vunpack.c.l.b16 %v3145
    %v3343 = vunpack.c.h.b16 %v3145
    %v3344 = vunpack.c.l.b16 %v3146
    %v3345 = vunpack.c.h.b16 %v3146
    %v3346 = vunpack.c.l.b16 %v3147
    %v3347 = vunpack.c.h.b16 %v3147
    %v3348 = vunpack.c.l.b16 %v3148
    %v3349 = vunpack.c.h.b16 %v3148
    %v3350 = vunpack.c.l.b16 %v3149
    %v3351 = vunpack.c.h.b16 %v3149
    %v3352 = vpack.c.b16 %v3226, %v3224
    %v3353 = vpack.c.b16 %v3227, %v3225
    %v3354 = vpack.c.b16 %v3230, %v3228
    %v3355 = vpack.c.b16 %v3231, %v3229
    %v3356 = vpack.c.b16 %v3234, %v3232
    %v3357 = vpack.c.b16 %v3235, %v3233
    %v3358 = vpack.c.b16 %v3238, %v3236
    %v3359 = vpack.c.b16 %v3239, %v3237
    %v3360 = vpack.c.b16 %v3242, %v3240
    %v3361 = vpack.c.b16 %v3243, %v3241
    %v3362 = vpack.c.b16 %v3246, %v3244
    %v3363 = vpack.c.b16 %v3247, %v3245
    %v3364 = vpack.c.b16 %v3250, %v3248
    %v3365 = vpack.c.b16 %v3251, %v3249
    %v3366 = vpack.c.b16 %v3254, %v3252
    %v3367 = vpack.c.b16 %v3255, %v3253
    %v3368 = vpack.c.b16 %v3258, %v3256
    %v3369 = vpack.c.b16 %v3259, %v3257
    %v3370 = vpack.c.b16 %v3262, %v3260
    %v3371 = vpack.c.b16 %v3263, %v3261
    %v3372 = vpack.c.b16 %v3266, %v3264
    %v3373 = vpack.c.b16 %v3267, %v3265
    %v3374 = vpack.c.b16 %v3270, %v3268
    %v3375 = vpack.c.b16 %v3271, %v3269
    %v3376 = vpack.c.b16 %v3274, %v3272
    %v3377 = vpack.c.b16 %v3275, %v3273
    %v3378 = vpack.c.b16 %v3278, %v3276
    %v3379 = vpack.c.b16 %v3279, %v3277
    %v3380 = vpack.c.b16 %v3282, %v3280
    %v3381 = vpack.c.b16 %v3283, %v3281
    %v3382 = vpack.c.b16 %v3286, %v3284
    %v3383 = vpack.c.b16 %v3287, %v3285
    %v3384 = vpack.c.b16 %v3290, %v3288
    %v3385 = vpack.c.b16 %v3291, %v3289
    %v3386 = vpack.c.b16 %v3294, %v3292
    %v3387 = vpack.c.b16 %v3295, %v3293
    %v3388 = vpack.c.b16 %v3298, %v3296
    %v3389 = vpack.c.b16 %v3299, %v3297
    %v3390 = vpack.c.b16 %v3302, %v3300
    %v3391 = vpack.c.b16 %v3303, %v3301
    %v3392 = vpack.c.b16 %v3306, %v3304
    %v3393 = vpack.c.b16 %v3307, %v3305
    %v3394 = vpack.c.b16 %v3310, %v3308
    %v3395 = vpack.c.b16 %v3311, %v3309
    %v3396 = vpack.c.b16 %v3314, %v3312
    %v3397 = vpack.c.b16 %v3315, %v3313
    %v3398 = vpack.c.b16 %v3318, %v3316
    %v3399 = vpack.c.b16 %v3319, %v3317
    %v3400 = vpack.c.b16 %v3322, %v3320
    %v3401 = vpack.c.b16 %v3323, %v3321
    %v3402 = vpack.c.b16 %v3326, %v3324
    %v3403 = vpack.c.b16 %v3327, %v3325
    %v3404 = vpack.c.b16 %v3330, %v3328
    %v3405 = vpack.c.b16 %v3331, %v3329
    %v3406 = vpack.c.b16 %v3334, %v3332
    %v3407 = vpack.c.b16 %v3335, %v3333
    %v3408 = vpack.c.b16 %v3338, %v3336
    %v3409 = vpack.c.b16 %v3339, %v3337
    %v3410 = vpack.c.b16 %v3342, %v3340
    %v3411 = vpack.c.b16 %v3343, %v3341
    %v3412 = vpack.c.b16 %v3346, %v3344
    %v3413 = vpack.c.b16 %v3347, %v3345
    %v3414 = vpack.c.b16 %v3350, %v3348
    %v3415 = vpack.c.b16 %v3351, %v3349
    %3480 = vmatpush.bf16.msra.mxu0 %v3366
    %3481 = vmatpush.bf16.msra.mxu0 %v3364
    %3482 = vmatpush.bf16.msra.mxu0 %v3362
    %3483 = vmatpush.bf16.msra.mxu0 %v3360
    %3484 = vmatpush.bf16.msra.mxu0 %v3358
    %3485 = vmatpush.bf16.msra.mxu0 %v3356
    %3486 = vmatpush.bf16.msra.mxu0 %v3354
    %3487 = vmatpush.bf16.msra.mxu0 %v3352
    %3488 = vmatmul.bf16.gmra.mxu0 %v3151
    %v3489 = vpop.f32.mrf.mxu0
    %v3490 = vadd.f32 %v3156, %v3489
    %v3491 = vpop.f32.mrf.mxu0
    %3492 = vdwg.mxu0
    %3493 = vmatpush.bf16.msra.mxu0 %v3382
    %3494 = vmatpush.bf16.msra.mxu0 %v3380
    %3495 = vmatpush.bf16.msra.mxu0 %v3378
    %3496 = vmatpush.bf16.msra.mxu0 %v3376
    %3497 = vmatpush.bf16.msra.mxu0 %v3374
    %3498 = vmatpush.bf16.msra.mxu0 %v3372
    %3499 = vmatpush.bf16.msra.mxu0 %v3370
    %3500 = vmatpush.bf16.msra.mxu0 %v3368
    %3501 = vmatmul.bf16.gmra.mxu0 %v3152
    %v3502 = vpop.f32.mrf.mxu0
    %v3503 = vadd.f32 %v3490, %v3502
    %v3504 = vpop.f32.mrf.mxu0
    %3505 = vdwg.mxu0
    %3506 = vmatpush.bf16.msra.mxu0 %v3398
    %3507 = vmatpush.bf16.msra.mxu0 %v3396
    %3508 = vmatpush.bf16.msra.mxu0 %v3394
    %3509 = vmatpush.bf16.msra.mxu0 %v3392
    %3510 = vmatpush.bf16.msra.mxu0 %v3390
    %3511 = vmatpush.bf16.msra.mxu0 %v3388
    %3512 = vmatpush.bf16.msra.mxu0 %v3386
    %3513 = vmatpush.bf16.msra.mxu0 %v3384
    %3514 = vmatmul.bf16.gmra.mxu0 %v3153
    %v3515 = vpop.f32.mrf.mxu0
    %v3516 = vadd.f32 %v3503, %v3515
    %v3517 = vpop.f32.mrf.mxu0
    %3518 = vdwg.mxu0
    %3519 = vmatpush.bf16.msra.mxu0 %v3414
    %3520 = vmatpush.bf16.msra.mxu0 %v3412
    %3521 = vmatpush.bf16.msra.mxu0 %v3410
    %3522 = vmatpush.bf16.msra.mxu0 %v3408
    %3523 = vmatpush.bf16.msra.mxu0 %v3406
    %3524 = vmatpush.bf16.msra.mxu0 %v3404
    %3525 = vmatpush.bf16.msra.mxu0 %v3402
    %3526 = vmatpush.bf16.msra.mxu0 %v3400
    %3527 = vmatmul.bf16.gmra.mxu0 %v3154
    %v3528 = vpop.f32.mrf.mxu0
    %v3529 = vadd.f32 %v3516, %v3528
    %v3530 = vpop.f32.mrf.mxu0
    %3531 = vdwg.mxu0
    %3532 = vmatpush.bf16.msra.mxu0 %v3367
    %3533 = vmatpush.bf16.msra.mxu0 %v3365
    %3534 = vmatpush.bf16.msra.mxu0 %v3363
    %3535 = vmatpush.bf16.msra.mxu0 %v3361
    %3536 = vmatpush.bf16.msra.mxu0 %v3359
    %3537 = vmatpush.bf16.msra.mxu0 %v3357
    %3538 = vmatpush.bf16.msra.mxu0 %v3355
    %3539 = vmatpush.bf16.msra.mxu0 %v3353
    %3540 = vmatmul.bf16.gmra.mxu0 %v3151
    %v3541 = vpop.f32.mrf.mxu0
    %v3542 = vadd.f32 %v3157, %v3541
    %v3543 = vpop.f32.mrf.mxu0
    %3544 = vdwg.mxu0
    %3545 = vmatpush.bf16.msra.mxu0 %v3383
    %3546 = vmatpush.bf16.msra.mxu0 %v3381
    %3547 = vmatpush.bf16.msra.mxu0 %v3379
    %3548 = vmatpush.bf16.msra.mxu0 %v3377
    %3549 = vmatpush.bf16.msra.mxu0 %v3375
    %3550 = vmatpush.bf16.msra.mxu0 %v3373
    %3551 = vmatpush.bf16.msra.mxu0 %v3371
    %3552 = vmatpush.bf16.msra.mxu0 %v3369
    %3553 = vmatmul.bf16.gmra.mxu0 %v3152
    %v3554 = vpop.f32.mrf.mxu0
    %v3555 = vadd.f32 %v3542, %v3554
    %v3556 = vpop.f32.mrf.mxu0
    %3557 = vdwg.mxu0
    %3558 = vmatpush.bf16.msra.mxu0 %v3399
    %3559 = vmatpush.bf16.msra.mxu0 %v3397
    %3560 = vmatpush.bf16.msra.mxu0 %v3395
    %3561 = vmatpush.bf16.msra.mxu0 %v3393
    %3562 = vmatpush.bf16.msra.mxu0 %v3391
    %3563 = vmatpush.bf16.msra.mxu0 %v3389
    %3564 = vmatpush.bf16.msra.mxu0 %v3387
    %3565 = vmatpush.bf16.msra.mxu0 %v3385
    %3566 = vmatmul.bf16.gmra.mxu0 %v3153
    %v3567 = vpop.f32.mrf.mxu0
    %v3568 = vadd.f32 %v3555, %v3567
    %v3569 = vpop.f32.mrf.mxu0
    %3570 = vdwg.mxu0
    %3571 = vmatpush.bf16.msra.mxu0 %v3415
    %3572 = vmatpush.bf16.msra.mxu0 %v3413
    %3573 = vmatpush.bf16.msra.mxu0 %v3411
    %3574 = vmatpush.bf16.msra.mxu0 %v3409
    %3575 = vmatpush.bf16.msra.mxu0 %v3407
    %3576 = vmatpush.bf16.msra.mxu0 %v3405
    %3577 = vmatpush.bf16.msra.mxu0 %v3403
    %3578 = vmatpush.bf16.msra.mxu0 %v3401
    %3579 = vmatmul.bf16.gmra.mxu0 %v3154
    %v3580 = vpop.f32.mrf.mxu0
    %v3581 = vadd.f32 %v3568, %v3580
    %v3582 = vpop.f32.mrf.mxu0
    %3583 = vdwg.mxu0
    %vm3584 = vcmp.gt.f32.partialorder %v3529, 0.0
    %vm3585 = vcmp.gt.f32.partialorder %v3581, 0.0
    %v3586 = vmin.f32 %v3529, 0.0
    %v3587 = vmin.f32 %v3581, 0.0
    %v3588 = vmul.f32 %v3586, 1.442695
    %v3589 = vpow.pop %v3588
    %v3590 = vmul.f32 %v3587, 1.442695
    %v3591 = vpow.pop %v3590
    %v3592 = vsub.f32 %v3589, 1.0
    %v3593 = vsub.f32 %v3591, 1.0
    %v3594 = vsel %vm3584, %v3529, %v3592
    %v3595 = vsel %vm3585, %v3581, %v3593
    %v3596 = vld [vmem:[%s49] sm:$0xf]
    %v3597 = vld [vmem:[%s49 + $0x4] sm:$0xf]
    %v3598 = vld [vmem:[%s49 + $0x8] sm:$0xf]
    %v3599 = vld [vmem:[%s49 + $0xc] sm:$0xf]
    %v3600 = vld [vmem:[%s49 + $0x10] sm:$0xf]
    %v3601 = vld [vmem:[%s49 + $0x14] sm:$0xf]
    %v3602 = vld [vmem:[%s49 + $0x18] sm:$0xf]
    %v3603 = vld [vmem:[%s49 + $0x1c] sm:$0xf]
    %v3604 = vld [vmem:[%s49 + $0x20] sm:$0xf]
    %v3605 = vld [vmem:[%s49 + $0x24] sm:$0xf]
    %v3606 = vld [vmem:[%s49 + $0x28] sm:$0xf]
    %v3607 = vld [vmem:[%s49 + $0x2c] sm:$0xf]
    %v3608 = vld [vmem:[%s49 + $0x30] sm:$0xf]
    %v3609 = vld [vmem:[%s49 + $0x34] sm:$0xf]
    %v3610 = vld [vmem:[%s49 + $0x38] sm:$0xf]
    %v3611 = vld [vmem:[%s49 + $0x3c] sm:$0xf]
    %v3612 = vld [vmem:[%s49 + $0x40] sm:$0xf]
    %v3613 = vld [vmem:[%s49 + $0x44] sm:$0xf]
    %v3614 = vld [vmem:[%s49 + $0x48] sm:$0xf]
    %v3615 = vld [vmem:[%s49 + $0x4c] sm:$0xf]
    %v3616 = vld [vmem:[%s49 + $0x50] sm:$0xf]
    %v3617 = vld [vmem:[%s49 + $0x54] sm:$0xf]
    %v3618 = vld [vmem:[%s49 + $0x58] sm:$0xf]
    %v3619 = vld [vmem:[%s49 + $0x5c] sm:$0xf]
    %v3620 = vld [vmem:[%s49 + $0x60] sm:$0xf]
    %v3621 = vld [vmem:[%s49 + $0x64] sm:$0xf]
    %v3622 = vld [vmem:[%s49 + $0x68] sm:$0xf]
    %v3623 = vld [vmem:[%s49 + $0x6c] sm:$0xf]
    %v3624 = vld [vmem:[%s49 + $0x70] sm:$0xf]
    %v3625 = vld [vmem:[%s49 + $0x74] sm:$0xf]
    %v3626 = vld [vmem:[%s49 + $0x78] sm:$0xf]
    %v3627 = vld [vmem:[%s49 + $0x7c] sm:$0xf]
    %v3628 = vld [vmem:[#allocation23] sm:$0x1]
    %v3629 = vpack.c.bf16 %v3594, %v3594
    %v3630 = vpack.c.bf16 %v3595, %v3595
    %v3632 = vperm.slane %v3628, 0
    %v3666 = vunpack.c.l.b16 %v3596
    %v3667 = vunpack.c.l.b16 %v3597
    %v3668 = vunpack.c.l.b16 %v3598
    %v3669 = vunpack.c.l.b16 %v3599
    %v3670 = vunpack.c.l.b16 %v3600
    %v3671 = vunpack.c.l.b16 %v3601
    %v3672 = vunpack.c.l.b16 %v3602
    %v3673 = vunpack.c.l.b16 %v3603
    %v3674 = vunpack.c.l.b16 %v3604
    %v3675 = vunpack.c.l.b16 %v3605
    %v3676 = vunpack.c.l.b16 %v3606
    %v3677 = vunpack.c.l.b16 %v3607
    %v3678 = vunpack.c.l.b16 %v3608
    %v3679 = vunpack.c.l.b16 %v3609
    %v3680 = vunpack.c.l.b16 %v3610
    %v3681 = vunpack.c.l.b16 %v3611
    %v3682 = vunpack.c.l.b16 %v3612
    %v3683 = vunpack.c.l.b16 %v3613
    %v3684 = vunpack.c.l.b16 %v3614
    %v3685 = vunpack.c.l.b16 %v3615
    %v3686 = vunpack.c.l.b16 %v3616
    %v3687 = vunpack.c.l.b16 %v3617
    %v3688 = vunpack.c.l.b16 %v3618
    %v3689 = vunpack.c.l.b16 %v3619
    %v3690 = vunpack.c.l.b16 %v3620
    %v3691 = vunpack.c.l.b16 %v3621
    %v3692 = vunpack.c.l.b16 %v3622
    %v3693 = vunpack.c.l.b16 %v3623
    %v3694 = vunpack.c.l.b16 %v3624
    %v3695 = vunpack.c.l.b16 %v3625
    %v3696 = vunpack.c.l.b16 %v3626
    %v3697 = vunpack.c.l.b16 %v3627
    %v3698 = vpack.c.b16 %v3667, %v3666
    %v3699 = vpack.c.b16 %v3669, %v3668
    %v3700 = vpack.c.b16 %v3671, %v3670
    %v3701 = vpack.c.b16 %v3673, %v3672
    %v3702 = vpack.c.b16 %v3675, %v3674
    %v3703 = vpack.c.b16 %v3677, %v3676
    %v3704 = vpack.c.b16 %v3679, %v3678
    %v3705 = vpack.c.b16 %v3681, %v3680
    %v3706 = vpack.c.b16 %v3683, %v3682
    %v3707 = vpack.c.b16 %v3685, %v3684
    %v3708 = vpack.c.b16 %v3687, %v3686
    %v3709 = vpack.c.b16 %v3689, %v3688
    %v3710 = vpack.c.b16 %v3691, %v3690
    %v3711 = vpack.c.b16 %v3693, %v3692
    %v3712 = vpack.c.b16 %v3695, %v3694
    %v3713 = vpack.c.b16 %v3697, %v3696
    %3730 = vmatpush.bf16.msra.mxu0 %v3705
    %3731 = vmatpush.bf16.msra.mxu0 %v3704
    %3732 = vmatpush.bf16.msra.mxu0 %v3703
    %3733 = vmatpush.bf16.msra.mxu0 %v3702
    %3734 = vmatpush.bf16.msra.mxu0 %v3701
    %3735 = vmatpush.bf16.msra.mxu0 %v3700
    %3736 = vmatpush.bf16.msra.mxu0 %v3699
    %3737 = vmatpush.bf16.msra.mxu0 %v3698
    %3738 = vmatmul.bf16.gmra.mxu0 %v3629
    %v3739 = vpop.f32.mrf.mxu0
    %v3740 = vadd.f32 %v3632, %v3739
    %v3741 = vpop.f32.mrf.mxu0
    %3742 = vdwg.mxu0
    %3743 = vmatpush.bf16.msra.mxu0 %v3713
    %3744 = vmatpush.bf16.msra.mxu0 %v3712
    %3745 = vmatpush.bf16.msra.mxu0 %v3711
    %3746 = vmatpush.bf16.msra.mxu0 %v3710
    %3747 = vmatpush.bf16.msra.mxu0 %v3709
    %3748 = vmatpush.bf16.msra.mxu0 %v3708
    %3749 = vmatpush.bf16.msra.mxu0 %v3707
    %3750 = vmatpush.bf16.msra.mxu0 %v3706
    %3751 = vmatmul.bf16.gmra.mxu0 %v3630
    %v3752 = vpop.f32.mrf.mxu0
    %v3753 = vadd.f32 %v3740, %v3752
    %v3754 = vpop.f32.mrf.mxu0
    %3755 = vdwg.mxu0
    %vm3756 = vcmp.gt.f32.partialorder %v3753, 0.0
    %v3757 = vmin.f32 %v3753, 0.0
    %v3758 = vmul.f32 %v3757, 1.442695
    %v3759 = vpow.pop %v3758
    %v3760 = vsub.f32 %v3759, 1.0
    %v3761 = vsel %vm3756, %v3753, %v3760
    %v3762 = vld [vmem:[%s53] sm:$0xf]
    %v3763 = vld [vmem:[%s53 + $0x4] sm:$0xf]
    %v3764 = vld [vmem:[%s53 + $0x8] sm:$0xf]
    %v3765 = vld [vmem:[%s53 + $0xc] sm:$0xf]
    %v3766 = vld [vmem:[%s53 + $0x10] sm:$0xf]
    %v3767 = vld [vmem:[%s53 + $0x14] sm:$0xf]
    %v3768 = vld [vmem:[%s53 + $0x18] sm:$0xf]
    %v3769 = vld [vmem:[%s53 + $0x1c] sm:$0xf]
    %v3770 = vld [vmem:[%s53 + $0x20] sm:$0xf]
    %v3771 = vld [vmem:[%s53 + $0x24] sm:$0xf]
    %v3772 = vld [vmem:[%s53 + $0x28] sm:$0xf]
    %v3773 = vld [vmem:[%s53 + $0x2c] sm:$0xf]
    %v3774 = vld [vmem:[%s53 + $0x30] sm:$0xf]
    %v3775 = vld [vmem:[%s53 + $0x34] sm:$0xf]
    %v3776 = vld [vmem:[%s53 + $0x38] sm:$0xf]
    %v3777 = vld [vmem:[%s53 + $0x3c] sm:$0xf]
    %v3778 = vld [vmem:[#allocation25] sm:$0x1]
    %v3779 = vpack.c.bf16 %v3761, %v3761
    %v3781 = vperm.slane %v3778, 0
    %v3799 = vunpack.c.l.b16 %v3762
    %v3800 = vunpack.c.l.b16 %v3763
    %v3801 = vunpack.c.l.b16 %v3764
    %v3802 = vunpack.c.l.b16 %v3765
    %v3803 = vunpack.c.l.b16 %v3766
    %v3804 = vunpack.c.l.b16 %v3767
    %v3805 = vunpack.c.l.b16 %v3768
    %v3806 = vunpack.c.l.b16 %v3769
    %v3807 = vunpack.c.l.b16 %v3770
    %v3808 = vunpack.c.l.b16 %v3771
    %v3809 = vunpack.c.l.b16 %v3772
    %v3810 = vunpack.c.l.b16 %v3773
    %v3811 = vunpack.c.l.b16 %v3774
    %v3812 = vunpack.c.l.b16 %v3775
    %v3813 = vunpack.c.l.b16 %v3776
    %v3814 = vunpack.c.l.b16 %v3777
    %v3815 = vpack.c.b16 %v3800, %v3799
    %v3816 = vpack.c.b16 %v3802, %v3801
    %v3817 = vpack.c.b16 %v3804, %v3803
    %v3818 = vpack.c.b16 %v3806, %v3805
    %v3819 = vpack.c.b16 %v3808, %v3807
    %v3820 = vpack.c.b16 %v3810, %v3809
    %v3821 = vpack.c.b16 %v3812, %v3811
    %v3822 = vpack.c.b16 %v3814, %v3813
    %3831 = vmatpush.bf16.msra.mxu0 %v3822
    %3832 = vmatpush.bf16.msra.mxu0 %v3821
    %3833 = vmatpush.bf16.msra.mxu0 %v3820
    %3834 = vmatpush.bf16.msra.mxu0 %v3819
    %3835 = vmatpush.bf16.msra.mxu0 %v3818
    %3836 = vmatpush.bf16.msra.mxu0 %v3817
    %3837 = vmatpush.bf16.msra.mxu0 %v3816
    %3838 = vmatpush.bf16.msra.mxu0 %v3815
    %3839 = vmatmul.bf16.gmra.mxu0 %v3779
    %v3840 = vpop.f32.mrf.mxu0
    %v3841 = vadd.f32 %v3781, %v3840
    %v3842 = vpop.f32.mrf.mxu0
    %3843 = vdwg.mxu0
    %v3844 = vld [vmem:[#allocation26] sm:$0xff]
    %v3845 = vld [vmem:[#allocation26 + $0x8] sm:$0xff]
    %v3846 = vld [vmem:[#allocation26 + $0x10] sm:$0xff]
    %v3847 = vld [vmem:[#allocation26 + $0x18] sm:$0xff]
    %v3848 = vld [vmem:[#allocation26 + $0x20] sm:$0xff]
    %v3849 = vld [vmem:[#allocation26 + $0x28] sm:$0xff]
    %v3850 = vld [vmem:[#allocation26 + $0x30] sm:$0xff]
    %v3851 = vld [vmem:[#allocation26 + $0x38] sm:$0xff]
    %v3852 = vld [vmem:[%s59] sm:$0xff]
    %v3853 = vld [vmem:[%s59 + $0x8] sm:$0xff]
    %v3854 = vld [vmem:[%s59 + $0x10] sm:$0xff]
    %v3855 = vld [vmem:[%s59 + $0x18] sm:$0xff]
    %v3860 = vunpack.c.l.b16 %v3852
    %v3861 = vunpack.c.h.b16 %v3852
    %v3862 = vunpack.c.l.b16 %v3853
    %v3863 = vunpack.c.h.b16 %v3853
    %v3864 = vunpack.c.l.b16 %v3854
    %v3865 = vunpack.c.h.b16 %v3854
    %v3866 = vunpack.c.l.b16 %v3855
    %v3867 = vunpack.c.h.b16 %v3855
    %v3868 = vpack.c.b16 %v3860, %v3860
    %v3869 = vpack.c.b16 %v3861, %v3861
    %v3870 = vpack.c.b16 %v3862, %v3862
    %v3871 = vpack.c.b16 %v3863, %v3863
    %v3872 = vpack.c.b16 %v3864, %v3864
    %v3873 = vpack.c.b16 %v3865, %v3865
    %v3874 = vpack.c.b16 %v3866, %v3866
    %v3875 = vpack.c.b16 %v3867, %v3867
    %v3877 = vsel %vm405, %v3868, 0
    %v3880 = vsel %vm405, %v3869, 0
    %v3883 = vsel %vm405, %v3870, 0
    %v3886 = vsel %vm405, %v3871, 0
    %v3889 = vsel %vm405, %v3872, 0
    %v3892 = vsel %vm405, %v3873, 0
    %v3895 = vsel %vm405, %v3874, 0
    %v3898 = vsel %vm405, %v3875, 0
    %3900 = vmatpush.bf16.msra.mxu0 0
    %3901 = vmatpush.bf16.msra.mxu0 0
    %3902 = vmatpush.bf16.msra.mxu0 0
    %3903 = vmatpush.bf16.msra.mxu0 0
    %3904 = vmatpush.bf16.msra.mxu0 0
    %3905 = vmatpush.bf16.msra.mxu0 0
    %3906 = vmatpush.bf16.msra.mxu0 0
    %3907 = vmatpush.bf16.msra.mxu0 %v3877
    %3908 = vmatmul.bf16.gmra.mxu0 %v403
    %v3909 = vpop.f32.mrf.mxu0
    %v3910 = vadd.f32 0.0, %v3909
    %v3911 = vpop.f32.mrf.mxu0
    %3912 = vdwg.mxu0
    %3913 = vmatpush.bf16.msra.mxu0 0
    %3914 = vmatpush.bf16.msra.mxu0 0
    %3915 = vmatpush.bf16.msra.mxu0 0
    %3916 = vmatpush.bf16.msra.mxu0 0
    %3917 = vmatpush.bf16.msra.mxu0 0
    %3918 = vmatpush.bf16.msra.mxu0 0
    %3919 = vmatpush.bf16.msra.mxu0 0
    %3920 = vmatpush.bf16.msra.mxu0 %v3880
    %3921 = vmatmul.bf16.gmra.mxu0 %v403
    %v3922 = vpop.f32.mrf.mxu0
    %v3923 = vadd.f32 0.0, %v3922
    %v3924 = vpop.f32.mrf.mxu0
    %3925 = vdwg.mxu0
    %3926 = vmatpush.bf16.msra.mxu0 0
    %3927 = vmatpush.bf16.msra.mxu0 0
    %3928 = vmatpush.bf16.msra.mxu0 0
    %3929 = vmatpush.bf16.msra.mxu0 0
    %3930 = vmatpush.bf16.msra.mxu0 0
    %3931 = vmatpush.bf16.msra.mxu0 0
    %3932 = vmatpush.bf16.msra.mxu0 0
    %3933 = vmatpush.bf16.msra.mxu0 %v3883
    %3934 = vmatmul.bf16.gmra.mxu0 %v403
    %v3935 = vpop.f32.mrf.mxu0
    %v3936 = vadd.f32 0.0, %v3935
    %v3937 = vpop.f32.mrf.mxu0
    %3938 = vdwg.mxu0
    %3939 = vmatpush.bf16.msra.mxu0 0
    %3940 = vmatpush.bf16.msra.mxu0 0
    %3941 = vmatpush.bf16.msra.mxu0 0
    %3942 = vmatpush.bf16.msra.mxu0 0
    %3943 = vmatpush.bf16.msra.mxu0 0
    %3944 = vmatpush.bf16.msra.mxu0 0
    %3945 = vmatpush.bf16.msra.mxu0 0
    %3946 = vmatpush.bf16.msra.mxu0 %v3886
    %3947 = vmatmul.bf16.gmra.mxu0 %v403
    %v3948 = vpop.f32.mrf.mxu0
    %v3949 = vadd.f32 0.0, %v3948
    %v3950 = vpop.f32.mrf.mxu0
    %3951 = vdwg.mxu0
    %3952 = vmatpush.bf16.msra.mxu0 0
    %3953 = vmatpush.bf16.msra.mxu0 0
    %3954 = vmatpush.bf16.msra.mxu0 0
    %3955 = vmatpush.bf16.msra.mxu0 0
    %3956 = vmatpush.bf16.msra.mxu0 0
    %3957 = vmatpush.bf16.msra.mxu0 0
    %3958 = vmatpush.bf16.msra.mxu0 0
    %3959 = vmatpush.bf16.msra.mxu0 %v3889
    %3960 = vmatmul.bf16.gmra.mxu0 %v403
    %v3961 = vpop.f32.mrf.mxu0
    %v3962 = vadd.f32 0.0, %v3961
    %v3963 = vpop.f32.mrf.mxu0
    %3964 = vdwg.mxu0
    %3965 = vmatpush.bf16.msra.mxu0 0
    %3966 = vmatpush.bf16.msra.mxu0 0
    %3967 = vmatpush.bf16.msra.mxu0 0
    %3968 = vmatpush.bf16.msra.mxu0 0
    %3969 = vmatpush.bf16.msra.mxu0 0
    %3970 = vmatpush.bf16.msra.mxu0 0
    %3971 = vmatpush.bf16.msra.mxu0 0
    %3972 = vmatpush.bf16.msra.mxu0 %v3892
    %3973 = vmatmul.bf16.gmra.mxu0 %v403
    %v3974 = vpop.f32.mrf.mxu0
    %v3975 = vadd.f32 0.0, %v3974
    %v3976 = vpop.f32.mrf.mxu0
    %3977 = vdwg.mxu0
    %3978 = vmatpush.bf16.msra.mxu0 0
    %3979 = vmatpush.bf16.msra.mxu0 0
    %3980 = vmatpush.bf16.msra.mxu0 0
    %3981 = vmatpush.bf16.msra.mxu0 0
    %3982 = vmatpush.bf16.msra.mxu0 0
    %3983 = vmatpush.bf16.msra.mxu0 0
    %3984 = vmatpush.bf16.msra.mxu0 0
    %3985 = vmatpush.bf16.msra.mxu0 %v3895
    %3986 = vmatmul.bf16.gmra.mxu0 %v403
    %v3987 = vpop.f32.mrf.mxu0
    %v3988 = vadd.f32 0.0, %v3987
    %v3989 = vpop.f32.mrf.mxu0
    %3990 = vdwg.mxu0
    %3991 = vmatpush.bf16.msra.mxu0 0
    %3992 = vmatpush.bf16.msra.mxu0 0
    %3993 = vmatpush.bf16.msra.mxu0 0
    %3994 = vmatpush.bf16.msra.mxu0 0
    %3995 = vmatpush.bf16.msra.mxu0 0
    %3996 = vmatpush.bf16.msra.mxu0 0
    %3997 = vmatpush.bf16.msra.mxu0 0
    %3998 = vmatpush.bf16.msra.mxu0 %v3898
    %3999 = vmatmul.bf16.gmra.mxu0 %v403
    %v4000 = vpop.f32.mrf.mxu0
    %v4001 = vadd.f32 0.0, %v4000
    %v4002 = vpop.f32.mrf.mxu0
    %4003 = vdwg.mxu0
    %v4012 = vunpack.c.l.b16 %v3844
    %v4013 = vunpack.c.h.b16 %v3844
    %v4014 = vunpack.c.l.b16 %v3845
    %v4015 = vunpack.c.h.b16 %v3845
    %v4016 = vunpack.c.l.b16 %v3846
    %v4017 = vunpack.c.h.b16 %v3846
    %v4018 = vunpack.c.l.b16 %v3847
    %v4019 = vunpack.c.h.b16 %v3847
    %v4020 = vunpack.c.l.b16 %v3848
    %v4021 = vunpack.c.h.b16 %v3848
    %v4022 = vunpack.c.l.b16 %v3849
    %v4023 = vunpack.c.h.b16 %v3849
    %v4024 = vunpack.c.l.b16 %v3850
    %v4025 = vunpack.c.h.b16 %v3850
    %v4026 = vunpack.c.l.b16 %v3851
    %v4027 = vunpack.c.h.b16 %v3851
    %v4028 = vpack.c.b16 %v4020, %v4012
    %v4029 = vpack.c.b16 %v4021, %v4013
    %v4030 = vpack.c.b16 %v4022, %v4014
    %v4031 = vpack.c.b16 %v4023, %v4015
    %v4032 = vpack.c.b16 %v4024, %v4016
    %v4033 = vpack.c.b16 %v4025, %v4017
    %v4034 = vpack.c.b16 %v4026, %v4018
    %v4035 = vpack.c.b16 %v4027, %v4019
    %4044 = vmatpush.bf16.msra.mxu0 0
    %4045 = vmatpush.bf16.msra.mxu0 0
    %4046 = vmatpush.bf16.msra.mxu0 0
    %4047 = vmatpush.bf16.msra.mxu0 0
    %4048 = vmatpush.bf16.msra.mxu0 0
    %4049 = vmatpush.bf16.msra.mxu0 0
    %4050 = vmatpush.bf16.msra.mxu0 0
    %4051 = vmatpush.bf16.msra.mxu0 %v4028
    %4052 = vmatmul.bf16.gmra.mxu0 %v2994
    %v4053 = vpop.f32.mrf.mxu0
    %v4054 = vadd.f32 %v3910, %v4053
    %v4055 = vpop.f32.mrf.mxu0
    %4056 = vdwg.mxu0
    %4057 = vmatpush.bf16.msra.mxu0 0
    %4058 = vmatpush.bf16.msra.mxu0 0
    %4059 = vmatpush.bf16.msra.mxu0 0
    %4060 = vmatpush.bf16.msra.mxu0 0
    %4061 = vmatpush.bf16.msra.mxu0 0
    %4062 = vmatpush.bf16.msra.mxu0 0
    %4063 = vmatpush.bf16.msra.mxu0 0
    %4064 = vmatpush.bf16.msra.mxu0 %v4029
    %4065 = vmatmul.bf16.gmra.mxu0 %v2994
    %v4066 = vpop.f32.mrf.mxu0
    %v4067 = vadd.f32 %v3923, %v4066
    %v4068 = vpop.f32.mrf.mxu0
    %4069 = vdwg.mxu0
    %4070 = vmatpush.bf16.msra.mxu0 0
    %4071 = vmatpush.bf16.msra.mxu0 0
    %4072 = vmatpush.bf16.msra.mxu0 0
    %4073 = vmatpush.bf16.msra.mxu0 0
    %4074 = vmatpush.bf16.msra.mxu0 0
    %4075 = vmatpush.bf16.msra.mxu0 0
    %4076 = vmatpush.bf16.msra.mxu0 0
    %4077 = vmatpush.bf16.msra.mxu0 %v4030
    %4078 = vmatmul.bf16.gmra.mxu0 %v2994
    %v4079 = vpop.f32.mrf.mxu0
    %v4080 = vadd.f32 %v3936, %v4079
    %v4081 = vpop.f32.mrf.mxu0
    %4082 = vdwg.mxu0
    %4083 = vmatpush.bf16.msra.mxu0 0
    %4084 = vmatpush.bf16.msra.mxu0 0
    %4085 = vmatpush.bf16.msra.mxu0 0
    %4086 = vmatpush.bf16.msra.mxu0 0
    %4087 = vmatpush.bf16.msra.mxu0 0
    %4088 = vmatpush.bf16.msra.mxu0 0
    %4089 = vmatpush.bf16.msra.mxu0 0
    %4090 = vmatpush.bf16.msra.mxu0 %v4031
    %4091 = vmatmul.bf16.gmra.mxu0 %v2994
    %v4092 = vpop.f32.mrf.mxu0
    %v4093 = vadd.f32 %v3949, %v4092
    %v4094 = vpop.f32.mrf.mxu0
    %4095 = vdwg.mxu0
    %4096 = vmatpush.bf16.msra.mxu0 0
    %4097 = vmatpush.bf16.msra.mxu0 0
    %4098 = vmatpush.bf16.msra.mxu0 0
    %4099 = vmatpush.bf16.msra.mxu0 0
    %4100 = vmatpush.bf16.msra.mxu0 0
    %4101 = vmatpush.bf16.msra.mxu0 0
    %4102 = vmatpush.bf16.msra.mxu0 0
    %4103 = vmatpush.bf16.msra.mxu0 %v4032
    %4104 = vmatmul.bf16.gmra.mxu0 %v2994
    %v4105 = vpop.f32.mrf.mxu0
    %v4106 = vadd.f32 %v3962, %v4105
    %v4107 = vpop.f32.mrf.mxu0
    %4108 = vdwg.mxu0
    %4109 = vmatpush.bf16.msra.mxu0 0
    %4110 = vmatpush.bf16.msra.mxu0 0
    %4111 = vmatpush.bf16.msra.mxu0 0
    %4112 = vmatpush.bf16.msra.mxu0 0
    %4113 = vmatpush.bf16.msra.mxu0 0
    %4114 = vmatpush.bf16.msra.mxu0 0
    %4115 = vmatpush.bf16.msra.mxu0 0
    %4116 = vmatpush.bf16.msra.mxu0 %v4033
    %4117 = vmatmul.bf16.gmra.mxu0 %v2994
    %v4118 = vpop.f32.mrf.mxu0
    %v4119 = vadd.f32 %v3975, %v4118
    %v4120 = vpop.f32.mrf.mxu0
    %4121 = vdwg.mxu0
    %4122 = vmatpush.bf16.msra.mxu0 0
    %4123 = vmatpush.bf16.msra.mxu0 0
    %4124 = vmatpush.bf16.msra.mxu0 0
    %4125 = vmatpush.bf16.msra.mxu0 0
    %4126 = vmatpush.bf16.msra.mxu0 0
    %4127 = vmatpush.bf16.msra.mxu0 0
    %4128 = vmatpush.bf16.msra.mxu0 0
    %4129 = vmatpush.bf16.msra.mxu0 %v4034
    %4130 = vmatmul.bf16.gmra.mxu0 %v2994
    %v4131 = vpop.f32.mrf.mxu0
    %v4132 = vadd.f32 %v3988, %v4131
    %v4133 = vpop.f32.mrf.mxu0
    %4134 = vdwg.mxu0
    %4135 = vmatpush.bf16.msra.mxu0 0
    %4136 = vmatpush.bf16.msra.mxu0 0
    %4137 = vmatpush.bf16.msra.mxu0 0
    %4138 = vmatpush.bf16.msra.mxu0 0
    %4139 = vmatpush.bf16.msra.mxu0 0
    %4140 = vmatpush.bf16.msra.mxu0 0
    %4141 = vmatpush.bf16.msra.mxu0 0
    %4142 = vmatpush.bf16.msra.mxu0 %v4035
    %4143 = vmatmul.bf16.gmra.mxu0 %v2994
    %v4144 = vpop.f32.mrf.mxu0
    %v4145 = vadd.f32 %v4001, %v4144
    %v4146 = vpop.f32.mrf.mxu0
    %4147 = vdwg.mxu0
    %v4148 = vld [vmem:[%s61] sm:$0xff]
    %v4150 = vperm.slane %v4148, 0
    %v4151 = vperm.slane %v4148, 1
    %v4152 = vperm.slane %v4148, 2
    %v4153 = vperm.slane %v4148, 3
    %v4154 = vperm.slane %v4148, 4
    %v4155 = vperm.slane %v4148, 5
    %v4156 = vperm.slane %v4148, 6
    %v4157 = vperm.slane %v4148, 7
    %v4166 = vadd.f32 %v4054, %v4150
    %v4167 = vadd.f32 %v4067, %v4151
    %v4168 = vadd.f32 %v4080, %v4152
    %v4169 = vadd.f32 %v4093, %v4153
    %v4170 = vadd.f32 %v4106, %v4154
    %v4171 = vadd.f32 %v4119, %v4155
    %v4172 = vadd.f32 %v4132, %v4156
    %v4173 = vadd.f32 %v4145, %v4157
    %vm4174 = vcmp.gt.f32.partialorder %v4166, 0.0
    %vm4175 = vcmp.gt.f32.partialorder %v4167, 0.0
    %vm4176 = vcmp.gt.f32.partialorder %v4168, 0.0
    %vm4177 = vcmp.gt.f32.partialorder %v4169, 0.0
    %vm4178 = vcmp.gt.f32.partialorder %v4170, 0.0
    %vm4179 = vcmp.gt.f32.partialorder %v4171, 0.0
    %vm4180 = vcmp.gt.f32.partialorder %v4172, 0.0
    %vm4181 = vcmp.gt.f32.partialorder %v4173, 0.0
    %v4182 = vmin.f32 %v4166, 0.0
    %v4183 = vmin.f32 %v4167, 0.0
    %v4184 = vmin.f32 %v4168, 0.0
    %v4185 = vmin.f32 %v4169, 0.0
    %v4186 = vmin.f32 %v4170, 0.0
    %v4187 = vmin.f32 %v4171, 0.0
    %v4188 = vmin.f32 %v4172, 0.0
    %v4189 = vmin.f32 %v4173, 0.0
    %v4190 = vmul.f32 %v4182, 1.442695
    %v4191 = vpow.pop %v4190
    %v4192 = vmul.f32 %v4183, 1.442695
    %v4193 = vpow.pop %v4192
    %v4194 = vmul.f32 %v4184, 1.442695
    %v4195 = vpow.pop %v4194
    %v4196 = vmul.f32 %v4185, 1.442695
    %v4197 = vpow.pop %v4196
    %v4198 = vmul.f32 %v4186, 1.442695
    %v4199 = vpow.pop %v4198
    %v4200 = vmul.f32 %v4187, 1.442695
    %v4201 = vpow.pop %v4200
    %v4202 = vmul.f32 %v4188, 1.442695
    %v4203 = vpow.pop %v4202
    %v4204 = vmul.f32 %v4189, 1.442695
    %v4205 = vpow.pop %v4204
    %v4206 = vsub.f32 %v4191, 1.0
    %v4207 = vsub.f32 %v4193, 1.0
    %v4208 = vsub.f32 %v4195, 1.0
    %v4209 = vsub.f32 %v4197, 1.0
    %v4210 = vsub.f32 %v4199, 1.0
    %v4211 = vsub.f32 %v4201, 1.0
    %v4212 = vsub.f32 %v4203, 1.0
    %v4213 = vsub.f32 %v4205, 1.0
    %v4214 = vsel %vm4174, %v4166, %v4206
    %v4215 = vsel %vm4175, %v4167, %v4207
    %v4216 = vsel %vm4176, %v4168, %v4208
    %v4217 = vsel %vm4177, %v4169, %v4209
    %v4218 = vsel %vm4178, %v4170, %v4210
    %v4219 = vsel %vm4179, %v4171, %v4211
    %v4220 = vsel %vm4180, %v4172, %v4212
    %v4221 = vsel %vm4181, %v4173, %v4213
    %s4222 = smul.u32 4, 128
    %s4223 = smul.u32 %s4222, 4
    %s4224 = sshll.u32 %s4223, 4
    %4225 = dma.done [#allocation4], %s4224
    %v4226 = vld [vmem:[#allocation2] sm:$0xff]
    %v4227 = vld [vmem:[#allocation2 + $0x8] sm:$0xff]
    %v4228 = vld [vmem:[#allocation2 + $0x10] sm:$0xff]
    %v4229 = vld [vmem:[#allocation2 + $0x18] sm:$0xff]
    %v4230 = vld [vmem:[#allocation2 + $0x20] sm:$0xff]
    %v4231 = vld [vmem:[#allocation2 + $0x28] sm:$0xff]
    %v4232 = vld [vmem:[#allocation2 + $0x30] sm:$0xff]
    %v4233 = vld [vmem:[#allocation2 + $0x38] sm:$0xff]
    %v4234 = vld [vmem:[#allocation2 + $0x40] sm:$0xff]
    %v4235 = vld [vmem:[#allocation2 + $0x48] sm:$0xff]
    %v4236 = vld [vmem:[#allocation2 + $0x50] sm:$0xff]
    %v4237 = vld [vmem:[#allocation2 + $0x58] sm:$0xff]
    %v4238 = vld [vmem:[#allocation2 + $0x60] sm:$0xff]
    %v4239 = vld [vmem:[#allocation2 + $0x68] sm:$0xff]
    %v4240 = vld [vmem:[#allocation2 + $0x70] sm:$0xff]
    %v4241 = vld [vmem:[#allocation2 + $0x78] sm:$0xff]
    %v4242 = vld [vmem:[#allocation2 + $0x80] sm:$0xff]
    %v4243 = vld [vmem:[#allocation2 + $0x88] sm:$0xff]
    %v4244 = vld [vmem:[#allocation2 + $0x90] sm:$0xff]
    %v4245 = vld [vmem:[#allocation2 + $0x98] sm:$0xff]
    %v4246 = vld [vmem:[#allocation2 + $0xa0] sm:$0xff]
    %v4247 = vld [vmem:[#allocation2 + $0xa8] sm:$0xff]
    %v4248 = vld [vmem:[#allocation2 + $0xb0] sm:$0xff]
    %v4249 = vld [vmem:[#allocation2 + $0xb8] sm:$0xff]
    %v4250 = vld [vmem:[#allocation2 + $0xc0] sm:$0xff]
    %v4251 = vld [vmem:[#allocation2 + $0xc8] sm:$0xff]
    %v4252 = vld [vmem:[#allocation2 + $0xd0] sm:$0xff]
    %v4253 = vld [vmem:[#allocation2 + $0xd8] sm:$0xff]
    %v4254 = vld [vmem:[#allocation2 + $0xe0] sm:$0xff]
    %v4255 = vld [vmem:[#allocation2 + $0xe8] sm:$0xff]
    %v4256 = vld [vmem:[#allocation2 + $0xf0] sm:$0xff]
    %v4257 = vld [vmem:[#allocation2 + $0xf8] sm:$0xff]
    %v4258 = vld [vmem:[#allocation2 + $0x100] sm:$0xff]
    %v4259 = vld [vmem:[#allocation2 + $0x108] sm:$0xff]
    %v4260 = vld [vmem:[#allocation2 + $0x110] sm:$0xff]
    %v4261 = vld [vmem:[#allocation2 + $0x118] sm:$0xff]
    %v4262 = vld [vmem:[#allocation2 + $0x120] sm:$0xff]
    %v4263 = vld [vmem:[#allocation2 + $0x128] sm:$0xff]
    %v4264 = vld [vmem:[#allocation2 + $0x130] sm:$0xff]
    %v4265 = vld [vmem:[#allocation2 + $0x138] sm:$0xff]
    %v4266 = vld [vmem:[#allocation2 + $0x140] sm:$0xff]
    %v4267 = vld [vmem:[#allocation2 + $0x148] sm:$0xff]
    %v4268 = vld [vmem:[#allocation2 + $0x150] sm:$0xff]
    %v4269 = vld [vmem:[#allocation2 + $0x158] sm:$0xff]
    %v4270 = vld [vmem:[#allocation2 + $0x160] sm:$0xff]
    %v4271 = vld [vmem:[#allocation2 + $0x168] sm:$0xff]
    %v4272 = vld [vmem:[#allocation2 + $0x170] sm:$0xff]
    %v4273 = vld [vmem:[#allocation2 + $0x178] sm:$0xff]
    %v4274 = vld [vmem:[#allocation2 + $0x180] sm:$0xff]
    %v4275 = vld [vmem:[#allocation2 + $0x188] sm:$0xff]
    %v4276 = vld [vmem:[#allocation2 + $0x190] sm:$0xff]
    %v4277 = vld [vmem:[#allocation2 + $0x198] sm:$0xff]
    %v4278 = vld [vmem:[#allocation2 + $0x1a0] sm:$0xff]
    %v4279 = vld [vmem:[#allocation2 + $0x1a8] sm:$0xff]
    %v4280 = vld [vmem:[#allocation2 + $0x1b0] sm:$0xff]
    %v4281 = vld [vmem:[#allocation2 + $0x1b8] sm:$0xff]
    %v4282 = vld [vmem:[#allocation2 + $0x1c0] sm:$0xff]
    %v4283 = vld [vmem:[#allocation2 + $0x1c8] sm:$0xff]
    %v4284 = vld [vmem:[#allocation2 + $0x1d0] sm:$0xff]
    %v4285 = vld [vmem:[#allocation2 + $0x1d8] sm:$0xff]
    %v4286 = vld [vmem:[#allocation2 + $0x1e0] sm:$0xff]
    %v4287 = vld [vmem:[#allocation2 + $0x1e8] sm:$0xff]
    %v4288 = vld [vmem:[#allocation2 + $0x1f0] sm:$0xff]
    %v4289 = vld [vmem:[#allocation2 + $0x1f8] sm:$0xff]
    %v4290 = vld [vmem:[#allocation2 + $0x200] sm:$0xff]
    %v4291 = vld [vmem:[#allocation2 + $0x208] sm:$0xff]
    %v4292 = vld [vmem:[#allocation2 + $0x210] sm:$0xff]
    %v4293 = vld [vmem:[#allocation2 + $0x218] sm:$0xff]
    %v4294 = vld [vmem:[#allocation2 + $0x220] sm:$0xff]
    %v4295 = vld [vmem:[#allocation2 + $0x228] sm:$0xff]
    %v4296 = vld [vmem:[#allocation2 + $0x230] sm:$0xff]
    %v4297 = vld [vmem:[#allocation2 + $0x238] sm:$0xff]
    %v4298 = vld [vmem:[#allocation2 + $0x240] sm:$0xff]
    %v4299 = vld [vmem:[#allocation2 + $0x248] sm:$0xff]
    %v4300 = vld [vmem:[#allocation2 + $0x250] sm:$0xff]
    %v4301 = vld [vmem:[#allocation2 + $0x258] sm:$0xff]
    %v4302 = vld [vmem:[#allocation2 + $0x260] sm:$0xff]
    %v4303 = vld [vmem:[#allocation2 + $0x268] sm:$0xff]
    %v4304 = vld [vmem:[#allocation2 + $0x270] sm:$0xff]
    %v4305 = vld [vmem:[#allocation2 + $0x278] sm:$0xff]
    %v4306 = vld [vmem:[#allocation2 + $0x280] sm:$0xff]
    %v4307 = vld [vmem:[#allocation2 + $0x288] sm:$0xff]
    %v4308 = vld [vmem:[#allocation2 + $0x290] sm:$0xff]
    %v4309 = vld [vmem:[#allocation2 + $0x298] sm:$0xff]
    %v4310 = vld [vmem:[#allocation2 + $0x2a0] sm:$0xff]
    %v4311 = vld [vmem:[#allocation2 + $0x2a8] sm:$0xff]
    %v4312 = vld [vmem:[#allocation2 + $0x2b0] sm:$0xff]
    %v4313 = vld [vmem:[#allocation2 + $0x2b8] sm:$0xff]
    %v4314 = vld [vmem:[#allocation2 + $0x2c0] sm:$0xff]
    %v4315 = vld [vmem:[#allocation2 + $0x2c8] sm:$0xff]
    %v4316 = vld [vmem:[#allocation2 + $0x2d0] sm:$0xff]
    %v4317 = vld [vmem:[#allocation2 + $0x2d8] sm:$0xff]
    %v4318 = vld [vmem:[#allocation2 + $0x2e0] sm:$0xff]
    %v4319 = vld [vmem:[#allocation2 + $0x2e8] sm:$0xff]
    %v4320 = vld [vmem:[#allocation2 + $0x2f0] sm:$0xff]
    %v4321 = vld [vmem:[#allocation2 + $0x2f8] sm:$0xff]
    %v4322 = vld [vmem:[#allocation2 + $0x300] sm:$0xff]
    %v4323 = vld [vmem:[#allocation2 + $0x308] sm:$0xff]
    %v4324 = vld [vmem:[#allocation2 + $0x310] sm:$0xff]
    %v4325 = vld [vmem:[#allocation2 + $0x318] sm:$0xff]
    %v4326 = vld [vmem:[#allocation2 + $0x320] sm:$0xff]
    %v4327 = vld [vmem:[#allocation2 + $0x328] sm:$0xff]
    %v4328 = vld [vmem:[#allocation2 + $0x330] sm:$0xff]
    %v4329 = vld [vmem:[#allocation2 + $0x338] sm:$0xff]
    %v4330 = vld [vmem:[#allocation2 + $0x340] sm:$0xff]
    %v4331 = vld [vmem:[#allocation2 + $0x348] sm:$0xff]
    %v4332 = vld [vmem:[#allocation2 + $0x350] sm:$0xff]
    %v4333 = vld [vmem:[#allocation2 + $0x358] sm:$0xff]
    %v4334 = vld [vmem:[#allocation2 + $0x360] sm:$0xff]
    %v4335 = vld [vmem:[#allocation2 + $0x368] sm:$0xff]
    %v4336 = vld [vmem:[#allocation2 + $0x370] sm:$0xff]
    %v4337 = vld [vmem:[#allocation2 + $0x378] sm:$0xff]
    %v4338 = vld [vmem:[#allocation2 + $0x380] sm:$0xff]
    %v4339 = vld [vmem:[#allocation2 + $0x388] sm:$0xff]
    %v4340 = vld [vmem:[#allocation2 + $0x390] sm:$0xff]
    %v4341 = vld [vmem:[#allocation2 + $0x398] sm:$0xff]
    %v4342 = vld [vmem:[#allocation2 + $0x3a0] sm:$0xff]
    %v4343 = vld [vmem:[#allocation2 + $0x3a8] sm:$0xff]
    %v4344 = vld [vmem:[#allocation2 + $0x3b0] sm:$0xff]
    %v4345 = vld [vmem:[#allocation2 + $0x3b8] sm:$0xff]
    %v4346 = vld [vmem:[#allocation2 + $0x3c0] sm:$0xff]
    %v4347 = vld [vmem:[#allocation2 + $0x3c8] sm:$0xff]
    %v4348 = vld [vmem:[#allocation2 + $0x3d0] sm:$0xff]
    %v4349 = vld [vmem:[#allocation2 + $0x3d8] sm:$0xff]
    %v4350 = vld [vmem:[#allocation2 + $0x3e0] sm:$0xff]
    %v4351 = vld [vmem:[#allocation2 + $0x3e8] sm:$0xff]
    %v4352 = vld [vmem:[#allocation2 + $0x3f0] sm:$0xff]
    %v4353 = vld [vmem:[#allocation2 + $0x3f8] sm:$0xff]
    %v4354 = vld [vmem:[#allocation2 + $0x400] sm:$0xff]
    %v4355 = vld [vmem:[#allocation2 + $0x408] sm:$0xff]
    %v4356 = vld [vmem:[#allocation2 + $0x410] sm:$0xff]
    %v4357 = vld [vmem:[#allocation2 + $0x418] sm:$0xff]
    %v4358 = vld [vmem:[#allocation2 + $0x420] sm:$0xff]
    %v4359 = vld [vmem:[#allocation2 + $0x428] sm:$0xff]
    %v4360 = vld [vmem:[#allocation2 + $0x430] sm:$0xff]
    %v4361 = vld [vmem:[#allocation2 + $0x438] sm:$0xff]
    %v4362 = vld [vmem:[#allocation2 + $0x440] sm:$0xff]
    %v4363 = vld [vmem:[#allocation2 + $0x448] sm:$0xff]
    %v4364 = vld [vmem:[#allocation2 + $0x450] sm:$0xff]
    %v4365 = vld [vmem:[#allocation2 + $0x458] sm:$0xff]
    %v4366 = vld [vmem:[#allocation2 + $0x460] sm:$0xff]
    %v4367 = vld [vmem:[#allocation2 + $0x468] sm:$0xff]
    %v4368 = vld [vmem:[#allocation2 + $0x470] sm:$0xff]
    %v4369 = vld [vmem:[#allocation2 + $0x478] sm:$0xff]
    %v4370 = vld [vmem:[#allocation2 + $0x480] sm:$0xff]
    %v4371 = vld [vmem:[#allocation2 + $0x488] sm:$0xff]
    %v4372 = vld [vmem:[#allocation2 + $0x490] sm:$0xff]
    %v4373 = vld [vmem:[#allocation2 + $0x498] sm:$0xff]
    %v4374 = vld [vmem:[#allocation2 + $0x4a0] sm:$0xff]
    %v4375 = vld [vmem:[#allocation2 + $0x4a8] sm:$0xff]
    %v4376 = vld [vmem:[#allocation2 + $0x4b0] sm:$0xff]
    %v4377 = vld [vmem:[#allocation2 + $0x4b8] sm:$0xff]
    %v4378 = vld [vmem:[#allocation2 + $0x4c0] sm:$0xff]
    %v4379 = vld [vmem:[#allocation2 + $0x4c8] sm:$0xff]
    %v4380 = vld [vmem:[#allocation2 + $0x4d0] sm:$0xff]
    %v4381 = vld [vmem:[#allocation2 + $0x4d8] sm:$0xff]
    %v4382 = vld [vmem:[#allocation2 + $0x4e0] sm:$0xff]
    %v4383 = vld [vmem:[#allocation2 + $0x4e8] sm:$0xff]
    %v4384 = vld [vmem:[#allocation2 + $0x4f0] sm:$0xff]
    %v4385 = vld [vmem:[#allocation2 + $0x4f8] sm:$0xff]
    %v4386 = vld [vmem:[#allocation2 + $0x500] sm:$0xff]
    %v4387 = vld [vmem:[#allocation2 + $0x508] sm:$0xff]
    %v4388 = vld [vmem:[#allocation2 + $0x510] sm:$0xff]
    %v4389 = vld [vmem:[#allocation2 + $0x518] sm:$0xff]
    %v4390 = vld [vmem:[#allocation2 + $0x520] sm:$0xff]
    %v4391 = vld [vmem:[#allocation2 + $0x528] sm:$0xff]
    %v4392 = vld [vmem:[#allocation2 + $0x530] sm:$0xff]
    %v4393 = vld [vmem:[#allocation2 + $0x538] sm:$0xff]
    %v4394 = vld [vmem:[#allocation2 + $0x540] sm:$0xff]
    %v4395 = vld [vmem:[#allocation2 + $0x548] sm:$0xff]
    %v4396 = vld [vmem:[#allocation2 + $0x550] sm:$0xff]
    %v4397 = vld [vmem:[#allocation2 + $0x558] sm:$0xff]
    %v4398 = vld [vmem:[#allocation2 + $0x560] sm:$0xff]
    %v4399 = vld [vmem:[#allocation2 + $0x568] sm:$0xff]
    %v4400 = vld [vmem:[#allocation2 + $0x570] sm:$0xff]
    %v4401 = vld [vmem:[#allocation2 + $0x578] sm:$0xff]
    %v4402 = vld [vmem:[#allocation2 + $0x580] sm:$0xff]
    %v4403 = vld [vmem:[#allocation2 + $0x588] sm:$0xff]
    %v4404 = vld [vmem:[#allocation2 + $0x590] sm:$0xff]
    %v4405 = vld [vmem:[#allocation2 + $0x598] sm:$0xff]
    %v4406 = vld [vmem:[#allocation2 + $0x5a0] sm:$0xff]
    %v4407 = vld [vmem:[#allocation2 + $0x5a8] sm:$0xff]
    %v4408 = vld [vmem:[#allocation2 + $0x5b0] sm:$0xff]
    %v4409 = vld [vmem:[#allocation2 + $0x5b8] sm:$0xff]
    %v4410 = vld [vmem:[#allocation2 + $0x5c0] sm:$0xff]
    %v4411 = vld [vmem:[#allocation2 + $0x5c8] sm:$0xff]
    %v4412 = vld [vmem:[#allocation2 + $0x5d0] sm:$0xff]
    %v4413 = vld [vmem:[#allocation2 + $0x5d8] sm:$0xff]
    %v4414 = vld [vmem:[#allocation2 + $0x5e0] sm:$0xff]
    %v4415 = vld [vmem:[#allocation2 + $0x5e8] sm:$0xff]
    %v4416 = vld [vmem:[#allocation2 + $0x5f0] sm:$0xff]
    %v4417 = vld [vmem:[#allocation2 + $0x5f8] sm:$0xff]
    %v4418 = vld [vmem:[#allocation2 + $0x600] sm:$0xff]
    %v4419 = vld [vmem:[#allocation2 + $0x608] sm:$0xff]
    %v4420 = vld [vmem:[#allocation2 + $0x610] sm:$0xff]
    %v4421 = vld [vmem:[#allocation2 + $0x618] sm:$0xff]
    %v4422 = vld [vmem:[#allocation2 + $0x620] sm:$0xff]
    %v4423 = vld [vmem:[#allocation2 + $0x628] sm:$0xff]
    %v4424 = vld [vmem:[#allocation2 + $0x630] sm:$0xff]
    %v4425 = vld [vmem:[#allocation2 + $0x638] sm:$0xff]
    %v4426 = vld [vmem:[#allocation2 + $0x640] sm:$0xff]
    %v4427 = vld [vmem:[#allocation2 + $0x648] sm:$0xff]
    %v4428 = vld [vmem:[#allocation2 + $0x650] sm:$0xff]
    %v4429 = vld [vmem:[#allocation2 + $0x658] sm:$0xff]
    %v4430 = vld [vmem:[#allocation2 + $0x660] sm:$0xff]
    %v4431 = vld [vmem:[#allocation2 + $0x668] sm:$0xff]
    %v4432 = vld [vmem:[#allocation2 + $0x670] sm:$0xff]
    %v4433 = vld [vmem:[#allocation2 + $0x678] sm:$0xff]
    %v4434 = vld [vmem:[#allocation2 + $0x680] sm:$0xff]
    %v4435 = vld [vmem:[#allocation2 + $0x688] sm:$0xff]
    %v4436 = vld [vmem:[#allocation2 + $0x690] sm:$0xff]
    %v4437 = vld [vmem:[#allocation2 + $0x698] sm:$0xff]
    %v4438 = vld [vmem:[#allocation2 + $0x6a0] sm:$0xff]
    %v4439 = vld [vmem:[#allocation2 + $0x6a8] sm:$0xff]
    %v4440 = vld [vmem:[#allocation2 + $0x6b0] sm:$0xff]
    %v4441 = vld [vmem:[#allocation2 + $0x6b8] sm:$0xff]
    %v4442 = vld [vmem:[#allocation2 + $0x6c0] sm:$0xff]
    %v4443 = vld [vmem:[#allocation2 + $0x6c8] sm:$0xff]
    %v4444 = vld [vmem:[#allocation2 + $0x6d0] sm:$0xff]
    %v4445 = vld [vmem:[#allocation2 + $0x6d8] sm:$0xff]
    %v4446 = vld [vmem:[#allocation2 + $0x6e0] sm:$0xff]
    %v4447 = vld [vmem:[#allocation2 + $0x6e8] sm:$0xff]
    %v4448 = vld [vmem:[#allocation2 + $0x6f0] sm:$0xff]
    %v4449 = vld [vmem:[#allocation2 + $0x6f8] sm:$0xff]
    %v4450 = vld [vmem:[#allocation2 + $0x700] sm:$0xff]
    %v4451 = vld [vmem:[#allocation2 + $0x708] sm:$0xff]
    %v4452 = vld [vmem:[#allocation2 + $0x710] sm:$0xff]
    %v4453 = vld [vmem:[#allocation2 + $0x718] sm:$0xff]
    %v4454 = vld [vmem:[#allocation2 + $0x720] sm:$0xff]
    %v4455 = vld [vmem:[#allocation2 + $0x728] sm:$0xff]
    %v4456 = vld [vmem:[#allocation2 + $0x730] sm:$0xff]
    %v4457 = vld [vmem:[#allocation2 + $0x738] sm:$0xff]
    %v4458 = vld [vmem:[#allocation2 + $0x740] sm:$0xff]
    %v4459 = vld [vmem:[#allocation2 + $0x748] sm:$0xff]
    %v4460 = vld [vmem:[#allocation2 + $0x750] sm:$0xff]
    %v4461 = vld [vmem:[#allocation2 + $0x758] sm:$0xff]
    %v4462 = vld [vmem:[#allocation2 + $0x760] sm:$0xff]
    %v4463 = vld [vmem:[#allocation2 + $0x768] sm:$0xff]
    %v4464 = vld [vmem:[#allocation2 + $0x770] sm:$0xff]
    %v4465 = vld [vmem:[#allocation2 + $0x778] sm:$0xff]
    %v4466 = vld [vmem:[#allocation2 + $0x780] sm:$0xff]
    %v4467 = vld [vmem:[#allocation2 + $0x788] sm:$0xff]
    %v4468 = vld [vmem:[#allocation2 + $0x790] sm:$0xff]
    %v4469 = vld [vmem:[#allocation2 + $0x798] sm:$0xff]
    %v4470 = vld [vmem:[#allocation2 + $0x7a0] sm:$0xff]
    %v4471 = vld [vmem:[#allocation2 + $0x7a8] sm:$0xff]
    %v4472 = vld [vmem:[#allocation2 + $0x7b0] sm:$0xff]
    %v4473 = vld [vmem:[#allocation2 + $0x7b8] sm:$0xff]
    %v4474 = vld [vmem:[#allocation2 + $0x7c0] sm:$0xff]
    %v4475 = vld [vmem:[#allocation2 + $0x7c8] sm:$0xff]
    %v4476 = vld [vmem:[#allocation2 + $0x7d0] sm:$0xff]
    %v4477 = vld [vmem:[#allocation2 + $0x7d8] sm:$0xff]
    %v4478 = vld [vmem:[#allocation2 + $0x7e0] sm:$0xff]
    %v4479 = vld [vmem:[#allocation2 + $0x7e8] sm:$0xff]
    %v4480 = vld [vmem:[#allocation2 + $0x7f0] sm:$0xff]
    %v4481 = vld [vmem:[#allocation2 + $0x7f8] sm:$0xff]
    %v4482 = vld [vmem:[%s65] sm:$0xf]
    %v4483 = vpack.c.bf16 %v4214, %v4214
    %v4484 = vpack.c.bf16 %v4215, %v4215
    %v4485 = vpack.c.bf16 %v4216, %v4216
    %v4486 = vpack.c.bf16 %v4217, %v4217
    %v4487 = vpack.c.bf16 %v4218, %v4218
    %v4488 = vpack.c.bf16 %v4219, %v4219
    %v4489 = vpack.c.bf16 %v4220, %v4220
    %v4490 = vpack.c.bf16 %v4221, %v4221
    %v4492 = vperm.slane %v4482, 0
    %v4493 = vperm.slane %v4482, 1
    %v4494 = vperm.slane %v4482, 2
    %v4495 = vperm.slane %v4482, 3
    %v4756 = vunpack.c.l.b16 %v4226
    %v4757 = vunpack.c.h.b16 %v4226
    %v4758 = vunpack.c.l.b16 %v4227
    %v4759 = vunpack.c.h.b16 %v4227
    %v4760 = vunpack.c.l.b16 %v4228
    %v4761 = vunpack.c.h.b16 %v4228
    %v4762 = vunpack.c.l.b16 %v4229
    %v4763 = vunpack.c.h.b16 %v4229
    %v4764 = vunpack.c.l.b16 %v4230
    %v4765 = vunpack.c.h.b16 %v4230
    %v4766 = vunpack.c.l.b16 %v4231
    %v4767 = vunpack.c.h.b16 %v4231
    %v4768 = vunpack.c.l.b16 %v4232
    %v4769 = vunpack.c.h.b16 %v4232
    %v4770 = vunpack.c.l.b16 %v4233
    %v4771 = vunpack.c.h.b16 %v4233
    %v4772 = vunpack.c.l.b16 %v4234
    %v4773 = vunpack.c.h.b16 %v4234
    %v4774 = vunpack.c.l.b16 %v4235
    %v4775 = vunpack.c.h.b16 %v4235
    %v4776 = vunpack.c.l.b16 %v4236
    %v4777 = vunpack.c.h.b16 %v4236
    %v4778 = vunpack.c.l.b16 %v4237
    %v4779 = vunpack.c.h.b16 %v4237
    %v4780 = vunpack.c.l.b16 %v4238
    %v4781 = vunpack.c.h.b16 %v4238
    %v4782 = vunpack.c.l.b16 %v4239
    %v4783 = vunpack.c.h.b16 %v4239
    %v4784 = vunpack.c.l.b16 %v4240
    %v4785 = vunpack.c.h.b16 %v4240
    %v4786 = vunpack.c.l.b16 %v4241
    %v4787 = vunpack.c.h.b16 %v4241
    %v4788 = vunpack.c.l.b16 %v4242
    %v4789 = vunpack.c.h.b16 %v4242
    %v4790 = vunpack.c.l.b16 %v4243
    %v4791 = vunpack.c.h.b16 %v4243
    %v4792 = vunpack.c.l.b16 %v4244
    %v4793 = vunpack.c.h.b16 %v4244
    %v4794 = vunpack.c.l.b16 %v4245
    %v4795 = vunpack.c.h.b16 %v4245
    %v4796 = vunpack.c.l.b16 %v4246
    %v4797 = vunpack.c.h.b16 %v4246
    %v4798 = vunpack.c.l.b16 %v4247
    %v4799 = vunpack.c.h.b16 %v4247
    %v4800 = vunpack.c.l.b16 %v4248
    %v4801 = vunpack.c.h.b16 %v4248
    %v4802 = vunpack.c.l.b16 %v4249
    %v4803 = vunpack.c.h.b16 %v4249
    %v4804 = vunpack.c.l.b16 %v4250
    %v4805 = vunpack.c.h.b16 %v4250
    %v4806 = vunpack.c.l.b16 %v4251
    %v4807 = vunpack.c.h.b16 %v4251
    %v4808 = vunpack.c.l.b16 %v4252
    %v4809 = vunpack.c.h.b16 %v4252
    %v4810 = vunpack.c.l.b16 %v4253
    %v4811 = vunpack.c.h.b16 %v4253
    %v4812 = vunpack.c.l.b16 %v4254
    %v4813 = vunpack.c.h.b16 %v4254
    %v4814 = vunpack.c.l.b16 %v4255
    %v4815 = vunpack.c.h.b16 %v4255
    %v4816 = vunpack.c.l.b16 %v4256
    %v4817 = vunpack.c.h.b16 %v4256
    %v4818 = vunpack.c.l.b16 %v4257
    %v4819 = vunpack.c.h.b16 %v4257
    %v4820 = vunpack.c.l.b16 %v4258
    %v4821 = vunpack.c.h.b16 %v4258
    %v4822 = vunpack.c.l.b16 %v4259
    %v4823 = vunpack.c.h.b16 %v4259
    %v4824 = vunpack.c.l.b16 %v4260
    %v4825 = vunpack.c.h.b16 %v4260
    %v4826 = vunpack.c.l.b16 %v4261
    %v4827 = vunpack.c.h.b16 %v4261
    %v4828 = vunpack.c.l.b16 %v4262
    %v4829 = vunpack.c.h.b16 %v4262
    %v4830 = vunpack.c.l.b16 %v4263
    %v4831 = vunpack.c.h.b16 %v4263
    %v4832 = vunpack.c.l.b16 %v4264
    %v4833 = vunpack.c.h.b16 %v4264
    %v4834 = vunpack.c.l.b16 %v4265
    %v4835 = vunpack.c.h.b16 %v4265
    %v4836 = vunpack.c.l.b16 %v4266
    %v4837 = vunpack.c.h.b16 %v4266
    %v4838 = vunpack.c.l.b16 %v4267
    %v4839 = vunpack.c.h.b16 %v4267
    %v4840 = vunpack.c.l.b16 %v4268
    %v4841 = vunpack.c.h.b16 %v4268
    %v4842 = vunpack.c.l.b16 %v4269
    %v4843 = vunpack.c.h.b16 %v4269
    %v4844 = vunpack.c.l.b16 %v4270
    %v4845 = vunpack.c.h.b16 %v4270
    %v4846 = vunpack.c.l.b16 %v4271
    %v4847 = vunpack.c.h.b16 %v4271
    %v4848 = vunpack.c.l.b16 %v4272
    %v4849 = vunpack.c.h.b16 %v4272
    %v4850 = vunpack.c.l.b16 %v4273
    %v4851 = vunpack.c.h.b16 %v4273
    %v4852 = vunpack.c.l.b16 %v4274
    %v4853 = vunpack.c.h.b16 %v4274
    %v4854 = vunpack.c.l.b16 %v4275
    %v4855 = vunpack.c.h.b16 %v4275
    %v4856 = vunpack.c.l.b16 %v4276
    %v4857 = vunpack.c.h.b16 %v4276
    %v4858 = vunpack.c.l.b16 %v4277
    %v4859 = vunpack.c.h.b16 %v4277
    %v4860 = vunpack.c.l.b16 %v4278
    %v4861 = vunpack.c.h.b16 %v4278
    %v4862 = vunpack.c.l.b16 %v4279
    %v4863 = vunpack.c.h.b16 %v4279
    %v4864 = vunpack.c.l.b16 %v4280
    %v4865 = vunpack.c.h.b16 %v4280
    %v4866 = vunpack.c.l.b16 %v4281
    %v4867 = vunpack.c.h.b16 %v4281
    %v4868 = vunpack.c.l.b16 %v4282
    %v4869 = vunpack.c.h.b16 %v4282
    %v4870 = vunpack.c.l.b16 %v4283
    %v4871 = vunpack.c.h.b16 %v4283
    %v4872 = vunpack.c.l.b16 %v4284
    %v4873 = vunpack.c.h.b16 %v4284
    %v4874 = vunpack.c.l.b16 %v4285
    %v4875 = vunpack.c.h.b16 %v4285
    %v4876 = vunpack.c.l.b16 %v4286
    %v4877 = vunpack.c.h.b16 %v4286
    %v4878 = vunpack.c.l.b16 %v4287
    %v4879 = vunpack.c.h.b16 %v4287
    %v4880 = vunpack.c.l.b16 %v4288
    %v4881 = vunpack.c.h.b16 %v4288
    %v4882 = vunpack.c.l.b16 %v4289
    %v4883 = vunpack.c.h.b16 %v4289
    %v4884 = vunpack.c.l.b16 %v4290
    %v4885 = vunpack.c.h.b16 %v4290
    %v4886 = vunpack.c.l.b16 %v4291
    %v4887 = vunpack.c.h.b16 %v4291
    %v4888 = vunpack.c.l.b16 %v4292
    %v4889 = vunpack.c.h.b16 %v4292
    %v4890 = vunpack.c.l.b16 %v4293
    %v4891 = vunpack.c.h.b16 %v4293
    %v4892 = vunpack.c.l.b16 %v4294
    %v4893 = vunpack.c.h.b16 %v4294
    %v4894 = vunpack.c.l.b16 %v4295
    %v4895 = vunpack.c.h.b16 %v4295
    %v4896 = vunpack.c.l.b16 %v4296
    %v4897 = vunpack.c.h.b16 %v4296
    %v4898 = vunpack.c.l.b16 %v4297
    %v4899 = vunpack.c.h.b16 %v4297
    %v4900 = vunpack.c.l.b16 %v4298
    %v4901 = vunpack.c.h.b16 %v4298
    %v4902 = vunpack.c.l.b16 %v4299
    %v4903 = vunpack.c.h.b16 %v4299
    %v4904 = vunpack.c.l.b16 %v4300
    %v4905 = vunpack.c.h.b16 %v4300
    %v4906 = vunpack.c.l.b16 %v4301
    %v4907 = vunpack.c.h.b16 %v4301
    %v4908 = vunpack.c.l.b16 %v4302
    %v4909 = vunpack.c.h.b16 %v4302
    %v4910 = vunpack.c.l.b16 %v4303
    %v4911 = vunpack.c.h.b16 %v4303
    %v4912 = vunpack.c.l.b16 %v4304
    %v4913 = vunpack.c.h.b16 %v4304
    %v4914 = vunpack.c.l.b16 %v4305
    %v4915 = vunpack.c.h.b16 %v4305
    %v4916 = vunpack.c.l.b16 %v4306
    %v4917 = vunpack.c.h.b16 %v4306
    %v4918 = vunpack.c.l.b16 %v4307
    %v4919 = vunpack.c.h.b16 %v4307
    %v4920 = vunpack.c.l.b16 %v4308
    %v4921 = vunpack.c.h.b16 %v4308
    %v4922 = vunpack.c.l.b16 %v4309
    %v4923 = vunpack.c.h.b16 %v4309
    %v4924 = vunpack.c.l.b16 %v4310
    %v4925 = vunpack.c.h.b16 %v4310
    %v4926 = vunpack.c.l.b16 %v4311
    %v4927 = vunpack.c.h.b16 %v4311
    %v4928 = vunpack.c.l.b16 %v4312
    %v4929 = vunpack.c.h.b16 %v4312
    %v4930 = vunpack.c.l.b16 %v4313
    %v4931 = vunpack.c.h.b16 %v4313
    %v4932 = vunpack.c.l.b16 %v4314
    %v4933 = vunpack.c.h.b16 %v4314
    %v4934 = vunpack.c.l.b16 %v4315
    %v4935 = vunpack.c.h.b16 %v4315
    %v4936 = vunpack.c.l.b16 %v4316
    %v4937 = vunpack.c.h.b16 %v4316
    %v4938 = vunpack.c.l.b16 %v4317
    %v4939 = vunpack.c.h.b16 %v4317
    %v4940 = vunpack.c.l.b16 %v4318
    %v4941 = vunpack.c.h.b16 %v4318
    %v4942 = vunpack.c.l.b16 %v4319
    %v4943 = vunpack.c.h.b16 %v4319
    %v4944 = vunpack.c.l.b16 %v4320
    %v4945 = vunpack.c.h.b16 %v4320
    %v4946 = vunpack.c.l.b16 %v4321
    %v4947 = vunpack.c.h.b16 %v4321
    %v4948 = vunpack.c.l.b16 %v4322
    %v4949 = vunpack.c.h.b16 %v4322
    %v4950 = vunpack.c.l.b16 %v4323
    %v4951 = vunpack.c.h.b16 %v4323
    %v4952 = vunpack.c.l.b16 %v4324
    %v4953 = vunpack.c.h.b16 %v4324
    %v4954 = vunpack.c.l.b16 %v4325
    %v4955 = vunpack.c.h.b16 %v4325
    %v4956 = vunpack.c.l.b16 %v4326
    %v4957 = vunpack.c.h.b16 %v4326
    %v4958 = vunpack.c.l.b16 %v4327
    %v4959 = vunpack.c.h.b16 %v4327
    %v4960 = vunpack.c.l.b16 %v4328
    %v4961 = vunpack.c.h.b16 %v4328
    %v4962 = vunpack.c.l.b16 %v4329
    %v4963 = vunpack.c.h.b16 %v4329
    %v4964 = vunpack.c.l.b16 %v4330
    %v4965 = vunpack.c.h.b16 %v4330
    %v4966 = vunpack.c.l.b16 %v4331
    %v4967 = vunpack.c.h.b16 %v4331
    %v4968 = vunpack.c.l.b16 %v4332
    %v4969 = vunpack.c.h.b16 %v4332
    %v4970 = vunpack.c.l.b16 %v4333
    %v4971 = vunpack.c.h.b16 %v4333
    %v4972 = vunpack.c.l.b16 %v4334
    %v4973 = vunpack.c.h.b16 %v4334
    %v4974 = vunpack.c.l.b16 %v4335
    %v4975 = vunpack.c.h.b16 %v4335
    %v4976 = vunpack.c.l.b16 %v4336
    %v4977 = vunpack.c.h.b16 %v4336
    %v4978 = vunpack.c.l.b16 %v4337
    %v4979 = vunpack.c.h.b16 %v4337
    %v4980 = vunpack.c.l.b16 %v4338
    %v4981 = vunpack.c.h.b16 %v4338
    %v4982 = vunpack.c.l.b16 %v4339
    %v4983 = vunpack.c.h.b16 %v4339
    %v4984 = vunpack.c.l.b16 %v4340
    %v4985 = vunpack.c.h.b16 %v4340
    %v4986 = vunpack.c.l.b16 %v4341
    %v4987 = vunpack.c.h.b16 %v4341
    %v4988 = vunpack.c.l.b16 %v4342
    %v4989 = vunpack.c.h.b16 %v4342
    %v4990 = vunpack.c.l.b16 %v4343
    %v4991 = vunpack.c.h.b16 %v4343
    %v4992 = vunpack.c.l.b16 %v4344
    %v4993 = vunpack.c.h.b16 %v4344
    %v4994 = vunpack.c.l.b16 %v4345
    %v4995 = vunpack.c.h.b16 %v4345
    %v4996 = vunpack.c.l.b16 %v4346
    %v4997 = vunpack.c.h.b16 %v4346
    %v4998 = vunpack.c.l.b16 %v4347
    %v4999 = vunpack.c.h.b16 %v4347
    %v5000 = vunpack.c.l.b16 %v4348
    %v5001 = vunpack.c.h.b16 %v4348
    %v5002 = vunpack.c.l.b16 %v4349
    %v5003 = vunpack.c.h.b16 %v4349
    %v5004 = vunpack.c.l.b16 %v4350
    %v5005 = vunpack.c.h.b16 %v4350
    %v5006 = vunpack.c.l.b16 %v4351
    %v5007 = vunpack.c.h.b16 %v4351
    %v5008 = vunpack.c.l.b16 %v4352
    %v5009 = vunpack.c.h.b16 %v4352
    %v5010 = vunpack.c.l.b16 %v4353
    %v5011 = vunpack.c.h.b16 %v4353
    %v5012 = vunpack.c.l.b16 %v4354
    %v5013 = vunpack.c.h.b16 %v4354
    %v5014 = vunpack.c.l.b16 %v4355
    %v5015 = vunpack.c.h.b16 %v4355
    %v5016 = vunpack.c.l.b16 %v4356
    %v5017 = vunpack.c.h.b16 %v4356
    %v5018 = vunpack.c.l.b16 %v4357
    %v5019 = vunpack.c.h.b16 %v4357
    %v5020 = vunpack.c.l.b16 %v4358
    %v5021 = vunpack.c.h.b16 %v4358
    %v5022 = vunpack.c.l.b16 %v4359
    %v5023 = vunpack.c.h.b16 %v4359
    %v5024 = vunpack.c.l.b16 %v4360
    %v5025 = vunpack.c.h.b16 %v4360
    %v5026 = vunpack.c.l.b16 %v4361
    %v5027 = vunpack.c.h.b16 %v4361
    %v5028 = vunpack.c.l.b16 %v4362
    %v5029 = vunpack.c.h.b16 %v4362
    %v5030 = vunpack.c.l.b16 %v4363
    %v5031 = vunpack.c.h.b16 %v4363
    %v5032 = vunpack.c.l.b16 %v4364
    %v5033 = vunpack.c.h.b16 %v4364
    %v5034 = vunpack.c.l.b16 %v4365
    %v5035 = vunpack.c.h.b16 %v4365
    %v5036 = vunpack.c.l.b16 %v4366
    %v5037 = vunpack.c.h.b16 %v4366
    %v5038 = vunpack.c.l.b16 %v4367
    %v5039 = vunpack.c.h.b16 %v4367
    %v5040 = vunpack.c.l.b16 %v4368
    %v5041 = vunpack.c.h.b16 %v4368
    %v5042 = vunpack.c.l.b16 %v4369
    %v5043 = vunpack.c.h.b16 %v4369
    %v5044 = vunpack.c.l.b16 %v4370
    %v5045 = vunpack.c.h.b16 %v4370
    %v5046 = vunpack.c.l.b16 %v4371
    %v5047 = vunpack.c.h.b16 %v4371
    %v5048 = vunpack.c.l.b16 %v4372
    %v5049 = vunpack.c.h.b16 %v4372
    %v5050 = vunpack.c.l.b16 %v4373
    %v5051 = vunpack.c.h.b16 %v4373
    %v5052 = vunpack.c.l.b16 %v4374
    %v5053 = vunpack.c.h.b16 %v4374
    %v5054 = vunpack.c.l.b16 %v4375
    %v5055 = vunpack.c.h.b16 %v4375
    %v5056 = vunpack.c.l.b16 %v4376
    %v5057 = vunpack.c.h.b16 %v4376
    %v5058 = vunpack.c.l.b16 %v4377
    %v5059 = vunpack.c.h.b16 %v4377
    %v5060 = vunpack.c.l.b16 %v4378
    %v5061 = vunpack.c.h.b16 %v4378
    %v5062 = vunpack.c.l.b16 %v4379
    %v5063 = vunpack.c.h.b16 %v4379
    %v5064 = vunpack.c.l.b16 %v4380
    %v5065 = vunpack.c.h.b16 %v4380
    %v5066 = vunpack.c.l.b16 %v4381
    %v5067 = vunpack.c.h.b16 %v4381
    %v5068 = vunpack.c.l.b16 %v4382
    %v5069 = vunpack.c.h.b16 %v4382
    %v5070 = vunpack.c.l.b16 %v4383
    %v5071 = vunpack.c.h.b16 %v4383
    %v5072 = vunpack.c.l.b16 %v4384
    %v5073 = vunpack.c.h.b16 %v4384
    %v5074 = vunpack.c.l.b16 %v4385
    %v5075 = vunpack.c.h.b16 %v4385
    %v5076 = vunpack.c.l.b16 %v4386
    %v5077 = vunpack.c.h.b16 %v4386
    %v5078 = vunpack.c.l.b16 %v4387
    %v5079 = vunpack.c.h.b16 %v4387
    %v5080 = vunpack.c.l.b16 %v4388
    %v5081 = vunpack.c.h.b16 %v4388
    %v5082 = vunpack.c.l.b16 %v4389
    %v5083 = vunpack.c.h.b16 %v4389
    %v5084 = vunpack.c.l.b16 %v4390
    %v5085 = vunpack.c.h.b16 %v4390
    %v5086 = vunpack.c.l.b16 %v4391
    %v5087 = vunpack.c.h.b16 %v4391
    %v5088 = vunpack.c.l.b16 %v4392
    %v5089 = vunpack.c.h.b16 %v4392
    %v5090 = vunpack.c.l.b16 %v4393
    %v5091 = vunpack.c.h.b16 %v4393
    %v5092 = vunpack.c.l.b16 %v4394
    %v5093 = vunpack.c.h.b16 %v4394
    %v5094 = vunpack.c.l.b16 %v4395
    %v5095 = vunpack.c.h.b16 %v4395
    %v5096 = vunpack.c.l.b16 %v4396
    %v5097 = vunpack.c.h.b16 %v4396
    %v5098 = vunpack.c.l.b16 %v4397
    %v5099 = vunpack.c.h.b16 %v4397
    %v5100 = vunpack.c.l.b16 %v4398
    %v5101 = vunpack.c.h.b16 %v4398
    %v5102 = vunpack.c.l.b16 %v4399
    %v5103 = vunpack.c.h.b16 %v4399
    %v5104 = vunpack.c.l.b16 %v4400
    %v5105 = vunpack.c.h.b16 %v4400
    %v5106 = vunpack.c.l.b16 %v4401
    %v5107 = vunpack.c.h.b16 %v4401
    %v5108 = vunpack.c.l.b16 %v4402
    %v5109 = vunpack.c.h.b16 %v4402
    %v5110 = vunpack.c.l.b16 %v4403
    %v5111 = vunpack.c.h.b16 %v4403
    %v5112 = vunpack.c.l.b16 %v4404
    %v5113 = vunpack.c.h.b16 %v4404
    %v5114 = vunpack.c.l.b16 %v4405
    %v5115 = vunpack.c.h.b16 %v4405
    %v5116 = vunpack.c.l.b16 %v4406
    %v5117 = vunpack.c.h.b16 %v4406
    %v5118 = vunpack.c.l.b16 %v4407
    %v5119 = vunpack.c.h.b16 %v4407
    %v5120 = vunpack.c.l.b16 %v4408
    %v5121 = vunpack.c.h.b16 %v4408
    %v5122 = vunpack.c.l.b16 %v4409
    %v5123 = vunpack.c.h.b16 %v4409
    %v5124 = vunpack.c.l.b16 %v4410
    %v5125 = vunpack.c.h.b16 %v4410
    %v5126 = vunpack.c.l.b16 %v4411
    %v5127 = vunpack.c.h.b16 %v4411
    %v5128 = vunpack.c.l.b16 %v4412
    %v5129 = vunpack.c.h.b16 %v4412
    %v5130 = vunpack.c.l.b16 %v4413
    %v5131 = vunpack.c.h.b16 %v4413
    %v5132 = vunpack.c.l.b16 %v4414
    %v5133 = vunpack.c.h.b16 %v4414
    %v5134 = vunpack.c.l.b16 %v4415
    %v5135 = vunpack.c.h.b16 %v4415
    %v5136 = vunpack.c.l.b16 %v4416
    %v5137 = vunpack.c.h.b16 %v4416
    %v5138 = vunpack.c.l.b16 %v4417
    %v5139 = vunpack.c.h.b16 %v4417
    %v5140 = vunpack.c.l.b16 %v4418
    %v5141 = vunpack.c.h.b16 %v4418
    %v5142 = vunpack.c.l.b16 %v4419
    %v5143 = vunpack.c.h.b16 %v4419
    %v5144 = vunpack.c.l.b16 %v4420
    %v5145 = vunpack.c.h.b16 %v4420
    %v5146 = vunpack.c.l.b16 %v4421
    %v5147 = vunpack.c.h.b16 %v4421
    %v5148 = vunpack.c.l.b16 %v4422
    %v5149 = vunpack.c.h.b16 %v4422
    %v5150 = vunpack.c.l.b16 %v4423
    %v5151 = vunpack.c.h.b16 %v4423
    %v5152 = vunpack.c.l.b16 %v4424
    %v5153 = vunpack.c.h.b16 %v4424
    %v5154 = vunpack.c.l.b16 %v4425
    %v5155 = vunpack.c.h.b16 %v4425
    %v5156 = vunpack.c.l.b16 %v4426
    %v5157 = vunpack.c.h.b16 %v4426
    %v5158 = vunpack.c.l.b16 %v4427
    %v5159 = vunpack.c.h.b16 %v4427
    %v5160 = vunpack.c.l.b16 %v4428
    %v5161 = vunpack.c.h.b16 %v4428
    %v5162 = vunpack.c.l.b16 %v4429
    %v5163 = vunpack.c.h.b16 %v4429
    %v5164 = vunpack.c.l.b16 %v4430
    %v5165 = vunpack.c.h.b16 %v4430
    %v5166 = vunpack.c.l.b16 %v4431
    %v5167 = vunpack.c.h.b16 %v4431
    %v5168 = vunpack.c.l.b16 %v4432
    %v5169 = vunpack.c.h.b16 %v4432
    %v5170 = vunpack.c.l.b16 %v4433
    %v5171 = vunpack.c.h.b16 %v4433
    %v5172 = vunpack.c.l.b16 %v4434
    %v5173 = vunpack.c.h.b16 %v4434
    %v5174 = vunpack.c.l.b16 %v4435
    %v5175 = vunpack.c.h.b16 %v4435
    %v5176 = vunpack.c.l.b16 %v4436
    %v5177 = vunpack.c.h.b16 %v4436
    %v5178 = vunpack.c.l.b16 %v4437
    %v5179 = vunpack.c.h.b16 %v4437
    %v5180 = vunpack.c.l.b16 %v4438
    %v5181 = vunpack.c.h.b16 %v4438
    %v5182 = vunpack.c.l.b16 %v4439
    %v5183 = vunpack.c.h.b16 %v4439
    %v5184 = vunpack.c.l.b16 %v4440
    %v5185 = vunpack.c.h.b16 %v4440
    %v5186 = vunpack.c.l.b16 %v4441
    %v5187 = vunpack.c.h.b16 %v4441
    %v5188 = vunpack.c.l.b16 %v4442
    %v5189 = vunpack.c.h.b16 %v4442
    %v5190 = vunpack.c.l.b16 %v4443
    %v5191 = vunpack.c.h.b16 %v4443
    %v5192 = vunpack.c.l.b16 %v4444
    %v5193 = vunpack.c.h.b16 %v4444
    %v5194 = vunpack.c.l.b16 %v4445
    %v5195 = vunpack.c.h.b16 %v4445
    %v5196 = vunpack.c.l.b16 %v4446
    %v5197 = vunpack.c.h.b16 %v4446
    %v5198 = vunpack.c.l.b16 %v4447
    %v5199 = vunpack.c.h.b16 %v4447
    %v5200 = vunpack.c.l.b16 %v4448
    %v5201 = vunpack.c.h.b16 %v4448
    %v5202 = vunpack.c.l.b16 %v4449
    %v5203 = vunpack.c.h.b16 %v4449
    %v5204 = vunpack.c.l.b16 %v4450
    %v5205 = vunpack.c.h.b16 %v4450
    %v5206 = vunpack.c.l.b16 %v4451
    %v5207 = vunpack.c.h.b16 %v4451
    %v5208 = vunpack.c.l.b16 %v4452
    %v5209 = vunpack.c.h.b16 %v4452
    %v5210 = vunpack.c.l.b16 %v4453
    %v5211 = vunpack.c.h.b16 %v4453
    %v5212 = vunpack.c.l.b16 %v4454
    %v5213 = vunpack.c.h.b16 %v4454
    %v5214 = vunpack.c.l.b16 %v4455
    %v5215 = vunpack.c.h.b16 %v4455
    %v5216 = vunpack.c.l.b16 %v4456
    %v5217 = vunpack.c.h.b16 %v4456
    %v5218 = vunpack.c.l.b16 %v4457
    %v5219 = vunpack.c.h.b16 %v4457
    %v5220 = vunpack.c.l.b16 %v4458
    %v5221 = vunpack.c.h.b16 %v4458
    %v5222 = vunpack.c.l.b16 %v4459
    %v5223 = vunpack.c.h.b16 %v4459
    %v5224 = vunpack.c.l.b16 %v4460
    %v5225 = vunpack.c.h.b16 %v4460
    %v5226 = vunpack.c.l.b16 %v4461
    %v5227 = vunpack.c.h.b16 %v4461
    %v5228 = vunpack.c.l.b16 %v4462
    %v5229 = vunpack.c.h.b16 %v4462
    %v5230 = vunpack.c.l.b16 %v4463
    %v5231 = vunpack.c.h.b16 %v4463
    %v5232 = vunpack.c.l.b16 %v4464
    %v5233 = vunpack.c.h.b16 %v4464
    %v5234 = vunpack.c.l.b16 %v4465
    %v5235 = vunpack.c.h.b16 %v4465
    %v5236 = vunpack.c.l.b16 %v4466
    %v5237 = vunpack.c.h.b16 %v4466
    %v5238 = vunpack.c.l.b16 %v4467
    %v5239 = vunpack.c.h.b16 %v4467
    %v5240 = vunpack.c.l.b16 %v4468
    %v5241 = vunpack.c.h.b16 %v4468
    %v5242 = vunpack.c.l.b16 %v4469
    %v5243 = vunpack.c.h.b16 %v4469
    %v5244 = vunpack.c.l.b16 %v4470
    %v5245 = vunpack.c.h.b16 %v4470
    %v5246 = vunpack.c.l.b16 %v4471
    %v5247 = vunpack.c.h.b16 %v4471
    %v5248 = vunpack.c.l.b16 %v4472
    %v5249 = vunpack.c.h.b16 %v4472
    %v5250 = vunpack.c.l.b16 %v4473
    %v5251 = vunpack.c.h.b16 %v4473
    %v5252 = vunpack.c.l.b16 %v4474
    %v5253 = vunpack.c.h.b16 %v4474
    %v5254 = vunpack.c.l.b16 %v4475
    %v5255 = vunpack.c.h.b16 %v4475
    %v5256 = vunpack.c.l.b16 %v4476
    %v5257 = vunpack.c.h.b16 %v4476
    %v5258 = vunpack.c.l.b16 %v4477
    %v5259 = vunpack.c.h.b16 %v4477
    %v5260 = vunpack.c.l.b16 %v4478
    %v5261 = vunpack.c.h.b16 %v4478
    %v5262 = vunpack.c.l.b16 %v4479
    %v5263 = vunpack.c.h.b16 %v4479
    %v5264 = vunpack.c.l.b16 %v4480
    %v5265 = vunpack.c.h.b16 %v4480
    %v5266 = vunpack.c.l.b16 %v4481
    %v5267 = vunpack.c.h.b16 %v4481
    %v5268 = vpack.c.b16 %v4760, %v4756
    %v5269 = vpack.c.b16 %v4761, %v4757
    %v5270 = vpack.c.b16 %v4762, %v4758
    %v5271 = vpack.c.b16 %v4763, %v4759
    %v5272 = vpack.c.b16 %v4768, %v4764
    %v5273 = vpack.c.b16 %v4769, %v4765
    %v5274 = vpack.c.b16 %v4770, %v4766
    %v5275 = vpack.c.b16 %v4771, %v4767
    %v5276 = vpack.c.b16 %v4776, %v4772
    %v5277 = vpack.c.b16 %v4777, %v4773
    %v5278 = vpack.c.b16 %v4778, %v4774
    %v5279 = vpack.c.b16 %v4779, %v4775
    %v5280 = vpack.c.b16 %v4784, %v4780
    %v5281 = vpack.c.b16 %v4785, %v4781
    %v5282 = vpack.c.b16 %v4786, %v4782
    %v5283 = vpack.c.b16 %v4787, %v4783
    %v5284 = vpack.c.b16 %v4792, %v4788
    %v5285 = vpack.c.b16 %v4793, %v4789
    %v5286 = vpack.c.b16 %v4794, %v4790
    %v5287 = vpack.c.b16 %v4795, %v4791
    %v5288 = vpack.c.b16 %v4800, %v4796
    %v5289 = vpack.c.b16 %v4801, %v4797
    %v5290 = vpack.c.b16 %v4802, %v4798
    %v5291 = vpack.c.b16 %v4803, %v4799
    %v5292 = vpack.c.b16 %v4808, %v4804
    %v5293 = vpack.c.b16 %v4809, %v4805
    %v5294 = vpack.c.b16 %v4810, %v4806
    %v5295 = vpack.c.b16 %v4811, %v4807
    %v5296 = vpack.c.b16 %v4816, %v4812
    %v5297 = vpack.c.b16 %v4817, %v4813
    %v5298 = vpack.c.b16 %v4818, %v4814
    %v5299 = vpack.c.b16 %v4819, %v4815
    %v5300 = vpack.c.b16 %v4824, %v4820
    %v5301 = vpack.c.b16 %v4825, %v4821
    %v5302 = vpack.c.b16 %v4826, %v4822
    %v5303 = vpack.c.b16 %v4827, %v4823
    %v5304 = vpack.c.b16 %v4832, %v4828
    %v5305 = vpack.c.b16 %v4833, %v4829
    %v5306 = vpack.c.b16 %v4834, %v4830
    %v5307 = vpack.c.b16 %v4835, %v4831
    %v5308 = vpack.c.b16 %v4840, %v4836
    %v5309 = vpack.c.b16 %v4841, %v4837
    %v5310 = vpack.c.b16 %v4842, %v4838
    %v5311 = vpack.c.b16 %v4843, %v4839
    %v5312 = vpack.c.b16 %v4848, %v4844
    %v5313 = vpack.c.b16 %v4849, %v4845
    %v5314 = vpack.c.b16 %v4850, %v4846
    %v5315 = vpack.c.b16 %v4851, %v4847
    %v5316 = vpack.c.b16 %v4856, %v4852
    %v5317 = vpack.c.b16 %v4857, %v4853
    %v5318 = vpack.c.b16 %v4858, %v4854
    %v5319 = vpack.c.b16 %v4859, %v4855
    %v5320 = vpack.c.b16 %v4864, %v4860
    %v5321 = vpack.c.b16 %v4865, %v4861
    %v5322 = vpack.c.b16 %v4866, %v4862
    %v5323 = vpack.c.b16 %v4867, %v4863
    %v5324 = vpack.c.b16 %v4872, %v4868
    %v5325 = vpack.c.b16 %v4873, %v4869
    %v5326 = vpack.c.b16 %v4874, %v4870
    %v5327 = vpack.c.b16 %v4875, %v4871
    %v5328 = vpack.c.b16 %v4880, %v4876
    %v5329 = vpack.c.b16 %v4881, %v4877
    %v5330 = vpack.c.b16 %v4882, %v4878
    %v5331 = vpack.c.b16 %v4883, %v4879
    %v5332 = vpack.c.b16 %v4888, %v4884
    %v5333 = vpack.c.b16 %v4889, %v4885
    %v5334 = vpack.c.b16 %v4890, %v4886
    %v5335 = vpack.c.b16 %v4891, %v4887
    %v5336 = vpack.c.b16 %v4896, %v4892
    %v5337 = vpack.c.b16 %v4897, %v4893
    %v5338 = vpack.c.b16 %v4898, %v4894
    %v5339 = vpack.c.b16 %v4899, %v4895
    %v5340 = vpack.c.b16 %v4904, %v4900
    %v5341 = vpack.c.b16 %v4905, %v4901
    %v5342 = vpack.c.b16 %v4906, %v4902
    %v5343 = vpack.c.b16 %v4907, %v4903
    %v5344 = vpack.c.b16 %v4912, %v4908
    %v5345 = vpack.c.b16 %v4913, %v4909
    %v5346 = vpack.c.b16 %v4914, %v4910
    %v5347 = vpack.c.b16 %v4915, %v4911
    %v5348 = vpack.c.b16 %v4920, %v4916
    %v5349 = vpack.c.b16 %v4921, %v4917
    %v5350 = vpack.c.b16 %v4922, %v4918
    %v5351 = vpack.c.b16 %v4923, %v4919
    %v5352 = vpack.c.b16 %v4928, %v4924
    %v5353 = vpack.c.b16 %v4929, %v4925
    %v5354 = vpack.c.b16 %v4930, %v4926
    %v5355 = vpack.c.b16 %v4931, %v4927
    %v5356 = vpack.c.b16 %v4936, %v4932
    %v5357 = vpack.c.b16 %v4937, %v4933
    %v5358 = vpack.c.b16 %v4938, %v4934
    %v5359 = vpack.c.b16 %v4939, %v4935
    %v5360 = vpack.c.b16 %v4944, %v4940
    %v5361 = vpack.c.b16 %v4945, %v4941
    %v5362 = vpack.c.b16 %v4946, %v4942
    %v5363 = vpack.c.b16 %v4947, %v4943
    %v5364 = vpack.c.b16 %v4952, %v4948
    %v5365 = vpack.c.b16 %v4953, %v4949
    %v5366 = vpack.c.b16 %v4954, %v4950
    %v5367 = vpack.c.b16 %v4955, %v4951
    %v5368 = vpack.c.b16 %v4960, %v4956
    %v5369 = vpack.c.b16 %v4961, %v4957
    %v5370 = vpack.c.b16 %v4962, %v4958
    %v5371 = vpack.c.b16 %v4963, %v4959
    %v5372 = vpack.c.b16 %v4968, %v4964
    %v5373 = vpack.c.b16 %v4969, %v4965
    %v5374 = vpack.c.b16 %v4970, %v4966
    %v5375 = vpack.c.b16 %v4971, %v4967
    %v5376 = vpack.c.b16 %v4976, %v4972
    %v5377 = vpack.c.b16 %v4977, %v4973
    %v5378 = vpack.c.b16 %v4978, %v4974
    %v5379 = vpack.c.b16 %v4979, %v4975
    %v5380 = vpack.c.b16 %v4984, %v4980
    %v5381 = vpack.c.b16 %v4985, %v4981
    %v5382 = vpack.c.b16 %v4986, %v4982
    %v5383 = vpack.c.b16 %v4987, %v4983
    %v5384 = vpack.c.b16 %v4992, %v4988
    %v5385 = vpack.c.b16 %v4993, %v4989
    %v5386 = vpack.c.b16 %v4994, %v4990
    %v5387 = vpack.c.b16 %v4995, %v4991
    %v5388 = vpack.c.b16 %v5000, %v4996
    %v5389 = vpack.c.b16 %v5001, %v4997
    %v5390 = vpack.c.b16 %v5002, %v4998
    %v5391 = vpack.c.b16 %v5003, %v4999
    %v5392 = vpack.c.b16 %v5008, %v5004
    %v5393 = vpack.c.b16 %v5009, %v5005
    %v5394 = vpack.c.b16 %v5010, %v5006
    %v5395 = vpack.c.b16 %v5011, %v5007
    %v5396 = vpack.c.b16 %v5016, %v5012
    %v5397 = vpack.c.b16 %v5017, %v5013
    %v5398 = vpack.c.b16 %v5018, %v5014
    %v5399 = vpack.c.b16 %v5019, %v5015
    %v5400 = vpack.c.b16 %v5024, %v5020
    %v5401 = vpack.c.b16 %v5025, %v5021
    %v5402 = vpack.c.b16 %v5026, %v5022
    %v5403 = vpack.c.b16 %v5027, %v5023
    %v5404 = vpack.c.b16 %v5032, %v5028
    %v5405 = vpack.c.b16 %v5033, %v5029
    %v5406 = vpack.c.b16 %v5034, %v5030
    %v5407 = vpack.c.b16 %v5035, %v5031
    %v5408 = vpack.c.b16 %v5040, %v5036
    %v5409 = vpack.c.b16 %v5041, %v5037
    %v5410 = vpack.c.b16 %v5042, %v5038
    %v5411 = vpack.c.b16 %v5043, %v5039
    %v5412 = vpack.c.b16 %v5048, %v5044
    %v5413 = vpack.c.b16 %v5049, %v5045
    %v5414 = vpack.c.b16 %v5050, %v5046
    %v5415 = vpack.c.b16 %v5051, %v5047
    %v5416 = vpack.c.b16 %v5056, %v5052
    %v5417 = vpack.c.b16 %v5057, %v5053
    %v5418 = vpack.c.b16 %v5058, %v5054
    %v5419 = vpack.c.b16 %v5059, %v5055
    %v5420 = vpack.c.b16 %v5064, %v5060
    %v5421 = vpack.c.b16 %v5065, %v5061
    %v5422 = vpack.c.b16 %v5066, %v5062
    %v5423 = vpack.c.b16 %v5067, %v5063
    %v5424 = vpack.c.b16 %v5072, %v5068
    %v5425 = vpack.c.b16 %v5073, %v5069
    %v5426 = vpack.c.b16 %v5074, %v5070
    %v5427 = vpack.c.b16 %v5075, %v5071
    %v5428 = vpack.c.b16 %v5080, %v5076
    %v5429 = vpack.c.b16 %v5081, %v5077
    %v5430 = vpack.c.b16 %v5082, %v5078
    %v5431 = vpack.c.b16 %v5083, %v5079
    %v5432 = vpack.c.b16 %v5088, %v5084
    %v5433 = vpack.c.b16 %v5089, %v5085
    %v5434 = vpack.c.b16 %v5090, %v5086
    %v5435 = vpack.c.b16 %v5091, %v5087
    %v5436 = vpack.c.b16 %v5096, %v5092
    %v5437 = vpack.c.b16 %v5097, %v5093
    %v5438 = vpack.c.b16 %v5098, %v5094
    %v5439 = vpack.c.b16 %v5099, %v5095
    %v5440 = vpack.c.b16 %v5104, %v5100
    %v5441 = vpack.c.b16 %v5105, %v5101
    %v5442 = vpack.c.b16 %v5106, %v5102
    %v5443 = vpack.c.b16 %v5107, %v5103
    %v5444 = vpack.c.b16 %v5112, %v5108
    %v5445 = vpack.c.b16 %v5113, %v5109
    %v5446 = vpack.c.b16 %v5114, %v5110
    %v5447 = vpack.c.b16 %v5115, %v5111
    %v5448 = vpack.c.b16 %v5120, %v5116
    %v5449 = vpack.c.b16 %v5121, %v5117
    %v5450 = vpack.c.b16 %v5122, %v5118
    %v5451 = vpack.c.b16 %v5123, %v5119
    %v5452 = vpack.c.b16 %v5128, %v5124
    %v5453 = vpack.c.b16 %v5129, %v5125
    %v5454 = vpack.c.b16 %v5130, %v5126
    %v5455 = vpack.c.b16 %v5131, %v5127
    %v5456 = vpack.c.b16 %v5136, %v5132
    %v5457 = vpack.c.b16 %v5137, %v5133
    %v5458 = vpack.c.b16 %v5138, %v5134
    %v5459 = vpack.c.b16 %v5139, %v5135
    %v5460 = vpack.c.b16 %v5144, %v5140
    %v5461 = vpack.c.b16 %v5145, %v5141
    %v5462 = vpack.c.b16 %v5146, %v5142
    %v5463 = vpack.c.b16 %v5147, %v5143
    %v5464 = vpack.c.b16 %v5152, %v5148
    %v5465 = vpack.c.b16 %v5153, %v5149
    %v5466 = vpack.c.b16 %v5154, %v5150
    %v5467 = vpack.c.b16 %v5155, %v5151
    %v5468 = vpack.c.b16 %v5160, %v5156
    %v5469 = vpack.c.b16 %v5161, %v5157
    %v5470 = vpack.c.b16 %v5162, %v5158
    %v5471 = vpack.c.b16 %v5163, %v5159
    %v5472 = vpack.c.b16 %v5168, %v5164
    %v5473 = vpack.c.b16 %v5169, %v5165
    %v5474 = vpack.c.b16 %v5170, %v5166
    %v5475 = vpack.c.b16 %v5171, %v5167
    %v5476 = vpack.c.b16 %v5176, %v5172
    %v5477 = vpack.c.b16 %v5177, %v5173
    %v5478 = vpack.c.b16 %v5178, %v5174
    %v5479 = vpack.c.b16 %v5179, %v5175
    %v5480 = vpack.c.b16 %v5184, %v5180
    %v5481 = vpack.c.b16 %v5185, %v5181
    %v5482 = vpack.c.b16 %v5186, %v5182
    %v5483 = vpack.c.b16 %v5187, %v5183
    %v5484 = vpack.c.b16 %v5192, %v5188
    %v5485 = vpack.c.b16 %v5193, %v5189
    %v5486 = vpack.c.b16 %v5194, %v5190
    %v5487 = vpack.c.b16 %v5195, %v5191
    %v5488 = vpack.c.b16 %v5200, %v5196
    %v5489 = vpack.c.b16 %v5201, %v5197
    %v5490 = vpack.c.b16 %v5202, %v5198
    %v5491 = vpack.c.b16 %v5203, %v5199
    %v5492 = vpack.c.b16 %v5208, %v5204
    %v5493 = vpack.c.b16 %v5209, %v5205
    %v5494 = vpack.c.b16 %v5210, %v5206
    %v5495 = vpack.c.b16 %v5211, %v5207
    %v5496 = vpack.c.b16 %v5216, %v5212
    %v5497 = vpack.c.b16 %v5217, %v5213
    %v5498 = vpack.c.b16 %v5218, %v5214
    %v5499 = vpack.c.b16 %v5219, %v5215
    %v5500 = vpack.c.b16 %v5224, %v5220
    %v5501 = vpack.c.b16 %v5225, %v5221
    %v5502 = vpack.c.b16 %v5226, %v5222
    %v5503 = vpack.c.b16 %v5227, %v5223
    %v5504 = vpack.c.b16 %v5232, %v5228
    %v5505 = vpack.c.b16 %v5233, %v5229
    %v5506 = vpack.c.b16 %v5234, %v5230
    %v5507 = vpack.c.b16 %v5235, %v5231
    %v5508 = vpack.c.b16 %v5240, %v5236
    %v5509 = vpack.c.b16 %v5241, %v5237
    %v5510 = vpack.c.b16 %v5242, %v5238
    %v5511 = vpack.c.b16 %v5243, %v5239
    %v5512 = vpack.c.b16 %v5248, %v5244
    %v5513 = vpack.c.b16 %v5249, %v5245
    %v5514 = vpack.c.b16 %v5250, %v5246
    %v5515 = vpack.c.b16 %v5251, %v5247
    %v5516 = vpack.c.b16 %v5256, %v5252
    %v5517 = vpack.c.b16 %v5257, %v5253
    %v5518 = vpack.c.b16 %v5258, %v5254
    %v5519 = vpack.c.b16 %v5259, %v5255
    %v5520 = vpack.c.b16 %v5264, %v5260
    %v5521 = vpack.c.b16 %v5265, %v5261
    %v5522 = vpack.c.b16 %v5266, %v5262
    %v5523 = vpack.c.b16 %v5267, %v5263
    %5780 = vmatpush.bf16.msra.mxu0 %v5296
    %5781 = vmatpush.bf16.msra.mxu0 %v5292
    %5782 = vmatpush.bf16.msra.mxu0 %v5288
    %5783 = vmatpush.bf16.msra.mxu0 %v5284
    %5784 = vmatpush.bf16.msra.mxu0 %v5280
    %5785 = vmatpush.bf16.msra.mxu0 %v5276
    %5786 = vmatpush.bf16.msra.mxu0 %v5272
    %5787 = vmatpush.bf16.msra.mxu0 %v5268
    %5788 = vmatmul.bf16.gmra.mxu0 %v4483
    %v5789 = vpop.f32.mrf.mxu0
    %v5790 = vadd.f32 %v4492, %v5789
    %v5791 = vpop.f32.mrf.mxu0
    %5792 = vdwg.mxu0
    %5793 = vmatpush.bf16.msra.mxu0 %v5328
    %5794 = vmatpush.bf16.msra.mxu0 %v5324
    %5795 = vmatpush.bf16.msra.mxu0 %v5320
    %5796 = vmatpush.bf16.msra.mxu0 %v5316
    %5797 = vmatpush.bf16.msra.mxu0 %v5312
    %5798 = vmatpush.bf16.msra.mxu0 %v5308
    %5799 = vmatpush.bf16.msra.mxu0 %v5304
    %5800 = vmatpush.bf16.msra.mxu0 %v5300
    %5801 = vmatmul.bf16.gmra.mxu0 %v4484
    %v5802 = vpop.f32.mrf.mxu0
    %v5803 = vadd.f32 %v5790, %v5802
    %v5804 = vpop.f32.mrf.mxu0
    %5805 = vdwg.mxu0
    %5806 = vmatpush.bf16.msra.mxu0 %v5360
    %5807 = vmatpush.bf16.msra.mxu0 %v5356
    %5808 = vmatpush.bf16.msra.mxu0 %v5352
    %5809 = vmatpush.bf16.msra.mxu0 %v5348
    %5810 = vmatpush.bf16.msra.mxu0 %v5344
    %5811 = vmatpush.bf16.msra.mxu0 %v5340
    %5812 = vmatpush.bf16.msra.mxu0 %v5336
    %5813 = vmatpush.bf16.msra.mxu0 %v5332
    %5814 = vmatmul.bf16.gmra.mxu0 %v4485
    %v5815 = vpop.f32.mrf.mxu0
    %v5816 = vadd.f32 %v5803, %v5815
    %v5817 = vpop.f32.mrf.mxu0
    %5818 = vdwg.mxu0
    %5819 = vmatpush.bf16.msra.mxu0 %v5392
    %5820 = vmatpush.bf16.msra.mxu0 %v5388
    %5821 = vmatpush.bf16.msra.mxu0 %v5384
    %5822 = vmatpush.bf16.msra.mxu0 %v5380
    %5823 = vmatpush.bf16.msra.mxu0 %v5376
    %5824 = vmatpush.bf16.msra.mxu0 %v5372
    %5825 = vmatpush.bf16.msra.mxu0 %v5368
    %5826 = vmatpush.bf16.msra.mxu0 %v5364
    %5827 = vmatmul.bf16.gmra.mxu0 %v4486
    %v5828 = vpop.f32.mrf.mxu0
    %v5829 = vadd.f32 %v5816, %v5828
    %v5830 = vpop.f32.mrf.mxu0
    %5831 = vdwg.mxu0
    %5832 = vmatpush.bf16.msra.mxu0 %v5424
    %5833 = vmatpush.bf16.msra.mxu0 %v5420
    %5834 = vmatpush.bf16.msra.mxu0 %v5416
    %5835 = vmatpush.bf16.msra.mxu0 %v5412
    %5836 = vmatpush.bf16.msra.mxu0 %v5408
    %5837 = vmatpush.bf16.msra.mxu0 %v5404
    %5838 = vmatpush.bf16.msra.mxu0 %v5400
    %5839 = vmatpush.bf16.msra.mxu0 %v5396
    %5840 = vmatmul.bf16.gmra.mxu0 %v4487
    %v5841 = vpop.f32.mrf.mxu0
    %v5842 = vadd.f32 %v5829, %v5841
    %v5843 = vpop.f32.mrf.mxu0
    %5844 = vdwg.mxu0
    %5845 = vmatpush.bf16.msra.mxu0 %v5456
    %5846 = vmatpush.bf16.msra.mxu0 %v5452
    %5847 = vmatpush.bf16.msra.mxu0 %v5448
    %5848 = vmatpush.bf16.msra.mxu0 %v5444
    %5849 = vmatpush.bf16.msra.mxu0 %v5440
    %5850 = vmatpush.bf16.msra.mxu0 %v5436
    %5851 = vmatpush.bf16.msra.mxu0 %v5432
    %5852 = vmatpush.bf16.msra.mxu0 %v5428
    %5853 = vmatmul.bf16.gmra.mxu0 %v4488
    %v5854 = vpop.f32.mrf.mxu0
    %v5855 = vadd.f32 %v5842, %v5854
    %v5856 = vpop.f32.mrf.mxu0
    %5857 = vdwg.mxu0
    %5858 = vmatpush.bf16.msra.mxu0 %v5488
    %5859 = vmatpush.bf16.msra.mxu0 %v5484
    %5860 = vmatpush.bf16.msra.mxu0 %v5480
    %5861 = vmatpush.bf16.msra.mxu0 %v5476
    %5862 = vmatpush.bf16.msra.mxu0 %v5472
    %5863 = vmatpush.bf16.msra.mxu0 %v5468
    %5864 = vmatpush.bf16.msra.mxu0 %v5464
    %5865 = vmatpush.bf16.msra.mxu0 %v5460
    %5866 = vmatmul.bf16.gmra.mxu0 %v4489
    %v5867 = vpop.f32.mrf.mxu0
    %v5868 = vadd.f32 %v5855, %v5867
    %v5869 = vpop.f32.mrf.mxu0
    %5870 = vdwg.mxu0
    %5871 = vmatpush.bf16.msra.mxu0 %v5520
    %5872 = vmatpush.bf16.msra.mxu0 %v5516
    %5873 = vmatpush.bf16.msra.mxu0 %v5512
    %5874 = vmatpush.bf16.msra.mxu0 %v5508
    %5875 = vmatpush.bf16.msra.mxu0 %v5504
    %5876 = vmatpush.bf16.msra.mxu0 %v5500
    %5877 = vmatpush.bf16.msra.mxu0 %v5496
    %5878 = vmatpush.bf16.msra.mxu0 %v5492
    %5879 = vmatmul.bf16.gmra.mxu0 %v4490
    %v5880 = vpop.f32.mrf.mxu0
    %v5881 = vadd.f32 %v5868, %v5880
    %v5882 = vpop.f32.mrf.mxu0
    %5883 = vdwg.mxu0
    %5884 = vmatpush.bf16.msra.mxu0 %v5297
    %5885 = vmatpush.bf16.msra.mxu0 %v5293
    %5886 = vmatpush.bf16.msra.mxu0 %v5289
    %5887 = vmatpush.bf16.msra.mxu0 %v5285
    %5888 = vmatpush.bf16.msra.mxu0 %v5281
    %5889 = vmatpush.bf16.msra.mxu0 %v5277
    %5890 = vmatpush.bf16.msra.mxu0 %v5273
    %5891 = vmatpush.bf16.msra.mxu0 %v5269
    %5892 = vmatmul.bf16.gmra.mxu0 %v4483
    %v5893 = vpop.f32.mrf.mxu0
    %v5894 = vadd.f32 %v4493, %v5893
    %v5895 = vpop.f32.mrf.mxu0
    %5896 = vdwg.mxu0
    %5897 = vmatpush.bf16.msra.mxu0 %v5329
    %5898 = vmatpush.bf16.msra.mxu0 %v5325
    %5899 = vmatpush.bf16.msra.mxu0 %v5321
    %5900 = vmatpush.bf16.msra.mxu0 %v5317
    %5901 = vmatpush.bf16.msra.mxu0 %v5313
    %5902 = vmatpush.bf16.msra.mxu0 %v5309
    %5903 = vmatpush.bf16.msra.mxu0 %v5305
    %5904 = vmatpush.bf16.msra.mxu0 %v5301
    %5905 = vmatmul.bf16.gmra.mxu0 %v4484
    %v5906 = vpop.f32.mrf.mxu0
    %v5907 = vadd.f32 %v5894, %v5906
    %v5908 = vpop.f32.mrf.mxu0
    %5909 = vdwg.mxu0
    %5910 = vmatpush.bf16.msra.mxu0 %v5361
    %5911 = vmatpush.bf16.msra.mxu0 %v5357
    %5912 = vmatpush.bf16.msra.mxu0 %v5353
    %5913 = vmatpush.bf16.msra.mxu0 %v5349
    %5914 = vmatpush.bf16.msra.mxu0 %v5345
    %5915 = vmatpush.bf16.msra.mxu0 %v5341
    %5916 = vmatpush.bf16.msra.mxu0 %v5337
    %5917 = vmatpush.bf16.msra.mxu0 %v5333
    %5918 = vmatmul.bf16.gmra.mxu0 %v4485
    %v5919 = vpop.f32.mrf.mxu0
    %v5920 = vadd.f32 %v5907, %v5919
    %v5921 = vpop.f32.mrf.mxu0
    %5922 = vdwg.mxu0
    %5923 = vmatpush.bf16.msra.mxu0 %v5393
    %5924 = vmatpush.bf16.msra.mxu0 %v5389
    %5925 = vmatpush.bf16.msra.mxu0 %v5385
    %5926 = vmatpush.bf16.msra.mxu0 %v5381
    %5927 = vmatpush.bf16.msra.mxu0 %v5377
    %5928 = vmatpush.bf16.msra.mxu0 %v5373
    %5929 = vmatpush.bf16.msra.mxu0 %v5369
    %5930 = vmatpush.bf16.msra.mxu0 %v5365
    %5931 = vmatmul.bf16.gmra.mxu0 %v4486
    %v5932 = vpop.f32.mrf.mxu0
    %v5933 = vadd.f32 %v5920, %v5932
    %v5934 = vpop.f32.mrf.mxu0
    %5935 = vdwg.mxu0
    %5936 = vmatpush.bf16.msra.mxu0 %v5425
    %5937 = vmatpush.bf16.msra.mxu0 %v5421
    %5938 = vmatpush.bf16.msra.mxu0 %v5417
    %5939 = vmatpush.bf16.msra.mxu0 %v5413
    %5940 = vmatpush.bf16.msra.mxu0 %v5409
    %5941 = vmatpush.bf16.msra.mxu0 %v5405
    %5942 = vmatpush.bf16.msra.mxu0 %v5401
    %5943 = vmatpush.bf16.msra.mxu0 %v5397
    %5944 = vmatmul.bf16.gmra.mxu0 %v4487
    %v5945 = vpop.f32.mrf.mxu0
    %v5946 = vadd.f32 %v5933, %v5945
    %v5947 = vpop.f32.mrf.mxu0
    %5948 = vdwg.mxu0
    %5949 = vmatpush.bf16.msra.mxu0 %v5457
    %5950 = vmatpush.bf16.msra.mxu0 %v5453
    %5951 = vmatpush.bf16.msra.mxu0 %v5449
    %5952 = vmatpush.bf16.msra.mxu0 %v5445
    %5953 = vmatpush.bf16.msra.mxu0 %v5441
    %5954 = vmatpush.bf16.msra.mxu0 %v5437
    %5955 = vmatpush.bf16.msra.mxu0 %v5433
    %5956 = vmatpush.bf16.msra.mxu0 %v5429
    %5957 = vmatmul.bf16.gmra.mxu0 %v4488
    %v5958 = vpop.f32.mrf.mxu0
    %v5959 = vadd.f32 %v5946, %v5958
    %v5960 = vpop.f32.mrf.mxu0
    %5961 = vdwg.mxu0
    %5962 = vmatpush.bf16.msra.mxu0 %v5489
    %5963 = vmatpush.bf16.msra.mxu0 %v5485
    %5964 = vmatpush.bf16.msra.mxu0 %v5481
    %5965 = vmatpush.bf16.msra.mxu0 %v5477
    %5966 = vmatpush.bf16.msra.mxu0 %v5473
    %5967 = vmatpush.bf16.msra.mxu0 %v5469
    %5968 = vmatpush.bf16.msra.mxu0 %v5465
    %5969 = vmatpush.bf16.msra.mxu0 %v5461
    %5970 = vmatmul.bf16.gmra.mxu0 %v4489
    %v5971 = vpop.f32.mrf.mxu0
    %v5972 = vadd.f32 %v5959, %v5971
    %v5973 = vpop.f32.mrf.mxu0
    %5974 = vdwg.mxu0
    %5975 = vmatpush.bf16.msra.mxu0 %v5521
    %5976 = vmatpush.bf16.msra.mxu0 %v5517
    %5977 = vmatpush.bf16.msra.mxu0 %v5513
    %5978 = vmatpush.bf16.msra.mxu0 %v5509
    %5979 = vmatpush.bf16.msra.mxu0 %v5505
    %5980 = vmatpush.bf16.msra.mxu0 %v5501
    %5981 = vmatpush.bf16.msra.mxu0 %v5497
    %5982 = vmatpush.bf16.msra.mxu0 %v5493
    %5983 = vmatmul.bf16.gmra.mxu0 %v4490
    %v5984 = vpop.f32.mrf.mxu0
    %v5985 = vadd.f32 %v5972, %v5984
    %v5986 = vpop.f32.mrf.mxu0
    %5987 = vdwg.mxu0
    %5988 = vmatpush.bf16.msra.mxu0 %v5298
    %5989 = vmatpush.bf16.msra.mxu0 %v5294
    %5990 = vmatpush.bf16.msra.mxu0 %v5290
    %5991 = vmatpush.bf16.msra.mxu0 %v5286
    %5992 = vmatpush.bf16.msra.mxu0 %v5282
    %5993 = vmatpush.bf16.msra.mxu0 %v5278
    %5994 = vmatpush.bf16.msra.mxu0 %v5274
    %5995 = vmatpush.bf16.msra.mxu0 %v5270
    %5996 = vmatmul.bf16.gmra.mxu0 %v4483
    %v5997 = vpop.f32.mrf.mxu0
    %v5998 = vadd.f32 %v4494, %v5997
    %v5999 = vpop.f32.mrf.mxu0
    %6000 = vdwg.mxu0
    %6001 = vmatpush.bf16.msra.mxu0 %v5330
    %6002 = vmatpush.bf16.msra.mxu0 %v5326
    %6003 = vmatpush.bf16.msra.mxu0 %v5322
    %6004 = vmatpush.bf16.msra.mxu0 %v5318
    %6005 = vmatpush.bf16.msra.mxu0 %v5314
    %6006 = vmatpush.bf16.msra.mxu0 %v5310
    %6007 = vmatpush.bf16.msra.mxu0 %v5306
    %6008 = vmatpush.bf16.msra.mxu0 %v5302
    %6009 = vmatmul.bf16.gmra.mxu0 %v4484
    %v6010 = vpop.f32.mrf.mxu0
    %v6011 = vadd.f32 %v5998, %v6010
    %v6012 = vpop.f32.mrf.mxu0
    %6013 = vdwg.mxu0
    %6014 = vmatpush.bf16.msra.mxu0 %v5362
    %6015 = vmatpush.bf16.msra.mxu0 %v5358
    %6016 = vmatpush.bf16.msra.mxu0 %v5354
    %6017 = vmatpush.bf16.msra.mxu0 %v5350
    %6018 = vmatpush.bf16.msra.mxu0 %v5346
    %6019 = vmatpush.bf16.msra.mxu0 %v5342
    %6020 = vmatpush.bf16.msra.mxu0 %v5338
    %6021 = vmatpush.bf16.msra.mxu0 %v5334
    %6022 = vmatmul.bf16.gmra.mxu0 %v4485
    %v6023 = vpop.f32.mrf.mxu0
    %v6024 = vadd.f32 %v6011, %v6023
    %v6025 = vpop.f32.mrf.mxu0
    %6026 = vdwg.mxu0
    %6027 = vmatpush.bf16.msra.mxu0 %v5394
    %6028 = vmatpush.bf16.msra.mxu0 %v5390
    %6029 = vmatpush.bf16.msra.mxu0 %v5386
    %6030 = vmatpush.bf16.msra.mxu0 %v5382
    %6031 = vmatpush.bf16.msra.mxu0 %v5378
    %6032 = vmatpush.bf16.msra.mxu0 %v5374
    %6033 = vmatpush.bf16.msra.mxu0 %v5370
    %6034 = vmatpush.bf16.msra.mxu0 %v5366
    %6035 = vmatmul.bf16.gmra.mxu0 %v4486
    %v6036 = vpop.f32.mrf.mxu0
    %v6037 = vadd.f32 %v6024, %v6036
    %v6038 = vpop.f32.mrf.mxu0
    %6039 = vdwg.mxu0
    %6040 = vmatpush.bf16.msra.mxu0 %v5426
    %6041 = vmatpush.bf16.msra.mxu0 %v5422
    %6042 = vmatpush.bf16.msra.mxu0 %v5418
    %6043 = vmatpush.bf16.msra.mxu0 %v5414
    %6044 = vmatpush.bf16.msra.mxu0 %v5410
    %6045 = vmatpush.bf16.msra.mxu0 %v5406
    %6046 = vmatpush.bf16.msra.mxu0 %v5402
    %6047 = vmatpush.bf16.msra.mxu0 %v5398
    %6048 = vmatmul.bf16.gmra.mxu0 %v4487
    %v6049 = vpop.f32.mrf.mxu0
    %v6050 = vadd.f32 %v6037, %v6049
    %v6051 = vpop.f32.mrf.mxu0
    %6052 = vdwg.mxu0
    %6053 = vmatpush.bf16.msra.mxu0 %v5458
    %6054 = vmatpush.bf16.msra.mxu0 %v5454
    %6055 = vmatpush.bf16.msra.mxu0 %v5450
    %6056 = vmatpush.bf16.msra.mxu0 %v5446
    %6057 = vmatpush.bf16.msra.mxu0 %v5442
    %6058 = vmatpush.bf16.msra.mxu0 %v5438
    %6059 = vmatpush.bf16.msra.mxu0 %v5434
    %6060 = vmatpush.bf16.msra.mxu0 %v5430
    %6061 = vmatmul.bf16.gmra.mxu0 %v4488
    %v6062 = vpop.f32.mrf.mxu0
    %v6063 = vadd.f32 %v6050, %v6062
    %v6064 = vpop.f32.mrf.mxu0
    %6065 = vdwg.mxu0
    %6066 = vmatpush.bf16.msra.mxu0 %v5490
    %6067 = vmatpush.bf16.msra.mxu0 %v5486
    %6068 = vmatpush.bf16.msra.mxu0 %v5482
    %6069 = vmatpush.bf16.msra.mxu0 %v5478
    %6070 = vmatpush.bf16.msra.mxu0 %v5474
    %6071 = vmatpush.bf16.msra.mxu0 %v5470
    %6072 = vmatpush.bf16.msra.mxu0 %v5466
    %6073 = vmatpush.bf16.msra.mxu0 %v5462
    %6074 = vmatmul.bf16.gmra.mxu0 %v4489
    %v6075 = vpop.f32.mrf.mxu0
    %v6076 = vadd.f32 %v6063, %v6075
    %v6077 = vpop.f32.mrf.mxu0
    %6078 = vdwg.mxu0
    %6079 = vmatpush.bf16.msra.mxu0 %v5522
    %6080 = vmatpush.bf16.msra.mxu0 %v5518
    %6081 = vmatpush.bf16.msra.mxu0 %v5514
    %6082 = vmatpush.bf16.msra.mxu0 %v5510
    %6083 = vmatpush.bf16.msra.mxu0 %v5506
    %6084 = vmatpush.bf16.msra.mxu0 %v5502
    %6085 = vmatpush.bf16.msra.mxu0 %v5498
    %6086 = vmatpush.bf16.msra.mxu0 %v5494
    %6087 = vmatmul.bf16.gmra.mxu0 %v4490
    %v6088 = vpop.f32.mrf.mxu0
    %v6089 = vadd.f32 %v6076, %v6088
    %v6090 = vpop.f32.mrf.mxu0
    %6091 = vdwg.mxu0
    %6092 = vmatpush.bf16.msra.mxu0 %v5299
    %6093 = vmatpush.bf16.msra.mxu0 %v5295
    %6094 = vmatpush.bf16.msra.mxu0 %v5291
    %6095 = vmatpush.bf16.msra.mxu0 %v5287
    %6096 = vmatpush.bf16.msra.mxu0 %v5283
    %6097 = vmatpush.bf16.msra.mxu0 %v5279
    %6098 = vmatpush.bf16.msra.mxu0 %v5275
    %6099 = vmatpush.bf16.msra.mxu0 %v5271
    %6100 = vmatmul.bf16.gmra.mxu0 %v4483
    %v6101 = vpop.f32.mrf.mxu0
    %v6102 = vadd.f32 %v4495, %v6101
    %v6103 = vpop.f32.mrf.mxu0
    %6104 = vdwg.mxu0
    %6105 = vmatpush.bf16.msra.mxu0 %v5331
    %6106 = vmatpush.bf16.msra.mxu0 %v5327
    %6107 = vmatpush.bf16.msra.mxu0 %v5323
    %6108 = vmatpush.bf16.msra.mxu0 %v5319
    %6109 = vmatpush.bf16.msra.mxu0 %v5315
    %6110 = vmatpush.bf16.msra.mxu0 %v5311
    %6111 = vmatpush.bf16.msra.mxu0 %v5307
    %6112 = vmatpush.bf16.msra.mxu0 %v5303
    %6113 = vmatmul.bf16.gmra.mxu0 %v4484
    %v6114 = vpop.f32.mrf.mxu0
    %v6115 = vadd.f32 %v6102, %v6114
    %v6116 = vpop.f32.mrf.mxu0
    %6117 = vdwg.mxu0
    %6118 = vmatpush.bf16.msra.mxu0 %v5363
    %6119 = vmatpush.bf16.msra.mxu0 %v5359
    %6120 = vmatpush.bf16.msra.mxu0 %v5355
    %6121 = vmatpush.bf16.msra.mxu0 %v5351
    %6122 = vmatpush.bf16.msra.mxu0 %v5347
    %6123 = vmatpush.bf16.msra.mxu0 %v5343
    %6124 = vmatpush.bf16.msra.mxu0 %v5339
    %6125 = vmatpush.bf16.msra.mxu0 %v5335
    %6126 = vmatmul.bf16.gmra.mxu0 %v4485
    %v6127 = vpop.f32.mrf.mxu0
    %v6128 = vadd.f32 %v6115, %v6127
    %v6129 = vpop.f32.mrf.mxu0
    %6130 = vdwg.mxu0
    %6131 = vmatpush.bf16.msra.mxu0 %v5395
    %6132 = vmatpush.bf16.msra.mxu0 %v5391
    %6133 = vmatpush.bf16.msra.mxu0 %v5387
    %6134 = vmatpush.bf16.msra.mxu0 %v5383
    %6135 = vmatpush.bf16.msra.mxu0 %v5379
    %6136 = vmatpush.bf16.msra.mxu0 %v5375
    %6137 = vmatpush.bf16.msra.mxu0 %v5371
    %6138 = vmatpush.bf16.msra.mxu0 %v5367
    %6139 = vmatmul.bf16.gmra.mxu0 %v4486
    %v6140 = vpop.f32.mrf.mxu0
    %v6141 = vadd.f32 %v6128, %v6140
    %v6142 = vpop.f32.mrf.mxu0
    %6143 = vdwg.mxu0
    %6144 = vmatpush.bf16.msra.mxu0 %v5427
    %6145 = vmatpush.bf16.msra.mxu0 %v5423
    %6146 = vmatpush.bf16.msra.mxu0 %v5419
    %6147 = vmatpush.bf16.msra.mxu0 %v5415
    %6148 = vmatpush.bf16.msra.mxu0 %v5411
    %6149 = vmatpush.bf16.msra.mxu0 %v5407
    %6150 = vmatpush.bf16.msra.mxu0 %v5403
    %6151 = vmatpush.bf16.msra.mxu0 %v5399
    %6152 = vmatmul.bf16.gmra.mxu0 %v4487
    %v6153 = vpop.f32.mrf.mxu0
    %v6154 = vadd.f32 %v6141, %v6153
    %v6155 = vpop.f32.mrf.mxu0
    %6156 = vdwg.mxu0
    %6157 = vmatpush.bf16.msra.mxu0 %v5459
    %6158 = vmatpush.bf16.msra.mxu0 %v5455
    %6159 = vmatpush.bf16.msra.mxu0 %v5451
    %6160 = vmatpush.bf16.msra.mxu0 %v5447
    %6161 = vmatpush.bf16.msra.mxu0 %v5443
    %6162 = vmatpush.bf16.msra.mxu0 %v5439
    %6163 = vmatpush.bf16.msra.mxu0 %v5435
    %6164 = vmatpush.bf16.msra.mxu0 %v5431
    %6165 = vmatmul.bf16.gmra.mxu0 %v4488
    %v6166 = vpop.f32.mrf.mxu0
    %v6167 = vadd.f32 %v6154, %v6166
    %v6168 = vpop.f32.mrf.mxu0
    %6169 = vdwg.mxu0
    %6170 = vmatpush.bf16.msra.mxu0 %v5491
    %6171 = vmatpush.bf16.msra.mxu0 %v5487
    %6172 = vmatpush.bf16.msra.mxu0 %v5483
    %6173 = vmatpush.bf16.msra.mxu0 %v5479
    %6174 = vmatpush.bf16.msra.mxu0 %v5475
    %6175 = vmatpush.bf16.msra.mxu0 %v5471
    %6176 = vmatpush.bf16.msra.mxu0 %v5467
    %6177 = vmatpush.bf16.msra.mxu0 %v5463
    %6178 = vmatmul.bf16.gmra.mxu0 %v4489
    %v6179 = vpop.f32.mrf.mxu0
    %v6180 = vadd.f32 %v6167, %v6179
    %v6181 = vpop.f32.mrf.mxu0
    %6182 = vdwg.mxu0
    %6183 = vmatpush.bf16.msra.mxu0 %v5523
    %6184 = vmatpush.bf16.msra.mxu0 %v5519
    %6185 = vmatpush.bf16.msra.mxu0 %v5515
    %6186 = vmatpush.bf16.msra.mxu0 %v5511
    %6187 = vmatpush.bf16.msra.mxu0 %v5507
    %6188 = vmatpush.bf16.msra.mxu0 %v5503
    %6189 = vmatpush.bf16.msra.mxu0 %v5499
    %6190 = vmatpush.bf16.msra.mxu0 %v5495
    %6191 = vmatmul.bf16.gmra.mxu0 %v4490
    %v6192 = vpop.f32.mrf.mxu0
    %v6193 = vadd.f32 %v6180, %v6192
    %v6194 = vpop.f32.mrf.mxu0
    %6195 = vdwg.mxu0
    %vm6196 = vcmp.gt.f32.partialorder %v5881, 0.0
    %vm6197 = vcmp.gt.f32.partialorder %v5985, 0.0
    %vm6198 = vcmp.gt.f32.partialorder %v6089, 0.0
    %vm6199 = vcmp.gt.f32.partialorder %v6193, 0.0
    %v6200 = vmin.f32 %v5881, 0.0
    %v6201 = vmin.f32 %v5985, 0.0
    %v6202 = vmin.f32 %v6089, 0.0
    %v6203 = vmin.f32 %v6193, 0.0
    %v6204 = vmul.f32 %v6200, 1.442695
    %v6205 = vpow.pop %v6204
    %v6206 = vmul.f32 %v6201, 1.442695
    %v6207 = vpow.pop %v6206
    %v6208 = vmul.f32 %v6202, 1.442695
    %v6209 = vpow.pop %v6208
    %v6210 = vmul.f32 %v6203, 1.442695
    %v6211 = vpow.pop %v6210
    %v6212 = vsub.f32 %v6205, 1.0
    %v6213 = vsub.f32 %v6207, 1.0
    %v6214 = vsub.f32 %v6209, 1.0
    %v6215 = vsub.f32 %v6211, 1.0
    %v6216 = vsel %vm6196, %v5881, %v6212
    %v6217 = vsel %vm6197, %v5985, %v6213
    %v6218 = vsel %vm6198, %v6089, %v6214
    %v6219 = vsel %vm6199, %v6193, %v6215
    %s6220 = smul.u32 4, 64
    %s6221 = smul.u32 %s6220, 1
    %s6222 = sshll.u32 %s6221, 4
    %6223 = dma.done %s379, %s6222
    %v6224 = vld [vmem:[#allocation3] sm:$0xf]
    %v6225 = vld [vmem:[#allocation3 + $0x4] sm:$0xf]
    %v6226 = vld [vmem:[#allocation3 + $0x8] sm:$0xf]
    %v6227 = vld [vmem:[#allocation3 + $0xc] sm:$0xf]
    %v6228 = vld [vmem:[#allocation3 + $0x10] sm:$0xf]
    %v6229 = vld [vmem:[#allocation3 + $0x14] sm:$0xf]
    %v6230 = vld [vmem:[#allocation3 + $0x18] sm:$0xf]
    %v6231 = vld [vmem:[#allocation3 + $0x1c] sm:$0xf]
    %v6232 = vld [vmem:[#allocation3 + $0x20] sm:$0xf]
    %v6233 = vld [vmem:[#allocation3 + $0x24] sm:$0xf]
    %v6234 = vld [vmem:[#allocation3 + $0x28] sm:$0xf]
    %v6235 = vld [vmem:[#allocation3 + $0x2c] sm:$0xf]
    %v6236 = vld [vmem:[#allocation3 + $0x30] sm:$0xf]
    %v6237 = vld [vmem:[#allocation3 + $0x34] sm:$0xf]
    %v6238 = vld [vmem:[#allocation3 + $0x38] sm:$0xf]
    %v6239 = vld [vmem:[#allocation3 + $0x3c] sm:$0xf]
    %v6240 = vld [vmem:[#allocation3 + $0x40] sm:$0xf]
    %v6241 = vld [vmem:[#allocation3 + $0x44] sm:$0xf]
    %v6242 = vld [vmem:[#allocation3 + $0x48] sm:$0xf]
    %v6243 = vld [vmem:[#allocation3 + $0x4c] sm:$0xf]
    %v6244 = vld [vmem:[#allocation3 + $0x50] sm:$0xf]
    %v6245 = vld [vmem:[#allocation3 + $0x54] sm:$0xf]
    %v6246 = vld [vmem:[#allocation3 + $0x58] sm:$0xf]
    %v6247 = vld [vmem:[#allocation3 + $0x5c] sm:$0xf]
    %v6248 = vld [vmem:[#allocation3 + $0x60] sm:$0xf]
    %v6249 = vld [vmem:[#allocation3 + $0x64] sm:$0xf]
    %v6250 = vld [vmem:[#allocation3 + $0x68] sm:$0xf]
    %v6251 = vld [vmem:[#allocation3 + $0x6c] sm:$0xf]
    %v6252 = vld [vmem:[#allocation3 + $0x70] sm:$0xf]
    %v6253 = vld [vmem:[#allocation3 + $0x74] sm:$0xf]
    %v6254 = vld [vmem:[#allocation3 + $0x78] sm:$0xf]
    %v6255 = vld [vmem:[#allocation3 + $0x7c] sm:$0xf]
    %v6256 = vld [vmem:[#allocation3 + $0x80] sm:$0xf]
    %v6257 = vld [vmem:[#allocation3 + $0x84] sm:$0xf]
    %v6258 = vld [vmem:[#allocation3 + $0x88] sm:$0xf]
    %v6259 = vld [vmem:[#allocation3 + $0x8c] sm:$0xf]
    %v6260 = vld [vmem:[#allocation3 + $0x90] sm:$0xf]
    %v6261 = vld [vmem:[#allocation3 + $0x94] sm:$0xf]
    %v6262 = vld [vmem:[#allocation3 + $0x98] sm:$0xf]
    %v6263 = vld [vmem:[#allocation3 + $0x9c] sm:$0xf]
    %v6264 = vld [vmem:[#allocation3 + $0xa0] sm:$0xf]
    %v6265 = vld [vmem:[#allocation3 + $0xa4] sm:$0xf]
    %v6266 = vld [vmem:[#allocation3 + $0xa8] sm:$0xf]
    %v6267 = vld [vmem:[#allocation3 + $0xac] sm:$0xf]
    %v6268 = vld [vmem:[#allocation3 + $0xb0] sm:$0xf]
    %v6269 = vld [vmem:[#allocation3 + $0xb4] sm:$0xf]
    %v6270 = vld [vmem:[#allocation3 + $0xb8] sm:$0xf]
    %v6271 = vld [vmem:[#allocation3 + $0xbc] sm:$0xf]
    %v6272 = vld [vmem:[#allocation3 + $0xc0] sm:$0xf]
    %v6273 = vld [vmem:[#allocation3 + $0xc4] sm:$0xf]
    %v6274 = vld [vmem:[#allocation3 + $0xc8] sm:$0xf]
    %v6275 = vld [vmem:[#allocation3 + $0xcc] sm:$0xf]
    %v6276 = vld [vmem:[#allocation3 + $0xd0] sm:$0xf]
    %v6277 = vld [vmem:[#allocation3 + $0xd4] sm:$0xf]
    %v6278 = vld [vmem:[#allocation3 + $0xd8] sm:$0xf]
    %v6279 = vld [vmem:[#allocation3 + $0xdc] sm:$0xf]
    %v6280 = vld [vmem:[#allocation3 + $0xe0] sm:$0xf]
    %v6281 = vld [vmem:[#allocation3 + $0xe4] sm:$0xf]
    %v6282 = vld [vmem:[#allocation3 + $0xe8] sm:$0xf]
    %v6283 = vld [vmem:[#allocation3 + $0xec] sm:$0xf]
    %v6284 = vld [vmem:[#allocation3 + $0xf0] sm:$0xf]
    %v6285 = vld [vmem:[#allocation3 + $0xf4] sm:$0xf]
    %v6286 = vld [vmem:[#allocation3 + $0xf8] sm:$0xf]
    %v6287 = vld [vmem:[#allocation3 + $0xfc] sm:$0xf]
    %v6288 = vld [vmem:[#allocation28] sm:$0x1]
    %v6289 = vpack.c.bf16 %v6216, %v6216
    %v6290 = vpack.c.bf16 %v6217, %v6217
    %v6291 = vpack.c.bf16 %v6218, %v6218
    %v6292 = vpack.c.bf16 %v6219, %v6219
    %v6294 = vperm.slane %v6288, 0
    %v6360 = vunpack.c.l.b16 %v6224
    %v6361 = vunpack.c.l.b16 %v6225
    %v6362 = vunpack.c.l.b16 %v6226
    %v6363 = vunpack.c.l.b16 %v6227
    %v6364 = vunpack.c.l.b16 %v6228
    %v6365 = vunpack.c.l.b16 %v6229
    %v6366 = vunpack.c.l.b16 %v6230
    %v6367 = vunpack.c.l.b16 %v6231
    %v6368 = vunpack.c.l.b16 %v6232
    %v6369 = vunpack.c.l.b16 %v6233
    %v6370 = vunpack.c.l.b16 %v6234
    %v6371 = vunpack.c.l.b16 %v6235
    %v6372 = vunpack.c.l.b16 %v6236
    %v6373 = vunpack.c.l.b16 %v6237
    %v6374 = vunpack.c.l.b16 %v6238
    %v6375 = vunpack.c.l.b16 %v6239
    %v6376 = vunpack.c.l.b16 %v6240
    %v6377 = vunpack.c.l.b16 %v6241
    %v6378 = vunpack.c.l.b16 %v6242
    %v6379 = vunpack.c.l.b16 %v6243
    %v6380 = vunpack.c.l.b16 %v6244
    %v6381 = vunpack.c.l.b16 %v6245
    %v6382 = vunpack.c.l.b16 %v6246
    %v6383 = vunpack.c.l.b16 %v6247
    %v6384 = vunpack.c.l.b16 %v6248
    %v6385 = vunpack.c.l.b16 %v6249
    %v6386 = vunpack.c.l.b16 %v6250
    %v6387 = vunpack.c.l.b16 %v6251
    %v6388 = vunpack.c.l.b16 %v6252
    %v6389 = vunpack.c.l.b16 %v6253
    %v6390 = vunpack.c.l.b16 %v6254
    %v6391 = vunpack.c.l.b16 %v6255
    %v6392 = vunpack.c.l.b16 %v6256
    %v6393 = vunpack.c.l.b16 %v6257
    %v6394 = vunpack.c.l.b16 %v6258
    %v6395 = vunpack.c.l.b16 %v6259
    %v6396 = vunpack.c.l.b16 %v6260
    %v6397 = vunpack.c.l.b16 %v6261
    %v6398 = vunpack.c.l.b16 %v6262
    %v6399 = vunpack.c.l.b16 %v6263
    %v6400 = vunpack.c.l.b16 %v6264
    %v6401 = vunpack.c.l.b16 %v6265
    %v6402 = vunpack.c.l.b16 %v6266
    %v6403 = vunpack.c.l.b16 %v6267
    %v6404 = vunpack.c.l.b16 %v6268
    %v6405 = vunpack.c.l.b16 %v6269
    %v6406 = vunpack.c.l.b16 %v6270
    %v6407 = vunpack.c.l.b16 %v6271
    %v6408 = vunpack.c.l.b16 %v6272
    %v6409 = vunpack.c.l.b16 %v6273
    %v6410 = vunpack.c.l.b16 %v6274
    %v6411 = vunpack.c.l.b16 %v6275
    %v6412 = vunpack.c.l.b16 %v6276
    %v6413 = vunpack.c.l.b16 %v6277
    %v6414 = vunpack.c.l.b16 %v6278
    %v6415 = vunpack.c.l.b16 %v6279
    %v6416 = vunpack.c.l.b16 %v6280
    %v6417 = vunpack.c.l.b16 %v6281
    %v6418 = vunpack.c.l.b16 %v6282
    %v6419 = vunpack.c.l.b16 %v6283
    %v6420 = vunpack.c.l.b16 %v6284
    %v6421 = vunpack.c.l.b16 %v6285
    %v6422 = vunpack.c.l.b16 %v6286
    %v6423 = vunpack.c.l.b16 %v6287
    %v6424 = vpack.c.b16 %v6361, %v6360
    %v6425 = vpack.c.b16 %v6363, %v6362
    %v6426 = vpack.c.b16 %v6365, %v6364
    %v6427 = vpack.c.b16 %v6367, %v6366
    %v6428 = vpack.c.b16 %v6369, %v6368
    %v6429 = vpack.c.b16 %v6371, %v6370
    %v6430 = vpack.c.b16 %v6373, %v6372
    %v6431 = vpack.c.b16 %v6375, %v6374
    %v6432 = vpack.c.b16 %v6377, %v6376
    %v6433 = vpack.c.b16 %v6379, %v6378
    %v6434 = vpack.c.b16 %v6381, %v6380
    %v6435 = vpack.c.b16 %v6383, %v6382
    %v6436 = vpack.c.b16 %v6385, %v6384
    %v6437 = vpack.c.b16 %v6387, %v6386
    %v6438 = vpack.c.b16 %v6389, %v6388
    %v6439 = vpack.c.b16 %v6391, %v6390
    %v6440 = vpack.c.b16 %v6393, %v6392
    %v6441 = vpack.c.b16 %v6395, %v6394
    %v6442 = vpack.c.b16 %v6397, %v6396
    %v6443 = vpack.c.b16 %v6399, %v6398
    %v6444 = vpack.c.b16 %v6401, %v6400
    %v6445 = vpack.c.b16 %v6403, %v6402
    %v6446 = vpack.c.b16 %v6405, %v6404
    %v6447 = vpack.c.b16 %v6407, %v6406
    %v6448 = vpack.c.b16 %v6409, %v6408
    %v6449 = vpack.c.b16 %v6411, %v6410
    %v6450 = vpack.c.b16 %v6413, %v6412
    %v6451 = vpack.c.b16 %v6415, %v6414
    %v6452 = vpack.c.b16 %v6417, %v6416
    %v6453 = vpack.c.b16 %v6419, %v6418
    %v6454 = vpack.c.b16 %v6421, %v6420
    %v6455 = vpack.c.b16 %v6423, %v6422
    %6488 = vmatpush.bf16.msra.mxu0 %v6431
    %6489 = vmatpush.bf16.msra.mxu0 %v6430
    %6490 = vmatpush.bf16.msra.mxu0 %v6429
    %6491 = vmatpush.bf16.msra.mxu0 %v6428
    %6492 = vmatpush.bf16.msra.mxu0 %v6427
    %6493 = vmatpush.bf16.msra.mxu0 %v6426
    %6494 = vmatpush.bf16.msra.mxu0 %v6425
    %6495 = vmatpush.bf16.msra.mxu0 %v6424
    %6496 = vmatmul.bf16.gmra.mxu0 %v6289
    %v6497 = vpop.f32.mrf.mxu0
    %v6498 = vadd.f32 %v6294, %v6497
    %v6499 = vpop.f32.mrf.mxu0
    %6500 = vdwg.mxu0
    %6501 = vmatpush.bf16.msra.mxu0 %v6439
    %6502 = vmatpush.bf16.msra.mxu0 %v6438
    %6503 = vmatpush.bf16.msra.mxu0 %v6437
    %6504 = vmatpush.bf16.msra.mxu0 %v6436
    %6505 = vmatpush.bf16.msra.mxu0 %v6435
    %6506 = vmatpush.bf16.msra.mxu0 %v6434
    %6507 = vmatpush.bf16.msra.mxu0 %v6433
    %6508 = vmatpush.bf16.msra.mxu0 %v6432
    %6509 = vmatmul.bf16.gmra.mxu0 %v6290
    %v6510 = vpop.f32.mrf.mxu0
    %v6511 = vadd.f32 %v6498, %v6510
    %v6512 = vpop.f32.mrf.mxu0
    %6513 = vdwg.mxu0
    %6514 = vmatpush.bf16.msra.mxu0 %v6447
    %6515 = vmatpush.bf16.msra.mxu0 %v6446
    %6516 = vmatpush.bf16.msra.mxu0 %v6445
    %6517 = vmatpush.bf16.msra.mxu0 %v6444
    %6518 = vmatpush.bf16.msra.mxu0 %v6443
    %6519 = vmatpush.bf16.msra.mxu0 %v6442
    %6520 = vmatpush.bf16.msra.mxu0 %v6441
    %6521 = vmatpush.bf16.msra.mxu0 %v6440
    %6522 = vmatmul.bf16.gmra.mxu0 %v6291
    %v6523 = vpop.f32.mrf.mxu0
    %v6524 = vadd.f32 %v6511, %v6523
    %v6525 = vpop.f32.mrf.mxu0
    %6526 = vdwg.mxu0
    %6527 = vmatpush.bf16.msra.mxu0 %v6455
    %6528 = vmatpush.bf16.msra.mxu0 %v6454
    %6529 = vmatpush.bf16.msra.mxu0 %v6453
    %6530 = vmatpush.bf16.msra.mxu0 %v6452
    %6531 = vmatpush.bf16.msra.mxu0 %v6451
    %6532 = vmatpush.bf16.msra.mxu0 %v6450
    %6533 = vmatpush.bf16.msra.mxu0 %v6449
    %6534 = vmatpush.bf16.msra.mxu0 %v6448
    %6535 = vmatmul.bf16.gmra.mxu0 %v6292
    %v6536 = vpop.f32.mrf.mxu0
    %v6537 = vadd.f32 %v6524, %v6536
    %v6538 = vpop.f32.mrf.mxu0
    %6539 = vdwg.mxu0
    %vm6540 = vcmp.gt.f32.partialorder %v6537, 0.0
    %v6541 = vmin.f32 %v6537, 0.0
    %v6542 = vmul.f32 %v6541, 1.442695
    %v6543 = vpow.pop %v6542
    %v6544 = vsub.f32 %v6543, 1.0
    %v6545 = vsel %vm6540, %v6537, %v6544
    %v6546 = vld [vmem:[%s71] sm:$0xf]
    %v6547 = vld [vmem:[%s71 + $0x4] sm:$0xf]
    %v6548 = vld [vmem:[%s71 + $0x8] sm:$0xf]
    %v6549 = vld [vmem:[%s71 + $0xc] sm:$0xf]
    %v6550 = vld [vmem:[%s71 + $0x10] sm:$0xf]
    %v6551 = vld [vmem:[%s71 + $0x14] sm:$0xf]
    %v6552 = vld [vmem:[%s71 + $0x18] sm:$0xf]
    %v6553 = vld [vmem:[%s71 + $0x1c] sm:$0xf]
    %v6554 = vld [vmem:[%s71 + $0x20] sm:$0xf]
    %v6555 = vld [vmem:[%s71 + $0x24] sm:$0xf]
    %v6556 = vld [vmem:[%s71 + $0x28] sm:$0xf]
    %v6557 = vld [vmem:[%s71 + $0x2c] sm:$0xf]
    %v6558 = vld [vmem:[%s71 + $0x30] sm:$0xf]
    %v6559 = vld [vmem:[%s71 + $0x34] sm:$0xf]
    %v6560 = vld [vmem:[%s71 + $0x38] sm:$0xf]
    %v6561 = vld [vmem:[%s71 + $0x3c] sm:$0xf]
    %v6562 = vld [vmem:[#allocation5] sm:$0x1]
    %v6563 = vpack.c.bf16 %v6545, %v6545
    %v6565 = vperm.slane %v6562, 0
    %v6583 = vunpack.c.l.b16 %v6546
    %v6584 = vunpack.c.l.b16 %v6547
    %v6585 = vunpack.c.l.b16 %v6548
    %v6586 = vunpack.c.l.b16 %v6549
    %v6587 = vunpack.c.l.b16 %v6550
    %v6588 = vunpack.c.l.b16 %v6551
    %v6589 = vunpack.c.l.b16 %v6552
    %v6590 = vunpack.c.l.b16 %v6553
    %v6591 = vunpack.c.l.b16 %v6554
    %v6592 = vunpack.c.l.b16 %v6555
    %v6593 = vunpack.c.l.b16 %v6556
    %v6594 = vunpack.c.l.b16 %v6557
    %v6595 = vunpack.c.l.b16 %v6558
    %v6596 = vunpack.c.l.b16 %v6559
    %v6597 = vunpack.c.l.b16 %v6560
    %v6598 = vunpack.c.l.b16 %v6561
    %v6599 = vpack.c.b16 %v6584, %v6583
    %v6600 = vpack.c.b16 %v6586, %v6585
    %v6601 = vpack.c.b16 %v6588, %v6587
    %v6602 = vpack.c.b16 %v6590, %v6589
    %v6603 = vpack.c.b16 %v6592, %v6591
    %v6604 = vpack.c.b16 %v6594, %v6593
    %v6605 = vpack.c.b16 %v6596, %v6595
    %v6606 = vpack.c.b16 %v6598, %v6597
    %6615 = vmatpush.bf16.msra.mxu0 %v6606
    %6616 = vmatpush.bf16.msra.mxu0 %v6605
    %6617 = vmatpush.bf16.msra.mxu0 %v6604
    %6618 = vmatpush.bf16.msra.mxu0 %v6603
    %6619 = vmatpush.bf16.msra.mxu0 %v6602
    %6620 = vmatpush.bf16.msra.mxu0 %v6601
    %6621 = vmatpush.bf16.msra.mxu0 %v6600
    %6622 = vmatpush.bf16.msra.mxu0 %v6599
    %6623 = vmatmul.bf16.gmra.mxu0 %v6563
    %v6624 = vpop.f32.mrf.mxu0
    %v6625 = vadd.f32 %v6565, %v6624
    %v6626 = vpop.f32.mrf.mxu0
    %6627 = vdwg.mxu0
    %6628 = vst [vmem:[%s75] sm:$0xff] 0.0
    %6629 = vst [vmem:[%s75 + $0x8] sm:$0xff] 0.0
    %vm6630 = vcmask 31744
    %6631 = vst.msk [vmem:[%s75] sm:$0xff] %vm6630, %v3841
    %6633 = vrot.lane.b32.xlu0 %v6625, 4
    %v6634 = vpop.permute.xlu0 %6633
    %vm6636 = vcmask 39968
    %6637 = vst.msk [vmem:[%s75] sm:$0xff] %vm6636, %v6634
    %6639 = vrot.lane.b32.xlu0 %v595, 5
    %v6640 = vpop.permute.xlu0 %6639
    %vm6642 = vcmask 564264
    %6643 = vst.msk [vmem:[%s75] sm:$0xff] %vm6642, %v6640
    %6645 = vrot.lane.b32.xlu0 %v2813, 69
    %v6646 = vpop.permute.xlu0 %6645
    %vm6648 = vcmask 1048104
    %6649 = vst.msk [vmem:[%s75] sm:$0xff] %vm6648, %v6646
    %vm6650 = vcmask 39936
    %6651 = vst.msk [vmem:[%s75 + $0x8] sm:$0xff] %vm6650, %v6646
    // Predicated region
    $region210: #{tcnrma_forward.1} parent=1 // pred_check
      _
    $region211: #{tcnrma_forward.1} parent=1 // pred_check_branch
      %6653 = sbr.rel (0) target = $region213
    $region212: #{tcnrma_forward.1} parent=1 // pred_region
      _
    $region213: #{tcnrma_forward.1} parent=1 // pred_fallthru
      _
    // Predicated region
    $region214: #{tcnrma_forward.1} parent=1 // pred_check
      _
    $region215: #{tcnrma_forward.1} parent=1 // pred_check_branch
      %6655 = sbr.rel (0) target = $region217
    $region216: #{tcnrma_forward.1} parent=1 // pred_region
      _
    $region217: #{tcnrma_forward.1} parent=1 // pred_fallthru
      _
    %6656 = vsyncpa [#allocation7], 1
    %6657 = vsyncpa [#allocation9], 1
    %6658 = vsyncpa [#allocation12], 1
    %6659 = vsyncpa [#allocation15], 1
    %6660 = vsyncpa [#allocation18], 1
    %6661 = vsyncpa [#allocation21], 1
    %6662 = vsyncpa [#allocation24], 1
    %6663 = vsyncpa [#allocation27], 1
  %6664 = vsyncmov [#allocation4]
  %s6665 = vpop.sfrf %6664
  %p6666 = scmp.eq.s32.totalorder %s6665, 0
  %p6667 = pneg %p6666
  %6669 = shalt.err (%p6667)
  %s6670 = scalar_lea.sflag [#allocation4], 1
  %6671 = vsyncmov %s6670
  %s6672 = vpop.sfrf %6671
  %p6673 = scmp.eq.s32.totalorder %s6672, 0
  %p6674 = pneg %p6673
  %6676 = shalt.err (%p6674)

</llo_original>
